<compile_context>
chip_gen: v6e
topology: v6e:2x2x1
jax: 0.10.0
libtpu: 0.0.40
codegen_flags: <defaults>
</compile_context>

<pallas_src>
import numpy as np
import jax
import jax.numpy as jnp
from jax.experimental import pallas as pl
from jax.experimental.pallas import tpu as pltpu

# ---------------- configuration (small synthetic shapes) ----------------
SIGNAL_LEN   = 160                        # raw audio samples
NFFT         = 32                         # nfft_stft
HOP          = NFFT // 2
NFREQ        = NFFT // 2 + 1              # 17
NFREQ_PAD    = 32                         # freq axis padded to a denser lane width
N_MELS       = 8
SAMPLE_RATE  = 16000
PRE_EMPHASIS = 0.97
LFR_M        = 4
LFR_N        = 2
LFR_M_FACTOR = (LFR_M - 1) // 2
T_STFT       = SIGNAL_LEN // HOP + 1      # stft_signal_len (center-padded frames) = 11
T_LFR        = int(np.ceil(T_STFT / LFR_N))   # lfr_len = 6
HIDDEN       = N_MELS * LFR_M             # cif_hidden_size = 32
NUM_HEAD     = 4
D_K          = HIDDEN // NUM_HEAD
FFN_DIM      = 64
VOCAB        = 32
BLANK_ID     = 0
N_ENC0, N_ENC, N_TP = 1, 2, 1             # encoders0 / encoders / tp_encoders layers
L_TOTAL      = N_ENC0 + N_ENC + N_TP
N_SYS        = 3                          # use_emo=True -> 3 system tokens
SEQ_LEN      = 1 + N_SYS + T_LFR          # 10
INT_INV16    = 1.0 / 32768.0
FSMN_KSIZE   = 3                          # TODO(synk): real SANM uses kernel_size=11 + sanm_shift
N_ROWS_AUDIO = SIGNAL_LEN // HOP          # 10

assert SIGNAL_LEN % HOP == 0

# ---- packed row-vector operand layout: one (N_VEC_ROWS, 96) f32 array ----
ROWS_PER_LAYER = 8
R_N1G, R_N1B, R_BQKV, R_BOUT, R_N2G, R_N2B, R_B1, R_B2 = range(ROWS_PER_LAYER)
G_BASE      = L_TOTAL * ROWS_PER_LAYER
G_CMVN_MEAN = G_BASE + 0
G_CMVN_VAR  = G_BASE + 1
G_AFTER_G   = G_BASE + 2
G_AFTER_B   = G_BASE + 3
G_TP_G      = G_BASE + 4
G_TP_B      = G_BASE + 5
G_CTC_B     = G_BASE + 6
N_VEC_ROWS  = G_BASE + 7
VEC_W       = 3 * HIDDEN

# ---- packed 32-lane matrix operand layout: one (N_MATS, 32) f32 array ----
M_LANG = 0                    # 8 language-embedding rows (7 real + pad)
M_SYS  = M_LANG + 8           # 3 system-embedding rows
M_PE   = M_SYS + N_SYS        # SEQ_LEN positional-encoding rows
M_CTCW = M_PE + SEQ_LEN       # HIDDEN rows of the CTC projection
N_MATS = M_CTCW + HIDDEN


# ============================== in-kernel helpers (pure) ==============================

def _layernorm(x, g, b):
    mu = jnp.mean(x, axis=-1, keepdims=True)
    xc = x - mu
    var = jnp.mean(xc * xc, axis=-1, keepdims=True)
    return xc * jax.lax.rsqrt(var + 1e-5) * g + b


def _shift_mat(n, m, off):
    # one-hot matrix with ones where col == row + off (row/lane shifts on the MXU)
    r = jax.lax.broadcasted_iota(jnp.int32, (n, m), 0)
    c = jax.lax.broadcasted_iota(jnp.int32, (n, m), 1)
    return (c == r + off).astype(jnp.float32)


# ============================== fused forward kernel ==============================

def sense_voice_kernel(lidx_ref, audio_ref, dft_ref, fbank_ref, lfr_ref,
                       mats_ref, attn_ref, vecs_ref,
                       wqkv_ref, fsmn_ref, w1_ref, w2_ref, wout_ref,
                       out_ref):
    f32 = jnp.float32
    bf16 = jnp.bfloat16
    T = SEQ_LEN
    R = N_ROWS_AUDIO

    # ---- constant shift / selection matrices, built once per grid step ----
    l_shift  = _shift_mat(HOP, HOP, 1)       # x @ l_shift -> previous lane (lane 0 -> 0)
    d_prev_r = _shift_mat(R, R, -1)          # row shift down (row 0 -> 0)
    a_frame  = _shift_mat(T_STFT, R, -1)     # frame first-half selector (center pad)
    b_frame  = _shift_mat(T_STFT, R, 0)      # frame second-half selector
    d_prev_t = _shift_mat(T, T, -1)
    d_next_t = _shift_mat(T, T, 1)
    r_i = jax.lax.broadcasted_iota(jnp.int32, (T, T), 0)
    c_i = jax.lax.broadcasted_iota(jnp.int32, (T, T), 1)
    d_roll_t = d_next_t + jnp.logical_and(r_i == T - 1, c_i == 0).astype(f32)  # torch.roll(-1)

    # ---------------- frontend: int16 scale, de-mean, pre-emphasis ----------------
    x = audio_ref[0].astype(f32) * INT_INV16                    # (R, HOP)
    x = x - jnp.mean(x)                                          # global DC removal
    last_col = x[:, HOP - 1:HOP]                                 # (R, 1), static lane slice
    prev_col = jnp.dot(d_prev_r, last_col, preferred_element_type=f32)
    lane_idx = jax.lax.broadcasted_iota(jnp.int32, (R, HOP), 1)
    shifted = jnp.where(lane_idx == 0, prev_col,
                        jnp.dot(x, l_shift, preferred_element_type=f32))
    e = x - PRE_EMPHASIS * shifted                               # first sample kept unchanged

    # ---------------- framing + windowed DFT power spectrum + log-mel ----------------
    # TODO(synk): window of STFT_Process unknown; periodic Hann assumed, folded into DFT tables.
    half0 = jnp.dot(e, dft_ref[0], preferred_element_type=f32)   # (R, 2*NFREQ_PAD)
    half1 = jnp.dot(e, dft_ref[1], preferred_element_type=f32)
    spec = (jnp.dot(a_frame, half0, preferred_element_type=f32) +
            jnp.dot(b_frame, half1, preferred_element_type=f32))  # (T_STFT, 2*NFREQ_PAD)
    real = spec[:, :NFREQ_PAD]
    imag = spec[:, NFREQ_PAD:]
    power = real * real + imag * imag
    mel = jnp.dot(power, fbank_ref[...], preferred_element_type=f32)   # (T_STFT, N_MELS)
    logmel = jnp.log(jnp.maximum(mel, 1e-5))

    # ---------------- LFR stacking via precomputed one-hot selection matmuls ----------------
    lfr = jnp.concatenate(
        [jnp.dot(lfr_ref[j], logmel, preferred_element_type=f32) for j in range(LFR_M)],
        axis=-1)                                                  # (T_LFR, HIDDEN)

    # ---------------- language / system embeddings + CMVN + pos-enc ----------------
    lidx = lidx_ref[pl.program_id(0)]
    lang = mats_ref[pl.ds(M_LANG + lidx, 1), :]                   # dynamic row select (1, HIDDEN)
    feats = jnp.concatenate([lang, mats_ref[M_SYS:M_SYS + N_SYS, :], lfr], axis=0)
    cmvn_mean = vecs_ref[G_CMVN_MEAN:G_CMVN_MEAN + 1, :HIDDEN]
    cmvn_var = vecs_ref[G_CMVN_VAR:G_CMVN_VAR + 1, :HIDDEN]
    h = (feats - cmvn_mean) * cmvn_var
    h = h * (float(HIDDEN) ** 0.5) + mats_ref[M_PE:M_PE + SEQ_LEN, :]

    # ---------------- block-diagonal attention constants ----------------
    mask2 = attn_ref[0]                                           # (H*T, HIDDEN) head lane mask
    rep = attn_ref[1][:, :T]                                      # (H*T, T) sublane replicator
    blkblk = jnp.einsum('rd,sd->rs', mask2, mask2,
                        preferred_element_type=f32) * (1.0 / D_K)  # per-head segment-sum matrix

    def vrow(i, w=HIDDEN):
        return vecs_ref[i:i + 1, :w]

    def enc_layer(h, l):
        base = l * ROWS_PER_LAYER
        xn = _layernorm(h, vrow(base + R_N1G), vrow(base + R_N1B))
        qkv = jnp.dot(xn.astype(bf16), wqkv_ref[l],
                      preferred_element_type=f32) + vrow(base + R_BQKV, 3 * HIDDEN)
        q = qkv[:, :HIDDEN]
        k = qkv[:, HIDDEN:2 * HIDDEN]
        v = qkv[:, 2 * HIDDEN:]

        # FSMN depthwise memory on v (+ residual with v); time shifts done on the MXU
        kern = fsmn_ref[l]                                        # (FSMN_KSIZE, HIDDEN)
        v_prev = jnp.dot(d_prev_t, v, preferred_element_type=f32)
        v_next = jnp.dot(d_next_t, v, preferred_element_type=f32)
        fsmn = v_prev * kern[0:1, :] + v * kern[1:2, :] + v_next * kern[2:3, :] + v

        # all heads in single wide block-diagonal contractions (q/k pre-scaled by d_k**-0.25)
        k_rep = jnp.dot(rep, k, preferred_element_type=f32) * mask2     # (H*T, HIDDEN)
        v_rep = jnp.dot(rep, v, preferred_element_type=f32) * mask2
        s = jnp.einsum('td,rd->tr', q, k_rep, preferred_element_type=f32)   # (T, H*T)
        s = s - jnp.max(s, axis=-1, keepdims=True)                # global max: safe, cancels per head
        p = jnp.exp(s)
        denom = jnp.dot(p, blkblk, preferred_element_type=f32)    # per-head softmax denominators
        p = p * pl.reciprocal(denom, approx=True)
        ctx = jnp.dot(p, v_rep, preferred_element_type=f32)       # (T, HIDDEN) head-interleaved
        att = jnp.dot(ctx.astype(bf16), wout_ref[l],
                      preferred_element_type=f32) + vrow(base + R_BOUT)
        h = h + att + fsmn

        xn = _layernorm(h, vrow(base + R_N2G), vrow(base + R_N2B))
        ff = jnp.maximum(jnp.dot(xn.astype(bf16), w1_ref[l],
                                 preferred_element_type=f32) + vrow(base + R_B1, FFN_DIM), 0.0)
        ff = jnp.dot(ff.astype(bf16), w2_ref[l],
                     preferred_element_type=f32) + vrow(base + R_B2)
        return h + ff

    for l in range(N_ENC0 + N_ENC):
        h = enc_layer(h, l)
    h = _layernorm(h, vrow(G_AFTER_G), vrow(G_AFTER_B))
    for l in range(N_ENC0 + N_ENC, L_TOTAL):
        h = enc_layer(h, l)
    h = _layernorm(h, vrow(G_TP_G), vrow(G_TP_B))

    # ---------------- CTC projection + argmax + dedup mask ----------------
    logits = jnp.dot(h, mats_ref[M_CTCW:M_CTCW + HIDDEN, :],
                     preferred_element_type=f32) + vrow(G_CTC_B, VOCAB)    # (T, VOCAB)
    mx = jnp.max(logits, axis=-1, keepdims=True)
    col = jax.lax.broadcasted_iota(jnp.int32, (T, VOCAB), 1)
    cand = jnp.where(logits == mx, col, VOCAB)
    toks = jnp.min(cand, axis=-1, keepdims=True)                  # (T, 1) int32, first argmax
    toks_f = toks.astype(f32)
    next_f = jnp.dot(d_roll_t, toks_f, preferred_element_type=f32)  # torch.roll(-1), exact in f32
    mask = jnp.logical_and(toks_f != next_f, toks != BLANK_ID).astype(jnp.int32)
    row0 = jax.lax.broadcasted_iota(jnp.int32, (T, 1), 0)
    mask = jnp.where(row0 == 0, 1, mask)

    out_ref[0] = jnp.concatenate([toks, mask], axis=-1)           # (SEQ_LEN, 2): tokens, keep-mask


# ============================== wrapper ==============================

def sense_voice_forward(audio, language_idx, params):
    """audio: (B, 1, SIGNAL_LEN) int; language_idx: (B,) int32 -> (B, SEQ_LEN, 2) int32."""
    B = audio.shape[0]
    audio_rows = audio.reshape(B, N_ROWS_AUDIO, HOP).astype(jnp.int32)

    grid_spec = pltpu.PrefetchScalarGridSpec(
        num_scalar_prefetch=1,
        grid=(B,),
        in_specs=[
            pl.BlockSpec((1, N_ROWS_AUDIO, HOP), lambda b, lidx: (b, 0, 0)),        # audio
            pl.BlockSpec((2, HOP, 2 * NFREQ_PAD), lambda b, lidx: (0, 0, 0)),       # windowed DFT
            pl.BlockSpec((NFREQ_PAD, N_MELS), lambda b, lidx: (0, 0)),              # mel fbank
            pl.BlockSpec((LFR_M, T_LFR, T_STFT), lambda b, lidx: (0, 0, 0)),        # LFR selectors
            pl.BlockSpec((N_MATS, HIDDEN), lambda b, lidx: (0, 0)),                 # lang/sys/pe/ctc_w
            pl.BlockSpec((2, NUM_HEAD * SEQ_LEN, HIDDEN), lambda b, lidx: (0, 0, 0)),  # attn consts
            pl.BlockSpec((N_VEC_ROWS, VEC_W), lambda b, lidx: (0, 0)),              # packed vectors
            pl.BlockSpec((L_TOTAL, HIDDEN, 3 * HIDDEN), lambda b, lidx: (0, 0, 0)),  # wqkv (bf16)
            pl.BlockSpec((L_TOTAL, FSMN_KSIZE, HIDDEN), lambda b, lidx: (0, 0, 0)),  # fsmn
            pl.BlockSpec((L_TOTAL, HIDDEN, FFN_DIM), lambda b, lidx: (0, 0, 0)),     # w1 (bf16)
            pl.BlockSpec((L_TOTAL, FFN_DIM, HIDDEN), lambda b, lidx: (0, 0, 0)),     # w2 (bf16)
            pl.BlockSpec((L_TOTAL, HIDDEN, HIDDEN), lambda b, lidx: (0, 0, 0)),      # wout (bf16)
        ],
        out_specs=pl.BlockSpec((1, SEQ_LEN, 2), lambda b, lidx: (b, 0, 0)),
    )
    return pl.pallas_call(
        sense_voice_kernel,
        out_shape=jax.ShapeDtypeStruct((B, SEQ_LEN, 2), jnp.int32),
        grid_spec=grid_spec,
        compiler_params=pltpu.CompilerParams(
            dimension_semantics=("parallel",),
            vmem_limit_bytes=32 * 1024 * 1024),
    )(language_idx.astype(jnp.int32), audio_rows,
      params['dft'], params['fbank'], params['lfr_sel'],
      params['mats32'], params['attn_const'], params['vecs'],
      params['wqkv'], params['fsmn'], params['w1'], params['w2'], params['wout'])


# ============================== parameter / table setup ==============================

def melscale_fbanks_htk(n_freqs, f_min, f_max, n_mels, sample_rate):
    # torchaudio.functional.melscale_fbanks(..., norm=None, mel_scale='htk') -> (n_freqs, n_mels)
    all_freqs = np.linspace(0.0, sample_rate // 2, n_freqs)
    hz2mel = lambda f: 2595.0 * np.log10(1.0 + f / 700.0)
    mel2hz = lambda m: 700.0 * (10.0 ** (m / 2595.0) - 1.0)
    m_pts = np.linspace(hz2mel(f_min), hz2mel(f_max), n_mels + 2)
    f_pts = mel2hz(m_pts)
    f_diff = f_pts[1:] - f_pts[:-1]
    slopes = f_pts[None, :] - all_freqs[:, None]
    down = -slopes[:, :-2] / f_diff[:-1]
    up = slopes[:, 2:] / f_diff[1:]
    return np.maximum(0.0, np.minimum(down, up)).astype(np.float32)


def sinusoidal_pe(T, depth):
    # FunASR SinusoidalPositionEncoder
    positions = np.arange(1, T + 1, dtype=np.float32)[:, None]
    log_ts_inc = np.log(10000.0) / (depth / 2 - 1)
    inv_ts = np.exp(np.arange(depth // 2, dtype=np.float32) * -log_ts_inc)
    scaled = positions * inv_ts[None, :]
    return np.concatenate([np.sin(scaled), np.cos(scaled)], axis=1).astype(np.float32)


def init_params(key):
    keys = iter(jax.random.split(key, 128))
    rnd = lambda shape, s=0.1: jax.random.normal(next(keys), shape, dtype=jnp.float32) * s

    # windowed DFT tables (freq padded to NFREQ_PAD lanes), split into the two frame halves
    n = np.arange(NFFT)[:, None]
    f = np.arange(NFREQ)[None, :]
    dft_cos = np.cos(2.0 * np.pi * n * f / NFFT)
    dft_sin = -np.sin(2.0 * np.pi * n * f / NFFT)
    cos_pad = np.zeros((NFFT, NFREQ_PAD), np.float32); cos_pad[:, :NFREQ] = dft_cos
    sin_pad = np.zeros((NFFT, NFREQ_PAD), np.float32); sin_pad[:, :NFREQ] = dft_sin
    # TODO(synk): custom STFT_Process window unspecified; periodic Hann assumed.
    window = (0.5 - 0.5 * np.cos(2.0 * np.pi * np.arange(NFFT) / NFFT)).astype(np.float32)[:, None]
    dft_full = np.concatenate([window * cos_pad, window * sin_pad], axis=1)   # (NFFT, 2*NFREQ_PAD)
    dft = dft_full.reshape(2, HOP, 2 * NFREQ_PAD).astype(np.float32)

    fbank = np.zeros((NFREQ_PAD, N_MELS), np.float32)
    fbank[:NFREQ, :] = melscale_fbanks_htk(NFREQ, 20.0, SAMPLE_RATE / 2, N_MELS, SAMPLE_RATE)

    # LFR one-hot selection matrices (edge-clamped exactly like torch indices_mel)
    lfr_sel = np.zeros((LFR_M, T_LFR, T_STFT), np.float32)
    max_padded_row = T_STFT + LFR_M_FACTOR - 1
    for i in range(T_LFR):
        for j in range(LFR_M):
            r = min(i * LFR_N + j, max_padded_row)
            src = max(r - LFR_M_FACTOR, 0)
            lfr_sel[j, i, src] = 1.0

    # block-diagonal attention constants
    HT = NUM_HEAD * SEQ_LEN
    mask2 = np.zeros((HT, HIDDEN), np.float32)
    rep = np.zeros((HT, HIDDEN), np.float32)
    for hh in range(NUM_HEAD):
        for j in range(SEQ_LEN):
            mask2[hh * SEQ_LEN + j, hh * D_K:(hh + 1) * D_K] = 1.0
            rep[hh * SEQ_LEN + j, j] = 1.0
    attn_const = np.stack([mask2, rep], axis=0)

    # lang / system embeddings + positional encoding + CTC weight packed as 32-lane rows
    embed_table = rnd((16, HIDDEN), 0.5)
    system_embed = embed_table[jnp.array([1, 2, 14])]                        # use_emo=True -> 3 tokens
    lang_rows = embed_table[jnp.array([0, 3, 4, 7, 11, 12, 13])]
    lang_rows = lang_rows.astype(jnp.float16).astype(jnp.float32)            # torch stores .half()
    lang_table = jnp.concatenate([lang_rows, jnp.zeros((1, HIDDEN), jnp.float32)], axis=0)
    pe = jnp.asarray(sinusoidal_pe(SEQ_LEN, HIDDEN))
    ctc_w = rnd((HIDDEN, VOCAB), 0.3)
    mats32 = jnp.concatenate([lang_table, system_embed, pe, ctc_w], axis=0)  # (N_MATS, HIDDEN)

    # all per-layer + global row vectors packed into one (N_VEC_ROWS, 96) array
    factor = float(D_K) ** -0.25
    vecs = np.zeros((N_VEC_ROWS, VEC_W), np.float32)
    wqkv, fsmn, w1, w2, wout = [], [], [], [], []
    for l in range(L_TOTAL):
        base = l * ROWS_PER_LAYER
        vecs[base + R_N1G, :HIDDEN] = 1.0
        vecs[base + R_N2G, :HIDDEN] = 1.0
        bqkv = np.array(rnd((3 * HIDDEN,), 0.05))
        bqkv[:2 * HIDDEN] *= factor          # q/k bias pre-scaled by d_k**-0.25 (as in __init__)
        vecs[base + R_BQKV, :] = bqkv
        vecs[base + R_BOUT, :HIDDEN] = np.array(rnd((HIDDEN,), 0.05))
        vecs[base + R_B1, :FFN_DIM] = np.array(rnd((FFN_DIM,), 0.05))
        vecs[base + R_B2, :HIDDEN] = np.array(rnd((HIDDEN,), 0.05))
        wq = np.array(rnd((HIDDEN, 3 * HIDDEN), 0.2))
        wq[:, :2 * HIDDEN] *= factor         # q/k weight pre-scaled by d_k**-0.25
        wqkv.append(wq)
        fsmn.append(np.array(rnd((FSMN_KSIZE, HIDDEN), 0.1)))
        w1.append(np.array(rnd((HIDDEN, FFN_DIM), 0.2)))
        w2.append(np.array(rnd((FFN_DIM, HIDDEN), 0.2)))
        wout.append(np.array(rnd((HIDDEN, HIDDEN), 0.2)))
    vecs[G_CMVN_MEAN, :HIDDEN] = np.array(rnd((HIDDEN,), 0.1))
    vecs[G_CMVN_VAR, :HIDDEN] = 1.0 + np.array(rnd((HIDDEN,), 0.05))
    vecs[G_AFTER_G, :HIDDEN] = 1.0
    vecs[G_TP_G, :HIDDEN] = 1.0
    vecs[G_CTC_B, :VOCAB] = np.array(rnd((VOCAB,), 0.05))

    return dict(
        dft=jnp.asarray(dft),
        fbank=jnp.asarray(fbank),
        lfr_sel=jnp.asarray(lfr_sel),
        mats32=mats32,
        attn_const=jnp.asarray(attn_const),
        vecs=jnp.asarray(vecs),
        wqkv=jnp.asarray(np.stack(wqkv)).astype(jnp.bfloat16),
        fsmn=jnp.asarray(np.stack(fsmn)),
        w1=jnp.asarray(np.stack(w1)).astype(jnp.bfloat16),
        w2=jnp.asarray(np.stack(w2)).astype(jnp.bfloat16),
        wout=jnp.asarray(np.stack(wout)).astype(jnp.bfloat16),
    )


# ============================== main ==============================

if __name__ == "__main__":
    root = jax.random.PRNGKey(0)
    k_audio, k_params = jax.random.split(root)

    B = 2                                                     # two utterances; parallel grid axis
    audio = jax.random.randint(k_audio, (B, 1, SIGNAL_LEN), -32768, 32768, dtype=jnp.int32)
    language_idx = jnp.array([0, 3], dtype=jnp.int32)
    params = init_params(k_params)

    fwd = jax.jit(lambda a, li: sense_voice_forward(a, li, params))
    out = jax.block_until_ready(fwd(audio, language_idx))

    # final dedup (dynamic output length) stays host-side, mirrors torch.nonzero + index_select
    for b in range(B):
        toks_np = np.array(out[b, :, 0])
        mask_np = np.array(out[b, :, 1])
        selected = toks_np[np.nonzero(mask_np)[0]]
        assert selected.ndim == 1 and selected.shape[0] >= 1

    print("KERNEL_OK")
</pallas_src>

<mosaic_0001>
module attributes {stable_mosaic.version = 11 : i64} {
  func.func @sense_voice_kernel(%arg0: i32, %arg1: memref<2xi32, #tpu.memory_space<smem>>, %arg2: memref<1x10x16xi32, #tpu.memory_space<vmem>>, %arg3: memref<2x16x64xf32, #tpu.memory_space<vmem>>, %arg4: memref<32x8xf32, #tpu.memory_space<vmem>>, %arg5: memref<4x6x11xf32, #tpu.memory_space<vmem>>, %arg6: memref<53x32xf32, #tpu.memory_space<vmem>>, %arg7: memref<2x40x32xf32, #tpu.memory_space<vmem>>, %arg8: memref<39x96xf32, #tpu.memory_space<vmem>>, %arg9: memref<4x32x96xbf16, #tpu.memory_space<vmem>>, %arg10: memref<4x3x32xf32, #tpu.memory_space<vmem>>, %arg11: memref<4x32x64xbf16, #tpu.memory_space<vmem>>, %arg12: memref<4x64x32xbf16, #tpu.memory_space<vmem>>, %arg13: memref<4x32x32xbf16, #tpu.memory_space<vmem>>, %arg14: memref<1x10x2xi32, #tpu.memory_space<vmem>>) attributes {dimension_semantics = [#tpu.dimension_semantics<parallel>], iteration_bounds = array<i64: 2>, scalar_prefetch = 1 : i64, scratch_operands = 0 : i64, tpu.core_type = #tpu.core_type<tc>, window_params = [{transform_indices = @transform_0, window_bounds = array<i64: 1, 10, 16>}, {pipeline_mode = #tpu.pipeline_mode<synchronous>, transform_indices = @transform_1, window_bounds = array<i64: 2, 16, 64>}, {pipeline_mode = #tpu.pipeline_mode<synchronous>, transform_indices = @transform_2, window_bounds = array<i64: 32, 8>}, {pipeline_mode = #tpu.pipeline_mode<synchronous>, transform_indices = @transform_3, window_bounds = array<i64: 4, 6, 11>}, {pipeline_mode = #tpu.pipeline_mode<synchronous>, transform_indices = @transform_4, window_bounds = array<i64: 53, 32>}, {pipeline_mode = #tpu.pipeline_mode<synchronous>, transform_indices = @transform_5, window_bounds = array<i64: 2, 40, 32>}, {pipeline_mode = #tpu.pipeline_mode<synchronous>, transform_indices = @transform_6, window_bounds = array<i64: 39, 96>}, {pipeline_mode = #tpu.pipeline_mode<synchronous>, transform_indices = @transform_7, window_bounds = array<i64: 4, 32, 96>}, {pipeline_mode = #tpu.pipeline_mode<synchronous>, transform_indices = @transform_8, window_bounds = array<i64: 4, 3, 32>}, {pipeline_mode = #tpu.pipeline_mode<synchronous>, transform_indices = @transform_9, window_bounds = array<i64: 4, 32, 64>}, {pipeline_mode = #tpu.pipeline_mode<synchronous>, transform_indices = @transform_10, window_bounds = array<i64: 4, 64, 32>}, {pipeline_mode = #tpu.pipeline_mode<synchronous>, transform_indices = @transform_11, window_bounds = array<i64: 4, 32, 32>}, {transform_indices = @transform_12, window_bounds = array<i64: 1, 10, 2>}]} {
    %0 = tpu.iota {dimensions = array<i32: 0>} : vector<16x16xi32>
    %1 = tpu.iota {dimensions = array<i32: 1>} : vector<16x16xi32>
    %c1_i32 = arith.constant 1 : i32
    %2 = vector.broadcast %c1_i32 : i32 to vector<16x16xi32>
    %3 = arith.addi %0, %2 : vector<16x16xi32>
    %4 = arith.cmpi eq, %1, %3 : vector<16x16xi32>
    %5 = arith.extui %4 : vector<16x16xi1> to vector<16x16xi32>
    %6 = arith.sitofp %5 : vector<16x16xi32> to vector<16x16xf32>
    %7 = tpu.iota {dimensions = array<i32: 0>} : vector<10x10xi32>
    %8 = tpu.iota {dimensions = array<i32: 1>} : vector<10x10xi32>
    %c-1_i32 = arith.constant -1 : i32
    %9 = vector.broadcast %c-1_i32 : i32 to vector<10x10xi32>
    %10 = arith.addi %7, %9 : vector<10x10xi32>
    %11 = arith.cmpi eq, %8, %10 : vector<10x10xi32>
    %12 = arith.extui %11 : vector<10x10xi1> to vector<10x10xi32>
    %13 = arith.sitofp %12 : vector<10x10xi32> to vector<10x10xf32>
    %14 = tpu.iota {dimensions = array<i32: 0>} : vector<11x10xi32>
    %15 = tpu.iota {dimensions = array<i32: 1>} : vector<11x10xi32>
    %c-1_i32_0 = arith.constant -1 : i32
    %16 = vector.broadcast %c-1_i32_0 : i32 to vector<11x10xi32>
    %17 = arith.addi %14, %16 : vector<11x10xi32>
    %18 = arith.cmpi eq, %15, %17 : vector<11x10xi32>
    %19 = arith.extui %18 : vector<11x10xi1> to vector<11x10xi32>
    %20 = arith.sitofp %19 : vector<11x10xi32> to vector<11x10xf32>
    %21 = tpu.iota {dimensions = array<i32: 0>} : vector<11x10xi32>
    %22 = tpu.iota {dimensions = array<i32: 1>} : vector<11x10xi32>
    %c0_i32 = arith.constant 0 : i32
    %23 = vector.broadcast %c0_i32 : i32 to vector<11x10xi32>
    %24 = arith.addi %21, %23 : vector<11x10xi32>
    %25 = arith.cmpi eq, %22, %24 : vector<11x10xi32>
    %26 = arith.extui %25 : vector<11x10xi1> to vector<11x10xi32>
    %27 = arith.sitofp %26 : vector<11x10xi32> to vector<11x10xf32>
    %28 = tpu.iota {dimensions = array<i32: 0>} : vector<10x10xi32>
    %29 = tpu.iota {dimensions = array<i32: 1>} : vector<10x10xi32>
    %c-1_i32_1 = arith.constant -1 : i32
    %30 = vector.broadcast %c-1_i32_1 : i32 to vector<10x10xi32>
    %31 = arith.addi %28, %30 : vector<10x10xi32>
    %32 = arith.cmpi eq, %29, %31 : vector<10x10xi32>
    %33 = arith.extui %32 : vector<10x10xi1> to vector<10x10xi32>
    %34 = arith.sitofp %33 : vector<10x10xi32> to vector<10x10xf32>
    %35 = tpu.iota {dimensions = array<i32: 0>} : vector<10x10xi32>
    %36 = tpu.iota {dimensions = array<i32: 1>} : vector<10x10xi32>
    %c1_i32_2 = arith.constant 1 : i32
    %37 = vector.broadcast %c1_i32_2 : i32 to vector<10x10xi32>
    %38 = arith.addi %35, %37 : vector<10x10xi32>
    %39 = arith.cmpi eq, %36, %38 : vector<10x10xi32>
    %40 = arith.extui %39 : vector<10x10xi1> to vector<10x10xi32>
    %41 = arith.sitofp %40 : vector<10x10xi32> to vector<10x10xf32>
    %42 = tpu.iota {dimensions = array<i32: 0>} : vector<10x10xi32>
    %43 = tpu.iota {dimensions = array<i32: 1>} : vector<10x10xi32>
    %c9_i32 = arith.constant 9 : i32
    %44 = vector.broadcast %c9_i32 : i32 to vector<10x10xi32>
    %45 = arith.cmpi eq, %42, %44 : vector<10x10xi32>
    %c0_i32_3 = arith.constant 0 : i32
    %46 = vector.broadcast %c0_i32_3 : i32 to vector<10x10xi32>
    %47 = arith.cmpi eq, %43, %46 : vector<10x10xi32>
    %48 = arith.andi %45, %47 : vector<10x10xi1>
    %49 = arith.extui %48 : vector<10x10xi1> to vector<10x10xi32>
    %50 = arith.sitofp %49 : vector<10x10xi32> to vector<10x10xf32>
    %51 = arith.addf %41, %50 : vector<10x10xf32>
    %c0 = arith.constant 0 : index
    %c0_4 = arith.constant 0 : index
    %c0_5 = arith.constant 0 : index
    %52 = vector.load %arg2[%c0, %c0_4, %c0_5] : memref<1x10x16xi32, #tpu.memory_space<vmem>>, vector<1x10x16xi32>
    %53 = vector.shape_cast %52 : vector<1x10x16xi32> to vector<10x16xi32>
    %54 = arith.sitofp %53 : vector<10x16xi32> to vector<10x16xf32>
    %cst = arith.constant 3.05175781E-5 : f32
    %55 = vector.broadcast %cst : f32 to vector<10x16xf32>
    %56 = arith.mulf %54, %55 : vector<10x16xf32>
    %57 = vector.shape_cast %56 : vector<10x16xf32> to vector<1x10x16xf32>
    %cst_6 = arith.constant dense<0.000000e+00> : vector<1xf32>
    %58 = vector.multi_reduction <add>, %57, %cst_6 [1, 2] : vector<1x10x16xf32> to vector<1xf32>
    %59 = vector.shape_cast %58 : vector<1xf32> to vector<1x1x1xf32>
    %60 = vector.extract %59[0, 0, 0] : f32 from vector<1x1x1xf32>
    %cst_7 = arith.constant 1.600000e+02 : f32
    %61 = arith.divf %60, %cst_7 : f32
    %62 = vector.broadcast %61 : f32 to vector<10x16xf32>
    %63 = arith.subf %56, %62 : vector<10x16xf32>
    %64 = vector.extract_strided_slice %63 {offsets = [0, 15], sizes = [10, 1], strides = [1, 1]} : vector<10x16xf32> to vector<10x1xf32>
    %cst_8 = arith.constant dense<0.000000e+00> : vector<10x1xf32>
    %65 = tpu.matmul %13, %64, %cst_8 {dimension_numbers = #tpu.dot_dimension_numbers<[1], [0], [0], [1], [0, 0, 1, 1], [], []>} : vector<10x10xf32>, vector<10x1xf32>, vector<10x1xf32> -> vector<10x1xf32>
    %66 = tpu.iota {dimensions = array<i32: 1>} : vector<10x16xi32>
    %c0_i32_9 = arith.constant 0 : i32
    %67 = vector.broadcast %c0_i32_9 : i32 to vector<10x16xi32>
    %68 = arith.cmpi eq, %66, %67 : vector<10x16xi32>
    %cst_10 = arith.constant dense<0.000000e+00> : vector<10x16xf32>
    %69 = tpu.matmul %63, %6, %cst_10 {dimension_numbers = #tpu.dot_dimension_numbers<[1], [0], [0], [1], [0, 0, 1, 1], [], []>} : vector<10x16xf32>, vector<16x16xf32>, vector<10x16xf32> -> vector<10x16xf32>
    %70 = vector.shape_cast %65 : vector<10x1xf32> to vector<10x1xf32>
    %71 = vector.broadcast %70 : vector<10x1xf32> to vector<10x16xf32>
    %72 = arith.select %68, %71, %69 : vector<10x16xi1>, vector<10x16xf32>
    %cst_11 = arith.constant 9.700000e-01 : f32
    %73 = vector.broadcast %cst_11 : f32 to vector<10x16xf32>
    %74 = arith.mulf %73, %72 : vector<10x16xf32>
    %75 = arith.subf %63, %74 : vector<10x16xf32>
    %c0_12 = arith.constant 0 : index
    %c0_13 = arith.constant 0 : index
    %c0_14 = arith.constant 0 : index
    %76 = vector.load %arg3[%c0_12, %c0_13, %c0_14] : memref<2x16x64xf32, #tpu.memory_space<vmem>>, vector<1x16x64xf32>
    %77 = vector.shape_cast %76 : vector<1x16x64xf32> to vector<16x64xf32>
    %cst_15 = arith.constant dense<0.000000e+00> : vector<10x64xf32>
    %78 = tpu.matmul %75, %77, %cst_15 {dimension_numbers = #tpu.dot_dimension_numbers<[1], [0], [0], [1], [0, 0, 1, 1], [], []>} : vector<10x16xf32>, vector<16x64xf32>, vector<10x64xf32> -> vector<10x64xf32>
    %c1 = arith.constant 1 : index
    %c0_16 = arith.constant 0 : index
    %c0_17 = arith.constant 0 : index
    %79 = vector.load %arg3[%c1, %c0_16, %c0_17] : memref<2x16x64xf32, #tpu.memory_space<vmem>>, vector<1x16x64xf32>
    %80 = vector.shape_cast %79 : vector<1x16x64xf32> to vector<16x64xf32>
    %cst_18 = arith.constant dense<0.000000e+00> : vector<10x64xf32>
    %81 = tpu.matmul %75, %80, %cst_18 {dimension_numbers = #tpu.dot_dimension_numbers<[1], [0], [0], [1], [0, 0, 1, 1], [], []>} : vector<10x16xf32>, vector<16x64xf32>, vector<10x64xf32> -> vector<10x64xf32>
    %cst_19 = arith.constant dense<0.000000e+00> : vector<11x64xf32>
    %82 = tpu.matmul %20, %78, %cst_19 {dimension_numbers = #tpu.dot_dimension_numbers<[1], [0], [0], [1], [0, 0, 1, 1], [], []>} : vector<11x10xf32>, vector<10x64xf32>, vector<11x64xf32> -> vector<11x64xf32>
    %cst_20 = arith.constant dense<0.000000e+00> : vector<11x64xf32>
    %83 = tpu.matmul %27, %81, %cst_20 {dimension_numbers = #tpu.dot_dimension_numbers<[1], [0], [0], [1], [0, 0, 1, 1], [], []>} : vector<11x10xf32>, vector<10x64xf32>, vector<11x64xf32> -> vector<11x64xf32>
    %84 = arith.addf %82, %83 : vector<11x64xf32>
    %85 = vector.extract_strided_slice %84 {offsets = [0, 0], sizes = [11, 32], strides = [1, 1]} : vector<11x64xf32> to vector<11x32xf32>
    %86 = vector.extract_strided_slice %84 {offsets = [0, 32], sizes = [11, 32], strides = [1, 1]} : vector<11x64xf32> to vector<11x32xf32>
    %87 = arith.mulf %85, %85 : vector<11x32xf32>
    %88 = arith.mulf %86, %86 : vector<11x32xf32>
    %89 = arith.addf %87, %88 : vector<11x32xf32>
    %c0_21 = arith.constant 0 : index
    %c0_22 = arith.constant 0 : index
    %90 = vector.load %arg4[%c0_21, %c0_22] : memref<32x8xf32, #tpu.memory_space<vmem>>, vector<32x8xf32>
    %cst_23 = arith.constant dense<0.000000e+00> : vector<11x8xf32>
    %91 = tpu.matmul %89, %90, %cst_23 {dimension_numbers = #tpu.dot_dimension_numbers<[1], [0], [0], [1], [0, 0, 1, 1], [], []>} : vector<11x32xf32>, vector<32x8xf32>, vector<11x8xf32> -> vector<11x8xf32>
    %cst_24 = arith.constant 9.99999974E-6 : f32
    %92 = vector.broadcast %cst_24 : f32 to vector<11x8xf32>
    %93 = arith.maximumf %91, %92 : vector<11x8xf32>
    %94 = math.log %93 : vector<11x8xf32>
    %c0_25 = arith.constant 0 : index
    %c0_26 = arith.constant 0 : index
    %c0_27 = arith.constant 0 : index
    %95 = vector.load %arg5[%c0_25, %c0_26, %c0_27] : memref<4x6x11xf32, #tpu.memory_space<vmem>>, vector<1x6x11xf32>
    %96 = vector.shape_cast %95 : vector<1x6x11xf32> to vector<6x11xf32>
    %cst_28 = arith.constant dense<0.000000e+00> : vector<6x8xf32>
    %97 = tpu.matmul %96, %94, %cst_28 {dimension_numbers = #tpu.dot_dimension_numbers<[1], [0], [0], [1], [0, 0, 1, 1], [], []>} : vector<6x11xf32>, vector<11x8xf32>, vector<6x8xf32> -> vector<6x8xf32>
    %c1_29 = arith.constant 1 : index
    %c0_30 = arith.constant 0 : index
    %c0_31 = arith.constant 0 : index
    %98 = vector.load %arg5[%c1_29, %c0_30, %c0_31] : memref<4x6x11xf32, #tpu.memory_space<vmem>>, vector<1x6x11xf32>
    %99 = vector.shape_cast %98 : vector<1x6x11xf32> to vector<6x11xf32>
    %cst_32 = arith.constant dense<0.000000e+00> : vector<6x8xf32>
    %100 = tpu.matmul %99, %94, %cst_32 {dimension_numbers = #tpu.dot_dimension_numbers<[1], [0], [0], [1], [0, 0, 1, 1], [], []>} : vector<6x11xf32>, vector<11x8xf32>, vector<6x8xf32> -> vector<6x8xf32>
    %c2 = arith.constant 2 : index
    %c0_33 = arith.constant 0 : index
    %c0_34 = arith.constant 0 : index
    %101 = vector.load %arg5[%c2, %c0_33, %c0_34] : memref<4x6x11xf32, #tpu.memory_space<vmem>>, vector<1x6x11xf32>
    %102 = vector.shape_cast %101 : vector<1x6x11xf32> to vector<6x11xf32>
    %cst_35 = arith.constant dense<0.000000e+00> : vector<6x8xf32>
    %103 = tpu.matmul %102, %94, %cst_35 {dimension_numbers = #tpu.dot_dimension_numbers<[1], [0], [0], [1], [0, 0, 1, 1], [], []>} : vector<6x11xf32>, vector<11x8xf32>, vector<6x8xf32> -> vector<6x8xf32>
    %c3 = arith.constant 3 : index
    %c0_36 = arith.constant 0 : index
    %c0_37 = arith.constant 0 : index
    %104 = vector.load %arg5[%c3, %c0_36, %c0_37] : memref<4x6x11xf32, #tpu.memory_space<vmem>>, vector<1x6x11xf32>
    %105 = vector.shape_cast %104 : vector<1x6x11xf32> to vector<6x11xf32>
    %cst_38 = arith.constant dense<0.000000e+00> : vector<6x8xf32>
    %106 = tpu.matmul %105, %94, %cst_38 {dimension_numbers = #tpu.dot_dimension_numbers<[1], [0], [0], [1], [0, 0, 1, 1], [], []>} : vector<6x11xf32>, vector<11x8xf32>, vector<6x8xf32> -> vector<6x8xf32>
    %107 = tpu.concatenate %97, %100, %103, %106 in 1 : vector<6x8xf32>, vector<6x8xf32>, vector<6x8xf32>, vector<6x8xf32> -> vector<6x32xf32>
    %108 = arith.index_cast %arg0 : i32 to index
    %109 = memref.load %arg1[%108] : memref<2xi32, #tpu.memory_space<smem>>
    %c0_i32_39 = arith.constant 0 : i32
    %110 = arith.addi %c0_i32_39, %109 : i32
    %111 = arith.index_cast %110 : i32 to index
    %c0_40 = arith.constant 0 : index
    %112 = vector.load %arg6[%111, %c0_40] : memref<53x32xf32, #tpu.memory_space<vmem>>, vector<1x32xf32>
    %c8 = arith.constant 8 : index
    %c0_41 = arith.constant 0 : index
    %113 = vector.load %arg6[%c8, %c0_41] : memref<53x32xf32, #tpu.memory_space<vmem>>, vector<3x32xf32>
    %114 = tpu.concatenate %112, %113, %107 in 0 : vector<1x32xf32>, vector<3x32xf32>, vector<6x32xf32> -> vector<10x32xf32>
    %c32 = arith.constant 32 : index
    %c0_42 = arith.constant 0 : index
    %115 = vector.load %arg8[%c32, %c0_42] : memref<39x96xf32, #tpu.memory_space<vmem>>, vector<1x32xf32>
    %c33 = arith.constant 33 : index
    %c0_43 = arith.constant 0 : index
    %116 = vector.load %arg8[%c33, %c0_43] : memref<39x96xf32, #tpu.memory_space<vmem>>, vector<1x32xf32>
    %117 = vector.broadcast %115 : vector<1x32xf32> to vector<10x32xf32>
    %118 = arith.subf %114, %117 : vector<10x32xf32>
    %119 = vector.broadcast %116 : vector<1x32xf32> to vector<10x32xf32>
    %120 = arith.mulf %118, %119 : vector<10x32xf32>
    %cst_44 = arith.constant 5.65685415 : f32
    %121 = vector.broadcast %cst_44 : f32 to vector<10x32xf32>
    %122 = arith.mulf %120, %121 : vector<10x32xf32>
    %c11 = arith.constant 11 : index
    %c0_45 = arith.constant 0 : index
    %123 = vector.load %arg6[%c11, %c0_45] : memref<53x32xf32, #tpu.memory_space<vmem>>, vector<10x32xf32>
    %124 = arith.addf %122, %123 : vector<10x32xf32>
    %c0_46 = arith.constant 0 : index
    %c0_47 = arith.constant 0 : index
    %c0_48 = arith.constant 0 : index
    %125 = vector.load %arg7[%c0_46, %c0_47, %c0_48] : memref<2x40x32xf32, #tpu.memory_space<vmem>>, vector<1x40x32xf32>
    %126 = vector.shape_cast %125 : vector<1x40x32xf32> to vector<40x32xf32>
    %c1_49 = arith.constant 1 : index
    %c0_50 = arith.constant 0 : index
    %c0_51 = arith.constant 0 : index
    %127 = vector.load %arg7[%c1_49, %c0_50, %c0_51] : memref<2x40x32xf32, #tpu.memory_space<vmem>>, vector<1x40x32xf32>
    %128 = vector.shape_cast %127 : vector<1x40x32xf32> to vector<40x32xf32>
    %129 = vector.extract_strided_slice %128 {offsets = [0, 0], sizes = [40, 10], strides = [1, 1]} : vector<40x32xf32> to vector<40x10xf32>
    "tpu.trace_start"() <{level = 10 : i32, message = "rd,sd->rs"}> : () -> ()
    %cst_52 = arith.constant dense<0.000000e+00> : vector<40x40xf32>
    %130 = tpu.matmul %126, %126, %cst_52 {dimension_numbers = #tpu.dot_dimension_numbers<[1], [1], [0], [0], [0, 0, 1, 0], [], []>} : vector<40x32xf32>, vector<40x32xf32>, vector<40x40xf32> -> vector<40x40xf32>
    "tpu.trace_stop"() : () -> ()
    %cst_53 = arith.constant 1.250000e-01 : f32
    %131 = vector.broadcast %cst_53 : f32 to vector<40x40xf32>
    %132 = arith.mulf %130, %131 : vector<40x40xf32>
    %c0_54 = arith.constant 0 : index
    %c0_55 = arith.constant 0 : index
    %133 = vector.load %arg8[%c0_54, %c0_55] : memref<39x96xf32, #tpu.memory_space<vmem>>, vector<1x32xf32>
    %c1_56 = arith.constant 1 : index
    %c0_57 = arith.constant 0 : index
    %134 = vector.load %arg8[%c1_56, %c0_57] : memref<39x96xf32, #tpu.memory_space<vmem>>, vector<1x32xf32>
    %cst_58 = arith.constant dense<0.000000e+00> : vector<10xf32>
    %135 = vector.multi_reduction <add>, %124, %cst_58 [1] : vector<10x32xf32> to vector<10xf32>
    %136 = vector.shape_cast %135 : vector<10xf32> to vector<10x1xf32>
    %cst_59 = arith.constant 3.200000e+01 : f32
    %137 = vector.broadcast %cst_59 : f32 to vector<10x1xf32>
    %138 = arith.divf %136, %137 : vector<10x1xf32>
    %139 = vector.broadcast %138 : vector<10x1xf32> to vector<10x32xf32>
    %140 = arith.subf %124, %139 : vector<10x32xf32>
    %141 = arith.mulf %140, %140 : vector<10x32xf32>
    %cst_60 = arith.constant dense<0.000000e+00> : vector<10xf32>
    %142 = vector.multi_reduction <add>, %141, %cst_60 [1] : vector<10x32xf32> to vector<10xf32>
    %143 = vector.shape_cast %142 : vector<10xf32> to vector<10x1xf32>
    %cst_61 = arith.constant 3.200000e+01 : f32
    %144 = vector.broadcast %cst_61 : f32 to vector<10x1xf32>
    %145 = arith.divf %143, %144 : vector<10x1xf32>
    %cst_62 = arith.constant 9.99999974E-6 : f32
    %146 = vector.broadcast %cst_62 : f32 to vector<10x1xf32>
    %147 = arith.addf %145, %146 : vector<10x1xf32>
    %148 = math.rsqrt %147 : vector<10x1xf32>
    %149 = vector.broadcast %148 : vector<10x1xf32> to vector<10x32xf32>
    %150 = arith.mulf %140, %149 : vector<10x32xf32>
    %151 = vector.broadcast %133 : vector<1x32xf32> to vector<10x32xf32>
    %152 = arith.mulf %150, %151 : vector<10x32xf32>
    %153 = vector.broadcast %134 : vector<1x32xf32> to vector<10x32xf32>
    %154 = arith.addf %152, %153 : vector<10x32xf32>
    %155 = arith.truncf %154 : vector<10x32xf32> to vector<10x32xbf16>
    %c0_63 = arith.constant 0 : index
    %c0_64 = arith.constant 0 : index
    %c0_65 = arith.constant 0 : index
    %156 = vector.load %arg9[%c0_63, %c0_64, %c0_65] : memref<4x32x96xbf16, #tpu.memory_space<vmem>>, vector<1x32x96xbf16>
    %157 = vector.shape_cast %156 : vector<1x32x96xbf16> to vector<32x96xbf16>
    %cst_66 = arith.constant dense<0.000000e+00> : vector<10x96xf32>
    %158 = tpu.matmul %155, %157, %cst_66 {dimension_numbers = #tpu.dot_dimension_numbers<[1], [0], [0], [1], [0, 0, 1, 1], [], []>} : vector<10x32xbf16>, vector<32x96xbf16>, vector<10x96xf32> -> vector<10x96xf32>
    %c2_67 = arith.constant 2 : index
    %c0_68 = arith.constant 0 : index
    %159 = vector.load %arg8[%c2_67, %c0_68] : memref<39x96xf32, #tpu.memory_space<vmem>>, vector<1x96xf32>
    %160 = vector.broadcast %159 : vector<1x96xf32> to vector<10x96xf32>
    %161 = arith.addf %158, %160 : vector<10x96xf32>
    %162 = vector.extract_strided_slice %161 {offsets = [0, 0], sizes = [10, 32], strides = [1, 1]} : vector<10x96xf32> to vector<10x32xf32>
    %163 = vector.extract_strided_slice %161 {offsets = [0, 32], sizes = [10, 32], strides = [1, 1]} : vector<10x96xf32> to vector<10x32xf32>
    %164 = vector.extract_strided_slice %161 {offsets = [0, 64], sizes = [10, 32], strides = [1, 1]} : vector<10x96xf32> to vector<10x32xf32>
    %c0_69 = arith.constant 0 : index
    %c0_70 = arith.constant 0 : index
    %c0_71 = arith.constant 0 : index
    %165 = vector.load %arg10[%c0_69, %c0_70, %c0_71] : memref<4x3x32xf32, #tpu.memory_space<vmem>>, vector<1x3x32xf32>
    %166 = vector.shape_cast %165 : vector<1x3x32xf32> to vector<3x32xf32>
    %cst_72 = arith.constant dense<0.000000e+00> : vector<10x32xf32>
    %167 = tpu.matmul %34, %164, %cst_72 {dimension_numbers = #tpu.dot_dimension_numbers<[1], [0], [0], [1], [0, 0, 1, 1], [], []>} : vector<10x10xf32>, vector<10x32xf32>, vector<10x32xf32> -> vector<10x32xf32>
    %cst_73 = arith.constant dense<0.000000e+00> : vector<10x32xf32>
    %168 = tpu.matmul %41, %164, %cst_73 {dimension_numbers = #tpu.dot_dimension_numbers<[1], [0], [0], [1], [0, 0, 1, 1], [], []>} : vector<10x10xf32>, vector<10x32xf32>, vector<10x32xf32> -> vector<10x32xf32>
    %169 = vector.extract_strided_slice %166 {offsets = [0, 0], sizes = [1, 32], strides = [1, 1]} : vector<3x32xf32> to vector<1x32xf32>
    %170 = vector.broadcast %169 : vector<1x32xf32> to vector<10x32xf32>
    %171 = arith.mulf %167, %170 : vector<10x32xf32>
    %172 = vector.extract_strided_slice %166 {offsets = [1, 0], sizes = [1, 32], strides = [1, 1]} : vector<3x32xf32> to vector<1x32xf32>
    %173 = vector.broadcast %172 : vector<1x32xf32> to vector<10x32xf32>
    %174 = arith.mulf %164, %173 : vector<10x32xf32>
    %175 = arith.addf %171, %174 : vector<10x32xf32>
    %176 = vector.extract_strided_slice %166 {offsets = [2, 0], sizes = [1, 32], strides = [1, 1]} : vector<3x32xf32> to vector<1x32xf32>
    %177 = vector.broadcast %176 : vector<1x32xf32> to vector<10x32xf32>
    %178 = arith.mulf %168, %177 : vector<10x32xf32>
    %179 = arith.addf %175, %178 : vector<10x32xf32>
    %180 = arith.addf %179, %164 : vector<10x32xf32>
    %cst_74 = arith.constant dense<0.000000e+00> : vector<40x32xf32>
    %181 = tpu.matmul %129, %163, %cst_74 {dimension_numbers = #tpu.dot_dimension_numbers<[1], [0], [0], [1], [0, 0, 1, 1], [], []>} : vector<40x10xf32>, vector<10x32xf32>, vector<40x32xf32> -> vector<40x32xf32>
    %182 = arith.mulf %181, %126 : vector<40x32xf32>
    %cst_75 = arith.constant dense<0.000000e+00> : vector<40x32xf32>
    %183 = tpu.matmul %129, %164, %cst_75 {dimension_numbers = #tpu.dot_dimension_numbers<[1], [0], [0], [1], [0, 0, 1, 1], [], []>} : vector<40x10xf32>, vector<10x32xf32>, vector<40x32xf32> -> vector<40x32xf32>
    %184 = arith.mulf %183, %126 : vector<40x32xf32>
    "tpu.trace_start"() <{level = 10 : i32, message = "td,rd->tr"}> : () -> ()
    %cst_76 = arith.constant dense<0.000000e+00> : vector<10x40xf32>
    %185 = tpu.matmul %162, %182, %cst_76 {dimension_numbers = #tpu.dot_dimension_numbers<[1], [1], [0], [0], [0, 0, 1, 0], [], []>} : vector<10x32xf32>, vector<40x32xf32>, vector<10x40xf32> -> vector<10x40xf32>
    "tpu.trace_stop"() : () -> ()
    %cst_77 = arith.constant dense<0xFF800000> : vector<10xf32>
    %186 = vector.multi_reduction <maximumf>, %185, %cst_77 [1] : vector<10x40xf32> to vector<10xf32>
    %187 = vector.shape_cast %186 : vector<10xf32> to vector<10x1xf32>
    %188 = vector.broadcast %187 : vector<10x1xf32> to vector<10x40xf32>
    %189 = arith.subf %185, %188 : vector<10x40xf32>
    %190 = math.exp %189 : vector<10x40xf32>
    %cst_78 = arith.constant dense<0.000000e+00> : vector<10x40xf32>
    %191 = tpu.matmul %190, %132, %cst_78 {dimension_numbers = #tpu.dot_dimension_numbers<[1], [0], [0], [1], [0, 0, 1, 1], [], []>} : vector<10x40xf32>, vector<40x40xf32>, vector<10x40xf32> -> vector<10x40xf32>
    %192 = tpu.reciprocal %191 {approx = true} : vector<10x40xf32> -> vector<10x40xf32>
    %193 = arith.mulf %190, %192 : vector<10x40xf32>
    %cst_79 = arith.constant dense<0.000000e+00> : vector<10x32xf32>
    %194 = tpu.matmul %193, %184, %cst_79 {dimension_numbers = #tpu.dot_dimension_numbers<[1], [0], [0], [1], [0, 0, 1, 1], [], []>} : vector<10x40xf32>, vector<40x32xf32>, vector<10x32xf32> -> vector<10x32xf32>
    %195 = arith.truncf %194 : vector<10x32xf32> to vector<10x32xbf16>
    %c0_80 = arith.constant 0 : index
    %c0_81 = arith.constant 0 : index
    %c0_82 = arith.constant 0 : index
    %196 = vector.load %arg13[%c0_80, %c0_81, %c0_82] : memref<4x32x32xbf16, #tpu.memory_space<vmem>>, vector<1x32x32xbf16>
    %197 = vector.shape_cast %196 : vector<1x32x32xbf16> to vector<32x32xbf16>
    %cst_83 = arith.constant dense<0.000000e+00> : vector<10x32xf32>
    %198 = tpu.matmul %195, %197, %cst_83 {dimension_numbers = #tpu.dot_dimension_numbers<[1], [0], [0], [1], [0, 0, 1, 1], [], []>} : vector<10x32xbf16>, vector<32x32xbf16>, vector<10x32xf32> -> vector<10x32xf32>
    %c3_84 = arith.constant 3 : index
    %c0_85 = arith.constant 0 : index
    %199 = vector.load %arg8[%c3_84, %c0_85] : memref<39x96xf32, #tpu.memory_space<vmem>>, vector<1x32xf32>
    %200 = vector.broadcast %199 : vector<1x32xf32> to vector<10x32xf32>
    %201 = arith.addf %198, %200 : vector<10x32xf32>
    %202 = arith.addf %124, %201 : vector<10x32xf32>
    %203 = arith.addf %202, %180 : vector<10x32xf32>
    %c4 = arith.constant 4 : index
    %c0_86 = arith.constant 0 : index
    %204 = vector.load %arg8[%c4, %c0_86] : memref<39x96xf32, #tpu.memory_space<vmem>>, vector<1x32xf32>
    %c5 = arith.constant 5 : index
    %c0_87 = arith.constant 0 : index
    %205 = vector.load %arg8[%c5, %c0_87] : memref<39x96xf32, #tpu.memory_space<vmem>>, vector<1x32xf32>
    %cst_88 = arith.constant dense<0.000000e+00> : vector<10xf32>
    %206 = vector.multi_reduction <add>, %203, %cst_88 [1] : vector<10x32xf32> to vector<10xf32>
    %207 = vector.shape_cast %206 : vector<10xf32> to vector<10x1xf32>
    %cst_89 = arith.constant 3.200000e+01 : f32
    %208 = vector.broadcast %cst_89 : f32 to vector<10x1xf32>
    %209 = arith.divf %207, %208 : vector<10x1xf32>
    %210 = vector.broadcast %209 : vector<10x1xf32> to vector<10x32xf32>
    %211 = arith.subf %203, %210 : vector<10x32xf32>
    %212 = arith.mulf %211, %211 : vector<10x32xf32>
    %cst_90 = arith.constant dense<0.000000e+00> : vector<10xf32>
    %213 = vector.multi_reduction <add>, %212, %cst_90 [1] : vector<10x32xf32> to vector<10xf32>
    %214 = vector.shape_cast %213 : vector<10xf32> to vector<10x1xf32>
    %cst_91 = arith.constant 3.200000e+01 : f32
    %215 = vector.broadcast %cst_91 : f32 to vector<10x1xf32>
    %216 = arith.divf %214, %215 : vector<10x1xf32>
    %cst_92 = arith.constant 9.99999974E-6 : f32
    %217 = vector.broadcast %cst_92 : f32 to vector<10x1xf32>
    %218 = arith.addf %216, %217 : vector<10x1xf32>
    %219 = math.rsqrt %218 : vector<10x1xf32>
    %220 = vector.broadcast %219 : vector<10x1xf32> to vector<10x32xf32>
    %221 = arith.mulf %211, %220 : vector<10x32xf32>
    %222 = vector.broadcast %204 : vector<1x32xf32> to vector<10x32xf32>
    %223 = arith.mulf %221, %222 : vector<10x32xf32>
    %224 = vector.broadcast %205 : vector<1x32xf32> to vector<10x32xf32>
    %225 = arith.addf %223, %224 : vector<10x32xf32>
    %226 = arith.truncf %225 : vector<10x32xf32> to vector<10x32xbf16>
    %c0_93 = arith.constant 0 : index
    %c0_94 = arith.constant 0 : index
    %c0_95 = arith.constant 0 : index
    %227 = vector.load %arg11[%c0_93, %c0_94, %c0_95] : memref<4x32x64xbf16, #tpu.memory_space<vmem>>, vector<1x32x64xbf16>
    %228 = vector.shape_cast %227 : vector<1x32x64xbf16> to vector<32x64xbf16>
    %cst_96 = arith.constant dense<0.000000e+00> : vector<10x64xf32>
    %229 = tpu.matmul %226, %228, %cst_96 {dimension_numbers = #tpu.dot_dimension_numbers<[1], [0], [0], [1], [0, 0, 1, 1], [], []>} : vector<10x32xbf16>, vector<32x64xbf16>, vector<10x64xf32> -> vector<10x64xf32>
    %c6 = arith.constant 6 : index
    %c0_97 = arith.constant 0 : index
    %230 = vector.load %arg8[%c6, %c0_97] : memref<39x96xf32, #tpu.memory_space<vmem>>, vector<1x64xf32>
    %231 = vector.broadcast %230 : vector<1x64xf32> to vector<10x64xf32>
    %232 = arith.addf %229, %231 : vector<10x64xf32>
    %cst_98 = arith.constant 0.000000e+00 : f32
    %233 = vector.broadcast %cst_98 : f32 to vector<10x64xf32>
    %234 = arith.maximumf %232, %233 : vector<10x64xf32>
    %235 = arith.truncf %234 : vector<10x64xf32> to vector<10x64xbf16>
    %c0_99 = arith.constant 0 : index
    %c0_100 = arith.constant 0 : index
    %c0_101 = arith.constant 0 : index
    %236 = vector.load %arg12[%c0_99, %c0_100, %c0_101] : memref<4x64x32xbf16, #tpu.memory_space<vmem>>, vector<1x64x32xbf16>
    %237 = vector.shape_cast %236 : vector<1x64x32xbf16> to vector<64x32xbf16>
    %cst_102 = arith.constant dense<0.000000e+00> : vector<10x32xf32>
    %238 = tpu.matmul %235, %237, %cst_102 {dimension_numbers = #tpu.dot_dimension_numbers<[1], [0], [0], [1], [0, 0, 1, 1], [], []>} : vector<10x64xbf16>, vector<64x32xbf16>, vector<10x32xf32> -> vector<10x32xf32>
    %c7 = arith.constant 7 : index
    %c0_103 = arith.constant 0 : index
    %239 = vector.load %arg8[%c7, %c0_103] : memref<39x96xf32, #tpu.memory_space<vmem>>, vector<1x32xf32>
    %240 = vector.broadcast %239 : vector<1x32xf32> to vector<10x32xf32>
    %241 = arith.addf %238, %240 : vector<10x32xf32>
    %242 = arith.addf %203, %241 : vector<10x32xf32>
    %c8_104 = arith.constant 8 : index
    %c0_105 = arith.constant 0 : index
    %243 = vector.load %arg8[%c8_104, %c0_105] : memref<39x96xf32, #tpu.memory_space<vmem>>, vector<1x32xf32>
    %c9 = arith.constant 9 : index
    %c0_106 = arith.constant 0 : index
    %244 = vector.load %arg8[%c9, %c0_106] : memref<39x96xf32, #tpu.memory_space<vmem>>, vector<1x32xf32>
    %cst_107 = arith.constant dense<0.000000e+00> : vector<10xf32>
    %245 = vector.multi_reduction <add>, %242, %cst_107 [1] : vector<10x32xf32> to vector<10xf32>
    %246 = vector.shape_cast %245 : vector<10xf32> to vector<10x1xf32>
    %cst_108 = arith.constant 3.200000e+01 : f32
    %247 = vector.broadcast %cst_108 : f32 to vector<10x1xf32>
    %248 = arith.divf %246, %247 : vector<10x1xf32>
    %249 = vector.broadcast %248 : vector<10x1xf32> to vector<10x32xf32>
    %250 = arith.subf %242, %249 : vector<10x32xf32>
    %251 = arith.mulf %250, %250 : vector<10x32xf32>
    %cst_109 = arith.constant dense<0.000000e+00> : vector<10xf32>
    %252 = vector.multi_reduction <add>, %251, %cst_109 [1] : vector<10x32xf32> to vector<10xf32>
    %253 = vector.shape_cast %252 : vector<10xf32> to vector<10x1xf32>
    %cst_110 = arith.constant 3.200000e+01 : f32
    %254 = vector.broadcast %cst_110 : f32 to vector<10x1xf32>
    %255 = arith.divf %253, %254 : vector<10x1xf32>
    %cst_111 = arith.constant 9.99999974E-6 : f32
    %256 = vector.broadcast %cst_111 : f32 to vector<10x1xf32>
    %257 = arith.addf %255, %256 : vector<10x1xf32>
    %258 = math.rsqrt %257 : vector<10x1xf32>
    %259 = vector.broadcast %258 : vector<10x1xf32> to vector<10x32xf32>
    %260 = arith.mulf %250, %259 : vector<10x32xf32>
    %261 = vector.broadcast %243 : vector<1x32xf32> to vector<10x32xf32>
    %262 = arith.mulf %260, %261 : vector<10x32xf32>
    %263 = vector.broadcast %244 : vector<1x32xf32> to vector<10x32xf32>
    %264 = arith.addf %262, %263 : vector<10x32xf32>
    %265 = arith.truncf %264 : vector<10x32xf32> to vector<10x32xbf16>
    %c1_112 = arith.constant 1 : index
    %c0_113 = arith.constant 0 : index
    %c0_114 = arith.constant 0 : index
    %266 = vector.load %arg9[%c1_112, %c0_113, %c0_114] : memref<4x32x96xbf16, #tpu.memory_space<vmem>>, vector<1x32x96xbf16>
    %267 = vector.shape_cast %266 : vector<1x32x96xbf16> to vector<32x96xbf16>
    %cst_115 = arith.constant dense<0.000000e+00> : vector<10x96xf32>
    %268 = tpu.matmul %265, %267, %cst_115 {dimension_numbers = #tpu.dot_dimension_numbers<[1], [0], [0], [1], [0, 0, 1, 1], [], []>} : vector<10x32xbf16>, vector<32x96xbf16>, vector<10x96xf32> -> vector<10x96xf32>
    %c10 = arith.constant 10 : index
    %c0_116 = arith.constant 0 : index
    %269 = vector.load %arg8[%c10, %c0_116] : memref<39x96xf32, #tpu.memory_space<vmem>>, vector<1x96xf32>
    %270 = vector.broadcast %269 : vector<1x96xf32> to vector<10x96xf32>
    %271 = arith.addf %268, %270 : vector<10x96xf32>
    %272 = vector.extract_strided_slice %271 {offsets = [0, 0], sizes = [10, 32], strides = [1, 1]} : vector<10x96xf32> to vector<10x32xf32>
    %273 = vector.extract_strided_slice %271 {offsets = [0, 32], sizes = [10, 32], strides = [1, 1]} : vector<10x96xf32> to vector<10x32xf32>
    %274 = vector.extract_strided_slice %271 {offsets = [0, 64], sizes = [10, 32], strides = [1, 1]} : vector<10x96xf32> to vector<10x32xf32>
    %c1_117 = arith.constant 1 : index
    %c0_118 = arith.constant 0 : index
    %c0_119 = arith.constant 0 : index
    %275 = vector.load %arg10[%c1_117, %c0_118, %c0_119] : memref<4x3x32xf32, #tpu.memory_space<vmem>>, vector<1x3x32xf32>
    %276 = vector.shape_cast %275 : vector<1x3x32xf32> to vector<3x32xf32>
    %cst_120 = arith.constant dense<0.000000e+00> : vector<10x32xf32>
    %277 = tpu.matmul %34, %274, %cst_120 {dimension_numbers = #tpu.dot_dimension_numbers<[1], [0], [0], [1], [0, 0, 1, 1], [], []>} : vector<10x10xf32>, vector<10x32xf32>, vector<10x32xf32> -> vector<10x32xf32>
    %cst_121 = arith.constant dense<0.000000e+00> : vector<10x32xf32>
    %278 = tpu.matmul %41, %274, %cst_121 {dimension_numbers = #tpu.dot_dimension_numbers<[1], [0], [0], [1], [0, 0, 1, 1], [], []>} : vector<10x10xf32>, vector<10x32xf32>, vector<10x32xf32> -> vector<10x32xf32>
    %279 = vector.extract_strided_slice %276 {offsets = [0, 0], sizes = [1, 32], strides = [1, 1]} : vector<3x32xf32> to vector<1x32xf32>
    %280 = vector.broadcast %279 : vector<1x32xf32> to vector<10x32xf32>
    %281 = arith.mulf %277, %280 : vector<10x32xf32>
    %282 = vector.extract_strided_slice %276 {offsets = [1, 0], sizes = [1, 32], strides = [1, 1]} : vector<3x32xf32> to vector<1x32xf32>
    %283 = vector.broadcast %282 : vector<1x32xf32> to vector<10x32xf32>
    %284 = arith.mulf %274, %283 : vector<10x32xf32>
    %285 = arith.addf %281, %284 : vector<10x32xf32>
    %286 = vector.extract_strided_slice %276 {offsets = [2, 0], sizes = [1, 32], strides = [1, 1]} : vector<3x32xf32> to vector<1x32xf32>
    %287 = vector.broadcast %286 : vector<1x32xf32> to vector<10x32xf32>
    %288 = arith.mulf %278, %287 : vector<10x32xf32>
    %289 = arith.addf %285, %288 : vector<10x32xf32>
    %290 = arith.addf %289, %274 : vector<10x32xf32>
    %cst_122 = arith.constant dense<0.000000e+00> : vector<40x32xf32>
    %291 = tpu.matmul %129, %273, %cst_122 {dimension_numbers = #tpu.dot_dimension_numbers<[1], [0], [0], [1], [0, 0, 1, 1], [], []>} : vector<40x10xf32>, vector<10x32xf32>, vector<40x32xf32> -> vector<40x32xf32>
    %292 = arith.mulf %291, %126 : vector<40x32xf32>
    %cst_123 = arith.constant dense<0.000000e+00> : vector<40x32xf32>
    %293 = tpu.matmul %129, %274, %cst_123 {dimension_numbers = #tpu.dot_dimension_numbers<[1], [0], [0], [1], [0, 0, 1, 1], [], []>} : vector<40x10xf32>, vector<10x32xf32>, vector<40x32xf32> -> vector<40x32xf32>
    %294 = arith.mulf %293, %126 : vector<40x32xf32>
    "tpu.trace_start"() <{level = 10 : i32, message = "td,rd->tr"}> : () -> ()
    %cst_124 = arith.constant dense<0.000000e+00> : vector<10x40xf32>
    %295 = tpu.matmul %272, %292, %cst_124 {dimension_numbers = #tpu.dot_dimension_numbers<[1], [1], [0], [0], [0, 0, 1, 0], [], []>} : vector<10x32xf32>, vector<40x32xf32>, vector<10x40xf32> -> vector<10x40xf32>
    "tpu.trace_stop"() : () -> ()
    %cst_125 = arith.constant dense<0xFF800000> : vector<10xf32>
    %296 = vector.multi_reduction <maximumf>, %295, %cst_125 [1] : vector<10x40xf32> to vector<10xf32>
    %297 = vector.shape_cast %296 : vector<10xf32> to vector<10x1xf32>
    %298 = vector.broadcast %297 : vector<10x1xf32> to vector<10x40xf32>
    %299 = arith.subf %295, %298 : vector<10x40xf32>
    %300 = math.exp %299 : vector<10x40xf32>
    %cst_126 = arith.constant dense<0.000000e+00> : vector<10x40xf32>
    %301 = tpu.matmul %300, %132, %cst_126 {dimension_numbers = #tpu.dot_dimension_numbers<[1], [0], [0], [1], [0, 0, 1, 1], [], []>} : vector<10x40xf32>, vector<40x40xf32>, vector<10x40xf32> -> vector<10x40xf32>
    %302 = tpu.reciprocal %301 {approx = true} : vector<10x40xf32> -> vector<10x40xf32>
    %303 = arith.mulf %300, %302 : vector<10x40xf32>
    %cst_127 = arith.constant dense<0.000000e+00> : vector<10x32xf32>
    %304 = tpu.matmul %303, %294, %cst_127 {dimension_numbers = #tpu.dot_dimension_numbers<[1], [0], [0], [1], [0, 0, 1, 1], [], []>} : vector<10x40xf32>, vector<40x32xf32>, vector<10x32xf32> -> vector<10x32xf32>
    %305 = arith.truncf %304 : vector<10x32xf32> to vector<10x32xbf16>
    %c1_128 = arith.constant 1 : index
    %c0_129 = arith.constant 0 : index
    %c0_130 = arith.constant 0 : index
    %306 = vector.load %arg13[%c1_128, %c0_129, %c0_130] : memref<4x32x32xbf16, #tpu.memory_space<vmem>>, vector<1x32x32xbf16>
    %307 = vector.shape_cast %306 : vector<1x32x32xbf16> to vector<32x32xbf16>
    %cst_131 = arith.constant dense<0.000000e+00> : vector<10x32xf32>
    %308 = tpu.matmul %305, %307, %cst_131 {dimension_numbers = #tpu.dot_dimension_numbers<[1], [0], [0], [1], [0, 0, 1, 1], [], []>} : vector<10x32xbf16>, vector<32x32xbf16>, vector<10x32xf32> -> vector<10x32xf32>
    %c11_132 = arith.constant 11 : index
    %c0_133 = arith.constant 0 : index
    %309 = vector.load %arg8[%c11_132, %c0_133] : memref<39x96xf32, #tpu.memory_space<vmem>>, vector<1x32xf32>
    %310 = vector.broadcast %309 : vector<1x32xf32> to vector<10x32xf32>
    %311 = arith.addf %308, %310 : vector<10x32xf32>
    %312 = arith.addf %242, %311 : vector<10x32xf32>
    %313 = arith.addf %312, %290 : vector<10x32xf32>
    %c12 = arith.constant 12 : index
    %c0_134 = arith.constant 0 : index
    %314 = vector.load %arg8[%c12, %c0_134] : memref<39x96xf32, #tpu.memory_space<vmem>>, vector<1x32xf32>
    %c13 = arith.constant 13 : index
    %c0_135 = arith.constant 0 : index
    %315 = vector.load %arg8[%c13, %c0_135] : memref<39x96xf32, #tpu.memory_space<vmem>>, vector<1x32xf32>
    %cst_136 = arith.constant dense<0.000000e+00> : vector<10xf32>
    %316 = vector.multi_reduction <add>, %313, %cst_136 [1] : vector<10x32xf32> to vector<10xf32>
    %317 = vector.shape_cast %316 : vector<10xf32> to vector<10x1xf32>
    %cst_137 = arith.constant 3.200000e+01 : f32
    %318 = vector.broadcast %cst_137 : f32 to vector<10x1xf32>
    %319 = arith.divf %317, %318 : vector<10x1xf32>
    %320 = vector.broadcast %319 : vector<10x1xf32> to vector<10x32xf32>
    %321 = arith.subf %313, %320 : vector<10x32xf32>
    %322 = arith.mulf %321, %321 : vector<10x32xf32>
    %cst_138 = arith.constant dense<0.000000e+00> : vector<10xf32>
    %323 = vector.multi_reduction <add>, %322, %cst_138 [1] : vector<10x32xf32> to vector<10xf32>
    %324 = vector.shape_cast %323 : vector<10xf32> to vector<10x1xf32>
    %cst_139 = arith.constant 3.200000e+01 : f32
    %325 = vector.broadcast %cst_139 : f32 to vector<10x1xf32>
    %326 = arith.divf %324, %325 : vector<10x1xf32>
    %cst_140 = arith.constant 9.99999974E-6 : f32
    %327 = vector.broadcast %cst_140 : f32 to vector<10x1xf32>
    %328 = arith.addf %326, %327 : vector<10x1xf32>
    %329 = math.rsqrt %328 : vector<10x1xf32>
    %330 = vector.broadcast %329 : vector<10x1xf32> to vector<10x32xf32>
    %331 = arith.mulf %321, %330 : vector<10x32xf32>
    %332 = vector.broadcast %314 : vector<1x32xf32> to vector<10x32xf32>
    %333 = arith.mulf %331, %332 : vector<10x32xf32>
    %334 = vector.broadcast %315 : vector<1x32xf32> to vector<10x32xf32>
    %335 = arith.addf %333, %334 : vector<10x32xf32>
    %336 = arith.truncf %335 : vector<10x32xf32> to vector<10x32xbf16>
    %c1_141 = arith.constant 1 : index
    %c0_142 = arith.constant 0 : index
    %c0_143 = arith.constant 0 : index
    %337 = vector.load %arg11[%c1_141, %c0_142, %c0_143] : memref<4x32x64xbf16, #tpu.memory_space<vmem>>, vector<1x32x64xbf16>
    %338 = vector.shape_cast %337 : vector<1x32x64xbf16> to vector<32x64xbf16>
    %cst_144 = arith.constant dense<0.000000e+00> : vector<10x64xf32>
    %339 = tpu.matmul %336, %338, %cst_144 {dimension_numbers = #tpu.dot_dimension_numbers<[1], [0], [0], [1], [0, 0, 1, 1], [], []>} : vector<10x32xbf16>, vector<32x64xbf16>, vector<10x64xf32> -> vector<10x64xf32>
    %c14 = arith.constant 14 : index
    %c0_145 = arith.constant 0 : index
    %340 = vector.load %arg8[%c14, %c0_145] : memref<39x96xf32, #tpu.memory_space<vmem>>, vector<1x64xf32>
    %341 = vector.broadcast %340 : vector<1x64xf32> to vector<10x64xf32>
    %342 = arith.addf %339, %341 : vector<10x64xf32>
    %cst_146 = arith.constant 0.000000e+00 : f32
    %343 = vector.broadcast %cst_146 : f32 to vector<10x64xf32>
    %344 = arith.maximumf %342, %343 : vector<10x64xf32>
    %345 = arith.truncf %344 : vector<10x64xf32> to vector<10x64xbf16>
    %c1_147 = arith.constant 1 : index
    %c0_148 = arith.constant 0 : index
    %c0_149 = arith.constant 0 : index
    %346 = vector.load %arg12[%c1_147, %c0_148, %c0_149] : memref<4x64x32xbf16, #tpu.memory_space<vmem>>, vector<1x64x32xbf16>
    %347 = vector.shape_cast %346 : vector<1x64x32xbf16> to vector<64x32xbf16>
    %cst_150 = arith.constant dense<0.000000e+00> : vector<10x32xf32>
    %348 = tpu.matmul %345, %347, %cst_150 {dimension_numbers = #tpu.dot_dimension_numbers<[1], [0], [0], [1], [0, 0, 1, 1], [], []>} : vector<10x64xbf16>, vector<64x32xbf16>, vector<10x32xf32> -> vector<10x32xf32>
    %c15 = arith.constant 15 : index
    %c0_151 = arith.constant 0 : index
    %349 = vector.load %arg8[%c15, %c0_151] : memref<39x96xf32, #tpu.memory_space<vmem>>, vector<1x32xf32>
    %350 = vector.broadcast %349 : vector<1x32xf32> to vector<10x32xf32>
    %351 = arith.addf %348, %350 : vector<10x32xf32>
    %352 = arith.addf %313, %351 : vector<10x32xf32>
    %c16 = arith.constant 16 : index
    %c0_152 = arith.constant 0 : index
    %353 = vector.load %arg8[%c16, %c0_152] : memref<39x96xf32, #tpu.memory_space<vmem>>, vector<1x32xf32>
    %c17 = arith.constant 17 : index
    %c0_153 = arith.constant 0 : index
    %354 = vector.load %arg8[%c17, %c0_153] : memref<39x96xf32, #tpu.memory_space<vmem>>, vector<1x32xf32>
    %cst_154 = arith.constant dense<0.000000e+00> : vector<10xf32>
    %355 = vector.multi_reduction <add>, %352, %cst_154 [1] : vector<10x32xf32> to vector<10xf32>
    %356 = vector.shape_cast %355 : vector<10xf32> to vector<10x1xf32>
    %cst_155 = arith.constant 3.200000e+01 : f32
    %357 = vector.broadcast %cst_155 : f32 to vector<10x1xf32>
    %358 = arith.divf %356, %357 : vector<10x1xf32>
    %359 = vector.broadcast %358 : vector<10x1xf32> to vector<10x32xf32>
    %360 = arith.subf %352, %359 : vector<10x32xf32>
    %361 = arith.mulf %360, %360 : vector<10x32xf32>
    %cst_156 = arith.constant dense<0.000000e+00> : vector<10xf32>
    %362 = vector.multi_reduction <add>, %361, %cst_156 [1] : vector<10x32xf32> to vector<10xf32>
    %363 = vector.shape_cast %362 : vector<10xf32> to vector<10x1xf32>
    %cst_157 = arith.constant 3.200000e+01 : f32
    %364 = vector.broadcast %cst_157 : f32 to vector<10x1xf32>
    %365 = arith.divf %363, %364 : vector<10x1xf32>
    %cst_158 = arith.constant 9.99999974E-6 : f32
    %366 = vector.broadcast %cst_158 : f32 to vector<10x1xf32>
    %367 = arith.addf %365, %366 : vector<10x1xf32>
    %368 = math.rsqrt %367 : vector<10x1xf32>
    %369 = vector.broadcast %368 : vector<10x1xf32> to vector<10x32xf32>
    %370 = arith.mulf %360, %369 : vector<10x32xf32>
    %371 = vector.broadcast %353 : vector<1x32xf32> to vector<10x32xf32>
    %372 = arith.mulf %370, %371 : vector<10x32xf32>
    %373 = vector.broadcast %354 : vector<1x32xf32> to vector<10x32xf32>
    %374 = arith.addf %372, %373 : vector<10x32xf32>
    %375 = arith.truncf %374 : vector<10x32xf32> to vector<10x32xbf16>
    %c2_159 = arith.constant 2 : index
    %c0_160 = arith.constant 0 : index
    %c0_161 = arith.constant 0 : index
    %376 = vector.load %arg9[%c2_159, %c0_160, %c0_161] : memref<4x32x96xbf16, #tpu.memory_space<vmem>>, vector<1x32x96xbf16>
    %377 = vector.shape_cast %376 : vector<1x32x96xbf16> to vector<32x96xbf16>
    %cst_162 = arith.constant dense<0.000000e+00> : vector<10x96xf32>
    %378 = tpu.matmul %375, %377, %cst_162 {dimension_numbers = #tpu.dot_dimension_numbers<[1], [0], [0], [1], [0, 0, 1, 1], [], []>} : vector<10x32xbf16>, vector<32x96xbf16>, vector<10x96xf32> -> vector<10x96xf32>
    %c18 = arith.constant 18 : index
    %c0_163 = arith.constant 0 : index
    %379 = vector.load %arg8[%c18, %c0_163] : memref<39x96xf32, #tpu.memory_space<vmem>>, vector<1x96xf32>
    %380 = vector.broadcast %379 : vector<1x96xf32> to vector<10x96xf32>
    %381 = arith.addf %378, %380 : vector<10x96xf32>
    %382 = vector.extract_strided_slice %381 {offsets = [0, 0], sizes = [10, 32], strides = [1, 1]} : vector<10x96xf32> to vector<10x32xf32>
    %383 = vector.extract_strided_slice %381 {offsets = [0, 32], sizes = [10, 32], strides = [1, 1]} : vector<10x96xf32> to vector<10x32xf32>
    %384 = vector.extract_strided_slice %381 {offsets = [0, 64], sizes = [10, 32], strides = [1, 1]} : vector<10x96xf32> to vector<10x32xf32>
    %c2_164 = arith.constant 2 : index
    %c0_165 = arith.constant 0 : index
    %c0_166 = arith.constant 0 : index
    %385 = vector.load %arg10[%c2_164, %c0_165, %c0_166] : memref<4x3x32xf32, #tpu.memory_space<vmem>>, vector<1x3x32xf32>
    %386 = vector.shape_cast %385 : vector<1x3x32xf32> to vector<3x32xf32>
    %cst_167 = arith.constant dense<0.000000e+00> : vector<10x32xf32>
    %387 = tpu.matmul %34, %384, %cst_167 {dimension_numbers = #tpu.dot_dimension_numbers<[1], [0], [0], [1], [0, 0, 1, 1], [], []>} : vector<10x10xf32>, vector<10x32xf32>, vector<10x32xf32> -> vector<10x32xf32>
    %cst_168 = arith.constant dense<0.000000e+00> : vector<10x32xf32>
    %388 = tpu.matmul %41, %384, %cst_168 {dimension_numbers = #tpu.dot_dimension_numbers<[1], [0], [0], [1], [0, 0, 1, 1], [], []>} : vector<10x10xf32>, vector<10x32xf32>, vector<10x32xf32> -> vector<10x32xf32>
    %389 = vector.extract_strided_slice %386 {offsets = [0, 0], sizes = [1, 32], strides = [1, 1]} : vector<3x32xf32> to vector<1x32xf32>
    %390 = vector.broadcast %389 : vector<1x32xf32> to vector<10x32xf32>
    %391 = arith.mulf %387, %390 : vector<10x32xf32>
    %392 = vector.extract_strided_slice %386 {offsets = [1, 0], sizes = [1, 32], strides = [1, 1]} : vector<3x32xf32> to vector<1x32xf32>
    %393 = vector.broadcast %392 : vector<1x32xf32> to vector<10x32xf32>
    %394 = arith.mulf %384, %393 : vector<10x32xf32>
    %395 = arith.addf %391, %394 : vector<10x32xf32>
    %396 = vector.extract_strided_slice %386 {offsets = [2, 0], sizes = [1, 32], strides = [1, 1]} : vector<3x32xf32> to vector<1x32xf32>
    %397 = vector.broadcast %396 : vector<1x32xf32> to vector<10x32xf32>
    %398 = arith.mulf %388, %397 : vector<10x32xf32>
    %399 = arith.addf %395, %398 : vector<10x32xf32>
    %400 = arith.addf %399, %384 : vector<10x32xf32>
    %cst_169 = arith.constant dense<0.000000e+00> : vector<40x32xf32>
    %401 = tpu.matmul %129, %383, %cst_169 {dimension_numbers = #tpu.dot_dimension_numbers<[1], [0], [0], [1], [0, 0, 1, 1], [], []>} : vector<40x10xf32>, vector<10x32xf32>, vector<40x32xf32> -> vector<40x32xf32>
    %402 = arith.mulf %401, %126 : vector<40x32xf32>
    %cst_170 = arith.constant dense<0.000000e+00> : vector<40x32xf32>
    %403 = tpu.matmul %129, %384, %cst_170 {dimension_numbers = #tpu.dot_dimension_numbers<[1], [0], [0], [1], [0, 0, 1, 1], [], []>} : vector<40x10xf32>, vector<10x32xf32>, vector<40x32xf32> -> vector<40x32xf32>
    %404 = arith.mulf %403, %126 : vector<40x32xf32>
    "tpu.trace_start"() <{level = 10 : i32, message = "td,rd->tr"}> : () -> ()
    %cst_171 = arith.constant dense<0.000000e+00> : vector<10x40xf32>
    %405 = tpu.matmul %382, %402, %cst_171 {dimension_numbers = #tpu.dot_dimension_numbers<[1], [1], [0], [0], [0, 0, 1, 0], [], []>} : vector<10x32xf32>, vector<40x32xf32>, vector<10x40xf32> -> vector<10x40xf32>
    "tpu.trace_stop"() : () -> ()
    %cst_172 = arith.constant dense<0xFF800000> : vector<10xf32>
    %406 = vector.multi_reduction <maximumf>, %405, %cst_172 [1] : vector<10x40xf32> to vector<10xf32>
    %407 = vector.shape_cast %406 : vector<10xf32> to vector<10x1xf32>
    %408 = vector.broadcast %407 : vector<10x1xf32> to vector<10x40xf32>
    %409 = arith.subf %405, %408 : vector<10x40xf32>
    %410 = math.exp %409 : vector<10x40xf32>
    %cst_173 = arith.constant dense<0.000000e+00> : vector<10x40xf32>
    %411 = tpu.matmul %410, %132, %cst_173 {dimension_numbers = #tpu.dot_dimension_numbers<[1], [0], [0], [1], [0, 0, 1, 1], [], []>} : vector<10x40xf32>, vector<40x40xf32>, vector<10x40xf32> -> vector<10x40xf32>
    %412 = tpu.reciprocal %411 {approx = true} : vector<10x40xf32> -> vector<10x40xf32>
    %413 = arith.mulf %410, %412 : vector<10x40xf32>
    %cst_174 = arith.constant dense<0.000000e+00> : vector<10x32xf32>
    %414 = tpu.matmul %413, %404, %cst_174 {dimension_numbers = #tpu.dot_dimension_numbers<[1], [0], [0], [1], [0, 0, 1, 1], [], []>} : vector<10x40xf32>, vector<40x32xf32>, vector<10x32xf32> -> vector<10x32xf32>
    %415 = arith.truncf %414 : vector<10x32xf32> to vector<10x32xbf16>
    %c2_175 = arith.constant 2 : index
    %c0_176 = arith.constant 0 : index
    %c0_177 = arith.constant 0 : index
    %416 = vector.load %arg13[%c2_175, %c0_176, %c0_177] : memref<4x32x32xbf16, #tpu.memory_space<vmem>>, vector<1x32x32xbf16>
    %417 = vector.shape_cast %416 : vector<1x32x32xbf16> to vector<32x32xbf16>
    %cst_178 = arith.constant dense<0.000000e+00> : vector<10x32xf32>
    %418 = tpu.matmul %415, %417, %cst_178 {dimension_numbers = #tpu.dot_dimension_numbers<[1], [0], [0], [1], [0, 0, 1, 1], [], []>} : vector<10x32xbf16>, vector<32x32xbf16>, vector<10x32xf32> -> vector<10x32xf32>
    %c19 = arith.constant 19 : index
    %c0_179 = arith.constant 0 : index
    %419 = vector.load %arg8[%c19, %c0_179] : memref<39x96xf32, #tpu.memory_space<vmem>>, vector<1x32xf32>
    %420 = vector.broadcast %419 : vector<1x32xf32> to vector<10x32xf32>
    %421 = arith.addf %418, %420 : vector<10x32xf32>
    %422 = arith.addf %352, %421 : vector<10x32xf32>
    %423 = arith.addf %422, %400 : vector<10x32xf32>
    %c20 = arith.constant 20 : index
    %c0_180 = arith.constant 0 : index
    %424 = vector.load %arg8[%c20, %c0_180] : memref<39x96xf32, #tpu.memory_space<vmem>>, vector<1x32xf32>
    %c21 = arith.constant 21 : index
    %c0_181 = arith.constant 0 : index
    %425 = vector.load %arg8[%c21, %c0_181] : memref<39x96xf32, #tpu.memory_space<vmem>>, vector<1x32xf32>
    %cst_182 = arith.constant dense<0.000000e+00> : vector<10xf32>
    %426 = vector.multi_reduction <add>, %423, %cst_182 [1] : vector<10x32xf32> to vector<10xf32>
    %427 = vector.shape_cast %426 : vector<10xf32> to vector<10x1xf32>
    %cst_183 = arith.constant 3.200000e+01 : f32
    %428 = vector.broadcast %cst_183 : f32 to vector<10x1xf32>
    %429 = arith.divf %427, %428 : vector<10x1xf32>
    %430 = vector.broadcast %429 : vector<10x1xf32> to vector<10x32xf32>
    %431 = arith.subf %423, %430 : vector<10x32xf32>
    %432 = arith.mulf %431, %431 : vector<10x32xf32>
    %cst_184 = arith.constant dense<0.000000e+00> : vector<10xf32>
    %433 = vector.multi_reduction <add>, %432, %cst_184 [1] : vector<10x32xf32> to vector<10xf32>
    %434 = vector.shape_cast %433 : vector<10xf32> to vector<10x1xf32>
    %cst_185 = arith.constant 3.200000e+01 : f32
    %435 = vector.broadcast %cst_185 : f32 to vector<10x1xf32>
    %436 = arith.divf %434, %435 : vector<10x1xf32>
    %cst_186 = arith.constant 9.99999974E-6 : f32
    %437 = vector.broadcast %cst_186 : f32 to vector<10x1xf32>
    %438 = arith.addf %436, %437 : vector<10x1xf32>
    %439 = math.rsqrt %438 : vector<10x1xf32>
    %440 = vector.broadcast %439 : vector<10x1xf32> to vector<10x32xf32>
    %441 = arith.mulf %431, %440 : vector<10x32xf32>
    %442 = vector.broadcast %424 : vector<1x32xf32> to vector<10x32xf32>
    %443 = arith.mulf %441, %442 : vector<10x32xf32>
    %444 = vector.broadcast %425 : vector<1x32xf32> to vector<10x32xf32>
    %445 = arith.addf %443, %444 : vector<10x32xf32>
    %446 = arith.truncf %445 : vector<10x32xf32> to vector<10x32xbf16>
    %c2_187 = arith.constant 2 : index
    %c0_188 = arith.constant 0 : index
    %c0_189 = arith.constant 0 : index
    %447 = vector.load %arg11[%c2_187, %c0_188, %c0_189] : memref<4x32x64xbf16, #tpu.memory_space<vmem>>, vector<1x32x64xbf16>
    %448 = vector.shape_cast %447 : vector<1x32x64xbf16> to vector<32x64xbf16>
    %cst_190 = arith.constant dense<0.000000e+00> : vector<10x64xf32>
    %449 = tpu.matmul %446, %448, %cst_190 {dimension_numbers = #tpu.dot_dimension_numbers<[1], [0], [0], [1], [0, 0, 1, 1], [], []>} : vector<10x32xbf16>, vector<32x64xbf16>, vector<10x64xf32> -> vector<10x64xf32>
    %c22 = arith.constant 22 : index
    %c0_191 = arith.constant 0 : index
    %450 = vector.load %arg8[%c22, %c0_191] : memref<39x96xf32, #tpu.memory_space<vmem>>, vector<1x64xf32>
    %451 = vector.broadcast %450 : vector<1x64xf32> to vector<10x64xf32>
    %452 = arith.addf %449, %451 : vector<10x64xf32>
    %cst_192 = arith.constant 0.000000e+00 : f32
    %453 = vector.broadcast %cst_192 : f32 to vector<10x64xf32>
    %454 = arith.maximumf %452, %453 : vector<10x64xf32>
    %455 = arith.truncf %454 : vector<10x64xf32> to vector<10x64xbf16>
    %c2_193 = arith.constant 2 : index
    %c0_194 = arith.constant 0 : index
    %c0_195 = arith.constant 0 : index
    %456 = vector.load %arg12[%c2_193, %c0_194, %c0_195] : memref<4x64x32xbf16, #tpu.memory_space<vmem>>, vector<1x64x32xbf16>
    %457 = vector.shape_cast %456 : vector<1x64x32xbf16> to vector<64x32xbf16>
    %cst_196 = arith.constant dense<0.000000e+00> : vector<10x32xf32>
    %458 = tpu.matmul %455, %457, %cst_196 {dimension_numbers = #tpu.dot_dimension_numbers<[1], [0], [0], [1], [0, 0, 1, 1], [], []>} : vector<10x64xbf16>, vector<64x32xbf16>, vector<10x32xf32> -> vector<10x32xf32>
    %c23 = arith.constant 23 : index
    %c0_197 = arith.constant 0 : index
    %459 = vector.load %arg8[%c23, %c0_197] : memref<39x96xf32, #tpu.memory_space<vmem>>, vector<1x32xf32>
    %460 = vector.broadcast %459 : vector<1x32xf32> to vector<10x32xf32>
    %461 = arith.addf %458, %460 : vector<10x32xf32>
    %462 = arith.addf %423, %461 : vector<10x32xf32>
    %c34 = arith.constant 34 : index
    %c0_198 = arith.constant 0 : index
    %463 = vector.load %arg8[%c34, %c0_198] : memref<39x96xf32, #tpu.memory_space<vmem>>, vector<1x32xf32>
    %c35 = arith.constant 35 : index
    %c0_199 = arith.constant 0 : index
    %464 = vector.load %arg8[%c35, %c0_199] : memref<39x96xf32, #tpu.memory_space<vmem>>, vector<1x32xf32>
    %cst_200 = arith.constant dense<0.000000e+00> : vector<10xf32>
    %465 = vector.multi_reduction <add>, %462, %cst_200 [1] : vector<10x32xf32> to vector<10xf32>
    %466 = vector.shape_cast %465 : vector<10xf32> to vector<10x1xf32>
    %cst_201 = arith.constant 3.200000e+01 : f32
    %467 = vector.broadcast %cst_201 : f32 to vector<10x1xf32>
    %468 = arith.divf %466, %467 : vector<10x1xf32>
    %469 = vector.broadcast %468 : vector<10x1xf32> to vector<10x32xf32>
    %470 = arith.subf %462, %469 : vector<10x32xf32>
    %471 = arith.mulf %470, %470 : vector<10x32xf32>
    %cst_202 = arith.constant dense<0.000000e+00> : vector<10xf32>
    %472 = vector.multi_reduction <add>, %471, %cst_202 [1] : vector<10x32xf32> to vector<10xf32>
    %473 = vector.shape_cast %472 : vector<10xf32> to vector<10x1xf32>
    %cst_203 = arith.constant 3.200000e+01 : f32
    %474 = vector.broadcast %cst_203 : f32 to vector<10x1xf32>
    %475 = arith.divf %473, %474 : vector<10x1xf32>
    %cst_204 = arith.constant 9.99999974E-6 : f32
    %476 = vector.broadcast %cst_204 : f32 to vector<10x1xf32>
    %477 = arith.addf %475, %476 : vector<10x1xf32>
    %478 = math.rsqrt %477 : vector<10x1xf32>
    %479 = vector.broadcast %478 : vector<10x1xf32> to vector<10x32xf32>
    %480 = arith.mulf %470, %479 : vector<10x32xf32>
    %481 = vector.broadcast %463 : vector<1x32xf32> to vector<10x32xf32>
    %482 = arith.mulf %480, %481 : vector<10x32xf32>
    %483 = vector.broadcast %464 : vector<1x32xf32> to vector<10x32xf32>
    %484 = arith.addf %482, %483 : vector<10x32xf32>
    %c24 = arith.constant 24 : index
    %c0_205 = arith.constant 0 : index
    %485 = vector.load %arg8[%c24, %c0_205] : memref<39x96xf32, #tpu.memory_space<vmem>>, vector<1x32xf32>
    %c25 = arith.constant 25 : index
    %c0_206 = arith.constant 0 : index
    %486 = vector.load %arg8[%c25, %c0_206] : memref<39x96xf32, #tpu.memory_space<vmem>>, vector<1x32xf32>
    %cst_207 = arith.constant dense<0.000000e+00> : vector<10xf32>
    %487 = vector.multi_reduction <add>, %484, %cst_207 [1] : vector<10x32xf32> to vector<10xf32>
    %488 = vector.shape_cast %487 : vector<10xf32> to vector<10x1xf32>
    %cst_208 = arith.constant 3.200000e+01 : f32
    %489 = vector.broadcast %cst_208 : f32 to vector<10x1xf32>
    %490 = arith.divf %488, %489 : vector<10x1xf32>
    %491 = vector.broadcast %490 : vector<10x1xf32> to vector<10x32xf32>
    %492 = arith.subf %484, %491 : vector<10x32xf32>
    %493 = arith.mulf %492, %492 : vector<10x32xf32>
    %cst_209 = arith.constant dense<0.000000e+00> : vector<10xf32>
    %494 = vector.multi_reduction <add>, %493, %cst_209 [1] : vector<10x32xf32> to vector<10xf32>
    %495 = vector.shape_cast %494 : vector<10xf32> to vector<10x1xf32>
    %cst_210 = arith.constant 3.200000e+01 : f32
    %496 = vector.broadcast %cst_210 : f32 to vector<10x1xf32>
    %497 = arith.divf %495, %496 : vector<10x1xf32>
    %cst_211 = arith.constant 9.99999974E-6 : f32
    %498 = vector.broadcast %cst_211 : f32 to vector<10x1xf32>
    %499 = arith.addf %497, %498 : vector<10x1xf32>
    %500 = math.rsqrt %499 : vector<10x1xf32>
    %501 = vector.broadcast %500 : vector<10x1xf32> to vector<10x32xf32>
    %502 = arith.mulf %492, %501 : vector<10x32xf32>
    %503 = vector.broadcast %485 : vector<1x32xf32> to vector<10x32xf32>
    %504 = arith.mulf %502, %503 : vector<10x32xf32>
    %505 = vector.broadcast %486 : vector<1x32xf32> to vector<10x32xf32>
    %506 = arith.addf %504, %505 : vector<10x32xf32>
    %507 = arith.truncf %506 : vector<10x32xf32> to vector<10x32xbf16>
    %c3_212 = arith.constant 3 : index
    %c0_213 = arith.constant 0 : index
    %c0_214 = arith.constant 0 : index
    %508 = vector.load %arg9[%c3_212, %c0_213, %c0_214] : memref<4x32x96xbf16, #tpu.memory_space<vmem>>, vector<1x32x96xbf16>
    %509 = vector.shape_cast %508 : vector<1x32x96xbf16> to vector<32x96xbf16>
    %cst_215 = arith.constant dense<0.000000e+00> : vector<10x96xf32>
    %510 = tpu.matmul %507, %509, %cst_215 {dimension_numbers = #tpu.dot_dimension_numbers<[1], [0], [0], [1], [0, 0, 1, 1], [], []>} : vector<10x32xbf16>, vector<32x96xbf16>, vector<10x96xf32> -> vector<10x96xf32>
    %c26 = arith.constant 26 : index
    %c0_216 = arith.constant 0 : index
    %511 = vector.load %arg8[%c26, %c0_216] : memref<39x96xf32, #tpu.memory_space<vmem>>, vector<1x96xf32>
    %512 = vector.broadcast %511 : vector<1x96xf32> to vector<10x96xf32>
    %513 = arith.addf %510, %512 : vector<10x96xf32>
    %514 = vector.extract_strided_slice %513 {offsets = [0, 0], sizes = [10, 32], strides = [1, 1]} : vector<10x96xf32> to vector<10x32xf32>
    %515 = vector.extract_strided_slice %513 {offsets = [0, 32], sizes = [10, 32], strides = [1, 1]} : vector<10x96xf32> to vector<10x32xf32>
    %516 = vector.extract_strided_slice %513 {offsets = [0, 64], sizes = [10, 32], strides = [1, 1]} : vector<10x96xf32> to vector<10x32xf32>
    %c3_217 = arith.constant 3 : index
    %c0_218 = arith.constant 0 : index
    %c0_219 = arith.constant 0 : index
    %517 = vector.load %arg10[%c3_217, %c0_218, %c0_219] : memref<4x3x32xf32, #tpu.memory_space<vmem>>, vector<1x3x32xf32>
    %518 = vector.shape_cast %517 : vector<1x3x32xf32> to vector<3x32xf32>
    %cst_220 = arith.constant dense<0.000000e+00> : vector<10x32xf32>
    %519 = tpu.matmul %34, %516, %cst_220 {dimension_numbers = #tpu.dot_dimension_numbers<[1], [0], [0], [1], [0, 0, 1, 1], [], []>} : vector<10x10xf32>, vector<10x32xf32>, vector<10x32xf32> -> vector<10x32xf32>
    %cst_221 = arith.constant dense<0.000000e+00> : vector<10x32xf32>
    %520 = tpu.matmul %41, %516, %cst_221 {dimension_numbers = #tpu.dot_dimension_numbers<[1], [0], [0], [1], [0, 0, 1, 1], [], []>} : vector<10x10xf32>, vector<10x32xf32>, vector<10x32xf32> -> vector<10x32xf32>
    %521 = vector.extract_strided_slice %518 {offsets = [0, 0], sizes = [1, 32], strides = [1, 1]} : vector<3x32xf32> to vector<1x32xf32>
    %522 = vector.broadcast %521 : vector<1x32xf32> to vector<10x32xf32>
    %523 = arith.mulf %519, %522 : vector<10x32xf32>
    %524 = vector.extract_strided_slice %518 {offsets = [1, 0], sizes = [1, 32], strides = [1, 1]} : vector<3x32xf32> to vector<1x32xf32>
    %525 = vector.broadcast %524 : vector<1x32xf32> to vector<10x32xf32>
    %526 = arith.mulf %516, %525 : vector<10x32xf32>
    %527 = arith.addf %523, %526 : vector<10x32xf32>
    %528 = vector.extract_strided_slice %518 {offsets = [2, 0], sizes = [1, 32], strides = [1, 1]} : vector<3x32xf32> to vector<1x32xf32>
    %529 = vector.broadcast %528 : vector<1x32xf32> to vector<10x32xf32>
    %530 = arith.mulf %520, %529 : vector<10x32xf32>
    %531 = arith.addf %527, %530 : vector<10x32xf32>
    %532 = arith.addf %531, %516 : vector<10x32xf32>
    %cst_222 = arith.constant dense<0.000000e+00> : vector<40x32xf32>
    %533 = tpu.matmul %129, %515, %cst_222 {dimension_numbers = #tpu.dot_dimension_numbers<[1], [0], [0], [1], [0, 0, 1, 1], [], []>} : vector<40x10xf32>, vector<10x32xf32>, vector<40x32xf32> -> vector<40x32xf32>
    %534 = arith.mulf %533, %126 : vector<40x32xf32>
    %cst_223 = arith.constant dense<0.000000e+00> : vector<40x32xf32>
    %535 = tpu.matmul %129, %516, %cst_223 {dimension_numbers = #tpu.dot_dimension_numbers<[1], [0], [0], [1], [0, 0, 1, 1], [], []>} : vector<40x10xf32>, vector<10x32xf32>, vector<40x32xf32> -> vector<40x32xf32>
    %536 = arith.mulf %535, %126 : vector<40x32xf32>
    "tpu.trace_start"() <{level = 10 : i32, message = "td,rd->tr"}> : () -> ()
    %cst_224 = arith.constant dense<0.000000e+00> : vector<10x40xf32>
    %537 = tpu.matmul %514, %534, %cst_224 {dimension_numbers = #tpu.dot_dimension_numbers<[1], [1], [0], [0], [0, 0, 1, 0], [], []>} : vector<10x32xf32>, vector<40x32xf32>, vector<10x40xf32> -> vector<10x40xf32>
    "tpu.trace_stop"() : () -> ()
    %cst_225 = arith.constant dense<0xFF800000> : vector<10xf32>
    %538 = vector.multi_reduction <maximumf>, %537, %cst_225 [1] : vector<10x40xf32> to vector<10xf32>
    %539 = vector.shape_cast %538 : vector<10xf32> to vector<10x1xf32>
    %540 = vector.broadcast %539 : vector<10x1xf32> to vector<10x40xf32>
    %541 = arith.subf %537, %540 : vector<10x40xf32>
    %542 = math.exp %541 : vector<10x40xf32>
    %cst_226 = arith.constant dense<0.000000e+00> : vector<10x40xf32>
    %543 = tpu.matmul %542, %132, %cst_226 {dimension_numbers = #tpu.dot_dimension_numbers<[1], [0], [0], [1], [0, 0, 1, 1], [], []>} : vector<10x40xf32>, vector<40x40xf32>, vector<10x40xf32> -> vector<10x40xf32>
    %544 = tpu.reciprocal %543 {approx = true} : vector<10x40xf32> -> vector<10x40xf32>
    %545 = arith.mulf %542, %544 : vector<10x40xf32>
    %cst_227 = arith.constant dense<0.000000e+00> : vector<10x32xf32>
    %546 = tpu.matmul %545, %536, %cst_227 {dimension_numbers = #tpu.dot_dimension_numbers<[1], [0], [0], [1], [0, 0, 1, 1], [], []>} : vector<10x40xf32>, vector<40x32xf32>, vector<10x32xf32> -> vector<10x32xf32>
    %547 = arith.truncf %546 : vector<10x32xf32> to vector<10x32xbf16>
    %c3_228 = arith.constant 3 : index
    %c0_229 = arith.constant 0 : index
    %c0_230 = arith.constant 0 : index
    %548 = vector.load %arg13[%c3_228, %c0_229, %c0_230] : memref<4x32x32xbf16, #tpu.memory_space<vmem>>, vector<1x32x32xbf16>
    %549 = vector.shape_cast %548 : vector<1x32x32xbf16> to vector<32x32xbf16>
    %cst_231 = arith.constant dense<0.000000e+00> : vector<10x32xf32>
    %550 = tpu.matmul %547, %549, %cst_231 {dimension_numbers = #tpu.dot_dimension_numbers<[1], [0], [0], [1], [0, 0, 1, 1], [], []>} : vector<10x32xbf16>, vector<32x32xbf16>, vector<10x32xf32> -> vector<10x32xf32>
    %c27 = arith.constant 27 : index
    %c0_232 = arith.constant 0 : index
    %551 = vector.load %arg8[%c27, %c0_232] : memref<39x96xf32, #tpu.memory_space<vmem>>, vector<1x32xf32>
    %552 = vector.broadcast %551 : vector<1x32xf32> to vector<10x32xf32>
    %553 = arith.addf %550, %552 : vector<10x32xf32>
    %554 = arith.addf %484, %553 : vector<10x32xf32>
    %555 = arith.addf %554, %532 : vector<10x32xf32>
    %c28 = arith.constant 28 : index
    %c0_233 = arith.constant 0 : index
    %556 = vector.load %arg8[%c28, %c0_233] : memref<39x96xf32, #tpu.memory_space<vmem>>, vector<1x32xf32>
    %c29 = arith.constant 29 : index
    %c0_234 = arith.constant 0 : index
    %557 = vector.load %arg8[%c29, %c0_234] : memref<39x96xf32, #tpu.memory_space<vmem>>, vector<1x32xf32>
    %cst_235 = arith.constant dense<0.000000e+00> : vector<10xf32>
    %558 = vector.multi_reduction <add>, %555, %cst_235 [1] : vector<10x32xf32> to vector<10xf32>
    %559 = vector.shape_cast %558 : vector<10xf32> to vector<10x1xf32>
    %cst_236 = arith.constant 3.200000e+01 : f32
    %560 = vector.broadcast %cst_236 : f32 to vector<10x1xf32>
    %561 = arith.divf %559, %560 : vector<10x1xf32>
    %562 = vector.broadcast %561 : vector<10x1xf32> to vector<10x32xf32>
    %563 = arith.subf %555, %562 : vector<10x32xf32>
    %564 = arith.mulf %563, %563 : vector<10x32xf32>
    %cst_237 = arith.constant dense<0.000000e+00> : vector<10xf32>
    %565 = vector.multi_reduction <add>, %564, %cst_237 [1] : vector<10x32xf32> to vector<10xf32>
    %566 = vector.shape_cast %565 : vector<10xf32> to vector<10x1xf32>
    %cst_238 = arith.constant 3.200000e+01 : f32
    %567 = vector.broadcast %cst_238 : f32 to vector<10x1xf32>
    %568 = arith.divf %566, %567 : vector<10x1xf32>
    %cst_239 = arith.constant 9.99999974E-6 : f32
    %569 = vector.broadcast %cst_239 : f32 to vector<10x1xf32>
    %570 = arith.addf %568, %569 : vector<10x1xf32>
    %571 = math.rsqrt %570 : vector<10x1xf32>
    %572 = vector.broadcast %571 : vector<10x1xf32> to vector<10x32xf32>
    %573 = arith.mulf %563, %572 : vector<10x32xf32>
    %574 = vector.broadcast %556 : vector<1x32xf32> to vector<10x32xf32>
    %575 = arith.mulf %573, %574 : vector<10x32xf32>
    %576 = vector.broadcast %557 : vector<1x32xf32> to vector<10x32xf32>
    %577 = arith.addf %575, %576 : vector<10x32xf32>
    %578 = arith.truncf %577 : vector<10x32xf32> to vector<10x32xbf16>
    %c3_240 = arith.constant 3 : index
    %c0_241 = arith.constant 0 : index
    %c0_242 = arith.constant 0 : index
    %579 = vector.load %arg11[%c3_240, %c0_241, %c0_242] : memref<4x32x64xbf16, #tpu.memory_space<vmem>>, vector<1x32x64xbf16>
    %580 = vector.shape_cast %579 : vector<1x32x64xbf16> to vector<32x64xbf16>
    %cst_243 = arith.constant dense<0.000000e+00> : vector<10x64xf32>
    %581 = tpu.matmul %578, %580, %cst_243 {dimension_numbers = #tpu.dot_dimension_numbers<[1], [0], [0], [1], [0, 0, 1, 1], [], []>} : vector<10x32xbf16>, vector<32x64xbf16>, vector<10x64xf32> -> vector<10x64xf32>
    %c30 = arith.constant 30 : index
    %c0_244 = arith.constant 0 : index
    %582 = vector.load %arg8[%c30, %c0_244] : memref<39x96xf32, #tpu.memory_space<vmem>>, vector<1x64xf32>
    %583 = vector.broadcast %582 : vector<1x64xf32> to vector<10x64xf32>
    %584 = arith.addf %581, %583 : vector<10x64xf32>
    %cst_245 = arith.constant 0.000000e+00 : f32
    %585 = vector.broadcast %cst_245 : f32 to vector<10x64xf32>
    %586 = arith.maximumf %584, %585 : vector<10x64xf32>
    %587 = arith.truncf %586 : vector<10x64xf32> to vector<10x64xbf16>
    %c3_246 = arith.constant 3 : index
    %c0_247 = arith.constant 0 : index
    %c0_248 = arith.constant 0 : index
    %588 = vector.load %arg12[%c3_246, %c0_247, %c0_248] : memref<4x64x32xbf16, #tpu.memory_space<vmem>>, vector<1x64x32xbf16>
    %589 = vector.shape_cast %588 : vector<1x64x32xbf16> to vector<64x32xbf16>
    %cst_249 = arith.constant dense<0.000000e+00> : vector<10x32xf32>
    %590 = tpu.matmul %587, %589, %cst_249 {dimension_numbers = #tpu.dot_dimension_numbers<[1], [0], [0], [1], [0, 0, 1, 1], [], []>} : vector<10x64xbf16>, vector<64x32xbf16>, vector<10x32xf32> -> vector<10x32xf32>
    %c31 = arith.constant 31 : index
    %c0_250 = arith.constant 0 : index
    %591 = vector.load %arg8[%c31, %c0_250] : memref<39x96xf32, #tpu.memory_space<vmem>>, vector<1x32xf32>
    %592 = vector.broadcast %591 : vector<1x32xf32> to vector<10x32xf32>
    %593 = arith.addf %590, %592 : vector<10x32xf32>
    %594 = arith.addf %555, %593 : vector<10x32xf32>
    %c36 = arith.constant 36 : index
    %c0_251 = arith.constant 0 : index
    %595 = vector.load %arg8[%c36, %c0_251] : memref<39x96xf32, #tpu.memory_space<vmem>>, vector<1x32xf32>
    %c37 = arith.constant 37 : index
    %c0_252 = arith.constant 0 : index
    %596 = vector.load %arg8[%c37, %c0_252] : memref<39x96xf32, #tpu.memory_space<vmem>>, vector<1x32xf32>
    %cst_253 = arith.constant dense<0.000000e+00> : vector<10xf32>
    %597 = vector.multi_reduction <add>, %594, %cst_253 [1] : vector<10x32xf32> to vector<10xf32>
    %598 = vector.shape_cast %597 : vector<10xf32> to vector<10x1xf32>
    %cst_254 = arith.constant 3.200000e+01 : f32
    %599 = vector.broadcast %cst_254 : f32 to vector<10x1xf32>
    %600 = arith.divf %598, %599 : vector<10x1xf32>
    %601 = vector.broadcast %600 : vector<10x1xf32> to vector<10x32xf32>
    %602 = arith.subf %594, %601 : vector<10x32xf32>
    %603 = arith.mulf %602, %602 : vector<10x32xf32>
    %cst_255 = arith.constant dense<0.000000e+00> : vector<10xf32>
    %604 = vector.multi_reduction <add>, %603, %cst_255 [1] : vector<10x32xf32> to vector<10xf32>
    %605 = vector.shape_cast %604 : vector<10xf32> to vector<10x1xf32>
    %cst_256 = arith.constant 3.200000e+01 : f32
    %606 = vector.broadcast %cst_256 : f32 to vector<10x1xf32>
    %607 = arith.divf %605, %606 : vector<10x1xf32>
    %cst_257 = arith.constant 9.99999974E-6 : f32
    %608 = vector.broadcast %cst_257 : f32 to vector<10x1xf32>
    %609 = arith.addf %607, %608 : vector<10x1xf32>
    %610 = math.rsqrt %609 : vector<10x1xf32>
    %611 = vector.broadcast %610 : vector<10x1xf32> to vector<10x32xf32>
    %612 = arith.mulf %602, %611 : vector<10x32xf32>
    %613 = vector.broadcast %595 : vector<1x32xf32> to vector<10x32xf32>
    %614 = arith.mulf %612, %613 : vector<10x32xf32>
    %615 = vector.broadcast %596 : vector<1x32xf32> to vector<10x32xf32>
    %616 = arith.addf %614, %615 : vector<10x32xf32>
    %c21_258 = arith.constant 21 : index
    %c0_259 = arith.constant 0 : index
    %617 = vector.load %arg6[%c21_258, %c0_259] : memref<53x32xf32, #tpu.memory_space<vmem>>, vector<32x32xf32>
    %cst_260 = arith.constant dense<0.000000e+00> : vector<10x32xf32>
    %618 = tpu.matmul %616, %617, %cst_260 {dimension_numbers = #tpu.dot_dimension_numbers<[1], [0], [0], [1], [0, 0, 1, 1], [], []>} : vector<10x32xf32>, vector<32x32xf32>, vector<10x32xf32> -> vector<10x32xf32>
    %c38 = arith.constant 38 : index
    %c0_261 = arith.constant 0 : index
    %619 = vector.load %arg8[%c38, %c0_261] : memref<39x96xf32, #tpu.memory_space<vmem>>, vector<1x32xf32>
    %620 = vector.broadcast %619 : vector<1x32xf32> to vector<10x32xf32>
    %621 = arith.addf %618, %620 : vector<10x32xf32>
    %cst_262 = arith.constant dense<0xFF800000> : vector<10xf32>
    %622 = vector.multi_reduction <maximumf>, %621, %cst_262 [1] : vector<10x32xf32> to vector<10xf32>
    %623 = vector.shape_cast %622 : vector<10xf32> to vector<10x1xf32>
    %624 = tpu.iota {dimensions = array<i32: 1>} : vector<10x32xi32>
    %625 = vector.broadcast %623 : vector<10x1xf32> to vector<10x32xf32>
    %626 = arith.cmpf oeq, %621, %625 : vector<10x32xf32>
    %c32_i32 = arith.constant 32 : i32
    %627 = vector.broadcast %c32_i32 : i32 to vector<10x32xi32>
    %628 = arith.select %626, %624, %627 : vector<10x32xi1>, vector<10x32xi32>
    %cst_263 = arith.constant dense<2147483647> : vector<10xi32>
    %629 = vector.multi_reduction <minsi>, %628, %cst_263 [1] : vector<10x32xi32> to vector<10xi32>
    %630 = vector.shape_cast %629 : vector<10xi32> to vector<10x1xi32>
    %631 = arith.sitofp %630 : vector<10x1xi32> to vector<10x1xf32>
    %cst_264 = arith.constant dense<0.000000e+00> : vector<10x1xf32>
    %632 = tpu.matmul %51, %631, %cst_264 {dimension_numbers = #tpu.dot_dimension_numbers<[1], [0], [0], [1], [0, 0, 1, 1], [], []>} : vector<10x10xf32>, vector<10x1xf32>, vector<10x1xf32> -> vector<10x1xf32>
    %633 = arith.cmpf one, %631, %632 : vector<10x1xf32>
    %c0_i32_265 = arith.constant 0 : i32
    %634 = vector.broadcast %c0_i32_265 : i32 to vector<10x1xi32>
    %635 = arith.cmpi ne, %630, %634 : vector<10x1xi32>
    %636 = arith.andi %633, %635 : vector<10x1xi1>
    %637 = arith.extui %636 : vector<10x1xi1> to vector<10x1xi32>
    %638 = tpu.iota {dimensions = array<i32: 0>} : vector<10x1xi32>
    %c0_i32_266 = arith.constant 0 : i32
    %639 = vector.broadcast %c0_i32_266 : i32 to vector<10x1xi32>
    %640 = arith.cmpi eq, %638, %639 : vector<10x1xi32>
    %c1_i32_267 = arith.constant 1 : i32
    %641 = vector.broadcast %c1_i32_267 : i32 to vector<10x1xi32>
    %642 = arith.select %640, %641, %637 : vector<10x1xi1>, vector<10x1xi32>
    %643 = tpu.concatenate %630, %642 in 1 : vector<10x1xi32>, vector<10x1xi32> -> vector<10x2xi32>
    %c0_268 = arith.constant 0 : index
    %c0_269 = arith.constant 0 : index
    %c0_270 = arith.constant 0 : index
    %644 = vector.load %arg14[%c0_268, %c0_269, %c0_270] : memref<1x10x2xi32, #tpu.memory_space<vmem>>, vector<1x10x2xi32>
    %645 = vector.shape_cast %644 : vector<1x10x2xi32> to vector<10x2xi32>
    %646 = vector.shape_cast %643 : vector<10x2xi32> to vector<1x10x2xi32>
    tpu.vector_store %arg14[%c0_268, %c0_269, %c0_270], %646 {strides = array<i32>} : memref<1x10x2xi32, #tpu.memory_space<vmem>>, vector<1x10x2xi32>,
    return
  }
  func.func @transform_0(%arg0: i32, %arg1: memref<2xi32, #tpu.memory_space<smem>>) -> (i32, i32, i32) {
    %c0_i32 = arith.constant 0 : i32
    %c0_i32_0 = arith.constant 0 : i32
    %c0_i32_1 = arith.constant 0 : i32
    return %arg0, %c0_i32, %c0_i32_0 : i32, i32, i32
  }
  func.func @transform_1(%arg0: i32, %arg1: memref<2xi32, #tpu.memory_space<smem>>) -> (i32, i32, i32) {
    %c0_i32 = arith.constant 0 : i32
    %c0_i32_0 = arith.constant 0 : i32
    %c0_i32_1 = arith.constant 0 : i32
    %c0_i32_2 = arith.constant 0 : i32
    return %c0_i32, %c0_i32_0, %c0_i32_1 : i32, i32, i32
  }
  func.func @transform_2(%arg0: i32, %arg1: memref<2xi32, #tpu.memory_space<smem>>) -> (i32, i32) {
    %c0_i32 = arith.constant 0 : i32
    %c0_i32_0 = arith.constant 0 : i32
    %c0_i32_1 = arith.constant 0 : i32
    return %c0_i32, %c0_i32_0 : i32, i32
  }
  func.func @transform_3(%arg0: i32, %arg1: memref<2xi32, #tpu.memory_space<smem>>) -> (i32, i32, i32) {
    %c0_i32 = arith.constant 0 : i32
    %c0_i32_0 = arith.constant 0 : i32
    %c0_i32_1 = arith.constant 0 : i32
    %c0_i32_2 = arith.constant 0 : i32
    return %c0_i32, %c0_i32_0, %c0_i32_1 : i32, i32, i32
  }
  func.func @transform_4(%arg0: i32, %arg1: memref<2xi32, #tpu.memory_space<smem>>) -> (i32, i32) {
    %c0_i32 = arith.constant 0 : i32
    %c0_i32_0 = arith.constant 0 : i32
    %c0_i32_1 = arith.constant 0 : i32
    return %c0_i32, %c0_i32_0 : i32, i32
  }
  func.func @transform_5(%arg0: i32, %arg1: memref<2xi32, #tpu.memory_space<smem>>) -> (i32, i32, i32) {
    %c0_i32 = arith.constant 0 : i32
    %c0_i32_0 = arith.constant 0 : i32
    %c0_i32_1 = arith.constant 0 : i32
    %c0_i32_2 = arith.constant 0 : i32
    return %c0_i32, %c0_i32_0, %c0_i32_1 : i32, i32, i32
  }
  func.func @transform_6(%arg0: i32, %arg1: memref<2xi32, #tpu.memory_space<smem>>) -> (i32, i32) {
    %c0_i32 = arith.constant 0 : i32
    %c0_i32_0 = arith.constant 0 : i32
    %c0_i32_1 = arith.constant 0 : i32
    return %c0_i32, %c0_i32_0 : i32, i32
  }
  func.func @transform_7(%arg0: i32, %arg1: memref<2xi32, #tpu.memory_space<smem>>) -> (i32, i32, i32) {
    %c0_i32 = arith.constant 0 : i32
    %c0_i32_0 = arith.constant 0 : i32
    %c0_i32_1 = arith.constant 0 : i32
    %c0_i32_2 = arith.constant 0 : i32
    return %c0_i32, %c0_i32_0, %c0_i32_1 : i32, i32, i32
  }
  func.func @transform_8(%arg0: i32, %arg1: memref<2xi32, #tpu.memory_space<smem>>) -> (i32, i32, i32) {
    %c0_i32 = arith.constant 0 : i32
    %c0_i32_0 = arith.constant 0 : i32
    %c0_i32_1 = arith.constant 0 : i32
    %c0_i32_2 = arith.constant 0 : i32
    return %c0_i32, %c0_i32_0, %c0_i32_1 : i32, i32, i32
  }
  func.func @transform_9(%arg0: i32, %arg1: memref<2xi32, #tpu.memory_space<smem>>) -> (i32, i32, i32) {
    %c0_i32 = arith.constant 0 : i32
    %c0_i32_0 = arith.constant 0 : i32
    %c0_i32_1 = arith.constant 0 : i32
    %c0_i32_2 = arith.constant 0 : i32
    return %c0_i32, %c0_i32_0, %c0_i32_1 : i32, i32, i32
  }
  func.func @transform_10(%arg0: i32, %arg1: memref<2xi32, #tpu.memory_space<smem>>) -> (i32, i32, i32) {
    %c0_i32 = arith.constant 0 : i32
    %c0_i32_0 = arith.constant 0 : i32
    %c0_i32_1 = arith.constant 0 : i32
    %c0_i32_2 = arith.constant 0 : i32
    return %c0_i32, %c0_i32_0, %c0_i32_1 : i32, i32, i32
  }
  func.func @transform_11(%arg0: i32, %arg1: memref<2xi32, #tpu.memory_space<smem>>) -> (i32, i32, i32) {
    %c0_i32 = arith.constant 0 : i32
    %c0_i32_0 = arith.constant 0 : i32
    %c0_i32_1 = arith.constant 0 : i32
    %c0_i32_2 = arith.constant 0 : i32
    return %c0_i32, %c0_i32_0, %c0_i32_1 : i32, i32, i32
  }
  func.func @transform_12(%arg0: i32, %arg1: memref<2xi32, #tpu.memory_space<smem>>) -> (i32, i32, i32) {
    %c0_i32 = arith.constant 0 : i32
    %c0_i32_0 = arith.constant 0 : i32
    %c0_i32_1 = arith.constant 0 : i32
    return %arg0, %c0_i32, %c0_i32_0 : i32, i32, i32
  }
}

</mosaic_0001>

<llo_original>
// kernel: _lambda_.1
$region0: #{_lambda_.1}
  #allocation0 [shape = 'u32[]', space=smem, size = 0x4, offset = 0x4, fixed_abs, tag = 'smem constant byte address 0x4 - core index']
  #allocation1 [shape = 'u32[144,128]{1,0:T(1,128)}', space=vmem, size = 0x12000, scoped, tag = 'internal scratch']
  #allocation2 [shape = 's32[1]{0}', space=sflag, size = 0x4, scoped, tag = 'scoped memory for _lambda_.1']
  #allocation3 [shape = 'u8[512]{0}', space=smem, size = 0x200, scoped, tag = 'prefetched SMEM operand 0']
  %s0 = inlined_call_operand.vmem [shape: s32[2], index: 0, kind: input, shape index: {}]
  %s1 = inlined_call_operand.vmem [shape: s32[2,10,16], index: 1, kind: input, shape index: {}]
  %s2 = inlined_call_operand.hbm [shape: f32[2,16,64], index: 2, kind: input, shape index: {}]
  %s3 = inlined_call_operand.hbm [shape: f32[32,8], index: 3, kind: input, shape index: {}]
  %s4 = inlined_call_operand.hbm [shape: f32[4,6,11], index: 4, kind: input, shape index: {}]
  %s5 = inlined_call_operand.hbm [shape: f32[53,32], index: 5, kind: input, shape index: {}]
  %s6 = inlined_call_operand.hbm [shape: f32[2,40,32], index: 6, kind: input, shape index: {}]
  %s7 = inlined_call_operand.hbm [shape: f32[39,96], index: 7, kind: input, shape index: {}]
  %s8 = inlined_call_operand.hbm [shape: bf16[4,32,96], index: 8, kind: input, shape index: {}]
  %s9 = inlined_call_operand.hbm [shape: f32[4,3,32], index: 9, kind: input, shape index: {}]
  %s10 = inlined_call_operand.hbm [shape: bf16[4,32,64], index: 10, kind: input, shape index: {}]
  %s11 = inlined_call_operand.hbm [shape: bf16[4,64,32], index: 11, kind: input, shape index: {}]
  %s12 = inlined_call_operand.vmem [shape: bf16[4,32,32], index: 12, kind: input, shape index: {}]
  %s13 = inlined_call_operand.vmem [shape: s32[2,10,2], index: 13, kind: output, shape index: {}]
  %s14 = sld [smem:[#allocation0]]
  $region121: #{_lambda_.1} parent=0
    _
  %s16 = ssub.s32 1, %s14
  %s17 = scalar_select 0, %s16, %s14
  %s18 = sshll.u32 %s0, 4
  %s19 = int_to_ptr.vmem [resolvable:$true] %s18
  %21 = dma.vmem_to_smem %s19, 16, [#allocation3], [#allocation2]
  %22 = dma.done [#allocation2], 16
  %23 = sfence
  $region1: #{_lambda_.1} parent=0
    #allocation4 [shape = 'u8[16384]{0}', space=vmem, size = 0x4000, scoped, tag = 'input window, operand 2, single buffered']
    #allocation5 [shape = 's32[2]{0}', space=sflag, size = 0x8, scoped, tag = 'scoped memory for _lambda_.1']
    #allocation6 [shape = 'u8[16384]{0}', space=vmem, size = 0x4000, scoped, tag = 'input window, operand 3, single buffered']
    #allocation7 [shape = 's32[1]{0}', space=sflag, size = 0x4, scoped, tag = 'scoped memory for _lambda_.1']
    #allocation8 [shape = 'u8[16384]{0}', space=vmem, size = 0x4000, scoped, tag = 'input window, operand 4, single buffered']
    #allocation9 [shape = 'u8[28672]{0}', space=vmem, size = 0x7000, scoped, tag = 'input window, operand 5, single buffered']
    #allocation10 [shape = 's32[1]{0}', space=sflag, size = 0x4, scoped, tag = 'scoped memory for _lambda_.1']
    #allocation11 [shape = 'u8[40960]{0}', space=vmem, size = 0xa000, scoped, tag = 'input window, operand 6, single buffered']
    #allocation12 [shape = 'u8[20480]{0}', space=vmem, size = 0x5000, scoped, tag = 'input window, operand 7, single buffered']
    #allocation13 [shape = 's32[1]{0}', space=sflag, size = 0x4, scoped, tag = 'scoped memory for _lambda_.1']
    #allocation14 [shape = 'u8[32768]{0}', space=vmem, size = 0x8000, scoped, tag = 'input window, operand 8, single buffered']
    #allocation15 [shape = 'u8[8192]{0}', space=vmem, size = 0x2000, scoped, tag = 'input window, operand 9, single buffered']
    #allocation16 [shape = 's32[1]{0}', space=sflag, size = 0x4, scoped, tag = 'scoped memory for _lambda_.1']
    #allocation17 [shape = 'u8[32768]{0}', space=vmem, size = 0x8000, scoped, tag = 'input window, operand 10, single buffered']
    #allocation18 [shape = 'u8[65536]{0}', space=vmem, size = 0x10000, scoped, tag = 'input window, operand 11, single buffered']
    #allocation19 [shape = 's32[1]{0}', space=sflag, size = 0x4, scoped, tag = 'scoped memory for _lambda_.1']
    %24 = vsyncpa [#allocation5], 0
    %25 = vsyncpa [#allocation7], 0
    %26 = vsyncpa [#allocation10], 0
    %27 = vsyncpa [#allocation13], 0
    %28 = vsyncpa [#allocation16], 0
    %29 = vsyncpa [#allocation19], 0
    loop: start=0, step=1, limit=4
    $region2: #{_lambda_.1} parent=1 // loop_pre_header
      _
    $region3: #{_lambda_.1} parent=1 // loop_header
      %s31 = sphi 0, %s35
      %p32 = scmp.ge.s32.totalorder %s31, 4
      %s41 = sphi 0, %s43
      %s44 = sphi 0, %s41
      %s45 = sphi 0, %s44
      %s61 = sphi 0, %s45
      %s65 = sphi 0, %s65
      %s67 = sphi 0, %s65
      %s68 = sphi 0, %s67
      %s82 = sphi 0, %s68
      %s86 = sphi 0, %s86
      %s88 = sphi 0, %s86
      %s89 = sphi 0, %s88
      %s103 = sphi 0, %s89
      %s107 = sphi 0, %s107
      %s109 = sphi 0, %s107
      %s110 = sphi 0, %s109
      %s124 = sphi 0, %s110
      %s128 = sphi 0, %s128
      %s130 = sphi 0, %s128
      %s131 = sphi 0, %s130
      %s145 = sphi 0, %s131
      %s149 = sphi 0, %s149
      %s151 = sphi 0, %s149
      %s152 = sphi 0, %s151
      %s166 = sphi 0, %s152
      %s170 = sphi 0, %s170
      %s172 = sphi 0, %s170
      %s173 = sphi 0, %s172
      %s187 = sphi 0, %s173
      %s191 = sphi 0, %s191
      %s193 = sphi 0, %s191
      %s194 = sphi 0, %s193
      %s208 = sphi 0, %s194
      %s212 = sphi 0, %s212
      %s214 = sphi 0, %s212
      %s215 = sphi 0, %s214
      %s229 = sphi 0, %s215
      %s233 = sphi 0, %s233
      %s235 = sphi 0, %s233
      %s236 = sphi 0, %s235
      %s250 = sphi 0, %s236
      %s254 = sphi 0, %s254
      %s256 = sphi 0, %s254
      %s257 = sphi 0, %s256
      %s271 = sphi 0, %s257
      %s275 = sphi 0, %s275
      %s277 = sphi 0, %s275
      %s278 = sphi 0, %s277
      %s292 = sphi 0, %s278
      %s298 = sphi 0, %s300
      %s301 = sphi 0, %s298
      %s302 = sphi 0, %s301
      %s318 = sphi 0, %s302
    $region4: #{_lambda_.1} parent=1 // loop_header_branch
      %34 = sbr.rel (%p32) target = $region8
    $region5: #{_lambda_.1} parent=1 // loop_body
      %s36 = ssub.s32 %s31, 1
      %s37 = ssub.s32 %s31, 2
      %s38 = sadd.s32 %s31, 1
      %s39 = ssub.s32 %s31, %s38
      %p40 = scmp.eq.s32.totalorder %s39, 0
      %s42 = sadd.s32 %s41, 1
      %s43 = scalar_select %p40, %s41, %s42
      %p46 = pneg %p40
      %p47 = scmp.eq.s32.totalorder %s31, 1
      %p48 = por %p46, %p47
      %p49 = scmp.ne.s32.totalorder %s41, %s44
      %p50 = scmp.eq.s32.totalorder %s31, 0
      %p51 = por %p49, %p50
      %p52 = scmp.ne.s32.totalorder %s41, %s44
      %p53 = scmp.eq.s32.totalorder %s36, 1
      %p54 = por %p52, %p53
      %p55 = scmp.ne.s32.totalorder %s44, %s45
      %p56 = scmp.eq.s32.totalorder %s36, 0
      %p57 = por %p55, %p56
      %p58 = scmp.ne.s32.totalorder %s44, %s45
      %p59 = scmp.eq.s32.totalorder %s37, 1
      %p60 = por %p58, %p59
      %p62 = scmp.ne.s32.totalorder %s45, %s61
      %p63 = scmp.eq.s32.totalorder %s37, 0
      %p64 = por %p62, %p63
      %s66 = sadd.s32 %s65, 1
      %p69 = scmp.eq.s32.totalorder %s31, 1
      %p70 = scmp.ne.s32.totalorder %s65, %s67
      %p71 = scmp.eq.s32.totalorder %s31, 0
      %p72 = por %p70, %p71
      %p73 = scmp.ne.s32.totalorder %s65, %s67
      %p74 = scmp.eq.s32.totalorder %s36, 1
      %p75 = por %p73, %p74
      %p76 = scmp.ne.s32.totalorder %s67, %s68
      %p77 = scmp.eq.s32.totalorder %s36, 0
      %p78 = por %p76, %p77
      %p79 = scmp.ne.s32.totalorder %s67, %s68
      %p80 = scmp.eq.s32.totalorder %s37, 1
      %p81 = por %p79, %p80
      %p83 = scmp.ne.s32.totalorder %s68, %s82
      %p84 = scmp.eq.s32.totalorder %s37, 0
      %p85 = por %p83, %p84
      %s87 = sadd.s32 %s86, 1
      %p90 = scmp.eq.s32.totalorder %s31, 1
      %p91 = scmp.ne.s32.totalorder %s86, %s88
      %p92 = scmp.eq.s32.totalorder %s31, 0
      %p93 = por %p91, %p92
      %p94 = scmp.ne.s32.totalorder %s86, %s88
      %p95 = scmp.eq.s32.totalorder %s36, 1
      %p96 = por %p94, %p95
      %p97 = scmp.ne.s32.totalorder %s88, %s89
      %p98 = scmp.eq.s32.totalorder %s36, 0
      %p99 = por %p97, %p98
      %p100 = scmp.ne.s32.totalorder %s88, %s89
      %p101 = scmp.eq.s32.totalorder %s37, 1
      %p102 = por %p100, %p101
      %p104 = scmp.ne.s32.totalorder %s89, %s103
      %p105 = scmp.eq.s32.totalorder %s37, 0
      %p106 = por %p104, %p105
      %s108 = sadd.s32 %s107, 1
      %p111 = scmp.eq.s32.totalorder %s31, 1
      %p112 = scmp.ne.s32.totalorder %s107, %s109
      %p113 = scmp.eq.s32.totalorder %s31, 0
      %p114 = por %p112, %p113
      %p115 = scmp.ne.s32.totalorder %s107, %s109
      %p116 = scmp.eq.s32.totalorder %s36, 1
      %p117 = por %p115, %p116
      %p118 = scmp.ne.s32.totalorder %s109, %s110
      %p119 = scmp.eq.s32.totalorder %s36, 0
      %p120 = por %p118, %p119
      %p121 = scmp.ne.s32.totalorder %s109, %s110
      %p122 = scmp.eq.s32.totalorder %s37, 1
      %p123 = por %p121, %p122
      %p125 = scmp.ne.s32.totalorder %s110, %s124
      %p126 = scmp.eq.s32.totalorder %s37, 0
      %p127 = por %p125, %p126
      %s129 = sadd.s32 %s128, 1
      %p132 = scmp.eq.s32.totalorder %s31, 1
      %p133 = scmp.ne.s32.totalorder %s128, %s130
      %p134 = scmp.eq.s32.totalorder %s31, 0
      %p135 = por %p133, %p134
      %p136 = scmp.ne.s32.totalorder %s128, %s130
      %p137 = scmp.eq.s32.totalorder %s36, 1
      %p138 = por %p136, %p137
      %p139 = scmp.ne.s32.totalorder %s130, %s131
      %p140 = scmp.eq.s32.totalorder %s36, 0
      %p141 = por %p139, %p140
      %p142 = scmp.ne.s32.totalorder %s130, %s131
      %p143 = scmp.eq.s32.totalorder %s37, 1
      %p144 = por %p142, %p143
      %p146 = scmp.ne.s32.totalorder %s131, %s145
      %p147 = scmp.eq.s32.totalorder %s37, 0
      %p148 = por %p146, %p147
      %s150 = sadd.s32 %s149, 1
      %p153 = scmp.eq.s32.totalorder %s31, 1
      %p154 = scmp.ne.s32.totalorder %s149, %s151
      %p155 = scmp.eq.s32.totalorder %s31, 0
      %p156 = por %p154, %p155
      %p157 = scmp.ne.s32.totalorder %s149, %s151
      %p158 = scmp.eq.s32.totalorder %s36, 1
      %p159 = por %p157, %p158
      %p160 = scmp.ne.s32.totalorder %s151, %s152
      %p161 = scmp.eq.s32.totalorder %s36, 0
      %p162 = por %p160, %p161
      %p163 = scmp.ne.s32.totalorder %s151, %s152
      %p164 = scmp.eq.s32.totalorder %s37, 1
      %p165 = por %p163, %p164
      %p167 = scmp.ne.s32.totalorder %s152, %s166
      %p168 = scmp.eq.s32.totalorder %s37, 0
      %p169 = por %p167, %p168
      %s171 = sadd.s32 %s170, 1
      %p174 = scmp.eq.s32.totalorder %s31, 1
      %p175 = scmp.ne.s32.totalorder %s170, %s172
      %p176 = scmp.eq.s32.totalorder %s31, 0
      %p177 = por %p175, %p176
      %p178 = scmp.ne.s32.totalorder %s170, %s172
      %p179 = scmp.eq.s32.totalorder %s36, 1
      %p180 = por %p178, %p179
      %p181 = scmp.ne.s32.totalorder %s172, %s173
      %p182 = scmp.eq.s32.totalorder %s36, 0
      %p183 = por %p181, %p182
      %p184 = scmp.ne.s32.totalorder %s172, %s173
      %p185 = scmp.eq.s32.totalorder %s37, 1
      %p186 = por %p184, %p185
      %p188 = scmp.ne.s32.totalorder %s173, %s187
      %p189 = scmp.eq.s32.totalorder %s37, 0
      %p190 = por %p188, %p189
      %s192 = sadd.s32 %s191, 1
      %p195 = scmp.eq.s32.totalorder %s31, 1
      %p196 = scmp.ne.s32.totalorder %s191, %s193
      %p197 = scmp.eq.s32.totalorder %s31, 0
      %p198 = por %p196, %p197
      %p199 = scmp.ne.s32.totalorder %s191, %s193
      %p200 = scmp.eq.s32.totalorder %s36, 1
      %p201 = por %p199, %p200
      %p202 = scmp.ne.s32.totalorder %s193, %s194
      %p203 = scmp.eq.s32.totalorder %s36, 0
      %p204 = por %p202, %p203
      %p205 = scmp.ne.s32.totalorder %s193, %s194
      %p206 = scmp.eq.s32.totalorder %s37, 1
      %p207 = por %p205, %p206
      %p209 = scmp.ne.s32.totalorder %s194, %s208
      %p210 = scmp.eq.s32.totalorder %s37, 0
      %p211 = por %p209, %p210
      %s213 = sadd.s32 %s212, 1
      %p216 = scmp.eq.s32.totalorder %s31, 1
      %p217 = scmp.ne.s32.totalorder %s212, %s214
      %p218 = scmp.eq.s32.totalorder %s31, 0
      %p219 = por %p217, %p218
      %p220 = scmp.ne.s32.totalorder %s212, %s214
      %p221 = scmp.eq.s32.totalorder %s36, 1
      %p222 = por %p220, %p221
      %p223 = scmp.ne.s32.totalorder %s214, %s215
      %p224 = scmp.eq.s32.totalorder %s36, 0
      %p225 = por %p223, %p224
      %p226 = scmp.ne.s32.totalorder %s214, %s215
      %p227 = scmp.eq.s32.totalorder %s37, 1
      %p228 = por %p226, %p227
      %p230 = scmp.ne.s32.totalorder %s215, %s229
      %p231 = scmp.eq.s32.totalorder %s37, 0
      %p232 = por %p230, %p231
      %s234 = sadd.s32 %s233, 1
      %p237 = scmp.eq.s32.totalorder %s31, 1
      %p238 = scmp.ne.s32.totalorder %s233, %s235
      %p239 = scmp.eq.s32.totalorder %s31, 0
      %p240 = por %p238, %p239
      %p241 = scmp.ne.s32.totalorder %s233, %s235
      %p242 = scmp.eq.s32.totalorder %s36, 1
      %p243 = por %p241, %p242
      %p244 = scmp.ne.s32.totalorder %s235, %s236
      %p245 = scmp.eq.s32.totalorder %s36, 0
      %p246 = por %p244, %p245
      %p247 = scmp.ne.s32.totalorder %s235, %s236
      %p248 = scmp.eq.s32.totalorder %s37, 1
      %p249 = por %p247, %p248
      %p251 = scmp.ne.s32.totalorder %s236, %s250
      %p252 = scmp.eq.s32.totalorder %s37, 0
      %p253 = por %p251, %p252
      %s255 = sadd.s32 %s254, 1
      %p258 = scmp.eq.s32.totalorder %s31, 1
      %p259 = scmp.ne.s32.totalorder %s254, %s256
      %p260 = scmp.eq.s32.totalorder %s31, 0
      %p261 = por %p259, %p260
      %p262 = scmp.ne.s32.totalorder %s254, %s256
      %p263 = scmp.eq.s32.totalorder %s36, 1
      %p264 = por %p262, %p263
      %p265 = scmp.ne.s32.totalorder %s256, %s257
      %p266 = scmp.eq.s32.totalorder %s36, 0
      %p267 = por %p265, %p266
      %p268 = scmp.ne.s32.totalorder %s256, %s257
      %p269 = scmp.eq.s32.totalorder %s37, 1
      %p270 = por %p268, %p269
      %p272 = scmp.ne.s32.totalorder %s257, %s271
      %p273 = scmp.eq.s32.totalorder %s37, 0
      %p274 = por %p272, %p273
      %s276 = sadd.s32 %s275, 1
      %p279 = scmp.eq.s32.totalorder %s31, 1
      %p280 = scmp.ne.s32.totalorder %s275, %s277
      %p281 = scmp.eq.s32.totalorder %s31, 0
      %p282 = por %p280, %p281
      %p283 = scmp.ne.s32.totalorder %s275, %s277
      %p284 = scmp.eq.s32.totalorder %s36, 1
      %p285 = por %p283, %p284
      %p286 = scmp.ne.s32.totalorder %s277, %s278
      %p287 = scmp.eq.s32.totalorder %s36, 0
      %p288 = por %p286, %p287
      %p289 = scmp.ne.s32.totalorder %s277, %s278
      %p290 = scmp.eq.s32.totalorder %s37, 1
      %p291 = por %p289, %p290
      %p293 = scmp.ne.s32.totalorder %s278, %s292
      %p294 = scmp.eq.s32.totalorder %s37, 0
      %p295 = por %p293, %p294
      %s296 = ssub.s32 %s31, %s38
      %p297 = scmp.eq.s32.totalorder %s296, 0
      %s299 = sadd.s32 %s298, 1
      %s300 = scalar_select %p297, %s298, %s299
      %p303 = pneg %p297
      %p304 = scmp.eq.s32.totalorder %s31, 1
      %p305 = por %p303, %p304
      %p306 = scmp.ne.s32.totalorder %s298, %s301
      %p307 = scmp.eq.s32.totalorder %s31, 0
      %p308 = por %p306, %p307
      %p309 = scmp.ne.s32.totalorder %s298, %s301
      %p310 = scmp.eq.s32.totalorder %s36, 1
      %p311 = por %p309, %p310
      %p312 = scmp.ne.s32.totalorder %s301, %s302
      %p313 = scmp.eq.s32.totalorder %s36, 0
      %p314 = por %p312, %p313
      %p315 = scmp.ne.s32.totalorder %s301, %s302
      %p316 = scmp.eq.s32.totalorder %s37, 1
      %p317 = por %p315, %p316
      %p319 = scmp.ne.s32.totalorder %s302, %s318
      %p320 = scmp.eq.s32.totalorder %s37, 0
      %p321 = por %p319, %p320
      %p322 = scmp.le.s32.totalorder 1, %s31
      %p323 = scmp.lt.s32.totalorder %s31, 3
      %p324 = pnand %p322, %p323
      %p325 = pneg %p324
      // Predicated region
      $region9: #{_lambda_.1} parent=5 // pred_check
        _
      $region10: #{_lambda_.1} parent=5 // pred_check_branch
        %327 = sbr.rel (%p324) target = $region12
      $region11: #{_lambda_.1} parent=5 // pred_region
        %s328 = ssub.s32 %s31, 1
        // Predicated region
        $region13: #{_lambda_.1} parent=11 // pred_check
          %p329 = pneg %p78
        $region14: #{_lambda_.1} parent=11 // pred_check_branch
          %331 = sbr.rel (%p329) target = $region16
        $region15: #{_lambda_.1} parent=11 // pred_region
          %s333 = ssub.s32 512, 512
          %334 = vsyncadd [#allocation5], %s333
          %s335 = sshll.u32 [#allocation4], 4
          %s336 = int_to_ptr.vmem [resolvable:$true] %s335
          %341 = dma.hbm_to_vmem [thread:$0]  %s2, 512, %s336, [#allocation5], 128, 128, 8
        $region16: #{_lambda_.1} parent=11 // pred_fallthru
          _
        // Predicated region
        $region17: #{_lambda_.1} parent=11 // pred_check
          %p342 = pneg %p99
        $region18: #{_lambda_.1} parent=11 // pred_check_branch
          %344 = sbr.rel (%p342) target = $region20
        $region19: #{_lambda_.1} parent=11 // pred_region
          %s346 = ssub.s32 512, 512
          %347 = vsyncadd [#allocation7], %s346
          %s348 = sshll.u32 [#allocation6], 4
          %s349 = int_to_ptr.vmem [resolvable:$true] %s348
          %354 = dma.hbm_to_vmem [thread:$0]  %s3, 512, %s349, [#allocation7], 128, 128, 8
        $region20: #{_lambda_.1} parent=11 // pred_fallthru
          _
        // Predicated region
        $region21: #{_lambda_.1} parent=11 // pred_check
          %p355 = pneg %p120
        $region22: #{_lambda_.1} parent=11 // pred_check_branch
          %357 = sbr.rel (%p355) target = $region24
        $region23: #{_lambda_.1} parent=11 // pred_region
          %s359 = ssub.s32 512, 512
          %360 = vsyncadd [#allocation7], %s359
          %s361 = sshll.u32 [#allocation8], 4
          %s362 = int_to_ptr.vmem [resolvable:$true] %s361
          %367 = dma.hbm_to_vmem [thread:$0]  %s4, 512, %s362, [#allocation7], 128, 128, 8
        $region24: #{_lambda_.1} parent=11 // pred_fallthru
          _
        // Predicated region
        $region25: #{_lambda_.1} parent=11 // pred_check
          %p368 = pneg %p141
        $region26: #{_lambda_.1} parent=11 // pred_check_branch
          %370 = sbr.rel (%p368) target = $region28
        $region27: #{_lambda_.1} parent=11 // pred_region
          %s372 = ssub.s32 896, 896
          %373 = vsyncadd [#allocation10], %s372
          %s374 = sshll.u32 [#allocation9], 4
          %s375 = int_to_ptr.vmem [resolvable:$true] %s374
          %380 = dma.hbm_to_vmem [thread:$0]  %s5, 896, %s375, [#allocation10], 128, 128, 8
        $region28: #{_lambda_.1} parent=11 // pred_fallthru
          _
        // Predicated region
        $region29: #{_lambda_.1} parent=11 // pred_check
          %p381 = pneg %p162
        $region30: #{_lambda_.1} parent=11 // pred_check_branch
          %383 = sbr.rel (%p381) target = $region32
        $region31: #{_lambda_.1} parent=11 // pred_region
          %s385 = ssub.s32 1280, 1280
          %386 = vsyncadd [#allocation10], %s385
          %s387 = sshll.u32 [#allocation11], 4
          %s388 = int_to_ptr.vmem [resolvable:$true] %s387
          %393 = dma.hbm_to_vmem [thread:$0]  %s6, 1280, %s388, [#allocation10], 128, 128, 8
        $region32: #{_lambda_.1} parent=11 // pred_fallthru
          _
        // Predicated region
        $region33: #{_lambda_.1} parent=11 // pred_check
          %p394 = pneg %p183
        $region34: #{_lambda_.1} parent=11 // pred_check_branch
          %396 = sbr.rel (%p394) target = $region36
        $region35: #{_lambda_.1} parent=11 // pred_region
          %s398 = ssub.s32 640, 640
          %399 = vsyncadd [#allocation13], %s398
          %s400 = sshll.u32 [#allocation12], 4
          %s401 = int_to_ptr.vmem [resolvable:$true] %s400
          %406 = dma.hbm_to_vmem [thread:$0]  %s7, 640, %s401, [#allocation13], 128, 128, 8
        $region36: #{_lambda_.1} parent=11 // pred_fallthru
          _
        // Predicated region
        $region37: #{_lambda_.1} parent=11 // pred_check
          %p407 = pneg %p204
        $region38: #{_lambda_.1} parent=11 // pred_check_branch
          %409 = sbr.rel (%p407) target = $region40
        $region39: #{_lambda_.1} parent=11 // pred_region
          %s411 = ssub.s32 1024, 1024
          %412 = vsyncadd [#allocation13], %s411
          %s413 = sshll.u32 [#allocation14], 4
          %s414 = int_to_ptr.vmem [resolvable:$true] %s413
          %419 = dma.hbm_to_vmem [thread:$0]  %s8, 1024, %s414, [#allocation13], 64, 64, 4
        $region40: #{_lambda_.1} parent=11 // pred_fallthru
          _
        // Predicated region
        $region41: #{_lambda_.1} parent=11 // pred_check
          %p420 = pneg %p225
        $region42: #{_lambda_.1} parent=11 // pred_check_branch
          %422 = sbr.rel (%p420) target = $region44
        $region43: #{_lambda_.1} parent=11 // pred_region
          %s424 = ssub.s32 256, 256
          %425 = vsyncadd [#allocation16], %s424
          %s426 = sshll.u32 [#allocation15], 4
          %s427 = int_to_ptr.vmem [resolvable:$true] %s426
          %432 = dma.hbm_to_vmem [thread:$0]  %s9, 256, %s427, [#allocation16], 64, 64, 4
        $region44: #{_lambda_.1} parent=11 // pred_fallthru
          _
        // Predicated region
        $region45: #{_lambda_.1} parent=11 // pred_check
          %p433 = pneg %p246
        $region46: #{_lambda_.1} parent=11 // pred_check_branch
          %435 = sbr.rel (%p433) target = $region48
        $region47: #{_lambda_.1} parent=11 // pred_region
          %s437 = ssub.s32 1024, 1024
          %438 = vsyncadd [#allocation16], %s437
          %s439 = sshll.u32 [#allocation17], 4
          %s440 = int_to_ptr.vmem [resolvable:$true] %s439
          %445 = dma.hbm_to_vmem [thread:$0]  %s10, 1024, %s440, [#allocation16], 64, 64, 4
        $region48: #{_lambda_.1} parent=11 // pred_fallthru
          _
        // Predicated region
        $region49: #{_lambda_.1} parent=11 // pred_check
          %p446 = pneg %p267
        $region50: #{_lambda_.1} parent=11 // pred_check_branch
          %448 = sbr.rel (%p446) target = $region52
        $region51: #{_lambda_.1} parent=11 // pred_region
          %s450 = ssub.s32 2048, 2048
          %451 = vsyncadd [#allocation19], %s450
          %s452 = sshll.u32 [#allocation18], 4
          %s453 = int_to_ptr.vmem [resolvable:$true] %s452
          %458 = dma.hbm_to_vmem [thread:$0]  %s11, 2048, %s453, [#allocation19], 64, 64, 4
        $region52: #{_lambda_.1} parent=11 // pred_fallthru
          _
        // Predicated region
        $region53: #{_lambda_.1} parent=11 // pred_check
          %p459 = pneg %p288
        $region54: #{_lambda_.1} parent=11 // pred_check_branch
          %461 = sbr.rel (%p459) target = $region56
        $region55: #{_lambda_.1} parent=11 // pred_region
          _
        $region56: #{_lambda_.1} parent=11 // pred_fallthru
          _
      $region12: #{_lambda_.1} parent=5 // pred_fallthru
        _
      %p462 = scmp.lt.s32.totalorder %s31, 2
      // Predicated region
      $region57: #{_lambda_.1} parent=5 // pred_check
        %p463 = pneg %p462
      $region58: #{_lambda_.1} parent=5 // pred_check_branch
        %465 = sbr.rel (%p463) target = $region60
      $region59: #{_lambda_.1} parent=5 // pred_region
        // Predicated region
        $region61: #{_lambda_.1} parent=59 // pred_check
          %p466 = pneg %p51
        $region62: #{_lambda_.1} parent=59 // pred_check_branch
          %468 = sbr.rel (%p466) target = $region64
        $region63: #{_lambda_.1} parent=59 // pred_region
          %p469 = scmp.lt.s32.totalorder %s31, 1
          %s470 = scalar_select %p469, %s31, 1
          %s471 = smul.addr %s470, 2
          %s472 = smul.addr %s471, 8
          %s473 = scalar_lea.vmem %s1, %s472
        $region64: #{_lambda_.1} parent=59 // pred_fallthru
          _
      $region60: #{_lambda_.1} parent=5 // pred_fallthru
        _
      %p474 = scmp.le.s32.totalorder 1, %s31
      %p475 = scmp.lt.s32.totalorder %s31, 3
      %p476 = pnand %p474, %p475
      %p477 = pneg %p476
      // Predicated region
      $region65: #{_lambda_.1} parent=5 // pred_check
        _
      $region66: #{_lambda_.1} parent=5 // pred_check_branch
        %479 = sbr.rel (%p476) target = $region68
      $region67: #{_lambda_.1} parent=5 // pred_region
        %s480 = ssub.s32 %s31, 1
        // Predicated region
        $region69: #{_lambda_.1} parent=67 // pred_check
          %p481 = pneg %p78
        $region70: #{_lambda_.1} parent=67 // pred_check_branch
          %483 = sbr.rel (%p481) target = $region72
        $region71: #{_lambda_.1} parent=67 // pred_region
          %484 = dma.done [#allocation5], 512
        $region72: #{_lambda_.1} parent=67 // pred_fallthru
          _
        // Predicated region
        $region73: #{_lambda_.1} parent=67 // pred_check
          %p485 = pneg %p99
        $region74: #{_lambda_.1} parent=67 // pred_check_branch
          %487 = sbr.rel (%p485) target = $region76
        $region75: #{_lambda_.1} parent=67 // pred_region
          %488 = dma.done [#allocation7], 512
        $region76: #{_lambda_.1} parent=67 // pred_fallthru
          _
        // Predicated region
        $region77: #{_lambda_.1} parent=67 // pred_check
          %p489 = pneg %p120
        $region78: #{_lambda_.1} parent=67 // pred_check_branch
          %491 = sbr.rel (%p489) target = $region80
        $region79: #{_lambda_.1} parent=67 // pred_region
          %492 = dma.done [#allocation7], 512
        $region80: #{_lambda_.1} parent=67 // pred_fallthru
          _
        // Predicated region
        $region81: #{_lambda_.1} parent=67 // pred_check
          %p493 = pneg %p141
        $region82: #{_lambda_.1} parent=67 // pred_check_branch
          %495 = sbr.rel (%p493) target = $region84
        $region83: #{_lambda_.1} parent=67 // pred_region
          %496 = dma.done [#allocation10], 896
        $region84: #{_lambda_.1} parent=67 // pred_fallthru
          _
        // Predicated region
        $region85: #{_lambda_.1} parent=67 // pred_check
          %p497 = pneg %p162
        $region86: #{_lambda_.1} parent=67 // pred_check_branch
          %499 = sbr.rel (%p497) target = $region88
        $region87: #{_lambda_.1} parent=67 // pred_region
          %500 = dma.done [#allocation10], 1280
        $region88: #{_lambda_.1} parent=67 // pred_fallthru
          _
        // Predicated region
        $region89: #{_lambda_.1} parent=67 // pred_check
          %p501 = pneg %p183
        $region90: #{_lambda_.1} parent=67 // pred_check_branch
          %503 = sbr.rel (%p501) target = $region92
        $region91: #{_lambda_.1} parent=67 // pred_region
          %504 = dma.done [#allocation13], 640
        $region92: #{_lambda_.1} parent=67 // pred_fallthru
          _
        // Predicated region
        $region93: #{_lambda_.1} parent=67 // pred_check
          %p505 = pneg %p204
        $region94: #{_lambda_.1} parent=67 // pred_check_branch
          %507 = sbr.rel (%p505) target = $region96
        $region95: #{_lambda_.1} parent=67 // pred_region
          %508 = dma.done [#allocation13], 1024
        $region96: #{_lambda_.1} parent=67 // pred_fallthru
          _
        // Predicated region
        $region97: #{_lambda_.1} parent=67 // pred_check
          %p509 = pneg %p225
        $region98: #{_lambda_.1} parent=67 // pred_check_branch
          %511 = sbr.rel (%p509) target = $region100
        $region99: #{_lambda_.1} parent=67 // pred_region
          %512 = dma.done [#allocation16], 256
        $region100: #{_lambda_.1} parent=67 // pred_fallthru
          _
        // Predicated region
        $region101: #{_lambda_.1} parent=67 // pred_check
          %p513 = pneg %p246
        $region102: #{_lambda_.1} parent=67 // pred_check_branch
          %515 = sbr.rel (%p513) target = $region104
        $region103: #{_lambda_.1} parent=67 // pred_region
          %516 = dma.done [#allocation16], 1024
        $region104: #{_lambda_.1} parent=67 // pred_fallthru
          _
        // Predicated region
        $region105: #{_lambda_.1} parent=67 // pred_check
          %p517 = pneg %p267
        $region106: #{_lambda_.1} parent=67 // pred_check_branch
          %519 = sbr.rel (%p517) target = $region108
        $region107: #{_lambda_.1} parent=67 // pred_region
          %520 = dma.done [#allocation19], 2048
        $region108: #{_lambda_.1} parent=67 // pred_fallthru
          _
        %p521 = scmp.lt.s32.totalorder %s36, 1
        %s522 = scalar_select %p521, %s36, 1
        %s523 = smul.addr %s522, 2
        %s524 = smul.addr %s523, 8
        %s525 = scalar_lea.vmem %s1, %s524
        %p526 = pneg %p57
        %p527 = pneg %p54
        %p528 = pneg %p78
        %p529 = pneg %p75
        %p530 = pneg %p99
        %p531 = pneg %p96
        %p532 = pneg %p120
        %p533 = pneg %p117
        %p534 = pneg %p141
        %p535 = pneg %p138
        %p536 = pneg %p162
        %p537 = pneg %p159
        %p538 = pneg %p183
        %p539 = pneg %p180
        %p540 = pneg %p204
        %p541 = pneg %p201
        %p542 = pneg %p225
        %p543 = pneg %p222
        %p544 = pneg %p246
        %p545 = pneg %p243
        %p546 = pneg %p267
        %p547 = pneg %p264
        %p548 = pneg %p288
        %p549 = pneg %p285
        %p550 = pneg %p314
        %p551 = pneg %p311
        %p552 = scmp.lt.s32.totalorder %s36, 1
        %s553 = scalar_select %p552, %s36, 1
        %s554 = smul.addr %s553, 2
        %s555 = smul.addr %s554, 8
        %s556 = scalar_lea.vmem %s13, %s555
        %p557 = scmp.lt.s32.totalorder %s36, 1
        %s558 = scalar_select %p557, %s36, 1
        %s559 = smul.addr %s558, 2
        %s560 = smul.addr %s559, 8
        %s561 = scalar_lea.vmem %s1, %s560
        %p562 = scmp.lt.s32.totalorder %s36, 1
        %s563 = scalar_select %p562, %s36, 1
        %s564 = smul.addr %s563, 2
        %s565 = smul.addr %s564, 8
        %s566 = scalar_lea.vmem %s13, %s565
        %v568 = vlaneseq
        %v569 = vshrl.u32 %v568, 7
        %v570 = vadd.s32 %v569, 8
        %v571 = vlaneseq
        %v572 = vand.u32 %v571, 127
        %v573 = vadd.s32 %v569, 1
        %v574 = vadd.s32 %v570, 1
        %vm575 = vcmp.eq.s32.totalorder %v572, %v573
        %vm576 = vcmp.eq.s32.totalorder %v572, %v574
        %v577 = vsel %vm575, 1, 0
        %v578 = vsel %vm576, 1, 0
        %v579 = vcvt.s32.f32 %v577
        %v580 = vcvt.s32.f32 %v578
        %v581 = vadd.s32 %v569, 4294967295
        %v582 = vadd.s32 %v570, 4294967295
        %vm583 = vcmp.eq.s32.totalorder %v572, %v581
        %vm584 = vcmp.eq.s32.totalorder %v572, %v582
        %v585 = vsel %vm583, 1, 0
        %v586 = vsel %vm584, 1, 0
        %v587 = vcvt.s32.f32 %v585
        %v588 = vcvt.s32.f32 %v586
        %vm589 = vcmp.eq.s32.totalorder %v572, %v569
        %vm590 = vcmp.eq.s32.totalorder %v572, %v570
        %v591 = vsel %vm589, 1, 0
        %v592 = vsel %vm590, 1, 0
        %v593 = vcvt.s32.f32 %v591
        %v594 = vcvt.s32.f32 %v592
        %vm595 = vcmp.eq.s32.totalorder %v569, 9
        %vm596 = vcmp.eq.s32.totalorder %v570, 9
        %vm597 = vcmp.eq.s32.totalorder %v572, 0
        %vm598 = vmand %vm595, %vm597
        %vm599 = vmand %vm596, %vm597
        %v600 = vsel %vm598, 1, 0
        %v601 = vsel %vm599, 1, 0
        %v602 = vcvt.s32.f32 %v600
        %v603 = vcvt.s32.f32 %v601
        %v604 = vadd.f32 %v579, %v602
        %v605 = vadd.f32 %v580, %v603
        %v606 = vld [vmem:[%s561] sm:$0xff]
        %v607 = vld [vmem:[%s561 + $0x8] sm:$0x3]
        %v608 = vcvt.s32.f32 %v606
        %v609 = vcvt.s32.f32 %v607
        %v610 = vmul.f32 %v608, 3.0517578e-05
        %v611 = vmul.f32 %v609, 3.0517578e-05
        %vm612 = vcmask 130048
        %v613 = vsel %vm612, %v610, 0.0
        %vm614 = vcmask 123904
        %v615 = vsel %vm614, %v611, 0.0
        %v616 = vadd.f32 %v613, %v615
        %617 = vadd.xlane.f32.xlu0 %v616
        %v618 = vpop.xlane.xlu0 %617
        %v619 = vrot.slane %v618, 4
        %v620 = vadd.f32 %v618, %v619
        %v621 = vrot.slane %v620, 2
        %v622 = vadd.f32 %v620, %v621
        %v623 = vrot.slane %v622, 1
        %v624 = vadd.f32 %v622, %v623
        %s625 = vtos %v624
        %v626 = vrcp.pop 160.0
        %s627 = vtos %v626
        %s628 = smul.f32 %s625, %s627
        %v629 = vstv %s628
        %v630 = vsub.f32 %v610, %v629
        %v631 = vsub.f32 %v611, %v629
        %634 = vrot.lane.b32.xlu0 %v630, 113
        %v635 = vpop.permute.xlu0 %634
        %636 = vrot.lane.b32.xlu0 %v631, 113
        %v637 = vpop.permute.xlu0 %636
        %vm639 = vcmask 80896
        %v641 = vsel %vm639, %v587, 0
        %v644 = vsel %vm639, %v588, 0
        %vm646 = vcmask 1041408
        %v647 = vsel %vm646, %v637, 0
        %649 = vmatprep.subr.mxu0 0.0
        %650 = vmatpush1.msra.mxu0 0.0
        %651 = vmatprep.subr.mxu0 0.0
        %652 = vmatpush1.msra.mxu0 0.0
        %653 = vmatprep.subr.mxu0 0.0
        %654 = vmatpush1.msra.mxu0 0.0
        %655 = vmatprep.subr.mxu0 0.0
        %656 = vmatpush1.msra.mxu0 0.0
        %657 = vmatprep.subr.mxu0 0.0
        %658 = vmatpush1.msra.mxu0 0.0
        %659 = vmatprep.subr.mxu0 0.0
        %660 = vmatpush1.msra.mxu0 0.0
        %661 = vmatprep.subr.mxu0 0.0
        %662 = vmatpush1.msra.mxu0 0.0
        %663 = vmatprep.subr.mxu0 0.0
        %664 = vmatpush1.msra.mxu0 0.0
        %665 = vmatprep.subr.mxu0 0.0
        %666 = vmatpush1.msra.mxu0 0.0
        %667 = vmatprep.subr.mxu0 0.0
        %668 = vmatpush1.msra.mxu0 0.0
        %669 = vmatprep.subr.mxu0 0.0
        %670 = vmatpush1.msra.mxu0 0.0
        %671 = vmatprep.subr.mxu0 0.0
        %672 = vmatpush1.msra.mxu0 0.0
        %673 = vmatprep.subr.mxu0 0.0
        %674 = vmatpush1.msra.mxu0 0.0
        %675 = vmatprep.subr.mxu0 0.0
        %676 = vmatpush1.msra.mxu0 0.0
        %677 = vmatprep.subr.mxu0 0.0
        %678 = vmatpush1.msra.mxu0 %v647
        %679 = vmatprep.subr.mxu0 0.0
        %680 = vmatpush1.msra.mxu0 %v635
        %681 = vmatprep.subr.mxu0 0.0
        %682 = vmatpush2.msra.mxu0 0.0
        %683 = vmatprep.subr.mxu0 0.0
        %684 = vmatpush2.msra.mxu0 0.0
        %685 = vmatprep.subr.mxu0 0.0
        %686 = vmatpush2.msra.mxu0 0.0
        %687 = vmatprep.subr.mxu0 0.0
        %688 = vmatpush2.msra.mxu0 0.0
        %689 = vmatprep.subr.mxu0 0.0
        %690 = vmatpush2.msra.mxu0 0.0
        %691 = vmatprep.subr.mxu0 0.0
        %692 = vmatpush2.msra.mxu0 0.0
        %693 = vmatprep.subr.mxu0 0.0
        %694 = vmatpush2.msra.mxu0 0.0
        %695 = vmatprep.subr.mxu0 0.0
        %696 = vmatpush2.msra.mxu0 0.0
        %697 = vmatprep.subr.mxu0 0.0
        %698 = vmatpush2.msra.mxu0 0.0
        %699 = vmatprep.subr.mxu0 0.0
        %700 = vmatpush2.msra.mxu0 0.0
        %701 = vmatprep.subr.mxu0 0.0
        %702 = vmatpush2.msra.mxu0 0.0
        %703 = vmatprep.subr.mxu0 0.0
        %704 = vmatpush2.msra.mxu0 0.0
        %705 = vmatprep.subr.mxu0 0.0
        %706 = vmatpush2.msra.mxu0 0.0
        %707 = vmatprep.subr.mxu0 0.0
        %708 = vmatpush2.msra.mxu0 0.0
        %709 = vmatprep.subr.mxu0 0.0
        %710 = vmatpush2.msra.mxu0 0.0
        %711 = vmatprep.subr.mxu0 0.0
        %712 = vmatpush2.msra.mxu0 0.0
        %713 = vmatprep.mubr.f32.mxu0 0.0
        %714 = vmatmul.mubr.f32.gmra.mxu0 %v641
        %v715 = vpop.f32.mrf.mxu0
        %v716 = vadd.f32 0.0, %v715
        %v717 = vpop.f32.mrf.mxu0
        %718 = vmatprep.mubr.f32.mxu0 0.0
        %719 = vmatmul.mubr.f32.gmra.mxu0 %v644
        %v720 = vpop.f32.mrf.mxu0
        %v721 = vadd.f32 0.0, %v720
        %v722 = vpop.f32.mrf.mxu0
        %723 = vdwg.mxu0
        %v724 = vsel %vm612, %v630, 0
        %v726 = vsel %vm612, %v631, 0
        %728 = vmatprep.subr.mxu0 0.0
        %729 = vmatpush1.msra.mxu0 0.0
        %730 = vmatprep.subr.mxu0 0.0
        %731 = vmatpush1.msra.mxu0 0.0
        %732 = vmatprep.subr.mxu0 0.0
        %733 = vmatpush1.msra.mxu0 0.0
        %734 = vmatprep.subr.mxu0 0.0
        %735 = vmatpush1.msra.mxu0 0.0
        %736 = vmatprep.subr.mxu0 0.0
        %737 = vmatpush1.msra.mxu0 0.0
        %738 = vmatprep.subr.mxu0 0.0
        %739 = vmatpush1.msra.mxu0 0.0
        %740 = vmatprep.subr.mxu0 0.0
        %741 = vmatpush1.msra.mxu0 0.0
        %742 = vmatprep.subr.mxu0 0.0
        %743 = vmatpush1.msra.mxu0 0.0
        %744 = vmatprep.subr.mxu0 0.0
        %745 = vmatpush1.msra.mxu0 0.0
        %746 = vmatprep.subr.mxu0 0.0
        %747 = vmatpush1.msra.mxu0 0.0
        %748 = vmatprep.subr.mxu0 0.0
        %749 = vmatpush1.msra.mxu0 0.0
        %750 = vmatprep.subr.mxu0 0.0
        %751 = vmatpush1.msra.mxu0 0.0
        %752 = vmatprep.subr.mxu0 0.0
        %753 = vmatpush1.msra.mxu0 0.0
        %754 = vmatprep.subr.mxu0 0.0
        %755 = vmatpush1.msra.mxu0 0.0
        %756 = vmatprep.subr.mxu0 0.0
        %757 = vmatpush1.msra.mxu0 %v580
        %758 = vmatprep.subr.mxu0 0.0
        %759 = vmatpush1.msra.mxu0 %v579
        %760 = vmatprep.subr.mxu0 0.0
        %761 = vmatpush2.msra.mxu0 0.0
        %762 = vmatprep.subr.mxu0 0.0
        %763 = vmatpush2.msra.mxu0 0.0
        %764 = vmatprep.subr.mxu0 0.0
        %765 = vmatpush2.msra.mxu0 0.0
        %766 = vmatprep.subr.mxu0 0.0
        %767 = vmatpush2.msra.mxu0 0.0
        %768 = vmatprep.subr.mxu0 0.0
        %769 = vmatpush2.msra.mxu0 0.0
        %770 = vmatprep.subr.mxu0 0.0
        %771 = vmatpush2.msra.mxu0 0.0
        %772 = vmatprep.subr.mxu0 0.0
        %773 = vmatpush2.msra.mxu0 0.0
        %774 = vmatprep.subr.mxu0 0.0
        %775 = vmatpush2.msra.mxu0 0.0
        %776 = vmatprep.subr.mxu0 0.0
        %777 = vmatpush2.msra.mxu0 0.0
        %778 = vmatprep.subr.mxu0 0.0
        %779 = vmatpush2.msra.mxu0 0.0
        %780 = vmatprep.subr.mxu0 0.0
        %781 = vmatpush2.msra.mxu0 0.0
        %782 = vmatprep.subr.mxu0 0.0
        %783 = vmatpush2.msra.mxu0 0.0
        %784 = vmatprep.subr.mxu0 0.0
        %785 = vmatpush2.msra.mxu0 0.0
        %786 = vmatprep.subr.mxu0 0.0
        %787 = vmatpush2.msra.mxu0 0.0
        %788 = vmatprep.subr.mxu0 0.0
        %789 = vmatpush2.msra.mxu0 0.0
        %790 = vmatprep.subr.mxu0 0.0
        %791 = vmatpush2.msra.mxu0 0.0
        %792 = vmatprep.mubr.f32.mxu0 0.0
        %793 = vmatmul.mubr.f32.gmra.mxu0 %v724
        %v794 = vpop.f32.mrf.mxu0
        %v795 = vadd.f32 0.0, %v794
        %v796 = vpop.f32.mrf.mxu0
        %797 = vmatprep.mubr.f32.mxu0 0.0
        %798 = vmatmul.mubr.f32.gmra.mxu0 %v726
        %v799 = vpop.f32.mrf.mxu0
        %v800 = vadd.f32 0.0, %v799
        %v801 = vpop.f32.mrf.mxu0
        %802 = vdwg.mxu0
        %804 = vset.pattern.permute.xlu0 0
        %805 = vperm.xlu0 %804, %v716
        %v806 = vpop.permute.xlu0 %805
        %809 = vset.pattern.permute.xlu0 0
        %810 = vperm.xlu0 %809, %v721
        %v811 = vpop.permute.xlu0 %810
        %v813 = vsel %vm597, %v806, %v795
        %v814 = vsel %vm597, %v811, %v800
        %v815 = vmul.f32 %v813, 0.97
        %v816 = vmul.f32 %v814, 0.97
        %v817 = vsub.f32 %v630, %v815
        %v818 = vsub.f32 %v631, %v816
        %v819 = vld [vmem:[#allocation4] sm:$0xff]
        %v820 = vld [vmem:[#allocation4 + $0x8] sm:$0xff]
        %v822 = vsel %vm612, %v817, 0
        %v825 = vsel %vm612, %v818, 0
        %827 = vmatprep.subr.mxu0 0.0
        %828 = vmatpush1.msra.mxu0 0.0
        %829 = vmatprep.subr.mxu0 0.0
        %830 = vmatpush1.msra.mxu0 0.0
        %831 = vmatprep.subr.mxu0 0.0
        %832 = vmatpush1.msra.mxu0 0.0
        %833 = vmatprep.subr.mxu0 0.0
        %834 = vmatpush1.msra.mxu0 0.0
        %835 = vmatprep.subr.mxu0 0.0
        %836 = vmatpush1.msra.mxu0 0.0
        %837 = vmatprep.subr.mxu0 0.0
        %838 = vmatpush1.msra.mxu0 0.0
        %839 = vmatprep.subr.mxu0 0.0
        %840 = vmatpush1.msra.mxu0 0.0
        %841 = vmatprep.subr.mxu0 0.0
        %842 = vmatpush1.msra.mxu0 0.0
        %843 = vmatprep.subr.mxu0 0.0
        %844 = vmatpush1.msra.mxu0 0.0
        %845 = vmatprep.subr.mxu0 0.0
        %846 = vmatpush1.msra.mxu0 0.0
        %847 = vmatprep.subr.mxu0 0.0
        %848 = vmatpush1.msra.mxu0 0.0
        %849 = vmatprep.subr.mxu0 0.0
        %850 = vmatpush1.msra.mxu0 0.0
        %851 = vmatprep.subr.mxu0 0.0
        %852 = vmatpush1.msra.mxu0 0.0
        %853 = vmatprep.subr.mxu0 0.0
        %854 = vmatpush1.msra.mxu0 0.0
        %855 = vmatprep.subr.mxu0 0.0
        %856 = vmatpush1.msra.mxu0 %v820
        %857 = vmatprep.subr.mxu0 0.0
        %858 = vmatpush1.msra.mxu0 %v819
        %859 = vmatprep.subr.mxu0 0.0
        %860 = vmatpush2.msra.mxu0 0.0
        %861 = vmatprep.subr.mxu0 0.0
        %862 = vmatpush2.msra.mxu0 0.0
        %863 = vmatprep.subr.mxu0 0.0
        %864 = vmatpush2.msra.mxu0 0.0
        %865 = vmatprep.subr.mxu0 0.0
        %866 = vmatpush2.msra.mxu0 0.0
        %867 = vmatprep.subr.mxu0 0.0
        %868 = vmatpush2.msra.mxu0 0.0
        %869 = vmatprep.subr.mxu0 0.0
        %870 = vmatpush2.msra.mxu0 0.0
        %871 = vmatprep.subr.mxu0 0.0
        %872 = vmatpush2.msra.mxu0 0.0
        %873 = vmatprep.subr.mxu0 0.0
        %874 = vmatpush2.msra.mxu0 0.0
        %875 = vmatprep.subr.mxu0 0.0
        %876 = vmatpush2.msra.mxu0 0.0
        %877 = vmatprep.subr.mxu0 0.0
        %878 = vmatpush2.msra.mxu0 0.0
        %879 = vmatprep.subr.mxu0 0.0
        %880 = vmatpush2.msra.mxu0 0.0
        %881 = vmatprep.subr.mxu0 0.0
        %882 = vmatpush2.msra.mxu0 0.0
        %883 = vmatprep.subr.mxu0 0.0
        %884 = vmatpush2.msra.mxu0 0.0
        %885 = vmatprep.subr.mxu0 0.0
        %886 = vmatpush2.msra.mxu0 0.0
        %887 = vmatprep.subr.mxu0 0.0
        %888 = vmatpush2.msra.mxu0 0.0
        %889 = vmatprep.subr.mxu0 0.0
        %890 = vmatpush2.msra.mxu0 0.0
        %891 = vmatprep.mubr.f32.mxu0 0.0
        %892 = vmatmul.mubr.f32.gmra.mxu0 %v822
        %v893 = vpop.f32.mrf.mxu0
        %v894 = vadd.f32 0.0, %v893
        %v895 = vpop.f32.mrf.mxu0
        %896 = vmatprep.mubr.f32.mxu0 0.0
        %897 = vmatmul.mubr.f32.gmra.mxu0 %v825
        %v898 = vpop.f32.mrf.mxu0
        %v899 = vadd.f32 0.0, %v898
        %v900 = vpop.f32.mrf.mxu0
        %901 = vdwg.mxu0
        %s902 = scalar_lea.vmem [#allocation4], 16
        %v903 = vld [vmem:[%s902] sm:$0xff]
        %v904 = vld [vmem:[%s902 + $0x8] sm:$0xff]
        %905 = vmatprep.subr.mxu0 0.0
        %906 = vmatpush1.msra.mxu0 0.0
        %907 = vmatprep.subr.mxu0 0.0
        %908 = vmatpush1.msra.mxu0 0.0
        %909 = vmatprep.subr.mxu0 0.0
        %910 = vmatpush1.msra.mxu0 0.0
        %911 = vmatprep.subr.mxu0 0.0
        %912 = vmatpush1.msra.mxu0 0.0
        %913 = vmatprep.subr.mxu0 0.0
        %914 = vmatpush1.msra.mxu0 0.0
        %915 = vmatprep.subr.mxu0 0.0
        %916 = vmatpush1.msra.mxu0 0.0
        %917 = vmatprep.subr.mxu0 0.0
        %918 = vmatpush1.msra.mxu0 0.0
        %919 = vmatprep.subr.mxu0 0.0
        %920 = vmatpush1.msra.mxu0 0.0
        %921 = vmatprep.subr.mxu0 0.0
        %922 = vmatpush1.msra.mxu0 0.0
        %923 = vmatprep.subr.mxu0 0.0
        %924 = vmatpush1.msra.mxu0 0.0
        %925 = vmatprep.subr.mxu0 0.0
        %926 = vmatpush1.msra.mxu0 0.0
        %927 = vmatprep.subr.mxu0 0.0
        %928 = vmatpush1.msra.mxu0 0.0
        %929 = vmatprep.subr.mxu0 0.0
        %930 = vmatpush1.msra.mxu0 0.0
        %931 = vmatprep.subr.mxu0 0.0
        %932 = vmatpush1.msra.mxu0 0.0
        %933 = vmatprep.subr.mxu0 0.0
        %934 = vmatpush1.msra.mxu0 %v904
        %935 = vmatprep.subr.mxu0 0.0
        %936 = vmatpush1.msra.mxu0 %v903
        %937 = vmatprep.subr.mxu0 0.0
        %938 = vmatpush2.msra.mxu0 0.0
        %939 = vmatprep.subr.mxu0 0.0
        %940 = vmatpush2.msra.mxu0 0.0
        %941 = vmatprep.subr.mxu0 0.0
        %942 = vmatpush2.msra.mxu0 0.0
        %943 = vmatprep.subr.mxu0 0.0
        %944 = vmatpush2.msra.mxu0 0.0
        %945 = vmatprep.subr.mxu0 0.0
        %946 = vmatpush2.msra.mxu0 0.0
        %947 = vmatprep.subr.mxu0 0.0
        %948 = vmatpush2.msra.mxu0 0.0
        %949 = vmatprep.subr.mxu0 0.0
        %950 = vmatpush2.msra.mxu0 0.0
        %951 = vmatprep.subr.mxu0 0.0
        %952 = vmatpush2.msra.mxu0 0.0
        %953 = vmatprep.subr.mxu0 0.0
        %954 = vmatpush2.msra.mxu0 0.0
        %955 = vmatprep.subr.mxu0 0.0
        %956 = vmatpush2.msra.mxu0 0.0
        %957 = vmatprep.subr.mxu0 0.0
        %958 = vmatpush2.msra.mxu0 0.0
        %959 = vmatprep.subr.mxu0 0.0
        %960 = vmatpush2.msra.mxu0 0.0
        %961 = vmatprep.subr.mxu0 0.0
        %962 = vmatpush2.msra.mxu0 0.0
        %963 = vmatprep.subr.mxu0 0.0
        %964 = vmatpush2.msra.mxu0 0.0
        %965 = vmatprep.subr.mxu0 0.0
        %966 = vmatpush2.msra.mxu0 0.0
        %967 = vmatprep.subr.mxu0 0.0
        %968 = vmatpush2.msra.mxu0 0.0
        %969 = vmatprep.mubr.f32.mxu0 0.0
        %970 = vmatmul.mubr.f32.gmra.mxu0 %v822
        %v971 = vpop.f32.mrf.mxu0
        %v972 = vadd.f32 0.0, %v971
        %v973 = vpop.f32.mrf.mxu0
        %974 = vmatprep.mubr.f32.mxu0 0.0
        %975 = vmatmul.mubr.f32.gmra.mxu0 %v825
        %v976 = vpop.f32.mrf.mxu0
        %v977 = vadd.f32 0.0, %v976
        %v978 = vpop.f32.mrf.mxu0
        %979 = vdwg.mxu0
        %v981 = vsel %vm639, %v593, 0
        %v984 = vsel %vm639, %v594, 0
        %v987 = vsel %vm646, %v977, 0
        %989 = vmatprep.subr.mxu0 0.0
        %990 = vmatpush1.msra.mxu0 0.0
        %991 = vmatprep.subr.mxu0 0.0
        %992 = vmatpush1.msra.mxu0 0.0
        %993 = vmatprep.subr.mxu0 0.0
        %994 = vmatpush1.msra.mxu0 0.0
        %995 = vmatprep.subr.mxu0 0.0
        %996 = vmatpush1.msra.mxu0 0.0
        %997 = vmatprep.subr.mxu0 0.0
        %998 = vmatpush1.msra.mxu0 0.0
        %999 = vmatprep.subr.mxu0 0.0
        %1000 = vmatpush1.msra.mxu0 0.0
        %1001 = vmatprep.subr.mxu0 0.0
        %1002 = vmatpush1.msra.mxu0 0.0
        %1003 = vmatprep.subr.mxu0 0.0
        %1004 = vmatpush1.msra.mxu0 0.0
        %1005 = vmatprep.subr.mxu0 0.0
        %1006 = vmatpush1.msra.mxu0 0.0
        %1007 = vmatprep.subr.mxu0 0.0
        %1008 = vmatpush1.msra.mxu0 0.0
        %1009 = vmatprep.subr.mxu0 0.0
        %1010 = vmatpush1.msra.mxu0 0.0
        %1011 = vmatprep.subr.mxu0 0.0
        %1012 = vmatpush1.msra.mxu0 0.0
        %1013 = vmatprep.subr.mxu0 0.0
        %1014 = vmatpush1.msra.mxu0 0.0
        %1015 = vmatprep.subr.mxu0 0.0
        %1016 = vmatpush1.msra.mxu0 0.0
        %1017 = vmatprep.subr.mxu0 0.0
        %1018 = vmatpush1.msra.mxu0 %v987
        %1019 = vmatprep.subr.mxu0 0.0
        %1020 = vmatpush1.msra.mxu0 %v972
        %1021 = vmatprep.subr.mxu0 0.0
        %1022 = vmatpush2.msra.mxu0 0.0
        %1023 = vmatprep.subr.mxu0 0.0
        %1024 = vmatpush2.msra.mxu0 0.0
        %1025 = vmatprep.subr.mxu0 0.0
        %1026 = vmatpush2.msra.mxu0 0.0
        %1027 = vmatprep.subr.mxu0 0.0
        %1028 = vmatpush2.msra.mxu0 0.0
        %1029 = vmatprep.subr.mxu0 0.0
        %1030 = vmatpush2.msra.mxu0 0.0
        %1031 = vmatprep.subr.mxu0 0.0
        %1032 = vmatpush2.msra.mxu0 0.0
        %1033 = vmatprep.subr.mxu0 0.0
        %1034 = vmatpush2.msra.mxu0 0.0
        %1035 = vmatprep.subr.mxu0 0.0
        %1036 = vmatpush2.msra.mxu0 0.0
        %1037 = vmatprep.subr.mxu0 0.0
        %1038 = vmatpush2.msra.mxu0 0.0
        %1039 = vmatprep.subr.mxu0 0.0
        %1040 = vmatpush2.msra.mxu0 0.0
        %1041 = vmatprep.subr.mxu0 0.0
        %1042 = vmatpush2.msra.mxu0 0.0
        %1043 = vmatprep.subr.mxu0 0.0
        %1044 = vmatpush2.msra.mxu0 0.0
        %1045 = vmatprep.subr.mxu0 0.0
        %1046 = vmatpush2.msra.mxu0 0.0
        %1047 = vmatprep.subr.mxu0 0.0
        %1048 = vmatpush2.msra.mxu0 0.0
        %1049 = vmatprep.subr.mxu0 0.0
        %1050 = vmatpush2.msra.mxu0 0.0
        %1051 = vmatprep.subr.mxu0 0.0
        %1052 = vmatpush2.msra.mxu0 0.0
        %1053 = vmatprep.mubr.f32.mxu0 0.0
        %1054 = vmatmul.mubr.f32.gmra.mxu0 %v981
        %v1055 = vpop.f32.mrf.mxu0
        %v1056 = vadd.f32 0.0, %v1055
        %v1057 = vpop.f32.mrf.mxu0
        %1058 = vmatprep.mubr.f32.mxu0 0.0
        %1059 = vmatmul.mubr.f32.gmra.mxu0 %v984
        %v1060 = vpop.f32.mrf.mxu0
        %v1061 = vadd.f32 0.0, %v1060
        %v1062 = vpop.f32.mrf.mxu0
        %1063 = vdwg.mxu0
        %v1065 = vsel %vm646, %v899, 0
        %1067 = vmatprep.subr.mxu0 0.0
        %1068 = vmatpush1.msra.mxu0 0.0
        %1069 = vmatprep.subr.mxu0 0.0
        %1070 = vmatpush1.msra.mxu0 0.0
        %1071 = vmatprep.subr.mxu0 0.0
        %1072 = vmatpush1.msra.mxu0 0.0
        %1073 = vmatprep.subr.mxu0 0.0
        %1074 = vmatpush1.msra.mxu0 0.0
        %1075 = vmatprep.subr.mxu0 0.0
        %1076 = vmatpush1.msra.mxu0 0.0
        %1077 = vmatprep.subr.mxu0 0.0
        %1078 = vmatpush1.msra.mxu0 0.0
        %1079 = vmatprep.subr.mxu0 0.0
        %1080 = vmatpush1.msra.mxu0 0.0
        %1081 = vmatprep.subr.mxu0 0.0
        %1082 = vmatpush1.msra.mxu0 0.0
        %1083 = vmatprep.subr.mxu0 0.0
        %1084 = vmatpush1.msra.mxu0 0.0
        %1085 = vmatprep.subr.mxu0 0.0
        %1086 = vmatpush1.msra.mxu0 0.0
        %1087 = vmatprep.subr.mxu0 0.0
        %1088 = vmatpush1.msra.mxu0 0.0
        %1089 = vmatprep.subr.mxu0 0.0
        %1090 = vmatpush1.msra.mxu0 0.0
        %1091 = vmatprep.subr.mxu0 0.0
        %1092 = vmatpush1.msra.mxu0 0.0
        %1093 = vmatprep.subr.mxu0 0.0
        %1094 = vmatpush1.msra.mxu0 0.0
        %1095 = vmatprep.subr.mxu0 0.0
        %1096 = vmatpush1.msra.mxu0 %v1065
        %1097 = vmatprep.subr.mxu0 0.0
        %1098 = vmatpush1.msra.mxu0 %v894
        %1099 = vmatprep.subr.mxu0 0.0
        %1100 = vmatpush2.msra.mxu0 0.0
        %1101 = vmatprep.subr.mxu0 0.0
        %1102 = vmatpush2.msra.mxu0 0.0
        %1103 = vmatprep.subr.mxu0 0.0
        %1104 = vmatpush2.msra.mxu0 0.0
        %1105 = vmatprep.subr.mxu0 0.0
        %1106 = vmatpush2.msra.mxu0 0.0
        %1107 = vmatprep.subr.mxu0 0.0
        %1108 = vmatpush2.msra.mxu0 0.0
        %1109 = vmatprep.subr.mxu0 0.0
        %1110 = vmatpush2.msra.mxu0 0.0
        %1111 = vmatprep.subr.mxu0 0.0
        %1112 = vmatpush2.msra.mxu0 0.0
        %1113 = vmatprep.subr.mxu0 0.0
        %1114 = vmatpush2.msra.mxu0 0.0
        %1115 = vmatprep.subr.mxu0 0.0
        %1116 = vmatpush2.msra.mxu0 0.0
        %1117 = vmatprep.subr.mxu0 0.0
        %1118 = vmatpush2.msra.mxu0 0.0
        %1119 = vmatprep.subr.mxu0 0.0
        %1120 = vmatpush2.msra.mxu0 0.0
        %1121 = vmatprep.subr.mxu0 0.0
        %1122 = vmatpush2.msra.mxu0 0.0
        %1123 = vmatprep.subr.mxu0 0.0
        %1124 = vmatpush2.msra.mxu0 0.0
        %1125 = vmatprep.subr.mxu0 0.0
        %1126 = vmatpush2.msra.mxu0 0.0
        %1127 = vmatprep.subr.mxu0 0.0
        %1128 = vmatpush2.msra.mxu0 0.0
        %1129 = vmatprep.subr.mxu0 0.0
        %1130 = vmatpush2.msra.mxu0 0.0
        %1131 = vmatprep.mubr.f32.mxu0 0.0
        %1132 = vmatmul.mubr.f32.gmra.mxu0 %v641
        %v1133 = vpop.f32.mrf.mxu0
        %v1134 = vadd.f32 %v1056, %v1133
        %v1135 = vpop.f32.mrf.mxu0
        %1136 = vmatprep.mubr.f32.mxu0 0.0
        %1137 = vmatmul.mubr.f32.gmra.mxu0 %v644
        %v1138 = vpop.f32.mrf.mxu0
        %v1139 = vadd.f32 %v1061, %v1138
        %v1140 = vpop.f32.mrf.mxu0
        %1141 = vdwg.mxu0
        %v1142 = vmul.f32 %v1134, %v1134
        %v1143 = vmul.f32 %v1139, %v1139
        %1146 = vrot.lane.b32.xlu0 %v1142, 96
        %v1147 = vpop.permute.xlu0 %1146
        %1148 = vrot.lane.b32.xlu0 %v1143, 96
        %v1149 = vpop.permute.xlu0 %1148
        %v1152 = vadd.f32 %v1142, %v1147
        %v1153 = vadd.f32 %v1143, %v1149
        %v1154 = vld [vmem:[#allocation6] sm:$0xff]
        %v1155 = vld [vmem:[#allocation6 + $0x8] sm:$0xff]
        %v1156 = vld [vmem:[#allocation6 + $0x10] sm:$0xff]
        %v1157 = vld [vmem:[#allocation6 + $0x18] sm:$0xff]
        %vm1158 = vcmask 261120
        %v1160 = vsel %vm1158, %v1152, 0
        %v1163 = vsel %vm1158, %v1153, 0
        %1165 = vmatprep.subr.mxu0 0.0
        %1166 = vmatpush1.msra.mxu0 0.0
        %1167 = vmatprep.subr.mxu0 0.0
        %1168 = vmatpush1.msra.mxu0 0.0
        %1169 = vmatprep.subr.mxu0 0.0
        %1170 = vmatpush1.msra.mxu0 0.0
        %1171 = vmatprep.subr.mxu0 0.0
        %1172 = vmatpush1.msra.mxu0 0.0
        %1173 = vmatprep.subr.mxu0 0.0
        %1174 = vmatpush1.msra.mxu0 0.0
        %1175 = vmatprep.subr.mxu0 0.0
        %1176 = vmatpush1.msra.mxu0 0.0
        %1177 = vmatprep.subr.mxu0 0.0
        %1178 = vmatpush1.msra.mxu0 0.0
        %1179 = vmatprep.subr.mxu0 0.0
        %1180 = vmatpush1.msra.mxu0 0.0
        %1181 = vmatprep.subr.mxu0 0.0
        %1182 = vmatpush1.msra.mxu0 0.0
        %1183 = vmatprep.subr.mxu0 0.0
        %1184 = vmatpush1.msra.mxu0 0.0
        %1185 = vmatprep.subr.mxu0 0.0
        %1186 = vmatpush1.msra.mxu0 0.0
        %1187 = vmatprep.subr.mxu0 0.0
        %1188 = vmatpush1.msra.mxu0 0.0
        %1189 = vmatprep.subr.mxu0 0.0
        %1190 = vmatpush1.msra.mxu0 %v1157
        %1191 = vmatprep.subr.mxu0 0.0
        %1192 = vmatpush1.msra.mxu0 %v1156
        %1193 = vmatprep.subr.mxu0 0.0
        %1194 = vmatpush1.msra.mxu0 %v1155
        %1195 = vmatprep.subr.mxu0 0.0
        %1196 = vmatpush1.msra.mxu0 %v1154
        %1197 = vmatprep.subr.mxu0 0.0
        %1198 = vmatpush2.msra.mxu0 0.0
        %1199 = vmatprep.subr.mxu0 0.0
        %1200 = vmatpush2.msra.mxu0 0.0
        %1201 = vmatprep.subr.mxu0 0.0
        %1202 = vmatpush2.msra.mxu0 0.0
        %1203 = vmatprep.subr.mxu0 0.0
        %1204 = vmatpush2.msra.mxu0 0.0
        %1205 = vmatprep.subr.mxu0 0.0
        %1206 = vmatpush2.msra.mxu0 0.0
        %1207 = vmatprep.subr.mxu0 0.0
        %1208 = vmatpush2.msra.mxu0 0.0
        %1209 = vmatprep.subr.mxu0 0.0
        %1210 = vmatpush2.msra.mxu0 0.0
        %1211 = vmatprep.subr.mxu0 0.0
        %1212 = vmatpush2.msra.mxu0 0.0
        %1213 = vmatprep.subr.mxu0 0.0
        %1214 = vmatpush2.msra.mxu0 0.0
        %1215 = vmatprep.subr.mxu0 0.0
        %1216 = vmatpush2.msra.mxu0 0.0
        %1217 = vmatprep.subr.mxu0 0.0
        %1218 = vmatpush2.msra.mxu0 0.0
        %1219 = vmatprep.subr.mxu0 0.0
        %1220 = vmatpush2.msra.mxu0 0.0
        %1221 = vmatprep.subr.mxu0 0.0
        %1222 = vmatpush2.msra.mxu0 0.0
        %1223 = vmatprep.subr.mxu0 0.0
        %1224 = vmatpush2.msra.mxu0 0.0
        %1225 = vmatprep.subr.mxu0 0.0
        %1226 = vmatpush2.msra.mxu0 0.0
        %1227 = vmatprep.subr.mxu0 0.0
        %1228 = vmatpush2.msra.mxu0 0.0
        %1229 = vmatprep.mubr.f32.mxu0 0.0
        %1230 = vmatmul.mubr.f32.gmra.mxu0 %v1160
        %v1231 = vpop.f32.mrf.mxu0
        %v1232 = vadd.f32 0.0, %v1231
        %v1233 = vpop.f32.mrf.mxu0
        %1234 = vmatprep.mubr.f32.mxu0 0.0
        %1235 = vmatmul.mubr.f32.gmra.mxu0 %v1163
        %v1236 = vpop.f32.mrf.mxu0
        %v1237 = vadd.f32 0.0, %v1236
        %v1238 = vpop.f32.mrf.mxu0
        %1239 = vdwg.mxu0
        %v1240 = vmax.f32 %v1232, 1e-05
        %v1241 = vmax.f32 %v1237, 1e-05
        %v1242 = vlog2.pop %v1240
        %v1243 = vmul.f32 %v1242, 0.6931472
        %v1244 = vlog2.pop %v1241
        %v1245 = vmul.f32 %v1244, 0.6931472
        %v1246 = vld [vmem:[#allocation8] sm:$0x3f]
        %vm1247 = vcmask 89088
        %v1249 = vsel %vm1247, %v1246, 0
        %vm1251 = vcmask 1042432
        %v1253 = vsel %vm1251, %v1245, 0
        %1255 = vmatprep.subr.mxu0 0.0
        %1256 = vmatpush1.msra.mxu0 0.0
        %1257 = vmatprep.subr.mxu0 0.0
        %1258 = vmatpush1.msra.mxu0 0.0
        %1259 = vmatprep.subr.mxu0 0.0
        %1260 = vmatpush1.msra.mxu0 0.0
        %1261 = vmatprep.subr.mxu0 0.0
        %1262 = vmatpush1.msra.mxu0 0.0
        %1263 = vmatprep.subr.mxu0 0.0
        %1264 = vmatpush1.msra.mxu0 0.0
        %1265 = vmatprep.subr.mxu0 0.0
        %1266 = vmatpush1.msra.mxu0 0.0
        %1267 = vmatprep.subr.mxu0 0.0
        %1268 = vmatpush1.msra.mxu0 0.0
        %1269 = vmatprep.subr.mxu0 0.0
        %1270 = vmatpush1.msra.mxu0 0.0
        %1271 = vmatprep.subr.mxu0 0.0
        %1272 = vmatpush1.msra.mxu0 0.0
        %1273 = vmatprep.subr.mxu0 0.0
        %1274 = vmatpush1.msra.mxu0 0.0
        %1275 = vmatprep.subr.mxu0 0.0
        %1276 = vmatpush1.msra.mxu0 0.0
        %1277 = vmatprep.subr.mxu0 0.0
        %1278 = vmatpush1.msra.mxu0 0.0
        %1279 = vmatprep.subr.mxu0 0.0
        %1280 = vmatpush1.msra.mxu0 0.0
        %1281 = vmatprep.subr.mxu0 0.0
        %1282 = vmatpush1.msra.mxu0 0.0
        %1283 = vmatprep.subr.mxu0 0.0
        %1284 = vmatpush1.msra.mxu0 %v1253
        %1285 = vmatprep.subr.mxu0 0.0
        %1286 = vmatpush1.msra.mxu0 %v1243
        %1287 = vmatprep.subr.mxu0 0.0
        %1288 = vmatpush2.msra.mxu0 0.0
        %1289 = vmatprep.subr.mxu0 0.0
        %1290 = vmatpush2.msra.mxu0 0.0
        %1291 = vmatprep.subr.mxu0 0.0
        %1292 = vmatpush2.msra.mxu0 0.0
        %1293 = vmatprep.subr.mxu0 0.0
        %1294 = vmatpush2.msra.mxu0 0.0
        %1295 = vmatprep.subr.mxu0 0.0
        %1296 = vmatpush2.msra.mxu0 0.0
        %1297 = vmatprep.subr.mxu0 0.0
        %1298 = vmatpush2.msra.mxu0 0.0
        %1299 = vmatprep.subr.mxu0 0.0
        %1300 = vmatpush2.msra.mxu0 0.0
        %1301 = vmatprep.subr.mxu0 0.0
        %1302 = vmatpush2.msra.mxu0 0.0
        %1303 = vmatprep.subr.mxu0 0.0
        %1304 = vmatpush2.msra.mxu0 0.0
        %1305 = vmatprep.subr.mxu0 0.0
        %1306 = vmatpush2.msra.mxu0 0.0
        %1307 = vmatprep.subr.mxu0 0.0
        %1308 = vmatpush2.msra.mxu0 0.0
        %1309 = vmatprep.subr.mxu0 0.0
        %1310 = vmatpush2.msra.mxu0 0.0
        %1311 = vmatprep.subr.mxu0 0.0
        %1312 = vmatpush2.msra.mxu0 0.0
        %1313 = vmatprep.subr.mxu0 0.0
        %1314 = vmatpush2.msra.mxu0 0.0
        %1315 = vmatprep.subr.mxu0 0.0
        %1316 = vmatpush2.msra.mxu0 0.0
        %1317 = vmatprep.subr.mxu0 0.0
        %1318 = vmatpush2.msra.mxu0 0.0
        %1319 = vmatprep.mubr.f32.mxu0 0.0
        %1320 = vmatmul.mubr.f32.gmra.mxu0 %v1249
        %v1321 = vpop.f32.mrf.mxu0
        %v1322 = vadd.f32 0.0, %v1321
        %v1323 = vpop.f32.mrf.mxu0
        %1324 = vdwg.mxu0
        %s1325 = scalar_lea.vmem [#allocation8], 8
        %v1326 = vld [vmem:[%s1325] sm:$0x3f]
        %v1328 = vsel %vm1247, %v1326, 0
        %1330 = vmatprep.subr.mxu0 0.0
        %1331 = vmatpush1.msra.mxu0 0.0
        %1332 = vmatprep.subr.mxu0 0.0
        %1333 = vmatpush1.msra.mxu0 0.0
        %1334 = vmatprep.subr.mxu0 0.0
        %1335 = vmatpush1.msra.mxu0 0.0
        %1336 = vmatprep.subr.mxu0 0.0
        %1337 = vmatpush1.msra.mxu0 0.0
        %1338 = vmatprep.subr.mxu0 0.0
        %1339 = vmatpush1.msra.mxu0 0.0
        %1340 = vmatprep.subr.mxu0 0.0
        %1341 = vmatpush1.msra.mxu0 0.0
        %1342 = vmatprep.subr.mxu0 0.0
        %1343 = vmatpush1.msra.mxu0 0.0
        %1344 = vmatprep.subr.mxu0 0.0
        %1345 = vmatpush1.msra.mxu0 0.0
        %1346 = vmatprep.subr.mxu0 0.0
        %1347 = vmatpush1.msra.mxu0 0.0
        %1348 = vmatprep.subr.mxu0 0.0
        %1349 = vmatpush1.msra.mxu0 0.0
        %1350 = vmatprep.subr.mxu0 0.0
        %1351 = vmatpush1.msra.mxu0 0.0
        %1352 = vmatprep.subr.mxu0 0.0
        %1353 = vmatpush1.msra.mxu0 0.0
        %1354 = vmatprep.subr.mxu0 0.0
        %1355 = vmatpush1.msra.mxu0 0.0
        %1356 = vmatprep.subr.mxu0 0.0
        %1357 = vmatpush1.msra.mxu0 0.0
        %1358 = vmatprep.subr.mxu0 0.0
        %1359 = vmatpush1.msra.mxu0 %v1253
        %1360 = vmatprep.subr.mxu0 0.0
        %1361 = vmatpush1.msra.mxu0 %v1243
        %1362 = vmatprep.subr.mxu0 0.0
        %1363 = vmatpush2.msra.mxu0 0.0
        %1364 = vmatprep.subr.mxu0 0.0
        %1365 = vmatpush2.msra.mxu0 0.0
        %1366 = vmatprep.subr.mxu0 0.0
        %1367 = vmatpush2.msra.mxu0 0.0
        %1368 = vmatprep.subr.mxu0 0.0
        %1369 = vmatpush2.msra.mxu0 0.0
        %1370 = vmatprep.subr.mxu0 0.0
        %1371 = vmatpush2.msra.mxu0 0.0
        %1372 = vmatprep.subr.mxu0 0.0
        %1373 = vmatpush2.msra.mxu0 0.0
        %1374 = vmatprep.subr.mxu0 0.0
        %1375 = vmatpush2.msra.mxu0 0.0
        %1376 = vmatprep.subr.mxu0 0.0
        %1377 = vmatpush2.msra.mxu0 0.0
        %1378 = vmatprep.subr.mxu0 0.0
        %1379 = vmatpush2.msra.mxu0 0.0
        %1380 = vmatprep.subr.mxu0 0.0
        %1381 = vmatpush2.msra.mxu0 0.0
        %1382 = vmatprep.subr.mxu0 0.0
        %1383 = vmatpush2.msra.mxu0 0.0
        %1384 = vmatprep.subr.mxu0 0.0
        %1385 = vmatpush2.msra.mxu0 0.0
        %1386 = vmatprep.subr.mxu0 0.0
        %1387 = vmatpush2.msra.mxu0 0.0
        %1388 = vmatprep.subr.mxu0 0.0
        %1389 = vmatpush2.msra.mxu0 0.0
        %1390 = vmatprep.subr.mxu0 0.0
        %1391 = vmatpush2.msra.mxu0 0.0
        %1392 = vmatprep.subr.mxu0 0.0
        %1393 = vmatpush2.msra.mxu0 0.0
        %1394 = vmatprep.mubr.f32.mxu0 0.0
        %1395 = vmatmul.mubr.f32.gmra.mxu0 %v1328
        %v1396 = vpop.f32.mrf.mxu0
        %v1397 = vadd.f32 0.0, %v1396
        %v1398 = vpop.f32.mrf.mxu0
        %1399 = vdwg.mxu0
        %s1400 = scalar_lea.vmem [#allocation8], 16
        %v1401 = vld [vmem:[%s1400] sm:$0x3f]
        %v1403 = vsel %vm1247, %v1401, 0
        %1405 = vmatprep.subr.mxu0 0.0
        %1406 = vmatpush1.msra.mxu0 0.0
        %1407 = vmatprep.subr.mxu0 0.0
        %1408 = vmatpush1.msra.mxu0 0.0
        %1409 = vmatprep.subr.mxu0 0.0
        %1410 = vmatpush1.msra.mxu0 0.0
        %1411 = vmatprep.subr.mxu0 0.0
        %1412 = vmatpush1.msra.mxu0 0.0
        %1413 = vmatprep.subr.mxu0 0.0
        %1414 = vmatpush1.msra.mxu0 0.0
        %1415 = vmatprep.subr.mxu0 0.0
        %1416 = vmatpush1.msra.mxu0 0.0
        %1417 = vmatprep.subr.mxu0 0.0
        %1418 = vmatpush1.msra.mxu0 0.0
        %1419 = vmatprep.subr.mxu0 0.0
        %1420 = vmatpush1.msra.mxu0 0.0
        %1421 = vmatprep.subr.mxu0 0.0
        %1422 = vmatpush1.msra.mxu0 0.0
        %1423 = vmatprep.subr.mxu0 0.0
        %1424 = vmatpush1.msra.mxu0 0.0
        %1425 = vmatprep.subr.mxu0 0.0
        %1426 = vmatpush1.msra.mxu0 0.0
        %1427 = vmatprep.subr.mxu0 0.0
        %1428 = vmatpush1.msra.mxu0 0.0
        %1429 = vmatprep.subr.mxu0 0.0
        %1430 = vmatpush1.msra.mxu0 0.0
        %1431 = vmatprep.subr.mxu0 0.0
        %1432 = vmatpush1.msra.mxu0 0.0
        %1433 = vmatprep.subr.mxu0 0.0
        %1434 = vmatpush1.msra.mxu0 %v1253
        %1435 = vmatprep.subr.mxu0 0.0
        %1436 = vmatpush1.msra.mxu0 %v1243
        %1437 = vmatprep.subr.mxu0 0.0
        %1438 = vmatpush2.msra.mxu0 0.0
        %1439 = vmatprep.subr.mxu0 0.0
        %1440 = vmatpush2.msra.mxu0 0.0
        %1441 = vmatprep.subr.mxu0 0.0
        %1442 = vmatpush2.msra.mxu0 0.0
        %1443 = vmatprep.subr.mxu0 0.0
        %1444 = vmatpush2.msra.mxu0 0.0
        %1445 = vmatprep.subr.mxu0 0.0
        %1446 = vmatpush2.msra.mxu0 0.0
        %1447 = vmatprep.subr.mxu0 0.0
        %1448 = vmatpush2.msra.mxu0 0.0
        %1449 = vmatprep.subr.mxu0 0.0
        %1450 = vmatpush2.msra.mxu0 0.0
        %1451 = vmatprep.subr.mxu0 0.0
        %1452 = vmatpush2.msra.mxu0 0.0
        %1453 = vmatprep.subr.mxu0 0.0
        %1454 = vmatpush2.msra.mxu0 0.0
        %1455 = vmatprep.subr.mxu0 0.0
        %1456 = vmatpush2.msra.mxu0 0.0
        %1457 = vmatprep.subr.mxu0 0.0
        %1458 = vmatpush2.msra.mxu0 0.0
        %1459 = vmatprep.subr.mxu0 0.0
        %1460 = vmatpush2.msra.mxu0 0.0
        %1461 = vmatprep.subr.mxu0 0.0
        %1462 = vmatpush2.msra.mxu0 0.0
        %1463 = vmatprep.subr.mxu0 0.0
        %1464 = vmatpush2.msra.mxu0 0.0
        %1465 = vmatprep.subr.mxu0 0.0
        %1466 = vmatpush2.msra.mxu0 0.0
        %1467 = vmatprep.subr.mxu0 0.0
        %1468 = vmatpush2.msra.mxu0 0.0
        %1469 = vmatprep.mubr.f32.mxu0 0.0
        %1470 = vmatmul.mubr.f32.gmra.mxu0 %v1403
        %v1471 = vpop.f32.mrf.mxu0
        %v1472 = vadd.f32 0.0, %v1471
        %v1473 = vpop.f32.mrf.mxu0
        %1474 = vdwg.mxu0
        %s1475 = scalar_lea.vmem [#allocation8], 24
        %v1476 = vld [vmem:[%s1475] sm:$0x3f]
        %v1478 = vsel %vm1247, %v1476, 0
        %1480 = vmatprep.subr.mxu0 0.0
        %1481 = vmatpush1.msra.mxu0 0.0
        %1482 = vmatprep.subr.mxu0 0.0
        %1483 = vmatpush1.msra.mxu0 0.0
        %1484 = vmatprep.subr.mxu0 0.0
        %1485 = vmatpush1.msra.mxu0 0.0
        %1486 = vmatprep.subr.mxu0 0.0
        %1487 = vmatpush1.msra.mxu0 0.0
        %1488 = vmatprep.subr.mxu0 0.0
        %1489 = vmatpush1.msra.mxu0 0.0
        %1490 = vmatprep.subr.mxu0 0.0
        %1491 = vmatpush1.msra.mxu0 0.0
        %1492 = vmatprep.subr.mxu0 0.0
        %1493 = vmatpush1.msra.mxu0 0.0
        %1494 = vmatprep.subr.mxu0 0.0
        %1495 = vmatpush1.msra.mxu0 0.0
        %1496 = vmatprep.subr.mxu0 0.0
        %1497 = vmatpush1.msra.mxu0 0.0
        %1498 = vmatprep.subr.mxu0 0.0
        %1499 = vmatpush1.msra.mxu0 0.0
        %1500 = vmatprep.subr.mxu0 0.0
        %1501 = vmatpush1.msra.mxu0 0.0
        %1502 = vmatprep.subr.mxu0 0.0
        %1503 = vmatpush1.msra.mxu0 0.0
        %1504 = vmatprep.subr.mxu0 0.0
        %1505 = vmatpush1.msra.mxu0 0.0
        %1506 = vmatprep.subr.mxu0 0.0
        %1507 = vmatpush1.msra.mxu0 0.0
        %1508 = vmatprep.subr.mxu0 0.0
        %1509 = vmatpush1.msra.mxu0 %v1253
        %1510 = vmatprep.subr.mxu0 0.0
        %1511 = vmatpush1.msra.mxu0 %v1243
        %1512 = vmatprep.subr.mxu0 0.0
        %1513 = vmatpush2.msra.mxu0 0.0
        %1514 = vmatprep.subr.mxu0 0.0
        %1515 = vmatpush2.msra.mxu0 0.0
        %1516 = vmatprep.subr.mxu0 0.0
        %1517 = vmatpush2.msra.mxu0 0.0
        %1518 = vmatprep.subr.mxu0 0.0
        %1519 = vmatpush2.msra.mxu0 0.0
        %1520 = vmatprep.subr.mxu0 0.0
        %1521 = vmatpush2.msra.mxu0 0.0
        %1522 = vmatprep.subr.mxu0 0.0
        %1523 = vmatpush2.msra.mxu0 0.0
        %1524 = vmatprep.subr.mxu0 0.0
        %1525 = vmatpush2.msra.mxu0 0.0
        %1526 = vmatprep.subr.mxu0 0.0
        %1527 = vmatpush2.msra.mxu0 0.0
        %1528 = vmatprep.subr.mxu0 0.0
        %1529 = vmatpush2.msra.mxu0 0.0
        %1530 = vmatprep.subr.mxu0 0.0
        %1531 = vmatpush2.msra.mxu0 0.0
        %1532 = vmatprep.subr.mxu0 0.0
        %1533 = vmatpush2.msra.mxu0 0.0
        %1534 = vmatprep.subr.mxu0 0.0
        %1535 = vmatpush2.msra.mxu0 0.0
        %1536 = vmatprep.subr.mxu0 0.0
        %1537 = vmatpush2.msra.mxu0 0.0
        %1538 = vmatprep.subr.mxu0 0.0
        %1539 = vmatpush2.msra.mxu0 0.0
        %1540 = vmatprep.subr.mxu0 0.0
        %1541 = vmatpush2.msra.mxu0 0.0
        %1542 = vmatprep.subr.mxu0 0.0
        %1543 = vmatpush2.msra.mxu0 0.0
        %1544 = vmatprep.mubr.f32.mxu0 0.0
        %1545 = vmatmul.mubr.f32.gmra.mxu0 %v1478
        %v1546 = vpop.f32.mrf.mxu0
        %v1547 = vadd.f32 0.0, %v1546
        %v1548 = vpop.f32.mrf.mxu0
        %1549 = vdwg.mxu0
        %1551 = vrot.lane.b32.xlu0 %v1397, 8
        %v1552 = vpop.permute.xlu0 %1551
        %1555 = vrot.lane.b32.xlu0 %v1472, 16
        %v1556 = vpop.permute.xlu0 %1555
        %1559 = vrot.lane.b32.xlu0 %v1547, 24
        %v1560 = vpop.permute.xlu0 %1559
        %vm1562 = vcmask 64512
        %v1563 = vsel %vm1562, %v1322, %v1552
        %v1564 = vsel %vm612, %v1563, %v1556
        %vm1565 = vcmask 195584
        %v1566 = vsel %vm1565, %v1564, %v1560
        %s1567 = sld [smem:[#allocation3 + %s36]]
        %s1568 = scalar_lea.vmem [#allocation9], %s1567
        %v1569 = vld [vmem:[%s1568] sm:$0x1]
        %v1570 = vld [vmem:[#allocation9 + $0x8] sm:$0x7]
        %v1572 = vrot.slane %v1570, 7
        %v1575 = vrot.slane %v1566, 4
        %vm1577 = vcmask 1040384
        %v1578 = vsel %vm1577, %v1569, %v1572
        %vm1579 = vcmask 1043456
        %v1580 = vsel %vm1579, %v1578, %v1575
        %v1581 = vld [vmem:[#allocation12 + $0x20] sm:$0x1]
        %v1582 = vld [vmem:[#allocation12 + $0x21] sm:$0x1]
        %v1583 = vlaneseq
        %v1584 = vshrl.u32 %v1583, 7
        %v1585 = vsub.s32 0, %v1584
        %v1586 = vrot.slane %v1581, %v1585
        %v1587 = vsub.f32 %v1580, %v1586
        %v1588 = vsub.f32 %v1575, %v1586
        %v1589 = vlaneseq
        %v1590 = vshrl.u32 %v1589, 7
        %v1591 = vsub.s32 0, %v1590
        %v1592 = vrot.slane %v1582, %v1591
        %v1593 = vmul.f32 %v1587, %v1592
        %v1594 = vmul.f32 %v1588, %v1592
        %v1595 = vmul.f32 %v1593, 5.656854
        %v1596 = vmul.f32 %v1594, 5.656854
        %v1597 = vld [vmem:[#allocation9 + $0xb] sm:$0xff]
        %v1598 = vld [vmem:[#allocation9 + $0x13] sm:$0x3]
        %v1599 = vadd.f32 %v1595, %v1597
        %v1600 = vadd.f32 %v1596, %v1598
        %v1601 = vld [vmem:[#allocation11] sm:$0xff]
        %v1602 = vld [vmem:[#allocation11 + $0x8] sm:$0xff]
        %v1603 = vld [vmem:[#allocation11 + $0x10] sm:$0xff]
        %v1604 = vld [vmem:[#allocation11 + $0x18] sm:$0xff]
        %v1605 = vld [vmem:[#allocation11 + $0x20] sm:$0xff]
        %s1606 = scalar_lea.vmem [#allocation11], 40
        %v1607 = vld [vmem:[%s1606] sm:$0xff]
        %v1608 = vld [vmem:[%s1606 + $0x8] sm:$0xff]
        %v1609 = vld [vmem:[%s1606 + $0x10] sm:$0xff]
        %v1610 = vld [vmem:[%s1606 + $0x18] sm:$0xff]
        %v1611 = vld [vmem:[%s1606 + $0x20] sm:$0xff]
        %v1613 = vsel %vm1158, %v1601, 0
        %v1616 = vsel %vm1158, %v1602, 0
        %v1619 = vsel %vm1158, %v1603, 0
        %v1622 = vsel %vm1158, %v1604, 0
        %v1625 = vsel %vm1158, %v1605, 0
        %1627 = vmatprep.subr.mxu0 0.0
        %1628 = vmatpush1.xpose.msra.mxu0 0.0
        %1629 = vmatprep.subr.mxu0 0.0
        %1630 = vmatpush1.xpose.msra.mxu0 0.0
        %1631 = vmatprep.subr.mxu0 0.0
        %1632 = vmatpush1.xpose.msra.mxu0 0.0
        %1633 = vmatprep.subr.mxu0 0.0
        %1634 = vmatpush1.xpose.msra.mxu0 0.0
        %1635 = vmatprep.subr.mxu0 0.0
        %1636 = vmatpush1.xpose.msra.mxu0 0.0
        %1637 = vmatprep.subr.mxu0 0.0
        %1638 = vmatpush1.xpose.msra.mxu0 0.0
        %1639 = vmatprep.subr.mxu0 0.0
        %1640 = vmatpush1.xpose.msra.mxu0 0.0
        %1641 = vmatprep.subr.mxu0 0.0
        %1642 = vmatpush1.xpose.msra.mxu0 0.0
        %1643 = vmatprep.subr.mxu0 0.0
        %1644 = vmatpush1.xpose.msra.mxu0 0.0
        %1645 = vmatprep.subr.mxu0 0.0
        %1646 = vmatpush1.xpose.msra.mxu0 0.0
        %1647 = vmatprep.subr.mxu0 0.0
        %1648 = vmatpush1.xpose.msra.mxu0 0.0
        %1649 = vmatprep.subr.mxu0 0.0
        %1650 = vmatpush1.xpose.msra.mxu0 %v1625
        %1651 = vmatprep.subr.mxu0 0.0
        %1652 = vmatpush1.xpose.msra.mxu0 %v1622
        %1653 = vmatprep.subr.mxu0 0.0
        %1654 = vmatpush1.xpose.msra.mxu0 %v1619
        %1655 = vmatprep.subr.mxu0 0.0
        %1656 = vmatpush1.xpose.msra.mxu0 %v1616
        %1657 = vmatprep.subr.mxu0 0.0
        %1658 = vmatpush1.xpose.msra.mxu0 %v1613
        %1659 = vmatprep.subr.mxu0 0.0
        %1660 = vmatpush2.xpose.msra.mxu0 0.0
        %1661 = vmatprep.subr.mxu0 0.0
        %1662 = vmatpush2.xpose.msra.mxu0 0.0
        %1663 = vmatprep.subr.mxu0 0.0
        %1664 = vmatpush2.xpose.msra.mxu0 0.0
        %1665 = vmatprep.subr.mxu0 0.0
        %1666 = vmatpush2.xpose.msra.mxu0 0.0
        %1667 = vmatprep.subr.mxu0 0.0
        %1668 = vmatpush2.xpose.msra.mxu0 0.0
        %1669 = vmatprep.subr.mxu0 0.0
        %1670 = vmatpush2.xpose.msra.mxu0 0.0
        %1671 = vmatprep.subr.mxu0 0.0
        %1672 = vmatpush2.xpose.msra.mxu0 0.0
        %1673 = vmatprep.subr.mxu0 0.0
        %1674 = vmatpush2.xpose.msra.mxu0 0.0
        %1675 = vmatprep.subr.mxu0 0.0
        %1676 = vmatpush2.xpose.msra.mxu0 0.0
        %1677 = vmatprep.subr.mxu0 0.0
        %1678 = vmatpush2.xpose.msra.mxu0 0.0
        %1679 = vmatprep.subr.mxu0 0.0
        %1680 = vmatpush2.xpose.msra.mxu0 0.0
        %1681 = vmatprep.subr.mxu0 0.0
        %1682 = vmatpush2.xpose.msra.mxu0 0.0
        %1683 = vmatprep.subr.mxu0 0.0
        %1684 = vmatpush2.xpose.msra.mxu0 0.0
        %1685 = vmatprep.subr.mxu0 0.0
        %1686 = vmatpush2.xpose.msra.mxu0 0.0
        %1687 = vmatprep.subr.mxu0 0.0
        %1688 = vmatpush2.xpose.msra.mxu0 0.0
        %1689 = vmatprep.subr.mxu0 0.0
        %1690 = vmatpush2.xpose.msra.mxu0 0.0
        %1691 = vmatprep.mubr.f32.mxu0 0.0
        %1692 = vmatmul.mubr.f32.gmra.mxu0 %v1613
        %v1693 = vpop.f32.mrf.mxu0
        %v1694 = vadd.f32 0.0, %v1693
        %v1695 = vpop.f32.mrf.mxu0
        %1696 = vmatprep.mubr.f32.mxu0 0.0
        %1697 = vmatmul.mubr.f32.gmra.mxu0 %v1616
        %v1698 = vpop.f32.mrf.mxu0
        %v1699 = vadd.f32 0.0, %v1698
        %v1700 = vpop.f32.mrf.mxu0
        %1701 = vmatprep.mubr.f32.mxu0 0.0
        %1702 = vmatmul.mubr.f32.gmra.mxu0 %v1619
        %v1703 = vpop.f32.mrf.mxu0
        %v1704 = vadd.f32 0.0, %v1703
        %v1705 = vpop.f32.mrf.mxu0
        %1706 = vmatprep.mubr.f32.mxu0 0.0
        %1707 = vmatmul.mubr.f32.gmra.mxu0 %v1622
        %v1708 = vpop.f32.mrf.mxu0
        %v1709 = vadd.f32 0.0, %v1708
        %v1710 = vpop.f32.mrf.mxu0
        %1711 = vmatprep.mubr.f32.mxu0 0.0
        %1712 = vmatmul.mubr.f32.gmra.mxu0 %v1625
        %v1713 = vpop.f32.mrf.mxu0
        %v1714 = vadd.f32 0.0, %v1713
        %v1715 = vpop.f32.mrf.mxu0
        %1716 = vdwg.mxu0
        %v1717 = vmul.f32 %v1694, 0.125
        %v1718 = vmul.f32 %v1699, 0.125
        %v1719 = vmul.f32 %v1704, 0.125
        %v1720 = vmul.f32 %v1709, 0.125
        %v1721 = vmul.f32 %v1714, 0.125
        %v1722 = vld [vmem:[#allocation12] sm:$0x1]
        %v1723 = vld [vmem:[#allocation12 + $0x1] sm:$0x1]
        %v1724 = vsel %vm1158, %v1599, 0.0
        %1725 = vadd.xlane.f32.xlu0 %v1724
        %v1726 = vpop.xlane.xlu0 %1725
        %vm1727 = vcmask 254976
        %v1728 = vsel %vm1727, %v1600, 0.0
        %1729 = vadd.xlane.f32.xlu0 %v1728
        %v1730 = vpop.xlane.xlu0 %1729
        %v1731 = vrcp.pop 32.0
        %v1732 = vmul.f32 %v1726, %v1731
        %v1733 = vmul.f32 %v1730, %v1731
        %v1734 = vsub.f32 %v1599, %v1732
        %v1735 = vsub.f32 %v1600, %v1733
        %v1736 = vmul.f32 %v1734, %v1734
        %v1737 = vmul.f32 %v1735, %v1735
        %v1738 = vsel %vm1158, %v1736, 0.0
        %1739 = vadd.xlane.f32.xlu0 %v1738
        %v1740 = vpop.xlane.xlu0 %1739
        %v1741 = vsel %vm1727, %v1737, 0.0
        %1742 = vadd.xlane.f32.xlu0 %v1741
        %v1743 = vpop.xlane.xlu0 %1742
        %v1744 = vmul.f32 %v1740, %v1731
        %v1745 = vmul.f32 %v1743, %v1731
        %v1746 = vadd.f32 %v1744, 1e-05
        %v1747 = vadd.f32 %v1745, 1e-05
        %v1748 = vrsqrt.pop %v1746
        %v1749 = vrsqrt.pop %v1747
        %v1750 = vmul.f32 %v1734, %v1748
        %v1751 = vmul.f32 %v1735, %v1749
        %v1752 = vlaneseq
        %v1753 = vshrl.u32 %v1752, 7
        %v1754 = vsub.s32 0, %v1753
        %v1755 = vrot.slane %v1722, %v1754
        %v1756 = vmul.f32 %v1750, %v1755
        %v1757 = vmul.f32 %v1751, %v1755
        %v1758 = vlaneseq
        %v1759 = vshrl.u32 %v1758, 7
        %v1760 = vsub.s32 0, %v1759
        %v1761 = vrot.slane %v1723, %v1760
        %v1762 = vadd.f32 %v1756, %v1761
        %v1763 = vadd.f32 %v1757, %v1761
        %v1764 = vpack.c.bf16 %v1763, %v1762
        %v1765 = vld [vmem:[#allocation14] sm:$0xf]
        %v1766 = vld [vmem:[#allocation14 + $0x4] sm:$0xf]
        %v1767 = vld [vmem:[#allocation14 + $0x8] sm:$0xf]
        %v1768 = vld [vmem:[#allocation14 + $0xc] sm:$0xf]
        %v1769 = vld [vmem:[#allocation12 + $0x2] sm:$0x1]
        %v1770 = vlaneseq
        %v1771 = vshrl.u32 %v1770, 7
        %v1772 = vsub.s32 0, %v1771
        %v1773 = vrot.slane %v1769, %v1772
        %v1778 = vunpack.c.l.b16 %v1765
        %v1779 = vunpack.c.l.b16 %v1766
        %v1780 = vunpack.c.l.b16 %v1767
        %v1781 = vunpack.c.l.b16 %v1768
        %v1782 = vpack.c.b16 %v1779, %v1778
        %v1783 = vpack.c.b16 %v1781, %v1780
        %v1787 = vsel %vm1158, %v1764, 0
        %1789 = vmatprep.subr.bf16.mxu0 0
        %1790 = vmatpush1.bf16.msra.mxu0 0
        %1791 = vmatprep.subr.bf16.mxu0 0
        %1792 = vmatpush1.bf16.msra.mxu0 0
        %1793 = vmatprep.subr.bf16.mxu0 0
        %1794 = vmatpush1.bf16.msra.mxu0 0
        %1795 = vmatprep.subr.bf16.mxu0 0
        %1796 = vmatpush1.bf16.msra.mxu0 0
        %1797 = vmatprep.subr.bf16.mxu0 0
        %1798 = vmatpush1.bf16.msra.mxu0 0
        %1799 = vmatprep.subr.bf16.mxu0 0
        %1800 = vmatpush1.bf16.msra.mxu0 0
        %1801 = vmatprep.subr.bf16.mxu0 0
        %1802 = vmatpush1.bf16.msra.mxu0 %v1783
        %1803 = vmatprep.subr.bf16.mxu0 0
        %1804 = vmatpush1.bf16.msra.mxu0 %v1782
        %1805 = vmatprep.subr.bf16.mxu0 0
        %1806 = vmatpush2.bf16.msra.mxu0 0
        %1807 = vmatprep.subr.bf16.mxu0 0
        %1808 = vmatpush2.bf16.msra.mxu0 0
        %1809 = vmatprep.subr.bf16.mxu0 0
        %1810 = vmatpush2.bf16.msra.mxu0 0
        %1811 = vmatprep.subr.bf16.mxu0 0
        %1812 = vmatpush2.bf16.msra.mxu0 0
        %1813 = vmatprep.subr.bf16.mxu0 0
        %1814 = vmatpush2.bf16.msra.mxu0 0
        %1815 = vmatprep.subr.bf16.mxu0 0
        %1816 = vmatpush2.bf16.msra.mxu0 0
        %1817 = vmatprep.subr.bf16.mxu0 0
        %1818 = vmatpush2.bf16.msra.mxu0 0
        %1819 = vmatprep.subr.bf16.mxu0 0
        %1820 = vmatpush2.bf16.msra.mxu0 0
        %1821 = vmatprep.mubr.bf16.mxu0 0
        %1822 = vmatmul.mubr.bf16.gmra.mxu0 %v1787
        %v1823 = vpop.f32.mrf.mxu0
        %v1824 = vadd.f32 %v1773, %v1823
        %v1825 = vpop.f32.mrf.mxu0
        %v1826 = vpop.f32.mrf.mxu0
        %v1827 = vadd.f32 %v1773, %v1826
        %v1828 = vpop.f32.mrf.mxu0
        %1829 = vdwg.mxu0
        %v1830 = vld [vmem:[#allocation15] sm:$0x7]
        %1833 = vrot.lane.b32.xlu0 %v1824, 64
        %v1834 = vpop.permute.xlu0 %1833
        %1835 = vrot.lane.b32.xlu0 %v1827, 64
        %v1836 = vpop.permute.xlu0 %1835
        %v1838 = vsel %vm646, %v1836, 0
        %1840 = vmatprep.subr.mxu0 0.0
        %1841 = vmatpush1.msra.mxu0 0.0
        %1842 = vmatprep.subr.mxu0 0.0
        %1843 = vmatpush1.msra.mxu0 0.0
        %1844 = vmatprep.subr.mxu0 0.0
        %1845 = vmatpush1.msra.mxu0 0.0
        %1846 = vmatprep.subr.mxu0 0.0
        %1847 = vmatpush1.msra.mxu0 0.0
        %1848 = vmatprep.subr.mxu0 0.0
        %1849 = vmatpush1.msra.mxu0 0.0
        %1850 = vmatprep.subr.mxu0 0.0
        %1851 = vmatpush1.msra.mxu0 0.0
        %1852 = vmatprep.subr.mxu0 0.0
        %1853 = vmatpush1.msra.mxu0 0.0
        %1854 = vmatprep.subr.mxu0 0.0
        %1855 = vmatpush1.msra.mxu0 0.0
        %1856 = vmatprep.subr.mxu0 0.0
        %1857 = vmatpush1.msra.mxu0 0.0
        %1858 = vmatprep.subr.mxu0 0.0
        %1859 = vmatpush1.msra.mxu0 0.0
        %1860 = vmatprep.subr.mxu0 0.0
        %1861 = vmatpush1.msra.mxu0 0.0
        %1862 = vmatprep.subr.mxu0 0.0
        %1863 = vmatpush1.msra.mxu0 0.0
        %1864 = vmatprep.subr.mxu0 0.0
        %1865 = vmatpush1.msra.mxu0 0.0
        %1866 = vmatprep.subr.mxu0 0.0
        %1867 = vmatpush1.msra.mxu0 0.0
        %1868 = vmatprep.subr.mxu0 0.0
        %1869 = vmatpush1.msra.mxu0 %v1838
        %1870 = vmatprep.subr.mxu0 0.0
        %1871 = vmatpush1.msra.mxu0 %v1834
        %1872 = vmatprep.subr.mxu0 0.0
        %1873 = vmatpush2.msra.mxu0 0.0
        %1874 = vmatprep.subr.mxu0 0.0
        %1875 = vmatpush2.msra.mxu0 0.0
        %1876 = vmatprep.subr.mxu0 0.0
        %1877 = vmatpush2.msra.mxu0 0.0
        %1878 = vmatprep.subr.mxu0 0.0
        %1879 = vmatpush2.msra.mxu0 0.0
        %1880 = vmatprep.subr.mxu0 0.0
        %1881 = vmatpush2.msra.mxu0 0.0
        %1882 = vmatprep.subr.mxu0 0.0
        %1883 = vmatpush2.msra.mxu0 0.0
        %1884 = vmatprep.subr.mxu0 0.0
        %1885 = vmatpush2.msra.mxu0 0.0
        %1886 = vmatprep.subr.mxu0 0.0
        %1887 = vmatpush2.msra.mxu0 0.0
        %1888 = vmatprep.subr.mxu0 0.0
        %1889 = vmatpush2.msra.mxu0 0.0
        %1890 = vmatprep.subr.mxu0 0.0
        %1891 = vmatpush2.msra.mxu0 0.0
        %1892 = vmatprep.subr.mxu0 0.0
        %1893 = vmatpush2.msra.mxu0 0.0
        %1894 = vmatprep.subr.mxu0 0.0
        %1895 = vmatpush2.msra.mxu0 0.0
        %1896 = vmatprep.subr.mxu0 0.0
        %1897 = vmatpush2.msra.mxu0 0.0
        %1898 = vmatprep.subr.mxu0 0.0
        %1899 = vmatpush2.msra.mxu0 0.0
        %1900 = vmatprep.subr.mxu0 0.0
        %1901 = vmatpush2.msra.mxu0 0.0
        %1902 = vmatprep.subr.mxu0 0.0
        %1903 = vmatpush2.msra.mxu0 0.0
        %1904 = vmatprep.mubr.f32.mxu0 0.0
        %1905 = vmatmul.mubr.f32.gmra.mxu0 %v641
        %v1906 = vpop.f32.mrf.mxu0
        %v1907 = vadd.f32 0.0, %v1906
        %v1908 = vpop.f32.mrf.mxu0
        %1909 = vmatprep.mubr.f32.mxu0 0.0
        %1910 = vmatmul.mubr.f32.gmra.mxu0 %v644
        %v1911 = vpop.f32.mrf.mxu0
        %v1912 = vadd.f32 0.0, %v1911
        %v1913 = vpop.f32.mrf.mxu0
        %1914 = vdwg.mxu0
        %v1916 = vsel %vm639, %v579, 0
        %v1919 = vsel %vm639, %v580, 0
        %1921 = vmatprep.subr.mxu0 0.0
        %1922 = vmatpush1.msra.mxu0 0.0
        %1923 = vmatprep.subr.mxu0 0.0
        %1924 = vmatpush1.msra.mxu0 0.0
        %1925 = vmatprep.subr.mxu0 0.0
        %1926 = vmatpush1.msra.mxu0 0.0
        %1927 = vmatprep.subr.mxu0 0.0
        %1928 = vmatpush1.msra.mxu0 0.0
        %1929 = vmatprep.subr.mxu0 0.0
        %1930 = vmatpush1.msra.mxu0 0.0
        %1931 = vmatprep.subr.mxu0 0.0
        %1932 = vmatpush1.msra.mxu0 0.0
        %1933 = vmatprep.subr.mxu0 0.0
        %1934 = vmatpush1.msra.mxu0 0.0
        %1935 = vmatprep.subr.mxu0 0.0
        %1936 = vmatpush1.msra.mxu0 0.0
        %1937 = vmatprep.subr.mxu0 0.0
        %1938 = vmatpush1.msra.mxu0 0.0
        %1939 = vmatprep.subr.mxu0 0.0
        %1940 = vmatpush1.msra.mxu0 0.0
        %1941 = vmatprep.subr.mxu0 0.0
        %1942 = vmatpush1.msra.mxu0 0.0
        %1943 = vmatprep.subr.mxu0 0.0
        %1944 = vmatpush1.msra.mxu0 0.0
        %1945 = vmatprep.subr.mxu0 0.0
        %1946 = vmatpush1.msra.mxu0 0.0
        %1947 = vmatprep.subr.mxu0 0.0
        %1948 = vmatpush1.msra.mxu0 0.0
        %1949 = vmatprep.subr.mxu0 0.0
        %1950 = vmatpush1.msra.mxu0 %v1838
        %1951 = vmatprep.subr.mxu0 0.0
        %1952 = vmatpush1.msra.mxu0 %v1834
        %1953 = vmatprep.subr.mxu0 0.0
        %1954 = vmatpush2.msra.mxu0 0.0
        %1955 = vmatprep.subr.mxu0 0.0
        %1956 = vmatpush2.msra.mxu0 0.0
        %1957 = vmatprep.subr.mxu0 0.0
        %1958 = vmatpush2.msra.mxu0 0.0
        %1959 = vmatprep.subr.mxu0 0.0
        %1960 = vmatpush2.msra.mxu0 0.0
        %1961 = vmatprep.subr.mxu0 0.0
        %1962 = vmatpush2.msra.mxu0 0.0
        %1963 = vmatprep.subr.mxu0 0.0
        %1964 = vmatpush2.msra.mxu0 0.0
        %1965 = vmatprep.subr.mxu0 0.0
        %1966 = vmatpush2.msra.mxu0 0.0
        %1967 = vmatprep.subr.mxu0 0.0
        %1968 = vmatpush2.msra.mxu0 0.0
        %1969 = vmatprep.subr.mxu0 0.0
        %1970 = vmatpush2.msra.mxu0 0.0
        %1971 = vmatprep.subr.mxu0 0.0
        %1972 = vmatpush2.msra.mxu0 0.0
        %1973 = vmatprep.subr.mxu0 0.0
        %1974 = vmatpush2.msra.mxu0 0.0
        %1975 = vmatprep.subr.mxu0 0.0
        %1976 = vmatpush2.msra.mxu0 0.0
        %1977 = vmatprep.subr.mxu0 0.0
        %1978 = vmatpush2.msra.mxu0 0.0
        %1979 = vmatprep.subr.mxu0 0.0
        %1980 = vmatpush2.msra.mxu0 0.0
        %1981 = vmatprep.subr.mxu0 0.0
        %1982 = vmatpush2.msra.mxu0 0.0
        %1983 = vmatprep.subr.mxu0 0.0
        %1984 = vmatpush2.msra.mxu0 0.0
        %1985 = vmatprep.mubr.f32.mxu0 0.0
        %1986 = vmatmul.mubr.f32.gmra.mxu0 %v1916
        %v1987 = vpop.f32.mrf.mxu0
        %v1988 = vadd.f32 0.0, %v1987
        %v1989 = vpop.f32.mrf.mxu0
        %1990 = vmatprep.mubr.f32.mxu0 0.0
        %1991 = vmatmul.mubr.f32.gmra.mxu0 %v1919
        %v1992 = vpop.f32.mrf.mxu0
        %v1993 = vadd.f32 0.0, %v1992
        %v1994 = vpop.f32.mrf.mxu0
        %1995 = vdwg.mxu0
        %v1996 = vlaneseq
        %v1997 = vshrl.u32 %v1996, 7
        %v1998 = vsub.s32 0, %v1997
        %v1999 = vrot.slane %v1830, %v1998
        %v2000 = vmul.f32 %v1907, %v1999
        %v2001 = vmul.f32 %v1912, %v1999
        %v2002 = vlaneseq
        %v2003 = vshrl.u32 %v2002, 7
        %v2004 = vsub.s32 1, %v2003
        %v2005 = vrot.slane %v1830, %v2004
        %2007 = vrot.lane.b32.xlu0 %v2005, 64
        %v2008 = vpop.permute.xlu0 %2007
        %v2010 = vmul.f32 %v1824, %v2008
        %v2011 = vmul.f32 %v1827, %v2008
        %2014 = vrot.lane.b32.xlu0 %v2010, 64
        %v2015 = vpop.permute.xlu0 %2014
        %2016 = vrot.lane.b32.xlu0 %v2011, 64
        %v2017 = vpop.permute.xlu0 %2016
        %v2020 = vadd.f32 %v2000, %v2015
        %v2021 = vadd.f32 %v2001, %v2017
        %v2022 = vlaneseq
        %v2023 = vshrl.u32 %v2022, 7
        %v2024 = vsub.s32 2, %v2023
        %v2025 = vrot.slane %v1830, %v2024
        %v2026 = vmul.f32 %v1988, %v2025
        %v2027 = vmul.f32 %v1993, %v2025
        %v2028 = vadd.f32 %v2020, %v2026
        %v2029 = vadd.f32 %v2021, %v2027
        %v2031 = vadd.f32 %v2028, %v1834
        %v2032 = vadd.f32 %v2029, %v1836
        %2033 = vrot.lane.b32.xlu0 %v1824, 96
        %v2034 = vpop.permute.xlu0 %2033
        %2035 = vrot.lane.b32.xlu0 %v1827, 96
        %v2036 = vpop.permute.xlu0 %2035
        %v2039 = vsel %vm639, %v1607, 0
        %v2042 = vsel %vm639, %v1608, 0
        %v2045 = vsel %vm639, %v1609, 0
        %v2048 = vsel %vm639, %v1610, 0
        %v2051 = vsel %vm639, %v1611, 0
        %v2053 = vsel %vm646, %v2036, 0
        %2055 = vmatprep.subr.mxu0 0.0
        %2056 = vmatpush1.msra.mxu0 0.0
        %2057 = vmatprep.subr.mxu0 0.0
        %2058 = vmatpush1.msra.mxu0 0.0
        %2059 = vmatprep.subr.mxu0 0.0
        %2060 = vmatpush1.msra.mxu0 0.0
        %2061 = vmatprep.subr.mxu0 0.0
        %2062 = vmatpush1.msra.mxu0 0.0
        %2063 = vmatprep.subr.mxu0 0.0
        %2064 = vmatpush1.msra.mxu0 0.0
        %2065 = vmatprep.subr.mxu0 0.0
        %2066 = vmatpush1.msra.mxu0 0.0
        %2067 = vmatprep.subr.mxu0 0.0
        %2068 = vmatpush1.msra.mxu0 0.0
        %2069 = vmatprep.subr.mxu0 0.0
        %2070 = vmatpush1.msra.mxu0 0.0
        %2071 = vmatprep.subr.mxu0 0.0
        %2072 = vmatpush1.msra.mxu0 0.0
        %2073 = vmatprep.subr.mxu0 0.0
        %2074 = vmatpush1.msra.mxu0 0.0
        %2075 = vmatprep.subr.mxu0 0.0
        %2076 = vmatpush1.msra.mxu0 0.0
        %2077 = vmatprep.subr.mxu0 0.0
        %2078 = vmatpush1.msra.mxu0 0.0
        %2079 = vmatprep.subr.mxu0 0.0
        %2080 = vmatpush1.msra.mxu0 0.0
        %2081 = vmatprep.subr.mxu0 0.0
        %2082 = vmatpush1.msra.mxu0 0.0
        %2083 = vmatprep.subr.mxu0 0.0
        %2084 = vmatpush1.msra.mxu0 %v2053
        %2085 = vmatprep.subr.mxu0 0.0
        %2086 = vmatpush1.msra.mxu0 %v2034
        %2087 = vmatprep.subr.mxu0 0.0
        %2088 = vmatpush2.msra.mxu0 0.0
        %2089 = vmatprep.subr.mxu0 0.0
        %2090 = vmatpush2.msra.mxu0 0.0
        %2091 = vmatprep.subr.mxu0 0.0
        %2092 = vmatpush2.msra.mxu0 0.0
        %2093 = vmatprep.subr.mxu0 0.0
        %2094 = vmatpush2.msra.mxu0 0.0
        %2095 = vmatprep.subr.mxu0 0.0
        %2096 = vmatpush2.msra.mxu0 0.0
        %2097 = vmatprep.subr.mxu0 0.0
        %2098 = vmatpush2.msra.mxu0 0.0
        %2099 = vmatprep.subr.mxu0 0.0
        %2100 = vmatpush2.msra.mxu0 0.0
        %2101 = vmatprep.subr.mxu0 0.0
        %2102 = vmatpush2.msra.mxu0 0.0
        %2103 = vmatprep.subr.mxu0 0.0
        %2104 = vmatpush2.msra.mxu0 0.0
        %2105 = vmatprep.subr.mxu0 0.0
        %2106 = vmatpush2.msra.mxu0 0.0
        %2107 = vmatprep.subr.mxu0 0.0
        %2108 = vmatpush2.msra.mxu0 0.0
        %2109 = vmatprep.subr.mxu0 0.0
        %2110 = vmatpush2.msra.mxu0 0.0
        %2111 = vmatprep.subr.mxu0 0.0
        %2112 = vmatpush2.msra.mxu0 0.0
        %2113 = vmatprep.subr.mxu0 0.0
        %2114 = vmatpush2.msra.mxu0 0.0
        %2115 = vmatprep.subr.mxu0 0.0
        %2116 = vmatpush2.msra.mxu0 0.0
        %2117 = vmatprep.subr.mxu0 0.0
        %2118 = vmatpush2.msra.mxu0 0.0
        %2119 = vmatprep.mubr.f32.mxu0 0.0
        %2120 = vmatmul.mubr.f32.gmra.mxu0 %v2039
        %v2121 = vpop.f32.mrf.mxu0
        %v2122 = vadd.f32 0.0, %v2121
        %v2123 = vpop.f32.mrf.mxu0
        %2124 = vmatprep.mubr.f32.mxu0 0.0
        %2125 = vmatmul.mubr.f32.gmra.mxu0 %v2042
        %v2126 = vpop.f32.mrf.mxu0
        %v2127 = vadd.f32 0.0, %v2126
        %v2128 = vpop.f32.mrf.mxu0
        %2129 = vmatprep.mubr.f32.mxu0 0.0
        %2130 = vmatmul.mubr.f32.gmra.mxu0 %v2045
        %v2131 = vpop.f32.mrf.mxu0
        %v2132 = vadd.f32 0.0, %v2131
        %v2133 = vpop.f32.mrf.mxu0
        %2134 = vmatprep.mubr.f32.mxu0 0.0
        %2135 = vmatmul.mubr.f32.gmra.mxu0 %v2048
        %v2136 = vpop.f32.mrf.mxu0
        %v2137 = vadd.f32 0.0, %v2136
        %v2138 = vpop.f32.mrf.mxu0
        %2139 = vmatprep.mubr.f32.mxu0 0.0
        %2140 = vmatmul.mubr.f32.gmra.mxu0 %v2051
        %v2141 = vpop.f32.mrf.mxu0
        %v2142 = vadd.f32 0.0, %v2141
        %v2143 = vpop.f32.mrf.mxu0
        %2144 = vdwg.mxu0
        %v2145 = vmul.f32 %v2122, %v1601
        %v2146 = vmul.f32 %v2127, %v1602
        %v2147 = vmul.f32 %v2132, %v1603
        %v2148 = vmul.f32 %v2137, %v1604
        %v2149 = vmul.f32 %v2142, %v1605
        %2150 = vmatprep.subr.mxu0 0.0
        %2151 = vmatpush1.msra.mxu0 0.0
        %2152 = vmatprep.subr.mxu0 0.0
        %2153 = vmatpush1.msra.mxu0 0.0
        %2154 = vmatprep.subr.mxu0 0.0
        %2155 = vmatpush1.msra.mxu0 0.0
        %2156 = vmatprep.subr.mxu0 0.0
        %2157 = vmatpush1.msra.mxu0 0.0
        %2158 = vmatprep.subr.mxu0 0.0
        %2159 = vmatpush1.msra.mxu0 0.0
        %2160 = vmatprep.subr.mxu0 0.0
        %2161 = vmatpush1.msra.mxu0 0.0
        %2162 = vmatprep.subr.mxu0 0.0
        %2163 = vmatpush1.msra.mxu0 0.0
        %2164 = vmatprep.subr.mxu0 0.0
        %2165 = vmatpush1.msra.mxu0 0.0
        %2166 = vmatprep.subr.mxu0 0.0
        %2167 = vmatpush1.msra.mxu0 0.0
        %2168 = vmatprep.subr.mxu0 0.0
        %2169 = vmatpush1.msra.mxu0 0.0
        %2170 = vmatprep.subr.mxu0 0.0
        %2171 = vmatpush1.msra.mxu0 0.0
        %2172 = vmatprep.subr.mxu0 0.0
        %2173 = vmatpush1.msra.mxu0 0.0
        %2174 = vmatprep.subr.mxu0 0.0
        %2175 = vmatpush1.msra.mxu0 0.0
        %2176 = vmatprep.subr.mxu0 0.0
        %2177 = vmatpush1.msra.mxu0 0.0
        %2178 = vmatprep.subr.mxu0 0.0
        %2179 = vmatpush1.msra.mxu0 %v1838
        %2180 = vmatprep.subr.mxu0 0.0
        %2181 = vmatpush1.msra.mxu0 %v1834
        %2182 = vmatprep.subr.mxu0 0.0
        %2183 = vmatpush2.msra.mxu0 0.0
        %2184 = vmatprep.subr.mxu0 0.0
        %2185 = vmatpush2.msra.mxu0 0.0
        %2186 = vmatprep.subr.mxu0 0.0
        %2187 = vmatpush2.msra.mxu0 0.0
        %2188 = vmatprep.subr.mxu0 0.0
        %2189 = vmatpush2.msra.mxu0 0.0
        %2190 = vmatprep.subr.mxu0 0.0
        %2191 = vmatpush2.msra.mxu0 0.0
        %2192 = vmatprep.subr.mxu0 0.0
        %2193 = vmatpush2.msra.mxu0 0.0
        %2194 = vmatprep.subr.mxu0 0.0
        %2195 = vmatpush2.msra.mxu0 0.0
        %2196 = vmatprep.subr.mxu0 0.0
        %2197 = vmatpush2.msra.mxu0 0.0
        %2198 = vmatprep.subr.mxu0 0.0
        %2199 = vmatpush2.msra.mxu0 0.0
        %2200 = vmatprep.subr.mxu0 0.0
        %2201 = vmatpush2.msra.mxu0 0.0
        %2202 = vmatprep.subr.mxu0 0.0
        %2203 = vmatpush2.msra.mxu0 0.0
        %2204 = vmatprep.subr.mxu0 0.0
        %2205 = vmatpush2.msra.mxu0 0.0
        %2206 = vmatprep.subr.mxu0 0.0
        %2207 = vmatpush2.msra.mxu0 0.0
        %2208 = vmatprep.subr.mxu0 0.0
        %2209 = vmatpush2.msra.mxu0 0.0
        %2210 = vmatprep.subr.mxu0 0.0
        %2211 = vmatpush2.msra.mxu0 0.0
        %2212 = vmatprep.subr.mxu0 0.0
        %2213 = vmatpush2.msra.mxu0 0.0
        %2214 = vmatprep.mubr.f32.mxu0 0.0
        %2215 = vmatmul.mubr.f32.gmra.mxu0 %v2039
        %v2216 = vpop.f32.mrf.mxu0
        %v2217 = vadd.f32 0.0, %v2216
        %v2218 = vpop.f32.mrf.mxu0
        %2219 = vmatprep.mubr.f32.mxu0 0.0
        %2220 = vmatmul.mubr.f32.gmra.mxu0 %v2042
        %v2221 = vpop.f32.mrf.mxu0
        %v2222 = vadd.f32 0.0, %v2221
        %v2223 = vpop.f32.mrf.mxu0
        %2224 = vmatprep.mubr.f32.mxu0 0.0
        %2225 = vmatmul.mubr.f32.gmra.mxu0 %v2045
        %v2226 = vpop.f32.mrf.mxu0
        %v2227 = vadd.f32 0.0, %v2226
        %v2228 = vpop.f32.mrf.mxu0
        %2229 = vmatprep.mubr.f32.mxu0 0.0
        %2230 = vmatmul.mubr.f32.gmra.mxu0 %v2048
        %v2231 = vpop.f32.mrf.mxu0
        %v2232 = vadd.f32 0.0, %v2231
        %v2233 = vpop.f32.mrf.mxu0
        %2234 = vmatprep.mubr.f32.mxu0 0.0
        %2235 = vmatmul.mubr.f32.gmra.mxu0 %v2051
        %v2236 = vpop.f32.mrf.mxu0
        %v2237 = vadd.f32 0.0, %v2236
        %v2238 = vpop.f32.mrf.mxu0
        %2239 = vdwg.mxu0
        %v2240 = vmul.f32 %v2217, %v1601
        %v2241 = vmul.f32 %v2222, %v1602
        %v2242 = vmul.f32 %v2227, %v1603
        %v2243 = vmul.f32 %v2232, %v1604
        %v2244 = vmul.f32 %v2237, %v1605
        %v2245 = vsel %vm1158, %v1824, 0
        %v2247 = vsel %vm1158, %v1827, 0
        %v2250 = vsel %vm1158, %v2145, 0
        %v2253 = vsel %vm1158, %v2146, 0
        %v2256 = vsel %vm1158, %v2147, 0
        %v2259 = vsel %vm1158, %v2148, 0
        %v2262 = vsel %vm1158, %v2149, 0
        %2264 = vmatprep.subr.mxu0 0.0
        %2265 = vmatpush1.xpose.msra.mxu0 0.0
        %2266 = vmatprep.subr.mxu0 0.0
        %2267 = vmatpush1.xpose.msra.mxu0 0.0
        %2268 = vmatprep.subr.mxu0 0.0
        %2269 = vmatpush1.xpose.msra.mxu0 0.0
        %2270 = vmatprep.subr.mxu0 0.0
        %2271 = vmatpush1.xpose.msra.mxu0 0.0
        %2272 = vmatprep.subr.mxu0 0.0
        %2273 = vmatpush1.xpose.msra.mxu0 0.0
        %2274 = vmatprep.subr.mxu0 0.0
        %2275 = vmatpush1.xpose.msra.mxu0 0.0
        %2276 = vmatprep.subr.mxu0 0.0
        %2277 = vmatpush1.xpose.msra.mxu0 0.0
        %2278 = vmatprep.subr.mxu0 0.0
        %2279 = vmatpush1.xpose.msra.mxu0 0.0
        %2280 = vmatprep.subr.mxu0 0.0
        %2281 = vmatpush1.xpose.msra.mxu0 0.0
        %2282 = vmatprep.subr.mxu0 0.0
        %2283 = vmatpush1.xpose.msra.mxu0 0.0
        %2284 = vmatprep.subr.mxu0 0.0
        %2285 = vmatpush1.xpose.msra.mxu0 0.0
        %2286 = vmatprep.subr.mxu0 0.0
        %2287 = vmatpush1.xpose.msra.mxu0 %v2262
        %2288 = vmatprep.subr.mxu0 0.0
        %2289 = vmatpush1.xpose.msra.mxu0 %v2259
        %2290 = vmatprep.subr.mxu0 0.0
        %2291 = vmatpush1.xpose.msra.mxu0 %v2256
        %2292 = vmatprep.subr.mxu0 0.0
        %2293 = vmatpush1.xpose.msra.mxu0 %v2253
        %2294 = vmatprep.subr.mxu0 0.0
        %2295 = vmatpush1.xpose.msra.mxu0 %v2250
        %2296 = vmatprep.subr.mxu0 0.0
        %2297 = vmatpush2.xpose.msra.mxu0 0.0
        %2298 = vmatprep.subr.mxu0 0.0
        %2299 = vmatpush2.xpose.msra.mxu0 0.0
        %2300 = vmatprep.subr.mxu0 0.0
        %2301 = vmatpush2.xpose.msra.mxu0 0.0
        %2302 = vmatprep.subr.mxu0 0.0
        %2303 = vmatpush2.xpose.msra.mxu0 0.0
        %2304 = vmatprep.subr.mxu0 0.0
        %2305 = vmatpush2.xpose.msra.mxu0 0.0
        %2306 = vmatprep.subr.mxu0 0.0
        %2307 = vmatpush2.xpose.msra.mxu0 0.0
        %2308 = vmatprep.subr.mxu0 0.0
        %2309 = vmatpush2.xpose.msra.mxu0 0.0
        %2310 = vmatprep.subr.mxu0 0.0
        %2311 = vmatpush2.xpose.msra.mxu0 0.0
        %2312 = vmatprep.subr.mxu0 0.0
        %2313 = vmatpush2.xpose.msra.mxu0 0.0
        %2314 = vmatprep.subr.mxu0 0.0
        %2315 = vmatpush2.xpose.msra.mxu0 0.0
        %2316 = vmatprep.subr.mxu0 0.0
        %2317 = vmatpush2.xpose.msra.mxu0 0.0
        %2318 = vmatprep.subr.mxu0 0.0
        %2319 = vmatpush2.xpose.msra.mxu0 0.0
        %2320 = vmatprep.subr.mxu0 0.0
        %2321 = vmatpush2.xpose.msra.mxu0 0.0
        %2322 = vmatprep.subr.mxu0 0.0
        %2323 = vmatpush2.xpose.msra.mxu0 0.0
        %2324 = vmatprep.subr.mxu0 0.0
        %2325 = vmatpush2.xpose.msra.mxu0 0.0
        %2326 = vmatprep.subr.mxu0 0.0
        %2327 = vmatpush2.xpose.msra.mxu0 0.0
        %2328 = vmatprep.mubr.f32.mxu0 0.0
        %2329 = vmatmul.mubr.f32.gmra.mxu0 %v2245
        %v2330 = vpop.f32.mrf.mxu0
        %v2331 = vadd.f32 0.0, %v2330
        %v2332 = vpop.f32.mrf.mxu0
        %2333 = vmatprep.mubr.f32.mxu0 0.0
        %2334 = vmatmul.mubr.f32.gmra.mxu0 %v2247
        %v2335 = vpop.f32.mrf.mxu0
        %v2336 = vadd.f32 0.0, %v2335
        %v2337 = vpop.f32.mrf.mxu0
        %2338 = vdwg.mxu0
        %vm2339 = vcmask 326656
        %v2340 = vsel %vm2339, %v2331, -inf
        %2341 = vmax.xlane.f32.xlu0 %v2340
        %v2342 = vpop.xlane.xlu0 %2341
        %vm2343 = vcmask 320512
        %v2344 = vsel %vm2343, %v2336, -inf
        %2345 = vmax.xlane.f32.xlu0 %v2344
        %v2346 = vpop.xlane.xlu0 %2345
        %v2347 = vsub.f32 %v2331, %v2342
        %v2348 = vsub.f32 %v2336, %v2346
        %v2349 = vmul.f32 %v2347, 1.442695
        %v2350 = vpow.pop %v2349
        %v2351 = vmul.f32 %v2348, 1.442695
        %v2352 = vpow.pop %v2351
        %v2354 = vsel %vm2339, %v2350, 0
        %v2357 = vsel %vm2339, %v2352, 0
        %2359 = vmatprep.subr.mxu0 0.0
        %2360 = vmatpush1.msra.mxu0 0.0
        %2361 = vmatprep.subr.mxu0 0.0
        %2362 = vmatpush1.msra.mxu0 0.0
        %2363 = vmatprep.subr.mxu0 0.0
        %2364 = vmatpush1.msra.mxu0 0.0
        %2365 = vmatprep.subr.mxu0 0.0
        %2366 = vmatpush1.msra.mxu0 0.0
        %2367 = vmatprep.subr.mxu0 0.0
        %2368 = vmatpush1.msra.mxu0 0.0
        %2369 = vmatprep.subr.mxu0 0.0
        %2370 = vmatpush1.msra.mxu0 0.0
        %2371 = vmatprep.subr.mxu0 0.0
        %2372 = vmatpush1.msra.mxu0 0.0
        %2373 = vmatprep.subr.mxu0 0.0
        %2374 = vmatpush1.msra.mxu0 0.0
        %2375 = vmatprep.subr.mxu0 0.0
        %2376 = vmatpush1.msra.mxu0 0.0
        %2377 = vmatprep.subr.mxu0 0.0
        %2378 = vmatpush1.msra.mxu0 0.0
        %2379 = vmatprep.subr.mxu0 0.0
        %2380 = vmatpush1.msra.mxu0 0.0
        %2381 = vmatprep.subr.mxu0 0.0
        %2382 = vmatpush1.msra.mxu0 %v1721
        %2383 = vmatprep.subr.mxu0 0.0
        %2384 = vmatpush1.msra.mxu0 %v1720
        %2385 = vmatprep.subr.mxu0 0.0
        %2386 = vmatpush1.msra.mxu0 %v1719
        %2387 = vmatprep.subr.mxu0 0.0
        %2388 = vmatpush1.msra.mxu0 %v1718
        %2389 = vmatprep.subr.mxu0 0.0
        %2390 = vmatpush1.msra.mxu0 %v1717
        %2391 = vmatprep.subr.mxu0 0.0
        %2392 = vmatpush2.msra.mxu0 0.0
        %2393 = vmatprep.subr.mxu0 0.0
        %2394 = vmatpush2.msra.mxu0 0.0
        %2395 = vmatprep.subr.mxu0 0.0
        %2396 = vmatpush2.msra.mxu0 0.0
        %2397 = vmatprep.subr.mxu0 0.0
        %2398 = vmatpush2.msra.mxu0 0.0
        %2399 = vmatprep.subr.mxu0 0.0
        %2400 = vmatpush2.msra.mxu0 0.0
        %2401 = vmatprep.subr.mxu0 0.0
        %2402 = vmatpush2.msra.mxu0 0.0
        %2403 = vmatprep.subr.mxu0 0.0
        %2404 = vmatpush2.msra.mxu0 0.0
        %2405 = vmatprep.subr.mxu0 0.0
        %2406 = vmatpush2.msra.mxu0 0.0
        %2407 = vmatprep.subr.mxu0 0.0
        %2408 = vmatpush2.msra.mxu0 0.0
        %2409 = vmatprep.subr.mxu0 0.0
        %2410 = vmatpush2.msra.mxu0 0.0
        %2411 = vmatprep.subr.mxu0 0.0
        %2412 = vmatpush2.msra.mxu0 0.0
        %2413 = vmatprep.subr.mxu0 0.0
        %2414 = vmatpush2.msra.mxu0 0.0
        %2415 = vmatprep.subr.mxu0 0.0
        %2416 = vmatpush2.msra.mxu0 0.0
        %2417 = vmatprep.subr.mxu0 0.0
        %2418 = vmatpush2.msra.mxu0 0.0
        %2419 = vmatprep.subr.mxu0 0.0
        %2420 = vmatpush2.msra.mxu0 0.0
        %2421 = vmatprep.subr.mxu0 0.0
        %2422 = vmatpush2.msra.mxu0 0.0
        %2423 = vmatprep.mubr.f32.mxu0 0.0
        %2424 = vmatmul.mubr.f32.gmra.mxu0 %v2354
        %v2425 = vpop.f32.mrf.mxu0
        %v2426 = vadd.f32 0.0, %v2425
        %v2427 = vpop.f32.mrf.mxu0
        %2428 = vmatprep.mubr.f32.mxu0 0.0
        %2429 = vmatmul.mubr.f32.gmra.mxu0 %v2357
        %v2430 = vpop.f32.mrf.mxu0
        %v2431 = vadd.f32 0.0, %v2430
        %v2432 = vpop.f32.mrf.mxu0
        %2433 = vdwg.mxu0
        %v2434 = vrcp.pop %v2426
        %v2435 = vrcp.pop %v2431
        %v2436 = vmul.f32 %v2350, %v2434
        %v2437 = vmul.f32 %v2352, %v2435
        %v2439 = vsel %vm2339, %v2436, 0
        %v2442 = vsel %vm2339, %v2437, 0
        %2444 = vmatprep.subr.mxu0 0.0
        %2445 = vmatpush1.msra.mxu0 0.0
        %2446 = vmatprep.subr.mxu0 0.0
        %2447 = vmatpush1.msra.mxu0 0.0
        %2448 = vmatprep.subr.mxu0 0.0
        %2449 = vmatpush1.msra.mxu0 0.0
        %2450 = vmatprep.subr.mxu0 0.0
        %2451 = vmatpush1.msra.mxu0 0.0
        %2452 = vmatprep.subr.mxu0 0.0
        %2453 = vmatpush1.msra.mxu0 0.0
        %2454 = vmatprep.subr.mxu0 0.0
        %2455 = vmatpush1.msra.mxu0 0.0
        %2456 = vmatprep.subr.mxu0 0.0
        %2457 = vmatpush1.msra.mxu0 0.0
        %2458 = vmatprep.subr.mxu0 0.0
        %2459 = vmatpush1.msra.mxu0 0.0
        %2460 = vmatprep.subr.mxu0 0.0
        %2461 = vmatpush1.msra.mxu0 0.0
        %2462 = vmatprep.subr.mxu0 0.0
        %2463 = vmatpush1.msra.mxu0 0.0
        %2464 = vmatprep.subr.mxu0 0.0
        %2465 = vmatpush1.msra.mxu0 0.0
        %2466 = vmatprep.subr.mxu0 0.0
        %2467 = vmatpush1.msra.mxu0 %v2244
        %2468 = vmatprep.subr.mxu0 0.0
        %2469 = vmatpush1.msra.mxu0 %v2243
        %2470 = vmatprep.subr.mxu0 0.0
        %2471 = vmatpush1.msra.mxu0 %v2242
        %2472 = vmatprep.subr.mxu0 0.0
        %2473 = vmatpush1.msra.mxu0 %v2241
        %2474 = vmatprep.subr.mxu0 0.0
        %2475 = vmatpush1.msra.mxu0 %v2240
        %2476 = vmatprep.subr.mxu0 0.0
        %2477 = vmatpush2.msra.mxu0 0.0
        %2478 = vmatprep.subr.mxu0 0.0
        %2479 = vmatpush2.msra.mxu0 0.0
        %2480 = vmatprep.subr.mxu0 0.0
        %2481 = vmatpush2.msra.mxu0 0.0
        %2482 = vmatprep.subr.mxu0 0.0
        %2483 = vmatpush2.msra.mxu0 0.0
        %2484 = vmatprep.subr.mxu0 0.0
        %2485 = vmatpush2.msra.mxu0 0.0
        %2486 = vmatprep.subr.mxu0 0.0
        %2487 = vmatpush2.msra.mxu0 0.0
        %2488 = vmatprep.subr.mxu0 0.0
        %2489 = vmatpush2.msra.mxu0 0.0
        %2490 = vmatprep.subr.mxu0 0.0
        %2491 = vmatpush2.msra.mxu0 0.0
        %2492 = vmatprep.subr.mxu0 0.0
        %2493 = vmatpush2.msra.mxu0 0.0
        %2494 = vmatprep.subr.mxu0 0.0
        %2495 = vmatpush2.msra.mxu0 0.0
        %2496 = vmatprep.subr.mxu0 0.0
        %2497 = vmatpush2.msra.mxu0 0.0
        %2498 = vmatprep.subr.mxu0 0.0
        %2499 = vmatpush2.msra.mxu0 0.0
        %2500 = vmatprep.subr.mxu0 0.0
        %2501 = vmatpush2.msra.mxu0 0.0
        %2502 = vmatprep.subr.mxu0 0.0
        %2503 = vmatpush2.msra.mxu0 0.0
        %2504 = vmatprep.subr.mxu0 0.0
        %2505 = vmatpush2.msra.mxu0 0.0
        %2506 = vmatprep.subr.mxu0 0.0
        %2507 = vmatpush2.msra.mxu0 0.0
        %2508 = vmatprep.mubr.f32.mxu0 0.0
        %2509 = vmatmul.mubr.f32.gmra.mxu0 %v2439
        %v2510 = vpop.f32.mrf.mxu0
        %v2511 = vadd.f32 0.0, %v2510
        %v2512 = vpop.f32.mrf.mxu0
        %2513 = vmatprep.mubr.f32.mxu0 0.0
        %2514 = vmatmul.mubr.f32.gmra.mxu0 %v2442
        %v2515 = vpop.f32.mrf.mxu0
        %v2516 = vadd.f32 0.0, %v2515
        %v2517 = vpop.f32.mrf.mxu0
        %2518 = vdwg.mxu0
        %v2519 = vpack.c.bf16 %v2516, %v2511
        %v2520 = vld [vmem:[%s12] sm:$0xf]
        %v2521 = vld [vmem:[%s12 + $0x4] sm:$0xf]
        %v2522 = vld [vmem:[%s12 + $0x8] sm:$0xf]
        %v2523 = vld [vmem:[%s12 + $0xc] sm:$0xf]
        %v2524 = vld [vmem:[#allocation12 + $0x3] sm:$0x1]
        %v2525 = vlaneseq
        %v2526 = vshrl.u32 %v2525, 7
        %v2527 = vsub.s32 0, %v2526
        %v2528 = vrot.slane %v2524, %v2527
        %v2533 = vunpack.c.l.b16 %v2520
        %v2534 = vunpack.c.l.b16 %v2521
        %v2535 = vunpack.c.l.b16 %v2522
        %v2536 = vunpack.c.l.b16 %v2523
        %v2537 = vpack.c.b16 %v2534, %v2533
        %v2538 = vpack.c.b16 %v2536, %v2535
        %v2542 = vsel %vm1158, %v2519, 0
        %2544 = vmatprep.subr.bf16.mxu0 0
        %2545 = vmatpush1.bf16.msra.mxu0 0
        %2546 = vmatprep.subr.bf16.mxu0 0
        %2547 = vmatpush1.bf16.msra.mxu0 0
        %2548 = vmatprep.subr.bf16.mxu0 0
        %2549 = vmatpush1.bf16.msra.mxu0 0
        %2550 = vmatprep.subr.bf16.mxu0 0
        %2551 = vmatpush1.bf16.msra.mxu0 0
        %2552 = vmatprep.subr.bf16.mxu0 0
        %2553 = vmatpush1.bf16.msra.mxu0 0
        %2554 = vmatprep.subr.bf16.mxu0 0
        %2555 = vmatpush1.bf16.msra.mxu0 0
        %2556 = vmatprep.subr.bf16.mxu0 0
        %2557 = vmatpush1.bf16.msra.mxu0 %v2538
        %2558 = vmatprep.subr.bf16.mxu0 0
        %2559 = vmatpush1.bf16.msra.mxu0 %v2537
        %2560 = vmatprep.subr.bf16.mxu0 0
        %2561 = vmatpush2.bf16.msra.mxu0 0
        %2562 = vmatprep.subr.bf16.mxu0 0
        %2563 = vmatpush2.bf16.msra.mxu0 0
        %2564 = vmatprep.subr.bf16.mxu0 0
        %2565 = vmatpush2.bf16.msra.mxu0 0
        %2566 = vmatprep.subr.bf16.mxu0 0
        %2567 = vmatpush2.bf16.msra.mxu0 0
        %2568 = vmatprep.subr.bf16.mxu0 0
        %2569 = vmatpush2.bf16.msra.mxu0 0
        %2570 = vmatprep.subr.bf16.mxu0 0
        %2571 = vmatpush2.bf16.msra.mxu0 0
        %2572 = vmatprep.subr.bf16.mxu0 0
        %2573 = vmatpush2.bf16.msra.mxu0 0
        %2574 = vmatprep.subr.bf16.mxu0 0
        %2575 = vmatpush2.bf16.msra.mxu0 0
        %2576 = vmatprep.mubr.bf16.mxu0 0
        %2577 = vmatmul.mubr.bf16.gmra.mxu0 %v2542
        %v2578 = vpop.f32.mrf.mxu0
        %v2579 = vadd.f32 %v2528, %v2578
        %v2580 = vpop.f32.mrf.mxu0
        %v2581 = vpop.f32.mrf.mxu0
        %v2582 = vadd.f32 %v2528, %v2581
        %v2583 = vpop.f32.mrf.mxu0
        %2584 = vdwg.mxu0
        %v2585 = vadd.f32 %v1599, %v2579
        %v2586 = vadd.f32 %v1600, %v2582
        %v2587 = vadd.f32 %v2585, %v2031
        %v2588 = vadd.f32 %v2586, %v2032
        %v2589 = vld [vmem:[#allocation12 + $0x4] sm:$0x1]
        %v2590 = vld [vmem:[#allocation12 + $0x5] sm:$0x1]
        %v2591 = vsel %vm1158, %v2587, 0.0
        %2592 = vadd.xlane.f32.xlu0 %v2591
        %v2593 = vpop.xlane.xlu0 %2592
        %v2594 = vsel %vm1727, %v2588, 0.0
        %2595 = vadd.xlane.f32.xlu0 %v2594
        %v2596 = vpop.xlane.xlu0 %2595
        %v2597 = vmul.f32 %v2593, %v1731
        %v2598 = vmul.f32 %v2596, %v1731
        %v2599 = vsub.f32 %v2587, %v2597
        %v2600 = vsub.f32 %v2588, %v2598
        %v2601 = vmul.f32 %v2599, %v2599
        %v2602 = vmul.f32 %v2600, %v2600
        %v2603 = vsel %vm1158, %v2601, 0.0
        %2604 = vadd.xlane.f32.xlu0 %v2603
        %v2605 = vpop.xlane.xlu0 %2604
        %v2606 = vsel %vm1727, %v2602, 0.0
        %2607 = vadd.xlane.f32.xlu0 %v2606
        %v2608 = vpop.xlane.xlu0 %2607
        %v2609 = vmul.f32 %v2605, %v1731
        %v2610 = vmul.f32 %v2608, %v1731
        %v2611 = vadd.f32 %v2609, 1e-05
        %v2612 = vadd.f32 %v2610, 1e-05
        %v2613 = vrsqrt.pop %v2611
        %v2614 = vrsqrt.pop %v2612
        %v2615 = vmul.f32 %v2599, %v2613
        %v2616 = vmul.f32 %v2600, %v2614
        %v2617 = vlaneseq
        %v2618 = vshrl.u32 %v2617, 7
        %v2619 = vsub.s32 0, %v2618
        %v2620 = vrot.slane %v2589, %v2619
        %v2621 = vmul.f32 %v2615, %v2620
        %v2622 = vmul.f32 %v2616, %v2620
        %v2623 = vlaneseq
        %v2624 = vshrl.u32 %v2623, 7
        %v2625 = vsub.s32 0, %v2624
        %v2626 = vrot.slane %v2590, %v2625
        %v2627 = vadd.f32 %v2621, %v2626
        %v2628 = vadd.f32 %v2622, %v2626
        %v2629 = vpack.c.bf16 %v2628, %v2627
        %v2630 = vld [vmem:[#allocation17] sm:$0xf]
        %v2631 = vld [vmem:[#allocation17 + $0x4] sm:$0xf]
        %v2632 = vld [vmem:[#allocation17 + $0x8] sm:$0xf]
        %v2633 = vld [vmem:[#allocation17 + $0xc] sm:$0xf]
        %v2634 = vld [vmem:[#allocation12 + $0x6] sm:$0x1]
        %v2635 = vlaneseq
        %v2636 = vshrl.u32 %v2635, 7
        %v2637 = vsub.s32 0, %v2636
        %v2638 = vrot.slane %v2634, %v2637
        %v2643 = vunpack.c.l.b16 %v2630
        %v2644 = vunpack.c.l.b16 %v2631
        %v2645 = vunpack.c.l.b16 %v2632
        %v2646 = vunpack.c.l.b16 %v2633
        %v2647 = vpack.c.b16 %v2644, %v2643
        %v2648 = vpack.c.b16 %v2646, %v2645
        %v2652 = vsel %vm1158, %v2629, 0
        %2654 = vmatprep.subr.bf16.mxu0 0
        %2655 = vmatpush1.bf16.msra.mxu0 0
        %2656 = vmatprep.subr.bf16.mxu0 0
        %2657 = vmatpush1.bf16.msra.mxu0 0
        %2658 = vmatprep.subr.bf16.mxu0 0
        %2659 = vmatpush1.bf16.msra.mxu0 0
        %2660 = vmatprep.subr.bf16.mxu0 0
        %2661 = vmatpush1.bf16.msra.mxu0 0
        %2662 = vmatprep.subr.bf16.mxu0 0
        %2663 = vmatpush1.bf16.msra.mxu0 0
        %2664 = vmatprep.subr.bf16.mxu0 0
        %2665 = vmatpush1.bf16.msra.mxu0 0
        %2666 = vmatprep.subr.bf16.mxu0 0
        %2667 = vmatpush1.bf16.msra.mxu0 %v2648
        %2668 = vmatprep.subr.bf16.mxu0 0
        %2669 = vmatpush1.bf16.msra.mxu0 %v2647
        %2670 = vmatprep.subr.bf16.mxu0 0
        %2671 = vmatpush2.bf16.msra.mxu0 0
        %2672 = vmatprep.subr.bf16.mxu0 0
        %2673 = vmatpush2.bf16.msra.mxu0 0
        %2674 = vmatprep.subr.bf16.mxu0 0
        %2675 = vmatpush2.bf16.msra.mxu0 0
        %2676 = vmatprep.subr.bf16.mxu0 0
        %2677 = vmatpush2.bf16.msra.mxu0 0
        %2678 = vmatprep.subr.bf16.mxu0 0
        %2679 = vmatpush2.bf16.msra.mxu0 0
        %2680 = vmatprep.subr.bf16.mxu0 0
        %2681 = vmatpush2.bf16.msra.mxu0 0
        %2682 = vmatprep.subr.bf16.mxu0 0
        %2683 = vmatpush2.bf16.msra.mxu0 0
        %2684 = vmatprep.subr.bf16.mxu0 0
        %2685 = vmatpush2.bf16.msra.mxu0 0
        %2686 = vmatprep.mubr.bf16.mxu0 0
        %2687 = vmatmul.mubr.bf16.gmra.mxu0 %v2652
        %v2688 = vpop.f32.mrf.mxu0
        %v2689 = vadd.f32 %v2638, %v2688
        %v2690 = vpop.f32.mrf.mxu0
        %v2691 = vpop.f32.mrf.mxu0
        %v2692 = vadd.f32 %v2638, %v2691
        %v2693 = vpop.f32.mrf.mxu0
        %2694 = vdwg.mxu0
        %v2695 = vmax.f32 %v2689, 0.0
        %v2696 = vmax.f32 %v2692, 0.0
        %v2697 = vpack.c.bf16 %v2696, %v2695
        %v2698 = vld [vmem:[#allocation18] sm:$0xf]
        %v2699 = vld [vmem:[#allocation18 + $0x4] sm:$0xf]
        %v2700 = vld [vmem:[#allocation18 + $0x8] sm:$0xf]
        %v2701 = vld [vmem:[#allocation18 + $0xc] sm:$0xf]
        %v2702 = vld [vmem:[#allocation18 + $0x10] sm:$0xf]
        %v2703 = vld [vmem:[#allocation18 + $0x14] sm:$0xf]
        %v2704 = vld [vmem:[#allocation18 + $0x18] sm:$0xf]
        %v2705 = vld [vmem:[#allocation18 + $0x1c] sm:$0xf]
        %v2706 = vld [vmem:[#allocation12 + $0x7] sm:$0x1]
        %v2707 = vlaneseq
        %v2708 = vshrl.u32 %v2707, 7
        %v2709 = vsub.s32 0, %v2708
        %v2710 = vrot.slane %v2706, %v2709
        %v2719 = vunpack.c.l.b16 %v2698
        %v2720 = vunpack.c.l.b16 %v2699
        %v2721 = vunpack.c.l.b16 %v2700
        %v2722 = vunpack.c.l.b16 %v2701
        %v2723 = vunpack.c.l.b16 %v2702
        %v2724 = vunpack.c.l.b16 %v2703
        %v2725 = vunpack.c.l.b16 %v2704
        %v2726 = vunpack.c.l.b16 %v2705
        %v2727 = vpack.c.b16 %v2720, %v2719
        %v2728 = vpack.c.b16 %v2722, %v2721
        %v2729 = vpack.c.b16 %v2724, %v2723
        %v2730 = vpack.c.b16 %v2726, %v2725
        %vm2735 = vcmask 523264
        %v2737 = vsel %vm2735, %v2697, 0
        %2739 = vmatprep.subr.bf16.mxu0 0
        %2740 = vmatpush1.bf16.msra.mxu0 0
        %2741 = vmatprep.subr.bf16.mxu0 0
        %2742 = vmatpush1.bf16.msra.mxu0 0
        %2743 = vmatprep.subr.bf16.mxu0 0
        %2744 = vmatpush1.bf16.msra.mxu0 0
        %2745 = vmatprep.subr.bf16.mxu0 0
        %2746 = vmatpush1.bf16.msra.mxu0 0
        %2747 = vmatprep.subr.bf16.mxu0 0
        %2748 = vmatpush1.bf16.msra.mxu0 %v2730
        %2749 = vmatprep.subr.bf16.mxu0 0
        %2750 = vmatpush1.bf16.msra.mxu0 %v2729
        %2751 = vmatprep.subr.bf16.mxu0 0
        %2752 = vmatpush1.bf16.msra.mxu0 %v2728
        %2753 = vmatprep.subr.bf16.mxu0 0
        %2754 = vmatpush1.bf16.msra.mxu0 %v2727
        %2755 = vmatprep.subr.bf16.mxu0 0
        %2756 = vmatpush2.bf16.msra.mxu0 0
        %2757 = vmatprep.subr.bf16.mxu0 0
        %2758 = vmatpush2.bf16.msra.mxu0 0
        %2759 = vmatprep.subr.bf16.mxu0 0
        %2760 = vmatpush2.bf16.msra.mxu0 0
        %2761 = vmatprep.subr.bf16.mxu0 0
        %2762 = vmatpush2.bf16.msra.mxu0 0
        %2763 = vmatprep.subr.bf16.mxu0 0
        %2764 = vmatpush2.bf16.msra.mxu0 0
        %2765 = vmatprep.subr.bf16.mxu0 0
        %2766 = vmatpush2.bf16.msra.mxu0 0
        %2767 = vmatprep.subr.bf16.mxu0 0
        %2768 = vmatpush2.bf16.msra.mxu0 0
        %2769 = vmatprep.subr.bf16.mxu0 0
        %2770 = vmatpush2.bf16.msra.mxu0 0
        %2771 = vmatprep.mubr.bf16.mxu0 0
        %2772 = vmatmul.mubr.bf16.gmra.mxu0 %v2737
        %v2773 = vpop.f32.mrf.mxu0
        %v2774 = vadd.f32 %v2710, %v2773
        %v2775 = vpop.f32.mrf.mxu0
        %v2776 = vpop.f32.mrf.mxu0
        %v2777 = vadd.f32 %v2710, %v2776
        %v2778 = vpop.f32.mrf.mxu0
        %2779 = vdwg.mxu0
        %v2780 = vadd.f32 %v2587, %v2774
        %v2781 = vadd.f32 %v2588, %v2777
        %v2782 = vld [vmem:[#allocation12 + $0x8] sm:$0x1]
        %v2783 = vld [vmem:[#allocation12 + $0x9] sm:$0x1]
        %v2784 = vsel %vm1158, %v2780, 0.0
        %2785 = vadd.xlane.f32.xlu0 %v2784
        %v2786 = vpop.xlane.xlu0 %2785
        %v2787 = vsel %vm1727, %v2781, 0.0
        %2788 = vadd.xlane.f32.xlu0 %v2787
        %v2789 = vpop.xlane.xlu0 %2788
        %v2790 = vmul.f32 %v2786, %v1731
        %v2791 = vmul.f32 %v2789, %v1731
        %v2792 = vsub.f32 %v2780, %v2790
        %v2793 = vsub.f32 %v2781, %v2791
        %v2794 = vmul.f32 %v2792, %v2792
        %v2795 = vmul.f32 %v2793, %v2793
        %v2796 = vsel %vm1158, %v2794, 0.0
        %2797 = vadd.xlane.f32.xlu0 %v2796
        %v2798 = vpop.xlane.xlu0 %2797
        %v2799 = vsel %vm1727, %v2795, 0.0
        %2800 = vadd.xlane.f32.xlu0 %v2799
        %v2801 = vpop.xlane.xlu0 %2800
        %v2802 = vmul.f32 %v2798, %v1731
        %v2803 = vmul.f32 %v2801, %v1731
        %v2804 = vadd.f32 %v2802, 1e-05
        %v2805 = vadd.f32 %v2803, 1e-05
        %v2806 = vrsqrt.pop %v2804
        %v2807 = vrsqrt.pop %v2805
        %v2808 = vmul.f32 %v2792, %v2806
        %v2809 = vmul.f32 %v2793, %v2807
        %v2810 = vlaneseq
        %v2811 = vshrl.u32 %v2810, 7
        %v2812 = vsub.s32 0, %v2811
        %v2813 = vrot.slane %v2782, %v2812
        %v2814 = vmul.f32 %v2808, %v2813
        %v2815 = vmul.f32 %v2809, %v2813
        %v2816 = vlaneseq
        %v2817 = vshrl.u32 %v2816, 7
        %v2818 = vsub.s32 0, %v2817
        %v2819 = vrot.slane %v2783, %v2818
        %v2820 = vadd.f32 %v2814, %v2819
        %v2821 = vadd.f32 %v2815, %v2819
        %v2822 = vpack.c.bf16 %v2821, %v2820
        %s2823 = scalar_lea.vmem [#allocation14], 16
        %v2824 = vld [vmem:[%s2823] sm:$0xf]
        %v2825 = vld [vmem:[%s2823 + $0x4] sm:$0xf]
        %v2826 = vld [vmem:[%s2823 + $0x8] sm:$0xf]
        %v2827 = vld [vmem:[%s2823 + $0xc] sm:$0xf]
        %v2828 = vld [vmem:[#allocation12 + $0xa] sm:$0x1]
        %v2829 = vlaneseq
        %v2830 = vshrl.u32 %v2829, 7
        %v2831 = vsub.s32 0, %v2830
        %v2832 = vrot.slane %v2828, %v2831
        %v2837 = vunpack.c.l.b16 %v2824
        %v2838 = vunpack.c.l.b16 %v2825
        %v2839 = vunpack.c.l.b16 %v2826
        %v2840 = vunpack.c.l.b16 %v2827
        %v2841 = vpack.c.b16 %v2838, %v2837
        %v2842 = vpack.c.b16 %v2840, %v2839
        %v2846 = vsel %vm1158, %v2822, 0
        %2848 = vmatprep.subr.bf16.mxu0 0
        %2849 = vmatpush1.bf16.msra.mxu0 0
        %2850 = vmatprep.subr.bf16.mxu0 0
        %2851 = vmatpush1.bf16.msra.mxu0 0
        %2852 = vmatprep.subr.bf16.mxu0 0
        %2853 = vmatpush1.bf16.msra.mxu0 0
        %2854 = vmatprep.subr.bf16.mxu0 0
        %2855 = vmatpush1.bf16.msra.mxu0 0
        %2856 = vmatprep.subr.bf16.mxu0 0
        %2857 = vmatpush1.bf16.msra.mxu0 0
        %2858 = vmatprep.subr.bf16.mxu0 0
        %2859 = vmatpush1.bf16.msra.mxu0 0
        %2860 = vmatprep.subr.bf16.mxu0 0
        %2861 = vmatpush1.bf16.msra.mxu0 %v2842
        %2862 = vmatprep.subr.bf16.mxu0 0
        %2863 = vmatpush1.bf16.msra.mxu0 %v2841
        %2864 = vmatprep.subr.bf16.mxu0 0
        %2865 = vmatpush2.bf16.msra.mxu0 0
        %2866 = vmatprep.subr.bf16.mxu0 0
        %2867 = vmatpush2.bf16.msra.mxu0 0
        %2868 = vmatprep.subr.bf16.mxu0 0
        %2869 = vmatpush2.bf16.msra.mxu0 0
        %2870 = vmatprep.subr.bf16.mxu0 0
        %2871 = vmatpush2.bf16.msra.mxu0 0
        %2872 = vmatprep.subr.bf16.mxu0 0
        %2873 = vmatpush2.bf16.msra.mxu0 0
        %2874 = vmatprep.subr.bf16.mxu0 0
        %2875 = vmatpush2.bf16.msra.mxu0 0
        %2876 = vmatprep.subr.bf16.mxu0 0
        %2877 = vmatpush2.bf16.msra.mxu0 0
        %2878 = vmatprep.subr.bf16.mxu0 0
        %2879 = vmatpush2.bf16.msra.mxu0 0
        %2880 = vmatprep.mubr.bf16.mxu0 0
        %2881 = vmatmul.mubr.bf16.gmra.mxu0 %v2846
        %v2882 = vpop.f32.mrf.mxu0
        %v2883 = vadd.f32 %v2832, %v2882
        %v2884 = vpop.f32.mrf.mxu0
        %v2885 = vpop.f32.mrf.mxu0
        %v2886 = vadd.f32 %v2832, %v2885
        %v2887 = vpop.f32.mrf.mxu0
        %2888 = vdwg.mxu0
        %s2889 = scalar_lea.vmem [#allocation15], 4
        %v2890 = vld [vmem:[%s2889] sm:$0x7]
        %2893 = vrot.lane.b32.xlu0 %v2883, 64
        %v2894 = vpop.permute.xlu0 %2893
        %2895 = vrot.lane.b32.xlu0 %v2886, 64
        %v2896 = vpop.permute.xlu0 %2895
        %v2898 = vsel %vm646, %v2896, 0
        %2900 = vmatprep.subr.mxu0 0.0
        %2901 = vmatpush1.msra.mxu0 0.0
        %2902 = vmatprep.subr.mxu0 0.0
        %2903 = vmatpush1.msra.mxu0 0.0
        %2904 = vmatprep.subr.mxu0 0.0
        %2905 = vmatpush1.msra.mxu0 0.0
        %2906 = vmatprep.subr.mxu0 0.0
        %2907 = vmatpush1.msra.mxu0 0.0
        %2908 = vmatprep.subr.mxu0 0.0
        %2909 = vmatpush1.msra.mxu0 0.0
        %2910 = vmatprep.subr.mxu0 0.0
        %2911 = vmatpush1.msra.mxu0 0.0
        %2912 = vmatprep.subr.mxu0 0.0
        %2913 = vmatpush1.msra.mxu0 0.0
        %2914 = vmatprep.subr.mxu0 0.0
        %2915 = vmatpush1.msra.mxu0 0.0
        %2916 = vmatprep.subr.mxu0 0.0
        %2917 = vmatpush1.msra.mxu0 0.0
        %2918 = vmatprep.subr.mxu0 0.0
        %2919 = vmatpush1.msra.mxu0 0.0
        %2920 = vmatprep.subr.mxu0 0.0
        %2921 = vmatpush1.msra.mxu0 0.0
        %2922 = vmatprep.subr.mxu0 0.0
        %2923 = vmatpush1.msra.mxu0 0.0
        %2924 = vmatprep.subr.mxu0 0.0
        %2925 = vmatpush1.msra.mxu0 0.0
        %2926 = vmatprep.subr.mxu0 0.0
        %2927 = vmatpush1.msra.mxu0 0.0
        %2928 = vmatprep.subr.mxu0 0.0
        %2929 = vmatpush1.msra.mxu0 %v2898
        %2930 = vmatprep.subr.mxu0 0.0
        %2931 = vmatpush1.msra.mxu0 %v2894
        %2932 = vmatprep.subr.mxu0 0.0
        %2933 = vmatpush2.msra.mxu0 0.0
        %2934 = vmatprep.subr.mxu0 0.0
        %2935 = vmatpush2.msra.mxu0 0.0
        %2936 = vmatprep.subr.mxu0 0.0
        %2937 = vmatpush2.msra.mxu0 0.0
        %2938 = vmatprep.subr.mxu0 0.0
        %2939 = vmatpush2.msra.mxu0 0.0
        %2940 = vmatprep.subr.mxu0 0.0
        %2941 = vmatpush2.msra.mxu0 0.0
        %2942 = vmatprep.subr.mxu0 0.0
        %2943 = vmatpush2.msra.mxu0 0.0
        %2944 = vmatprep.subr.mxu0 0.0
        %2945 = vmatpush2.msra.mxu0 0.0
        %2946 = vmatprep.subr.mxu0 0.0
        %2947 = vmatpush2.msra.mxu0 0.0
        %2948 = vmatprep.subr.mxu0 0.0
        %2949 = vmatpush2.msra.mxu0 0.0
        %2950 = vmatprep.subr.mxu0 0.0
        %2951 = vmatpush2.msra.mxu0 0.0
        %2952 = vmatprep.subr.mxu0 0.0
        %2953 = vmatpush2.msra.mxu0 0.0
        %2954 = vmatprep.subr.mxu0 0.0
        %2955 = vmatpush2.msra.mxu0 0.0
        %2956 = vmatprep.subr.mxu0 0.0
        %2957 = vmatpush2.msra.mxu0 0.0
        %2958 = vmatprep.subr.mxu0 0.0
        %2959 = vmatpush2.msra.mxu0 0.0
        %2960 = vmatprep.subr.mxu0 0.0
        %2961 = vmatpush2.msra.mxu0 0.0
        %2962 = vmatprep.subr.mxu0 0.0
        %2963 = vmatpush2.msra.mxu0 0.0
        %2964 = vmatprep.mubr.f32.mxu0 0.0
        %2965 = vmatmul.mubr.f32.gmra.mxu0 %v641
        %v2966 = vpop.f32.mrf.mxu0
        %v2967 = vadd.f32 0.0, %v2966
        %v2968 = vpop.f32.mrf.mxu0
        %2969 = vmatprep.mubr.f32.mxu0 0.0
        %2970 = vmatmul.mubr.f32.gmra.mxu0 %v644
        %v2971 = vpop.f32.mrf.mxu0
        %v2972 = vadd.f32 0.0, %v2971
        %v2973 = vpop.f32.mrf.mxu0
        %2974 = vdwg.mxu0
        %2975 = vmatprep.subr.mxu0 0.0
        %2976 = vmatpush1.msra.mxu0 0.0
        %2977 = vmatprep.subr.mxu0 0.0
        %2978 = vmatpush1.msra.mxu0 0.0
        %2979 = vmatprep.subr.mxu0 0.0
        %2980 = vmatpush1.msra.mxu0 0.0
        %2981 = vmatprep.subr.mxu0 0.0
        %2982 = vmatpush1.msra.mxu0 0.0
        %2983 = vmatprep.subr.mxu0 0.0
        %2984 = vmatpush1.msra.mxu0 0.0
        %2985 = vmatprep.subr.mxu0 0.0
        %2986 = vmatpush1.msra.mxu0 0.0
        %2987 = vmatprep.subr.mxu0 0.0
        %2988 = vmatpush1.msra.mxu0 0.0
        %2989 = vmatprep.subr.mxu0 0.0
        %2990 = vmatpush1.msra.mxu0 0.0
        %2991 = vmatprep.subr.mxu0 0.0
        %2992 = vmatpush1.msra.mxu0 0.0
        %2993 = vmatprep.subr.mxu0 0.0
        %2994 = vmatpush1.msra.mxu0 0.0
        %2995 = vmatprep.subr.mxu0 0.0
        %2996 = vmatpush1.msra.mxu0 0.0
        %2997 = vmatprep.subr.mxu0 0.0
        %2998 = vmatpush1.msra.mxu0 0.0
        %2999 = vmatprep.subr.mxu0 0.0
        %3000 = vmatpush1.msra.mxu0 0.0
        %3001 = vmatprep.subr.mxu0 0.0
        %3002 = vmatpush1.msra.mxu0 0.0
        %3003 = vmatprep.subr.mxu0 0.0
        %3004 = vmatpush1.msra.mxu0 %v2898
        %3005 = vmatprep.subr.mxu0 0.0
        %3006 = vmatpush1.msra.mxu0 %v2894
        %3007 = vmatprep.subr.mxu0 0.0
        %3008 = vmatpush2.msra.mxu0 0.0
        %3009 = vmatprep.subr.mxu0 0.0
        %3010 = vmatpush2.msra.mxu0 0.0
        %3011 = vmatprep.subr.mxu0 0.0
        %3012 = vmatpush2.msra.mxu0 0.0
        %3013 = vmatprep.subr.mxu0 0.0
        %3014 = vmatpush2.msra.mxu0 0.0
        %3015 = vmatprep.subr.mxu0 0.0
        %3016 = vmatpush2.msra.mxu0 0.0
        %3017 = vmatprep.subr.mxu0 0.0
        %3018 = vmatpush2.msra.mxu0 0.0
        %3019 = vmatprep.subr.mxu0 0.0
        %3020 = vmatpush2.msra.mxu0 0.0
        %3021 = vmatprep.subr.mxu0 0.0
        %3022 = vmatpush2.msra.mxu0 0.0
        %3023 = vmatprep.subr.mxu0 0.0
        %3024 = vmatpush2.msra.mxu0 0.0
        %3025 = vmatprep.subr.mxu0 0.0
        %3026 = vmatpush2.msra.mxu0 0.0
        %3027 = vmatprep.subr.mxu0 0.0
        %3028 = vmatpush2.msra.mxu0 0.0
        %3029 = vmatprep.subr.mxu0 0.0
        %3030 = vmatpush2.msra.mxu0 0.0
        %3031 = vmatprep.subr.mxu0 0.0
        %3032 = vmatpush2.msra.mxu0 0.0
        %3033 = vmatprep.subr.mxu0 0.0
        %3034 = vmatpush2.msra.mxu0 0.0
        %3035 = vmatprep.subr.mxu0 0.0
        %3036 = vmatpush2.msra.mxu0 0.0
        %3037 = vmatprep.subr.mxu0 0.0
        %3038 = vmatpush2.msra.mxu0 0.0
        %3039 = vmatprep.mubr.f32.mxu0 0.0
        %3040 = vmatmul.mubr.f32.gmra.mxu0 %v1916
        %v3041 = vpop.f32.mrf.mxu0
        %v3042 = vadd.f32 0.0, %v3041
        %v3043 = vpop.f32.mrf.mxu0
        %3044 = vmatprep.mubr.f32.mxu0 0.0
        %3045 = vmatmul.mubr.f32.gmra.mxu0 %v1919
        %v3046 = vpop.f32.mrf.mxu0
        %v3047 = vadd.f32 0.0, %v3046
        %v3048 = vpop.f32.mrf.mxu0
        %3049 = vdwg.mxu0
        %v3050 = vlaneseq
        %v3051 = vshrl.u32 %v3050, 7
        %v3052 = vsub.s32 0, %v3051
        %v3053 = vrot.slane %v2890, %v3052
        %v3054 = vmul.f32 %v2967, %v3053
        %v3055 = vmul.f32 %v2972, %v3053
        %v3056 = vlaneseq
        %v3057 = vshrl.u32 %v3056, 7
        %v3058 = vsub.s32 1, %v3057
        %v3059 = vrot.slane %v2890, %v3058
        %3061 = vrot.lane.b32.xlu0 %v3059, 64
        %v3062 = vpop.permute.xlu0 %3061
        %v3064 = vmul.f32 %v2883, %v3062
        %v3065 = vmul.f32 %v2886, %v3062
        %3068 = vrot.lane.b32.xlu0 %v3064, 64
        %v3069 = vpop.permute.xlu0 %3068
        %3070 = vrot.lane.b32.xlu0 %v3065, 64
        %v3071 = vpop.permute.xlu0 %3070
        %v3074 = vadd.f32 %v3054, %v3069
        %v3075 = vadd.f32 %v3055, %v3071
        %v3076 = vlaneseq
        %v3077 = vshrl.u32 %v3076, 7
        %v3078 = vsub.s32 2, %v3077
        %v3079 = vrot.slane %v2890, %v3078
        %v3080 = vmul.f32 %v3042, %v3079
        %v3081 = vmul.f32 %v3047, %v3079
        %v3082 = vadd.f32 %v3074, %v3080
        %v3083 = vadd.f32 %v3075, %v3081
        %v3085 = vadd.f32 %v3082, %v2894
        %v3086 = vadd.f32 %v3083, %v2896
        %3087 = vrot.lane.b32.xlu0 %v2883, 96
        %v3088 = vpop.permute.xlu0 %3087
        %3089 = vrot.lane.b32.xlu0 %v2886, 96
        %v3090 = vpop.permute.xlu0 %3089
        %v3092 = vsel %vm646, %v3090, 0
        %3094 = vmatprep.subr.mxu0 0.0
        %3095 = vmatpush1.msra.mxu0 0.0
        %3096 = vmatprep.subr.mxu0 0.0
        %3097 = vmatpush1.msra.mxu0 0.0
        %3098 = vmatprep.subr.mxu0 0.0
        %3099 = vmatpush1.msra.mxu0 0.0
        %3100 = vmatprep.subr.mxu0 0.0
        %3101 = vmatpush1.msra.mxu0 0.0
        %3102 = vmatprep.subr.mxu0 0.0
        %3103 = vmatpush1.msra.mxu0 0.0
        %3104 = vmatprep.subr.mxu0 0.0
        %3105 = vmatpush1.msra.mxu0 0.0
        %3106 = vmatprep.subr.mxu0 0.0
        %3107 = vmatpush1.msra.mxu0 0.0
        %3108 = vmatprep.subr.mxu0 0.0
        %3109 = vmatpush1.msra.mxu0 0.0
        %3110 = vmatprep.subr.mxu0 0.0
        %3111 = vmatpush1.msra.mxu0 0.0
        %3112 = vmatprep.subr.mxu0 0.0
        %3113 = vmatpush1.msra.mxu0 0.0
        %3114 = vmatprep.subr.mxu0 0.0
        %3115 = vmatpush1.msra.mxu0 0.0
        %3116 = vmatprep.subr.mxu0 0.0
        %3117 = vmatpush1.msra.mxu0 0.0
        %3118 = vmatprep.subr.mxu0 0.0
        %3119 = vmatpush1.msra.mxu0 0.0
        %3120 = vmatprep.subr.mxu0 0.0
        %3121 = vmatpush1.msra.mxu0 0.0
        %3122 = vmatprep.subr.mxu0 0.0
        %3123 = vmatpush1.msra.mxu0 %v3092
        %3124 = vmatprep.subr.mxu0 0.0
        %3125 = vmatpush1.msra.mxu0 %v3088
        %3126 = vmatprep.subr.mxu0 0.0
        %3127 = vmatpush2.msra.mxu0 0.0
        %3128 = vmatprep.subr.mxu0 0.0
        %3129 = vmatpush2.msra.mxu0 0.0
        %3130 = vmatprep.subr.mxu0 0.0
        %3131 = vmatpush2.msra.mxu0 0.0
        %3132 = vmatprep.subr.mxu0 0.0
        %3133 = vmatpush2.msra.mxu0 0.0
        %3134 = vmatprep.subr.mxu0 0.0
        %3135 = vmatpush2.msra.mxu0 0.0
        %3136 = vmatprep.subr.mxu0 0.0
        %3137 = vmatpush2.msra.mxu0 0.0
        %3138 = vmatprep.subr.mxu0 0.0
        %3139 = vmatpush2.msra.mxu0 0.0
        %3140 = vmatprep.subr.mxu0 0.0
        %3141 = vmatpush2.msra.mxu0 0.0
        %3142 = vmatprep.subr.mxu0 0.0
        %3143 = vmatpush2.msra.mxu0 0.0
        %3144 = vmatprep.subr.mxu0 0.0
        %3145 = vmatpush2.msra.mxu0 0.0
        %3146 = vmatprep.subr.mxu0 0.0
        %3147 = vmatpush2.msra.mxu0 0.0
        %3148 = vmatprep.subr.mxu0 0.0
        %3149 = vmatpush2.msra.mxu0 0.0
        %3150 = vmatprep.subr.mxu0 0.0
        %3151 = vmatpush2.msra.mxu0 0.0
        %3152 = vmatprep.subr.mxu0 0.0
        %3153 = vmatpush2.msra.mxu0 0.0
        %3154 = vmatprep.subr.mxu0 0.0
        %3155 = vmatpush2.msra.mxu0 0.0
        %3156 = vmatprep.subr.mxu0 0.0
        %3157 = vmatpush2.msra.mxu0 0.0
        %3158 = vmatprep.mubr.f32.mxu0 0.0
        %3159 = vmatmul.mubr.f32.gmra.mxu0 %v2039
        %v3160 = vpop.f32.mrf.mxu0
        %v3161 = vadd.f32 0.0, %v3160
        %v3162 = vpop.f32.mrf.mxu0
        %3163 = vmatprep.mubr.f32.mxu0 0.0
        %3164 = vmatmul.mubr.f32.gmra.mxu0 %v2042
        %v3165 = vpop.f32.mrf.mxu0
        %v3166 = vadd.f32 0.0, %v3165
        %v3167 = vpop.f32.mrf.mxu0
        %3168 = vmatprep.mubr.f32.mxu0 0.0
        %3169 = vmatmul.mubr.f32.gmra.mxu0 %v2045
        %v3170 = vpop.f32.mrf.mxu0
        %v3171 = vadd.f32 0.0, %v3170
        %v3172 = vpop.f32.mrf.mxu0
        %3173 = vmatprep.mubr.f32.mxu0 0.0
        %3174 = vmatmul.mubr.f32.gmra.mxu0 %v2048
        %v3175 = vpop.f32.mrf.mxu0
        %v3176 = vadd.f32 0.0, %v3175
        %v3177 = vpop.f32.mrf.mxu0
        %3178 = vmatprep.mubr.f32.mxu0 0.0
        %3179 = vmatmul.mubr.f32.gmra.mxu0 %v2051
        %v3180 = vpop.f32.mrf.mxu0
        %v3181 = vadd.f32 0.0, %v3180
        %v3182 = vpop.f32.mrf.mxu0
        %3183 = vdwg.mxu0
        %v3184 = vmul.f32 %v3161, %v1601
        %v3185 = vmul.f32 %v3166, %v1602
        %v3186 = vmul.f32 %v3171, %v1603
        %v3187 = vmul.f32 %v3176, %v1604
        %v3188 = vmul.f32 %v3181, %v1605
        %3189 = vmatprep.subr.mxu0 0.0
        %3190 = vmatpush1.msra.mxu0 0.0
        %3191 = vmatprep.subr.mxu0 0.0
        %3192 = vmatpush1.msra.mxu0 0.0
        %3193 = vmatprep.subr.mxu0 0.0
        %3194 = vmatpush1.msra.mxu0 0.0
        %3195 = vmatprep.subr.mxu0 0.0
        %3196 = vmatpush1.msra.mxu0 0.0
        %3197 = vmatprep.subr.mxu0 0.0
        %3198 = vmatpush1.msra.mxu0 0.0
        %3199 = vmatprep.subr.mxu0 0.0
        %3200 = vmatpush1.msra.mxu0 0.0
        %3201 = vmatprep.subr.mxu0 0.0
        %3202 = vmatpush1.msra.mxu0 0.0
        %3203 = vmatprep.subr.mxu0 0.0
        %3204 = vmatpush1.msra.mxu0 0.0
        %3205 = vmatprep.subr.mxu0 0.0
        %3206 = vmatpush1.msra.mxu0 0.0
        %3207 = vmatprep.subr.mxu0 0.0
        %3208 = vmatpush1.msra.mxu0 0.0
        %3209 = vmatprep.subr.mxu0 0.0
        %3210 = vmatpush1.msra.mxu0 0.0
        %3211 = vmatprep.subr.mxu0 0.0
        %3212 = vmatpush1.msra.mxu0 0.0
        %3213 = vmatprep.subr.mxu0 0.0
        %3214 = vmatpush1.msra.mxu0 0.0
        %3215 = vmatprep.subr.mxu0 0.0
        %3216 = vmatpush1.msra.mxu0 0.0
        %3217 = vmatprep.subr.mxu0 0.0
        %3218 = vmatpush1.msra.mxu0 %v2898
        %3219 = vmatprep.subr.mxu0 0.0
        %3220 = vmatpush1.msra.mxu0 %v2894
        %3221 = vmatprep.subr.mxu0 0.0
        %3222 = vmatpush2.msra.mxu0 0.0
        %3223 = vmatprep.subr.mxu0 0.0
        %3224 = vmatpush2.msra.mxu0 0.0
        %3225 = vmatprep.subr.mxu0 0.0
        %3226 = vmatpush2.msra.mxu0 0.0
        %3227 = vmatprep.subr.mxu0 0.0
        %3228 = vmatpush2.msra.mxu0 0.0
        %3229 = vmatprep.subr.mxu0 0.0
        %3230 = vmatpush2.msra.mxu0 0.0
        %3231 = vmatprep.subr.mxu0 0.0
        %3232 = vmatpush2.msra.mxu0 0.0
        %3233 = vmatprep.subr.mxu0 0.0
        %3234 = vmatpush2.msra.mxu0 0.0
        %3235 = vmatprep.subr.mxu0 0.0
        %3236 = vmatpush2.msra.mxu0 0.0
        %3237 = vmatprep.subr.mxu0 0.0
        %3238 = vmatpush2.msra.mxu0 0.0
        %3239 = vmatprep.subr.mxu0 0.0
        %3240 = vmatpush2.msra.mxu0 0.0
        %3241 = vmatprep.subr.mxu0 0.0
        %3242 = vmatpush2.msra.mxu0 0.0
        %3243 = vmatprep.subr.mxu0 0.0
        %3244 = vmatpush2.msra.mxu0 0.0
        %3245 = vmatprep.subr.mxu0 0.0
        %3246 = vmatpush2.msra.mxu0 0.0
        %3247 = vmatprep.subr.mxu0 0.0
        %3248 = vmatpush2.msra.mxu0 0.0
        %3249 = vmatprep.subr.mxu0 0.0
        %3250 = vmatpush2.msra.mxu0 0.0
        %3251 = vmatprep.subr.mxu0 0.0
        %3252 = vmatpush2.msra.mxu0 0.0
        %3253 = vmatprep.mubr.f32.mxu0 0.0
        %3254 = vmatmul.mubr.f32.gmra.mxu0 %v2039
        %v3255 = vpop.f32.mrf.mxu0
        %v3256 = vadd.f32 0.0, %v3255
        %v3257 = vpop.f32.mrf.mxu0
        %3258 = vmatprep.mubr.f32.mxu0 0.0
        %3259 = vmatmul.mubr.f32.gmra.mxu0 %v2042
        %v3260 = vpop.f32.mrf.mxu0
        %v3261 = vadd.f32 0.0, %v3260
        %v3262 = vpop.f32.mrf.mxu0
        %3263 = vmatprep.mubr.f32.mxu0 0.0
        %3264 = vmatmul.mubr.f32.gmra.mxu0 %v2045
        %v3265 = vpop.f32.mrf.mxu0
        %v3266 = vadd.f32 0.0, %v3265
        %v3267 = vpop.f32.mrf.mxu0
        %3268 = vmatprep.mubr.f32.mxu0 0.0
        %3269 = vmatmul.mubr.f32.gmra.mxu0 %v2048
        %v3270 = vpop.f32.mrf.mxu0
        %v3271 = vadd.f32 0.0, %v3270
        %v3272 = vpop.f32.mrf.mxu0
        %3273 = vmatprep.mubr.f32.mxu0 0.0
        %3274 = vmatmul.mubr.f32.gmra.mxu0 %v2051
        %v3275 = vpop.f32.mrf.mxu0
        %v3276 = vadd.f32 0.0, %v3275
        %v3277 = vpop.f32.mrf.mxu0
        %3278 = vdwg.mxu0
        %v3279 = vmul.f32 %v3256, %v1601
        %v3280 = vmul.f32 %v3261, %v1602
        %v3281 = vmul.f32 %v3266, %v1603
        %v3282 = vmul.f32 %v3271, %v1604
        %v3283 = vmul.f32 %v3276, %v1605
        %v3284 = vsel %vm1158, %v2883, 0
        %v3286 = vsel %vm1158, %v2886, 0
        %v3289 = vsel %vm1158, %v3184, 0
        %v3292 = vsel %vm1158, %v3185, 0
        %v3295 = vsel %vm1158, %v3186, 0
        %v3298 = vsel %vm1158, %v3187, 0
        %v3301 = vsel %vm1158, %v3188, 0
        %3303 = vmatprep.subr.mxu0 0.0
        %3304 = vmatpush1.xpose.msra.mxu0 0.0
        %3305 = vmatprep.subr.mxu0 0.0
        %3306 = vmatpush1.xpose.msra.mxu0 0.0
        %3307 = vmatprep.subr.mxu0 0.0
        %3308 = vmatpush1.xpose.msra.mxu0 0.0
        %3309 = vmatprep.subr.mxu0 0.0
        %3310 = vmatpush1.xpose.msra.mxu0 0.0
        %3311 = vmatprep.subr.mxu0 0.0
        %3312 = vmatpush1.xpose.msra.mxu0 0.0
        %3313 = vmatprep.subr.mxu0 0.0
        %3314 = vmatpush1.xpose.msra.mxu0 0.0
        %3315 = vmatprep.subr.mxu0 0.0
        %3316 = vmatpush1.xpose.msra.mxu0 0.0
        %3317 = vmatprep.subr.mxu0 0.0
        %3318 = vmatpush1.xpose.msra.mxu0 0.0
        %3319 = vmatprep.subr.mxu0 0.0
        %3320 = vmatpush1.xpose.msra.mxu0 0.0
        %3321 = vmatprep.subr.mxu0 0.0
        %3322 = vmatpush1.xpose.msra.mxu0 0.0
        %3323 = vmatprep.subr.mxu0 0.0
        %3324 = vmatpush1.xpose.msra.mxu0 0.0
        %3325 = vmatprep.subr.mxu0 0.0
        %3326 = vmatpush1.xpose.msra.mxu0 %v3301
        %3327 = vmatprep.subr.mxu0 0.0
        %3328 = vmatpush1.xpose.msra.mxu0 %v3298
        %3329 = vmatprep.subr.mxu0 0.0
        %3330 = vmatpush1.xpose.msra.mxu0 %v3295
        %3331 = vmatprep.subr.mxu0 0.0
        %3332 = vmatpush1.xpose.msra.mxu0 %v3292
        %3333 = vmatprep.subr.mxu0 0.0
        %3334 = vmatpush1.xpose.msra.mxu0 %v3289
        %3335 = vmatprep.subr.mxu0 0.0
        %3336 = vmatpush2.xpose.msra.mxu0 0.0
        %3337 = vmatprep.subr.mxu0 0.0
        %3338 = vmatpush2.xpose.msra.mxu0 0.0
        %3339 = vmatprep.subr.mxu0 0.0
        %3340 = vmatpush2.xpose.msra.mxu0 0.0
        %3341 = vmatprep.subr.mxu0 0.0
        %3342 = vmatpush2.xpose.msra.mxu0 0.0
        %3343 = vmatprep.subr.mxu0 0.0
        %3344 = vmatpush2.xpose.msra.mxu0 0.0
        %3345 = vmatprep.subr.mxu0 0.0
        %3346 = vmatpush2.xpose.msra.mxu0 0.0
        %3347 = vmatprep.subr.mxu0 0.0
        %3348 = vmatpush2.xpose.msra.mxu0 0.0
        %3349 = vmatprep.subr.mxu0 0.0
        %3350 = vmatpush2.xpose.msra.mxu0 0.0
        %3351 = vmatprep.subr.mxu0 0.0
        %3352 = vmatpush2.xpose.msra.mxu0 0.0
        %3353 = vmatprep.subr.mxu0 0.0
        %3354 = vmatpush2.xpose.msra.mxu0 0.0
        %3355 = vmatprep.subr.mxu0 0.0
        %3356 = vmatpush2.xpose.msra.mxu0 0.0
        %3357 = vmatprep.subr.mxu0 0.0
        %3358 = vmatpush2.xpose.msra.mxu0 0.0
        %3359 = vmatprep.subr.mxu0 0.0
        %3360 = vmatpush2.xpose.msra.mxu0 0.0
        %3361 = vmatprep.subr.mxu0 0.0
        %3362 = vmatpush2.xpose.msra.mxu0 0.0
        %3363 = vmatprep.subr.mxu0 0.0
        %3364 = vmatpush2.xpose.msra.mxu0 0.0
        %3365 = vmatprep.subr.mxu0 0.0
        %3366 = vmatpush2.xpose.msra.mxu0 0.0
        %3367 = vmatprep.mubr.f32.mxu0 0.0
        %3368 = vmatmul.mubr.f32.gmra.mxu0 %v3284
        %v3369 = vpop.f32.mrf.mxu0
        %v3370 = vadd.f32 0.0, %v3369
        %v3371 = vpop.f32.mrf.mxu0
        %3372 = vmatprep.mubr.f32.mxu0 0.0
        %3373 = vmatmul.mubr.f32.gmra.mxu0 %v3286
        %v3374 = vpop.f32.mrf.mxu0
        %v3375 = vadd.f32 0.0, %v3374
        %v3376 = vpop.f32.mrf.mxu0
        %3377 = vdwg.mxu0
        %v3378 = vsel %vm2339, %v3370, -inf
        %3379 = vmax.xlane.f32.xlu0 %v3378
        %v3380 = vpop.xlane.xlu0 %3379
        %v3381 = vsel %vm2343, %v3375, -inf
        %3382 = vmax.xlane.f32.xlu0 %v3381
        %v3383 = vpop.xlane.xlu0 %3382
        %v3384 = vsub.f32 %v3370, %v3380
        %v3385 = vsub.f32 %v3375, %v3383
        %v3386 = vmul.f32 %v3384, 1.442695
        %v3387 = vpow.pop %v3386
        %v3388 = vmul.f32 %v3385, 1.442695
        %v3389 = vpow.pop %v3388
        %v3391 = vsel %vm2339, %v3387, 0
        %v3394 = vsel %vm2339, %v3389, 0
        %3396 = vmatprep.subr.mxu0 0.0
        %3397 = vmatpush1.msra.mxu0 0.0
        %3398 = vmatprep.subr.mxu0 0.0
        %3399 = vmatpush1.msra.mxu0 0.0
        %3400 = vmatprep.subr.mxu0 0.0
        %3401 = vmatpush1.msra.mxu0 0.0
        %3402 = vmatprep.subr.mxu0 0.0
        %3403 = vmatpush1.msra.mxu0 0.0
        %3404 = vmatprep.subr.mxu0 0.0
        %3405 = vmatpush1.msra.mxu0 0.0
        %3406 = vmatprep.subr.mxu0 0.0
        %3407 = vmatpush1.msra.mxu0 0.0
        %3408 = vmatprep.subr.mxu0 0.0
        %3409 = vmatpush1.msra.mxu0 0.0
        %3410 = vmatprep.subr.mxu0 0.0
        %3411 = vmatpush1.msra.mxu0 0.0
        %3412 = vmatprep.subr.mxu0 0.0
        %3413 = vmatpush1.msra.mxu0 0.0
        %3414 = vmatprep.subr.mxu0 0.0
        %3415 = vmatpush1.msra.mxu0 0.0
        %3416 = vmatprep.subr.mxu0 0.0
        %3417 = vmatpush1.msra.mxu0 0.0
        %3418 = vmatprep.subr.mxu0 0.0
        %3419 = vmatpush1.msra.mxu0 %v1721
        %3420 = vmatprep.subr.mxu0 0.0
        %3421 = vmatpush1.msra.mxu0 %v1720
        %3422 = vmatprep.subr.mxu0 0.0
        %3423 = vmatpush1.msra.mxu0 %v1719
        %3424 = vmatprep.subr.mxu0 0.0
        %3425 = vmatpush1.msra.mxu0 %v1718
        %3426 = vmatprep.subr.mxu0 0.0
        %3427 = vmatpush1.msra.mxu0 %v1717
        %3428 = vmatprep.subr.mxu0 0.0
        %3429 = vmatpush2.msra.mxu0 0.0
        %3430 = vmatprep.subr.mxu0 0.0
        %3431 = vmatpush2.msra.mxu0 0.0
        %3432 = vmatprep.subr.mxu0 0.0
        %3433 = vmatpush2.msra.mxu0 0.0
        %3434 = vmatprep.subr.mxu0 0.0
        %3435 = vmatpush2.msra.mxu0 0.0
        %3436 = vmatprep.subr.mxu0 0.0
        %3437 = vmatpush2.msra.mxu0 0.0
        %3438 = vmatprep.subr.mxu0 0.0
        %3439 = vmatpush2.msra.mxu0 0.0
        %3440 = vmatprep.subr.mxu0 0.0
        %3441 = vmatpush2.msra.mxu0 0.0
        %3442 = vmatprep.subr.mxu0 0.0
        %3443 = vmatpush2.msra.mxu0 0.0
        %3444 = vmatprep.subr.mxu0 0.0
        %3445 = vmatpush2.msra.mxu0 0.0
        %3446 = vmatprep.subr.mxu0 0.0
        %3447 = vmatpush2.msra.mxu0 0.0
        %3448 = vmatprep.subr.mxu0 0.0
        %3449 = vmatpush2.msra.mxu0 0.0
        %3450 = vmatprep.subr.mxu0 0.0
        %3451 = vmatpush2.msra.mxu0 0.0
        %3452 = vmatprep.subr.mxu0 0.0
        %3453 = vmatpush2.msra.mxu0 0.0
        %3454 = vmatprep.subr.mxu0 0.0
        %3455 = vmatpush2.msra.mxu0 0.0
        %3456 = vmatprep.subr.mxu0 0.0
        %3457 = vmatpush2.msra.mxu0 0.0
        %3458 = vmatprep.subr.mxu0 0.0
        %3459 = vmatpush2.msra.mxu0 0.0
        %3460 = vmatprep.mubr.f32.mxu0 0.0
        %3461 = vmatmul.mubr.f32.gmra.mxu0 %v3391
        %v3462 = vpop.f32.mrf.mxu0
        %v3463 = vadd.f32 0.0, %v3462
        %v3464 = vpop.f32.mrf.mxu0
        %3465 = vmatprep.mubr.f32.mxu0 0.0
        %3466 = vmatmul.mubr.f32.gmra.mxu0 %v3394
        %v3467 = vpop.f32.mrf.mxu0
        %v3468 = vadd.f32 0.0, %v3467
        %v3469 = vpop.f32.mrf.mxu0
        %3470 = vdwg.mxu0
        %v3471 = vrcp.pop %v3463
        %v3472 = vrcp.pop %v3468
        %v3473 = vmul.f32 %v3387, %v3471
        %v3474 = vmul.f32 %v3389, %v3472
        %v3476 = vsel %vm2339, %v3473, 0
        %v3479 = vsel %vm2339, %v3474, 0
        %3481 = vmatprep.subr.mxu0 0.0
        %3482 = vmatpush1.msra.mxu0 0.0
        %3483 = vmatprep.subr.mxu0 0.0
        %3484 = vmatpush1.msra.mxu0 0.0
        %3485 = vmatprep.subr.mxu0 0.0
        %3486 = vmatpush1.msra.mxu0 0.0
        %3487 = vmatprep.subr.mxu0 0.0
        %3488 = vmatpush1.msra.mxu0 0.0
        %3489 = vmatprep.subr.mxu0 0.0
        %3490 = vmatpush1.msra.mxu0 0.0
        %3491 = vmatprep.subr.mxu0 0.0
        %3492 = vmatpush1.msra.mxu0 0.0
        %3493 = vmatprep.subr.mxu0 0.0
        %3494 = vmatpush1.msra.mxu0 0.0
        %3495 = vmatprep.subr.mxu0 0.0
        %3496 = vmatpush1.msra.mxu0 0.0
        %3497 = vmatprep.subr.mxu0 0.0
        %3498 = vmatpush1.msra.mxu0 0.0
        %3499 = vmatprep.subr.mxu0 0.0
        %3500 = vmatpush1.msra.mxu0 0.0
        %3501 = vmatprep.subr.mxu0 0.0
        %3502 = vmatpush1.msra.mxu0 0.0
        %3503 = vmatprep.subr.mxu0 0.0
        %3504 = vmatpush1.msra.mxu0 %v3283
        %3505 = vmatprep.subr.mxu0 0.0
        %3506 = vmatpush1.msra.mxu0 %v3282
        %3507 = vmatprep.subr.mxu0 0.0
        %3508 = vmatpush1.msra.mxu0 %v3281
        %3509 = vmatprep.subr.mxu0 0.0
        %3510 = vmatpush1.msra.mxu0 %v3280
        %3511 = vmatprep.subr.mxu0 0.0
        %3512 = vmatpush1.msra.mxu0 %v3279
        %3513 = vmatprep.subr.mxu0 0.0
        %3514 = vmatpush2.msra.mxu0 0.0
        %3515 = vmatprep.subr.mxu0 0.0
        %3516 = vmatpush2.msra.mxu0 0.0
        %3517 = vmatprep.subr.mxu0 0.0
        %3518 = vmatpush2.msra.mxu0 0.0
        %3519 = vmatprep.subr.mxu0 0.0
        %3520 = vmatpush2.msra.mxu0 0.0
        %3521 = vmatprep.subr.mxu0 0.0
        %3522 = vmatpush2.msra.mxu0 0.0
        %3523 = vmatprep.subr.mxu0 0.0
        %3524 = vmatpush2.msra.mxu0 0.0
        %3525 = vmatprep.subr.mxu0 0.0
        %3526 = vmatpush2.msra.mxu0 0.0
        %3527 = vmatprep.subr.mxu0 0.0
        %3528 = vmatpush2.msra.mxu0 0.0
        %3529 = vmatprep.subr.mxu0 0.0
        %3530 = vmatpush2.msra.mxu0 0.0
        %3531 = vmatprep.subr.mxu0 0.0
        %3532 = vmatpush2.msra.mxu0 0.0
        %3533 = vmatprep.subr.mxu0 0.0
        %3534 = vmatpush2.msra.mxu0 0.0
        %3535 = vmatprep.subr.mxu0 0.0
        %3536 = vmatpush2.msra.mxu0 0.0
        %3537 = vmatprep.subr.mxu0 0.0
        %3538 = vmatpush2.msra.mxu0 0.0
        %3539 = vmatprep.subr.mxu0 0.0
        %3540 = vmatpush2.msra.mxu0 0.0
        %3541 = vmatprep.subr.mxu0 0.0
        %3542 = vmatpush2.msra.mxu0 0.0
        %3543 = vmatprep.subr.mxu0 0.0
        %3544 = vmatpush2.msra.mxu0 0.0
        %3545 = vmatprep.mubr.f32.mxu0 0.0
        %3546 = vmatmul.mubr.f32.gmra.mxu0 %v3476
        %v3547 = vpop.f32.mrf.mxu0
        %v3548 = vadd.f32 0.0, %v3547
        %v3549 = vpop.f32.mrf.mxu0
        %3550 = vmatprep.mubr.f32.mxu0 0.0
        %3551 = vmatmul.mubr.f32.gmra.mxu0 %v3479
        %v3552 = vpop.f32.mrf.mxu0
        %v3553 = vadd.f32 0.0, %v3552
        %v3554 = vpop.f32.mrf.mxu0
        %3555 = vdwg.mxu0
        %v3556 = vpack.c.bf16 %v3553, %v3548
        %s3557 = scalar_lea.vmem %s12, 16
        %v3558 = vld [vmem:[%s3557] sm:$0xf]
        %v3559 = vld [vmem:[%s3557 + $0x4] sm:$0xf]
        %v3560 = vld [vmem:[%s3557 + $0x8] sm:$0xf]
        %v3561 = vld [vmem:[%s3557 + $0xc] sm:$0xf]
        %v3562 = vld [vmem:[#allocation12 + $0xb] sm:$0x1]
        %v3563 = vlaneseq
        %v3564 = vshrl.u32 %v3563, 7
        %v3565 = vsub.s32 0, %v3564
        %v3566 = vrot.slane %v3562, %v3565
        %v3571 = vunpack.c.l.b16 %v3558
        %v3572 = vunpack.c.l.b16 %v3559
        %v3573 = vunpack.c.l.b16 %v3560
        %v3574 = vunpack.c.l.b16 %v3561
        %v3575 = vpack.c.b16 %v3572, %v3571
        %v3576 = vpack.c.b16 %v3574, %v3573
        %v3580 = vsel %vm1158, %v3556, 0
        %3582 = vmatprep.subr.bf16.mxu0 0
        %3583 = vmatpush1.bf16.msra.mxu0 0
        %3584 = vmatprep.subr.bf16.mxu0 0
        %3585 = vmatpush1.bf16.msra.mxu0 0
        %3586 = vmatprep.subr.bf16.mxu0 0
        %3587 = vmatpush1.bf16.msra.mxu0 0
        %3588 = vmatprep.subr.bf16.mxu0 0
        %3589 = vmatpush1.bf16.msra.mxu0 0
        %3590 = vmatprep.subr.bf16.mxu0 0
        %3591 = vmatpush1.bf16.msra.mxu0 0
        %3592 = vmatprep.subr.bf16.mxu0 0
        %3593 = vmatpush1.bf16.msra.mxu0 0
        %3594 = vmatprep.subr.bf16.mxu0 0
        %3595 = vmatpush1.bf16.msra.mxu0 %v3576
        %3596 = vmatprep.subr.bf16.mxu0 0
        %3597 = vmatpush1.bf16.msra.mxu0 %v3575
        %3598 = vmatprep.subr.bf16.mxu0 0
        %3599 = vmatpush2.bf16.msra.mxu0 0
        %3600 = vmatprep.subr.bf16.mxu0 0
        %3601 = vmatpush2.bf16.msra.mxu0 0
        %3602 = vmatprep.subr.bf16.mxu0 0
        %3603 = vmatpush2.bf16.msra.mxu0 0
        %3604 = vmatprep.subr.bf16.mxu0 0
        %3605 = vmatpush2.bf16.msra.mxu0 0
        %3606 = vmatprep.subr.bf16.mxu0 0
        %3607 = vmatpush2.bf16.msra.mxu0 0
        %3608 = vmatprep.subr.bf16.mxu0 0
        %3609 = vmatpush2.bf16.msra.mxu0 0
        %3610 = vmatprep.subr.bf16.mxu0 0
        %3611 = vmatpush2.bf16.msra.mxu0 0
        %3612 = vmatprep.subr.bf16.mxu0 0
        %3613 = vmatpush2.bf16.msra.mxu0 0
        %3614 = vmatprep.mubr.bf16.mxu0 0
        %3615 = vmatmul.mubr.bf16.gmra.mxu0 %v3580
        %v3616 = vpop.f32.mrf.mxu0
        %v3617 = vadd.f32 %v3566, %v3616
        %v3618 = vpop.f32.mrf.mxu0
        %v3619 = vpop.f32.mrf.mxu0
        %v3620 = vadd.f32 %v3566, %v3619
        %v3621 = vpop.f32.mrf.mxu0
        %3622 = vdwg.mxu0
        %v3623 = vadd.f32 %v2780, %v3617
        %v3624 = vadd.f32 %v2781, %v3620
        %v3625 = vadd.f32 %v3623, %v3085
        %v3626 = vadd.f32 %v3624, %v3086
        %v3627 = vld [vmem:[#allocation12 + $0xc] sm:$0x1]
        %v3628 = vld [vmem:[#allocation12 + $0xd] sm:$0x1]
        %v3629 = vsel %vm1158, %v3625, 0.0
        %3630 = vadd.xlane.f32.xlu0 %v3629
        %v3631 = vpop.xlane.xlu0 %3630
        %v3632 = vsel %vm1727, %v3626, 0.0
        %3633 = vadd.xlane.f32.xlu0 %v3632
        %v3634 = vpop.xlane.xlu0 %3633
        %v3635 = vmul.f32 %v3631, %v1731
        %v3636 = vmul.f32 %v3634, %v1731
        %v3637 = vsub.f32 %v3625, %v3635
        %v3638 = vsub.f32 %v3626, %v3636
        %v3639 = vmul.f32 %v3637, %v3637
        %v3640 = vmul.f32 %v3638, %v3638
        %v3641 = vsel %vm1158, %v3639, 0.0
        %3642 = vadd.xlane.f32.xlu0 %v3641
        %v3643 = vpop.xlane.xlu0 %3642
        %v3644 = vsel %vm1727, %v3640, 0.0
        %3645 = vadd.xlane.f32.xlu0 %v3644
        %v3646 = vpop.xlane.xlu0 %3645
        %v3647 = vmul.f32 %v3643, %v1731
        %v3648 = vmul.f32 %v3646, %v1731
        %v3649 = vadd.f32 %v3647, 1e-05
        %v3650 = vadd.f32 %v3648, 1e-05
        %v3651 = vrsqrt.pop %v3649
        %v3652 = vrsqrt.pop %v3650
        %v3653 = vmul.f32 %v3637, %v3651
        %v3654 = vmul.f32 %v3638, %v3652
        %v3655 = vlaneseq
        %v3656 = vshrl.u32 %v3655, 7
        %v3657 = vsub.s32 0, %v3656
        %v3658 = vrot.slane %v3627, %v3657
        %v3659 = vmul.f32 %v3653, %v3658
        %v3660 = vmul.f32 %v3654, %v3658
        %v3661 = vlaneseq
        %v3662 = vshrl.u32 %v3661, 7
        %v3663 = vsub.s32 0, %v3662
        %v3664 = vrot.slane %v3628, %v3663
        %v3665 = vadd.f32 %v3659, %v3664
        %v3666 = vadd.f32 %v3660, %v3664
        %v3667 = vpack.c.bf16 %v3666, %v3665
        %s3668 = scalar_lea.vmem [#allocation17], 16
        %v3669 = vld [vmem:[%s3668] sm:$0xf]
        %v3670 = vld [vmem:[%s3668 + $0x4] sm:$0xf]
        %v3671 = vld [vmem:[%s3668 + $0x8] sm:$0xf]
        %v3672 = vld [vmem:[%s3668 + $0xc] sm:$0xf]
        %v3673 = vld [vmem:[#allocation12 + $0xe] sm:$0x1]
        %v3674 = vlaneseq
        %v3675 = vshrl.u32 %v3674, 7
        %v3676 = vsub.s32 0, %v3675
        %v3677 = vrot.slane %v3673, %v3676
        %v3682 = vunpack.c.l.b16 %v3669
        %v3683 = vunpack.c.l.b16 %v3670
        %v3684 = vunpack.c.l.b16 %v3671
        %v3685 = vunpack.c.l.b16 %v3672
        %v3686 = vpack.c.b16 %v3683, %v3682
        %v3687 = vpack.c.b16 %v3685, %v3684
        %v3691 = vsel %vm1158, %v3667, 0
        %3693 = vmatprep.subr.bf16.mxu0 0
        %3694 = vmatpush1.bf16.msra.mxu0 0
        %3695 = vmatprep.subr.bf16.mxu0 0
        %3696 = vmatpush1.bf16.msra.mxu0 0
        %3697 = vmatprep.subr.bf16.mxu0 0
        %3698 = vmatpush1.bf16.msra.mxu0 0
        %3699 = vmatprep.subr.bf16.mxu0 0
        %3700 = vmatpush1.bf16.msra.mxu0 0
        %3701 = vmatprep.subr.bf16.mxu0 0
        %3702 = vmatpush1.bf16.msra.mxu0 0
        %3703 = vmatprep.subr.bf16.mxu0 0
        %3704 = vmatpush1.bf16.msra.mxu0 0
        %3705 = vmatprep.subr.bf16.mxu0 0
        %3706 = vmatpush1.bf16.msra.mxu0 %v3687
        %3707 = vmatprep.subr.bf16.mxu0 0
        %3708 = vmatpush1.bf16.msra.mxu0 %v3686
        %3709 = vmatprep.subr.bf16.mxu0 0
        %3710 = vmatpush2.bf16.msra.mxu0 0
        %3711 = vmatprep.subr.bf16.mxu0 0
        %3712 = vmatpush2.bf16.msra.mxu0 0
        %3713 = vmatprep.subr.bf16.mxu0 0
        %3714 = vmatpush2.bf16.msra.mxu0 0
        %3715 = vmatprep.subr.bf16.mxu0 0
        %3716 = vmatpush2.bf16.msra.mxu0 0
        %3717 = vmatprep.subr.bf16.mxu0 0
        %3718 = vmatpush2.bf16.msra.mxu0 0
        %3719 = vmatprep.subr.bf16.mxu0 0
        %3720 = vmatpush2.bf16.msra.mxu0 0
        %3721 = vmatprep.subr.bf16.mxu0 0
        %3722 = vmatpush2.bf16.msra.mxu0 0
        %3723 = vmatprep.subr.bf16.mxu0 0
        %3724 = vmatpush2.bf16.msra.mxu0 0
        %3725 = vmatprep.mubr.bf16.mxu0 0
        %3726 = vmatmul.mubr.bf16.gmra.mxu0 %v3691
        %v3727 = vpop.f32.mrf.mxu0
        %v3728 = vadd.f32 %v3677, %v3727
        %v3729 = vpop.f32.mrf.mxu0
        %v3730 = vpop.f32.mrf.mxu0
        %v3731 = vadd.f32 %v3677, %v3730
        %v3732 = vpop.f32.mrf.mxu0
        %3733 = vdwg.mxu0
        %v3734 = vmax.f32 %v3728, 0.0
        %v3735 = vmax.f32 %v3731, 0.0
        %v3736 = vpack.c.bf16 %v3735, %v3734
        %s3737 = scalar_lea.vmem [#allocation18], 32
        %v3738 = vld [vmem:[%s3737] sm:$0xf]
        %v3739 = vld [vmem:[%s3737 + $0x4] sm:$0xf]
        %v3740 = vld [vmem:[%s3737 + $0x8] sm:$0xf]
        %v3741 = vld [vmem:[%s3737 + $0xc] sm:$0xf]
        %v3742 = vld [vmem:[%s3737 + $0x10] sm:$0xf]
        %v3743 = vld [vmem:[%s3737 + $0x14] sm:$0xf]
        %v3744 = vld [vmem:[%s3737 + $0x18] sm:$0xf]
        %v3745 = vld [vmem:[%s3737 + $0x1c] sm:$0xf]
        %v3746 = vld [vmem:[#allocation12 + $0xf] sm:$0x1]
        %v3747 = vlaneseq
        %v3748 = vshrl.u32 %v3747, 7
        %v3749 = vsub.s32 0, %v3748
        %v3750 = vrot.slane %v3746, %v3749
        %v3759 = vunpack.c.l.b16 %v3738
        %v3760 = vunpack.c.l.b16 %v3739
        %v3761 = vunpack.c.l.b16 %v3740
        %v3762 = vunpack.c.l.b16 %v3741
        %v3763 = vunpack.c.l.b16 %v3742
        %v3764 = vunpack.c.l.b16 %v3743
        %v3765 = vunpack.c.l.b16 %v3744
        %v3766 = vunpack.c.l.b16 %v3745
        %v3767 = vpack.c.b16 %v3760, %v3759
        %v3768 = vpack.c.b16 %v3762, %v3761
        %v3769 = vpack.c.b16 %v3764, %v3763
        %v3770 = vpack.c.b16 %v3766, %v3765
        %v3776 = vsel %vm2735, %v3736, 0
        %3778 = vmatprep.subr.bf16.mxu0 0
        %3779 = vmatpush1.bf16.msra.mxu0 0
        %3780 = vmatprep.subr.bf16.mxu0 0
        %3781 = vmatpush1.bf16.msra.mxu0 0
        %3782 = vmatprep.subr.bf16.mxu0 0
        %3783 = vmatpush1.bf16.msra.mxu0 0
        %3784 = vmatprep.subr.bf16.mxu0 0
        %3785 = vmatpush1.bf16.msra.mxu0 0
        %3786 = vmatprep.subr.bf16.mxu0 0
        %3787 = vmatpush1.bf16.msra.mxu0 %v3770
        %3788 = vmatprep.subr.bf16.mxu0 0
        %3789 = vmatpush1.bf16.msra.mxu0 %v3769
        %3790 = vmatprep.subr.bf16.mxu0 0
        %3791 = vmatpush1.bf16.msra.mxu0 %v3768
        %3792 = vmatprep.subr.bf16.mxu0 0
        %3793 = vmatpush1.bf16.msra.mxu0 %v3767
        %3794 = vmatprep.subr.bf16.mxu0 0
        %3795 = vmatpush2.bf16.msra.mxu0 0
        %3796 = vmatprep.subr.bf16.mxu0 0
        %3797 = vmatpush2.bf16.msra.mxu0 0
        %3798 = vmatprep.subr.bf16.mxu0 0
        %3799 = vmatpush2.bf16.msra.mxu0 0
        %3800 = vmatprep.subr.bf16.mxu0 0
        %3801 = vmatpush2.bf16.msra.mxu0 0
        %3802 = vmatprep.subr.bf16.mxu0 0
        %3803 = vmatpush2.bf16.msra.mxu0 0
        %3804 = vmatprep.subr.bf16.mxu0 0
        %3805 = vmatpush2.bf16.msra.mxu0 0
        %3806 = vmatprep.subr.bf16.mxu0 0
        %3807 = vmatpush2.bf16.msra.mxu0 0
        %3808 = vmatprep.subr.bf16.mxu0 0
        %3809 = vmatpush2.bf16.msra.mxu0 0
        %3810 = vmatprep.mubr.bf16.mxu0 0
        %3811 = vmatmul.mubr.bf16.gmra.mxu0 %v3776
        %v3812 = vpop.f32.mrf.mxu0
        %v3813 = vadd.f32 %v3750, %v3812
        %v3814 = vpop.f32.mrf.mxu0
        %v3815 = vpop.f32.mrf.mxu0
        %v3816 = vadd.f32 %v3750, %v3815
        %v3817 = vpop.f32.mrf.mxu0
        %3818 = vdwg.mxu0
        %v3819 = vadd.f32 %v3625, %v3813
        %v3820 = vadd.f32 %v3626, %v3816
        %v3821 = vld [vmem:[#allocation12 + $0x10] sm:$0x1]
        %v3822 = vld [vmem:[#allocation12 + $0x11] sm:$0x1]
        %v3823 = vsel %vm1158, %v3819, 0.0
        %3824 = vadd.xlane.f32.xlu0 %v3823
        %v3825 = vpop.xlane.xlu0 %3824
        %v3826 = vsel %vm1727, %v3820, 0.0
        %3827 = vadd.xlane.f32.xlu0 %v3826
        %v3828 = vpop.xlane.xlu0 %3827
        %v3829 = vmul.f32 %v3825, %v1731
        %v3830 = vmul.f32 %v3828, %v1731
        %v3831 = vsub.f32 %v3819, %v3829
        %v3832 = vsub.f32 %v3820, %v3830
        %v3833 = vmul.f32 %v3831, %v3831
        %v3834 = vmul.f32 %v3832, %v3832
        %v3835 = vsel %vm1158, %v3833, 0.0
        %3836 = vadd.xlane.f32.xlu0 %v3835
        %v3837 = vpop.xlane.xlu0 %3836
        %v3838 = vsel %vm1727, %v3834, 0.0
        %3839 = vadd.xlane.f32.xlu0 %v3838
        %v3840 = vpop.xlane.xlu0 %3839
        %v3841 = vmul.f32 %v3837, %v1731
        %v3842 = vmul.f32 %v3840, %v1731
        %v3843 = vadd.f32 %v3841, 1e-05
        %v3844 = vadd.f32 %v3842, 1e-05
        %v3845 = vrsqrt.pop %v3843
        %v3846 = vrsqrt.pop %v3844
        %v3847 = vmul.f32 %v3831, %v3845
        %v3848 = vmul.f32 %v3832, %v3846
        %v3849 = vlaneseq
        %v3850 = vshrl.u32 %v3849, 7
        %v3851 = vsub.s32 0, %v3850
        %v3852 = vrot.slane %v3821, %v3851
        %v3853 = vmul.f32 %v3847, %v3852
        %v3854 = vmul.f32 %v3848, %v3852
        %v3855 = vlaneseq
        %v3856 = vshrl.u32 %v3855, 7
        %v3857 = vsub.s32 0, %v3856
        %v3858 = vrot.slane %v3822, %v3857
        %v3859 = vadd.f32 %v3853, %v3858
        %v3860 = vadd.f32 %v3854, %v3858
        %v3861 = vpack.c.bf16 %v3860, %v3859
        %s3862 = scalar_lea.vmem [#allocation14], 32
        %v3863 = vld [vmem:[%s3862] sm:$0xf]
        %v3864 = vld [vmem:[%s3862 + $0x4] sm:$0xf]
        %v3865 = vld [vmem:[%s3862 + $0x8] sm:$0xf]
        %v3866 = vld [vmem:[%s3862 + $0xc] sm:$0xf]
        %v3867 = vld [vmem:[#allocation12 + $0x12] sm:$0x1]
        %v3868 = vlaneseq
        %v3869 = vshrl.u32 %v3868, 7
        %v3870 = vsub.s32 0, %v3869
        %v3871 = vrot.slane %v3867, %v3870
        %v3876 = vunpack.c.l.b16 %v3863
        %v3877 = vunpack.c.l.b16 %v3864
        %v3878 = vunpack.c.l.b16 %v3865
        %v3879 = vunpack.c.l.b16 %v3866
        %v3880 = vpack.c.b16 %v3877, %v3876
        %v3881 = vpack.c.b16 %v3879, %v3878
        %v3885 = vsel %vm1158, %v3861, 0
        %3887 = vmatprep.subr.bf16.mxu0 0
        %3888 = vmatpush1.bf16.msra.mxu0 0
        %3889 = vmatprep.subr.bf16.mxu0 0
        %3890 = vmatpush1.bf16.msra.mxu0 0
        %3891 = vmatprep.subr.bf16.mxu0 0
        %3892 = vmatpush1.bf16.msra.mxu0 0
        %3893 = vmatprep.subr.bf16.mxu0 0
        %3894 = vmatpush1.bf16.msra.mxu0 0
        %3895 = vmatprep.subr.bf16.mxu0 0
        %3896 = vmatpush1.bf16.msra.mxu0 0
        %3897 = vmatprep.subr.bf16.mxu0 0
        %3898 = vmatpush1.bf16.msra.mxu0 0
        %3899 = vmatprep.subr.bf16.mxu0 0
        %3900 = vmatpush1.bf16.msra.mxu0 %v3881
        %3901 = vmatprep.subr.bf16.mxu0 0
        %3902 = vmatpush1.bf16.msra.mxu0 %v3880
        %3903 = vmatprep.subr.bf16.mxu0 0
        %3904 = vmatpush2.bf16.msra.mxu0 0
        %3905 = vmatprep.subr.bf16.mxu0 0
        %3906 = vmatpush2.bf16.msra.mxu0 0
        %3907 = vmatprep.subr.bf16.mxu0 0
        %3908 = vmatpush2.bf16.msra.mxu0 0
        %3909 = vmatprep.subr.bf16.mxu0 0
        %3910 = vmatpush2.bf16.msra.mxu0 0
        %3911 = vmatprep.subr.bf16.mxu0 0
        %3912 = vmatpush2.bf16.msra.mxu0 0
        %3913 = vmatprep.subr.bf16.mxu0 0
        %3914 = vmatpush2.bf16.msra.mxu0 0
        %3915 = vmatprep.subr.bf16.mxu0 0
        %3916 = vmatpush2.bf16.msra.mxu0 0
        %3917 = vmatprep.subr.bf16.mxu0 0
        %3918 = vmatpush2.bf16.msra.mxu0 0
        %3919 = vmatprep.mubr.bf16.mxu0 0
        %3920 = vmatmul.mubr.bf16.gmra.mxu0 %v3885
        %v3921 = vpop.f32.mrf.mxu0
        %v3922 = vadd.f32 %v3871, %v3921
        %v3923 = vpop.f32.mrf.mxu0
        %v3924 = vpop.f32.mrf.mxu0
        %v3925 = vadd.f32 %v3871, %v3924
        %v3926 = vpop.f32.mrf.mxu0
        %3927 = vdwg.mxu0
        %s3928 = scalar_lea.vmem [#allocation15], 8
        %v3929 = vld [vmem:[%s3928] sm:$0x7]
        %3932 = vrot.lane.b32.xlu0 %v3922, 64
        %v3933 = vpop.permute.xlu0 %3932
        %3934 = vrot.lane.b32.xlu0 %v3925, 64
        %v3935 = vpop.permute.xlu0 %3934
        %v3937 = vsel %vm646, %v3935, 0
        %3939 = vmatprep.subr.mxu0 0.0
        %3940 = vmatpush1.msra.mxu0 0.0
        %3941 = vmatprep.subr.mxu0 0.0
        %3942 = vmatpush1.msra.mxu0 0.0
        %3943 = vmatprep.subr.mxu0 0.0
        %3944 = vmatpush1.msra.mxu0 0.0
        %3945 = vmatprep.subr.mxu0 0.0
        %3946 = vmatpush1.msra.mxu0 0.0
        %3947 = vmatprep.subr.mxu0 0.0
        %3948 = vmatpush1.msra.mxu0 0.0
        %3949 = vmatprep.subr.mxu0 0.0
        %3950 = vmatpush1.msra.mxu0 0.0
        %3951 = vmatprep.subr.mxu0 0.0
        %3952 = vmatpush1.msra.mxu0 0.0
        %3953 = vmatprep.subr.mxu0 0.0
        %3954 = vmatpush1.msra.mxu0 0.0
        %3955 = vmatprep.subr.mxu0 0.0
        %3956 = vmatpush1.msra.mxu0 0.0
        %3957 = vmatprep.subr.mxu0 0.0
        %3958 = vmatpush1.msra.mxu0 0.0
        %3959 = vmatprep.subr.mxu0 0.0
        %3960 = vmatpush1.msra.mxu0 0.0
        %3961 = vmatprep.subr.mxu0 0.0
        %3962 = vmatpush1.msra.mxu0 0.0
        %3963 = vmatprep.subr.mxu0 0.0
        %3964 = vmatpush1.msra.mxu0 0.0
        %3965 = vmatprep.subr.mxu0 0.0
        %3966 = vmatpush1.msra.mxu0 0.0
        %3967 = vmatprep.subr.mxu0 0.0
        %3968 = vmatpush1.msra.mxu0 %v3937
        %3969 = vmatprep.subr.mxu0 0.0
        %3970 = vmatpush1.msra.mxu0 %v3933
        %3971 = vmatprep.subr.mxu0 0.0
        %3972 = vmatpush2.msra.mxu0 0.0
        %3973 = vmatprep.subr.mxu0 0.0
        %3974 = vmatpush2.msra.mxu0 0.0
        %3975 = vmatprep.subr.mxu0 0.0
        %3976 = vmatpush2.msra.mxu0 0.0
        %3977 = vmatprep.subr.mxu0 0.0
        %3978 = vmatpush2.msra.mxu0 0.0
        %3979 = vmatprep.subr.mxu0 0.0
        %3980 = vmatpush2.msra.mxu0 0.0
        %3981 = vmatprep.subr.mxu0 0.0
        %3982 = vmatpush2.msra.mxu0 0.0
        %3983 = vmatprep.subr.mxu0 0.0
        %3984 = vmatpush2.msra.mxu0 0.0
        %3985 = vmatprep.subr.mxu0 0.0
        %3986 = vmatpush2.msra.mxu0 0.0
        %3987 = vmatprep.subr.mxu0 0.0
        %3988 = vmatpush2.msra.mxu0 0.0
        %3989 = vmatprep.subr.mxu0 0.0
        %3990 = vmatpush2.msra.mxu0 0.0
        %3991 = vmatprep.subr.mxu0 0.0
        %3992 = vmatpush2.msra.mxu0 0.0
        %3993 = vmatprep.subr.mxu0 0.0
        %3994 = vmatpush2.msra.mxu0 0.0
        %3995 = vmatprep.subr.mxu0 0.0
        %3996 = vmatpush2.msra.mxu0 0.0
        %3997 = vmatprep.subr.mxu0 0.0
        %3998 = vmatpush2.msra.mxu0 0.0
        %3999 = vmatprep.subr.mxu0 0.0
        %4000 = vmatpush2.msra.mxu0 0.0
        %4001 = vmatprep.subr.mxu0 0.0
        %4002 = vmatpush2.msra.mxu0 0.0
        %4003 = vmatprep.mubr.f32.mxu0 0.0
        %4004 = vmatmul.mubr.f32.gmra.mxu0 %v641
        %v4005 = vpop.f32.mrf.mxu0
        %v4006 = vadd.f32 0.0, %v4005
        %v4007 = vpop.f32.mrf.mxu0
        %4008 = vmatprep.mubr.f32.mxu0 0.0
        %4009 = vmatmul.mubr.f32.gmra.mxu0 %v644
        %v4010 = vpop.f32.mrf.mxu0
        %v4011 = vadd.f32 0.0, %v4010
        %v4012 = vpop.f32.mrf.mxu0
        %4013 = vdwg.mxu0
        %4014 = vmatprep.subr.mxu0 0.0
        %4015 = vmatpush1.msra.mxu0 0.0
        %4016 = vmatprep.subr.mxu0 0.0
        %4017 = vmatpush1.msra.mxu0 0.0
        %4018 = vmatprep.subr.mxu0 0.0
        %4019 = vmatpush1.msra.mxu0 0.0
        %4020 = vmatprep.subr.mxu0 0.0
        %4021 = vmatpush1.msra.mxu0 0.0
        %4022 = vmatprep.subr.mxu0 0.0
        %4023 = vmatpush1.msra.mxu0 0.0
        %4024 = vmatprep.subr.mxu0 0.0
        %4025 = vmatpush1.msra.mxu0 0.0
        %4026 = vmatprep.subr.mxu0 0.0
        %4027 = vmatpush1.msra.mxu0 0.0
        %4028 = vmatprep.subr.mxu0 0.0
        %4029 = vmatpush1.msra.mxu0 0.0
        %4030 = vmatprep.subr.mxu0 0.0
        %4031 = vmatpush1.msra.mxu0 0.0
        %4032 = vmatprep.subr.mxu0 0.0
        %4033 = vmatpush1.msra.mxu0 0.0
        %4034 = vmatprep.subr.mxu0 0.0
        %4035 = vmatpush1.msra.mxu0 0.0
        %4036 = vmatprep.subr.mxu0 0.0
        %4037 = vmatpush1.msra.mxu0 0.0
        %4038 = vmatprep.subr.mxu0 0.0
        %4039 = vmatpush1.msra.mxu0 0.0
        %4040 = vmatprep.subr.mxu0 0.0
        %4041 = vmatpush1.msra.mxu0 0.0
        %4042 = vmatprep.subr.mxu0 0.0
        %4043 = vmatpush1.msra.mxu0 %v3937
        %4044 = vmatprep.subr.mxu0 0.0
        %4045 = vmatpush1.msra.mxu0 %v3933
        %4046 = vmatprep.subr.mxu0 0.0
        %4047 = vmatpush2.msra.mxu0 0.0
        %4048 = vmatprep.subr.mxu0 0.0
        %4049 = vmatpush2.msra.mxu0 0.0
        %4050 = vmatprep.subr.mxu0 0.0
        %4051 = vmatpush2.msra.mxu0 0.0
        %4052 = vmatprep.subr.mxu0 0.0
        %4053 = vmatpush2.msra.mxu0 0.0
        %4054 = vmatprep.subr.mxu0 0.0
        %4055 = vmatpush2.msra.mxu0 0.0
        %4056 = vmatprep.subr.mxu0 0.0
        %4057 = vmatpush2.msra.mxu0 0.0
        %4058 = vmatprep.subr.mxu0 0.0
        %4059 = vmatpush2.msra.mxu0 0.0
        %4060 = vmatprep.subr.mxu0 0.0
        %4061 = vmatpush2.msra.mxu0 0.0
        %4062 = vmatprep.subr.mxu0 0.0
        %4063 = vmatpush2.msra.mxu0 0.0
        %4064 = vmatprep.subr.mxu0 0.0
        %4065 = vmatpush2.msra.mxu0 0.0
        %4066 = vmatprep.subr.mxu0 0.0
        %4067 = vmatpush2.msra.mxu0 0.0
        %4068 = vmatprep.subr.mxu0 0.0
        %4069 = vmatpush2.msra.mxu0 0.0
        %4070 = vmatprep.subr.mxu0 0.0
        %4071 = vmatpush2.msra.mxu0 0.0
        %4072 = vmatprep.subr.mxu0 0.0
        %4073 = vmatpush2.msra.mxu0 0.0
        %4074 = vmatprep.subr.mxu0 0.0
        %4075 = vmatpush2.msra.mxu0 0.0
        %4076 = vmatprep.subr.mxu0 0.0
        %4077 = vmatpush2.msra.mxu0 0.0
        %4078 = vmatprep.mubr.f32.mxu0 0.0
        %4079 = vmatmul.mubr.f32.gmra.mxu0 %v1916
        %v4080 = vpop.f32.mrf.mxu0
        %v4081 = vadd.f32 0.0, %v4080
        %v4082 = vpop.f32.mrf.mxu0
        %4083 = vmatprep.mubr.f32.mxu0 0.0
        %4084 = vmatmul.mubr.f32.gmra.mxu0 %v1919
        %v4085 = vpop.f32.mrf.mxu0
        %v4086 = vadd.f32 0.0, %v4085
        %v4087 = vpop.f32.mrf.mxu0
        %4088 = vdwg.mxu0
        %v4089 = vlaneseq
        %v4090 = vshrl.u32 %v4089, 7
        %v4091 = vsub.s32 0, %v4090
        %v4092 = vrot.slane %v3929, %v4091
        %v4093 = vmul.f32 %v4006, %v4092
        %v4094 = vmul.f32 %v4011, %v4092
        %v4095 = vlaneseq
        %v4096 = vshrl.u32 %v4095, 7
        %v4097 = vsub.s32 1, %v4096
        %v4098 = vrot.slane %v3929, %v4097
        %4100 = vrot.lane.b32.xlu0 %v4098, 64
        %v4101 = vpop.permute.xlu0 %4100
        %v4103 = vmul.f32 %v3922, %v4101
        %v4104 = vmul.f32 %v3925, %v4101
        %4107 = vrot.lane.b32.xlu0 %v4103, 64
        %v4108 = vpop.permute.xlu0 %4107
        %4109 = vrot.lane.b32.xlu0 %v4104, 64
        %v4110 = vpop.permute.xlu0 %4109
        %v4113 = vadd.f32 %v4093, %v4108
        %v4114 = vadd.f32 %v4094, %v4110
        %v4115 = vlaneseq
        %v4116 = vshrl.u32 %v4115, 7
        %v4117 = vsub.s32 2, %v4116
        %v4118 = vrot.slane %v3929, %v4117
        %v4119 = vmul.f32 %v4081, %v4118
        %v4120 = vmul.f32 %v4086, %v4118
        %v4121 = vadd.f32 %v4113, %v4119
        %v4122 = vadd.f32 %v4114, %v4120
        %v4124 = vadd.f32 %v4121, %v3933
        %v4125 = vadd.f32 %v4122, %v3935
        %4126 = vrot.lane.b32.xlu0 %v3922, 96
        %v4127 = vpop.permute.xlu0 %4126
        %4128 = vrot.lane.b32.xlu0 %v3925, 96
        %v4129 = vpop.permute.xlu0 %4128
        %v4131 = vsel %vm646, %v4129, 0
        %4133 = vmatprep.subr.mxu0 0.0
        %4134 = vmatpush1.msra.mxu0 0.0
        %4135 = vmatprep.subr.mxu0 0.0
        %4136 = vmatpush1.msra.mxu0 0.0
        %4137 = vmatprep.subr.mxu0 0.0
        %4138 = vmatpush1.msra.mxu0 0.0
        %4139 = vmatprep.subr.mxu0 0.0
        %4140 = vmatpush1.msra.mxu0 0.0
        %4141 = vmatprep.subr.mxu0 0.0
        %4142 = vmatpush1.msra.mxu0 0.0
        %4143 = vmatprep.subr.mxu0 0.0
        %4144 = vmatpush1.msra.mxu0 0.0
        %4145 = vmatprep.subr.mxu0 0.0
        %4146 = vmatpush1.msra.mxu0 0.0
        %4147 = vmatprep.subr.mxu0 0.0
        %4148 = vmatpush1.msra.mxu0 0.0
        %4149 = vmatprep.subr.mxu0 0.0
        %4150 = vmatpush1.msra.mxu0 0.0
        %4151 = vmatprep.subr.mxu0 0.0
        %4152 = vmatpush1.msra.mxu0 0.0
        %4153 = vmatprep.subr.mxu0 0.0
        %4154 = vmatpush1.msra.mxu0 0.0
        %4155 = vmatprep.subr.mxu0 0.0
        %4156 = vmatpush1.msra.mxu0 0.0
        %4157 = vmatprep.subr.mxu0 0.0
        %4158 = vmatpush1.msra.mxu0 0.0
        %4159 = vmatprep.subr.mxu0 0.0
        %4160 = vmatpush1.msra.mxu0 0.0
        %4161 = vmatprep.subr.mxu0 0.0
        %4162 = vmatpush1.msra.mxu0 %v4131
        %4163 = vmatprep.subr.mxu0 0.0
        %4164 = vmatpush1.msra.mxu0 %v4127
        %4165 = vmatprep.subr.mxu0 0.0
        %4166 = vmatpush2.msra.mxu0 0.0
        %4167 = vmatprep.subr.mxu0 0.0
        %4168 = vmatpush2.msra.mxu0 0.0
        %4169 = vmatprep.subr.mxu0 0.0
        %4170 = vmatpush2.msra.mxu0 0.0
        %4171 = vmatprep.subr.mxu0 0.0
        %4172 = vmatpush2.msra.mxu0 0.0
        %4173 = vmatprep.subr.mxu0 0.0
        %4174 = vmatpush2.msra.mxu0 0.0
        %4175 = vmatprep.subr.mxu0 0.0
        %4176 = vmatpush2.msra.mxu0 0.0
        %4177 = vmatprep.subr.mxu0 0.0
        %4178 = vmatpush2.msra.mxu0 0.0
        %4179 = vmatprep.subr.mxu0 0.0
        %4180 = vmatpush2.msra.mxu0 0.0
        %4181 = vmatprep.subr.mxu0 0.0
        %4182 = vmatpush2.msra.mxu0 0.0
        %4183 = vmatprep.subr.mxu0 0.0
        %4184 = vmatpush2.msra.mxu0 0.0
        %4185 = vmatprep.subr.mxu0 0.0
        %4186 = vmatpush2.msra.mxu0 0.0
        %4187 = vmatprep.subr.mxu0 0.0
        %4188 = vmatpush2.msra.mxu0 0.0
        %4189 = vmatprep.subr.mxu0 0.0
        %4190 = vmatpush2.msra.mxu0 0.0
        %4191 = vmatprep.subr.mxu0 0.0
        %4192 = vmatpush2.msra.mxu0 0.0
        %4193 = vmatprep.subr.mxu0 0.0
        %4194 = vmatpush2.msra.mxu0 0.0
        %4195 = vmatprep.subr.mxu0 0.0
        %4196 = vmatpush2.msra.mxu0 0.0
        %4197 = vmatprep.mubr.f32.mxu0 0.0
        %4198 = vmatmul.mubr.f32.gmra.mxu0 %v2039
        %v4199 = vpop.f32.mrf.mxu0
        %v4200 = vadd.f32 0.0, %v4199
        %v4201 = vpop.f32.mrf.mxu0
        %4202 = vmatprep.mubr.f32.mxu0 0.0
        %4203 = vmatmul.mubr.f32.gmra.mxu0 %v2042
        %v4204 = vpop.f32.mrf.mxu0
        %v4205 = vadd.f32 0.0, %v4204
        %v4206 = vpop.f32.mrf.mxu0
        %4207 = vmatprep.mubr.f32.mxu0 0.0
        %4208 = vmatmul.mubr.f32.gmra.mxu0 %v2045
        %v4209 = vpop.f32.mrf.mxu0
        %v4210 = vadd.f32 0.0, %v4209
        %v4211 = vpop.f32.mrf.mxu0
        %4212 = vmatprep.mubr.f32.mxu0 0.0
        %4213 = vmatmul.mubr.f32.gmra.mxu0 %v2048
        %v4214 = vpop.f32.mrf.mxu0
        %v4215 = vadd.f32 0.0, %v4214
        %v4216 = vpop.f32.mrf.mxu0
        %4217 = vmatprep.mubr.f32.mxu0 0.0
        %4218 = vmatmul.mubr.f32.gmra.mxu0 %v2051
        %v4219 = vpop.f32.mrf.mxu0
        %v4220 = vadd.f32 0.0, %v4219
        %v4221 = vpop.f32.mrf.mxu0
        %4222 = vdwg.mxu0
        %v4223 = vmul.f32 %v4200, %v1601
        %v4224 = vmul.f32 %v4205, %v1602
        %v4225 = vmul.f32 %v4210, %v1603
        %v4226 = vmul.f32 %v4215, %v1604
        %v4227 = vmul.f32 %v4220, %v1605
        %4228 = vmatprep.subr.mxu0 0.0
        %4229 = vmatpush1.msra.mxu0 0.0
        %4230 = vmatprep.subr.mxu0 0.0
        %4231 = vmatpush1.msra.mxu0 0.0
        %4232 = vmatprep.subr.mxu0 0.0
        %4233 = vmatpush1.msra.mxu0 0.0
        %4234 = vmatprep.subr.mxu0 0.0
        %4235 = vmatpush1.msra.mxu0 0.0
        %4236 = vmatprep.subr.mxu0 0.0
        %4237 = vmatpush1.msra.mxu0 0.0
        %4238 = vmatprep.subr.mxu0 0.0
        %4239 = vmatpush1.msra.mxu0 0.0
        %4240 = vmatprep.subr.mxu0 0.0
        %4241 = vmatpush1.msra.mxu0 0.0
        %4242 = vmatprep.subr.mxu0 0.0
        %4243 = vmatpush1.msra.mxu0 0.0
        %4244 = vmatprep.subr.mxu0 0.0
        %4245 = vmatpush1.msra.mxu0 0.0
        %4246 = vmatprep.subr.mxu0 0.0
        %4247 = vmatpush1.msra.mxu0 0.0
        %4248 = vmatprep.subr.mxu0 0.0
        %4249 = vmatpush1.msra.mxu0 0.0
        %4250 = vmatprep.subr.mxu0 0.0
        %4251 = vmatpush1.msra.mxu0 0.0
        %4252 = vmatprep.subr.mxu0 0.0
        %4253 = vmatpush1.msra.mxu0 0.0
        %4254 = vmatprep.subr.mxu0 0.0
        %4255 = vmatpush1.msra.mxu0 0.0
        %4256 = vmatprep.subr.mxu0 0.0
        %4257 = vmatpush1.msra.mxu0 %v3937
        %4258 = vmatprep.subr.mxu0 0.0
        %4259 = vmatpush1.msra.mxu0 %v3933
        %4260 = vmatprep.subr.mxu0 0.0
        %4261 = vmatpush2.msra.mxu0 0.0
        %4262 = vmatprep.subr.mxu0 0.0
        %4263 = vmatpush2.msra.mxu0 0.0
        %4264 = vmatprep.subr.mxu0 0.0
        %4265 = vmatpush2.msra.mxu0 0.0
        %4266 = vmatprep.subr.mxu0 0.0
        %4267 = vmatpush2.msra.mxu0 0.0
        %4268 = vmatprep.subr.mxu0 0.0
        %4269 = vmatpush2.msra.mxu0 0.0
        %4270 = vmatprep.subr.mxu0 0.0
        %4271 = vmatpush2.msra.mxu0 0.0
        %4272 = vmatprep.subr.mxu0 0.0
        %4273 = vmatpush2.msra.mxu0 0.0
        %4274 = vmatprep.subr.mxu0 0.0
        %4275 = vmatpush2.msra.mxu0 0.0
        %4276 = vmatprep.subr.mxu0 0.0
        %4277 = vmatpush2.msra.mxu0 0.0
        %4278 = vmatprep.subr.mxu0 0.0
        %4279 = vmatpush2.msra.mxu0 0.0
        %4280 = vmatprep.subr.mxu0 0.0
        %4281 = vmatpush2.msra.mxu0 0.0
        %4282 = vmatprep.subr.mxu0 0.0
        %4283 = vmatpush2.msra.mxu0 0.0
        %4284 = vmatprep.subr.mxu0 0.0
        %4285 = vmatpush2.msra.mxu0 0.0
        %4286 = vmatprep.subr.mxu0 0.0
        %4287 = vmatpush2.msra.mxu0 0.0
        %4288 = vmatprep.subr.mxu0 0.0
        %4289 = vmatpush2.msra.mxu0 0.0
        %4290 = vmatprep.subr.mxu0 0.0
        %4291 = vmatpush2.msra.mxu0 0.0
        %4292 = vmatprep.mubr.f32.mxu0 0.0
        %4293 = vmatmul.mubr.f32.gmra.mxu0 %v2039
        %v4294 = vpop.f32.mrf.mxu0
        %v4295 = vadd.f32 0.0, %v4294
        %v4296 = vpop.f32.mrf.mxu0
        %4297 = vmatprep.mubr.f32.mxu0 0.0
        %4298 = vmatmul.mubr.f32.gmra.mxu0 %v2042
        %v4299 = vpop.f32.mrf.mxu0
        %v4300 = vadd.f32 0.0, %v4299
        %v4301 = vpop.f32.mrf.mxu0
        %4302 = vmatprep.mubr.f32.mxu0 0.0
        %4303 = vmatmul.mubr.f32.gmra.mxu0 %v2045
        %v4304 = vpop.f32.mrf.mxu0
        %v4305 = vadd.f32 0.0, %v4304
        %v4306 = vpop.f32.mrf.mxu0
        %4307 = vmatprep.mubr.f32.mxu0 0.0
        %4308 = vmatmul.mubr.f32.gmra.mxu0 %v2048
        %v4309 = vpop.f32.mrf.mxu0
        %v4310 = vadd.f32 0.0, %v4309
        %v4311 = vpop.f32.mrf.mxu0
        %4312 = vmatprep.mubr.f32.mxu0 0.0
        %4313 = vmatmul.mubr.f32.gmra.mxu0 %v2051
        %v4314 = vpop.f32.mrf.mxu0
        %v4315 = vadd.f32 0.0, %v4314
        %v4316 = vpop.f32.mrf.mxu0
        %4317 = vdwg.mxu0
        %v4318 = vmul.f32 %v4295, %v1601
        %v4319 = vmul.f32 %v4300, %v1602
        %v4320 = vmul.f32 %v4305, %v1603
        %v4321 = vmul.f32 %v4310, %v1604
        %v4322 = vmul.f32 %v4315, %v1605
        %v4323 = vsel %vm1158, %v3922, 0
        %v4325 = vsel %vm1158, %v3925, 0
        %v4328 = vsel %vm1158, %v4223, 0
        %v4331 = vsel %vm1158, %v4224, 0
        %v4334 = vsel %vm1158, %v4225, 0
        %v4337 = vsel %vm1158, %v4226, 0
        %v4340 = vsel %vm1158, %v4227, 0
        %4342 = vmatprep.subr.mxu0 0.0
        %4343 = vmatpush1.xpose.msra.mxu0 0.0
        %4344 = vmatprep.subr.mxu0 0.0
        %4345 = vmatpush1.xpose.msra.mxu0 0.0
        %4346 = vmatprep.subr.mxu0 0.0
        %4347 = vmatpush1.xpose.msra.mxu0 0.0
        %4348 = vmatprep.subr.mxu0 0.0
        %4349 = vmatpush1.xpose.msra.mxu0 0.0
        %4350 = vmatprep.subr.mxu0 0.0
        %4351 = vmatpush1.xpose.msra.mxu0 0.0
        %4352 = vmatprep.subr.mxu0 0.0
        %4353 = vmatpush1.xpose.msra.mxu0 0.0
        %4354 = vmatprep.subr.mxu0 0.0
        %4355 = vmatpush1.xpose.msra.mxu0 0.0
        %4356 = vmatprep.subr.mxu0 0.0
        %4357 = vmatpush1.xpose.msra.mxu0 0.0
        %4358 = vmatprep.subr.mxu0 0.0
        %4359 = vmatpush1.xpose.msra.mxu0 0.0
        %4360 = vmatprep.subr.mxu0 0.0
        %4361 = vmatpush1.xpose.msra.mxu0 0.0
        %4362 = vmatprep.subr.mxu0 0.0
        %4363 = vmatpush1.xpose.msra.mxu0 0.0
        %4364 = vmatprep.subr.mxu0 0.0
        %4365 = vmatpush1.xpose.msra.mxu0 %v4340
        %4366 = vmatprep.subr.mxu0 0.0
        %4367 = vmatpush1.xpose.msra.mxu0 %v4337
        %4368 = vmatprep.subr.mxu0 0.0
        %4369 = vmatpush1.xpose.msra.mxu0 %v4334
        %4370 = vmatprep.subr.mxu0 0.0
        %4371 = vmatpush1.xpose.msra.mxu0 %v4331
        %4372 = vmatprep.subr.mxu0 0.0
        %4373 = vmatpush1.xpose.msra.mxu0 %v4328
        %4374 = vmatprep.subr.mxu0 0.0
        %4375 = vmatpush2.xpose.msra.mxu0 0.0
        %4376 = vmatprep.subr.mxu0 0.0
        %4377 = vmatpush2.xpose.msra.mxu0 0.0
        %4378 = vmatprep.subr.mxu0 0.0
        %4379 = vmatpush2.xpose.msra.mxu0 0.0
        %4380 = vmatprep.subr.mxu0 0.0
        %4381 = vmatpush2.xpose.msra.mxu0 0.0
        %4382 = vmatprep.subr.mxu0 0.0
        %4383 = vmatpush2.xpose.msra.mxu0 0.0
        %4384 = vmatprep.subr.mxu0 0.0
        %4385 = vmatpush2.xpose.msra.mxu0 0.0
        %4386 = vmatprep.subr.mxu0 0.0
        %4387 = vmatpush2.xpose.msra.mxu0 0.0
        %4388 = vmatprep.subr.mxu0 0.0
        %4389 = vmatpush2.xpose.msra.mxu0 0.0
        %4390 = vmatprep.subr.mxu0 0.0
        %4391 = vmatpush2.xpose.msra.mxu0 0.0
        %4392 = vmatprep.subr.mxu0 0.0
        %4393 = vmatpush2.xpose.msra.mxu0 0.0
        %4394 = vmatprep.subr.mxu0 0.0
        %4395 = vmatpush2.xpose.msra.mxu0 0.0
        %4396 = vmatprep.subr.mxu0 0.0
        %4397 = vmatpush2.xpose.msra.mxu0 0.0
        %4398 = vmatprep.subr.mxu0 0.0
        %4399 = vmatpush2.xpose.msra.mxu0 0.0
        %4400 = vmatprep.subr.mxu0 0.0
        %4401 = vmatpush2.xpose.msra.mxu0 0.0
        %4402 = vmatprep.subr.mxu0 0.0
        %4403 = vmatpush2.xpose.msra.mxu0 0.0
        %4404 = vmatprep.subr.mxu0 0.0
        %4405 = vmatpush2.xpose.msra.mxu0 0.0
        %4406 = vmatprep.mubr.f32.mxu0 0.0
        %4407 = vmatmul.mubr.f32.gmra.mxu0 %v4323
        %v4408 = vpop.f32.mrf.mxu0
        %v4409 = vadd.f32 0.0, %v4408
        %v4410 = vpop.f32.mrf.mxu0
        %4411 = vmatprep.mubr.f32.mxu0 0.0
        %4412 = vmatmul.mubr.f32.gmra.mxu0 %v4325
        %v4413 = vpop.f32.mrf.mxu0
        %v4414 = vadd.f32 0.0, %v4413
        %v4415 = vpop.f32.mrf.mxu0
        %4416 = vdwg.mxu0
        %v4417 = vsel %vm2339, %v4409, -inf
        %4418 = vmax.xlane.f32.xlu0 %v4417
        %v4419 = vpop.xlane.xlu0 %4418
        %v4420 = vsel %vm2343, %v4414, -inf
        %4421 = vmax.xlane.f32.xlu0 %v4420
        %v4422 = vpop.xlane.xlu0 %4421
        %v4423 = vsub.f32 %v4409, %v4419
        %v4424 = vsub.f32 %v4414, %v4422
        %v4425 = vmul.f32 %v4423, 1.442695
        %v4426 = vpow.pop %v4425
        %v4427 = vmul.f32 %v4424, 1.442695
        %v4428 = vpow.pop %v4427
        %v4430 = vsel %vm2339, %v4426, 0
        %v4433 = vsel %vm2339, %v4428, 0
        %4435 = vmatprep.subr.mxu0 0.0
        %4436 = vmatpush1.msra.mxu0 0.0
        %4437 = vmatprep.subr.mxu0 0.0
        %4438 = vmatpush1.msra.mxu0 0.0
        %4439 = vmatprep.subr.mxu0 0.0
        %4440 = vmatpush1.msra.mxu0 0.0
        %4441 = vmatprep.subr.mxu0 0.0
        %4442 = vmatpush1.msra.mxu0 0.0
        %4443 = vmatprep.subr.mxu0 0.0
        %4444 = vmatpush1.msra.mxu0 0.0
        %4445 = vmatprep.subr.mxu0 0.0
        %4446 = vmatpush1.msra.mxu0 0.0
        %4447 = vmatprep.subr.mxu0 0.0
        %4448 = vmatpush1.msra.mxu0 0.0
        %4449 = vmatprep.subr.mxu0 0.0
        %4450 = vmatpush1.msra.mxu0 0.0
        %4451 = vmatprep.subr.mxu0 0.0
        %4452 = vmatpush1.msra.mxu0 0.0
        %4453 = vmatprep.subr.mxu0 0.0
        %4454 = vmatpush1.msra.mxu0 0.0
        %4455 = vmatprep.subr.mxu0 0.0
        %4456 = vmatpush1.msra.mxu0 0.0
        %4457 = vmatprep.subr.mxu0 0.0
        %4458 = vmatpush1.msra.mxu0 %v1721
        %4459 = vmatprep.subr.mxu0 0.0
        %4460 = vmatpush1.msra.mxu0 %v1720
        %4461 = vmatprep.subr.mxu0 0.0
        %4462 = vmatpush1.msra.mxu0 %v1719
        %4463 = vmatprep.subr.mxu0 0.0
        %4464 = vmatpush1.msra.mxu0 %v1718
        %4465 = vmatprep.subr.mxu0 0.0
        %4466 = vmatpush1.msra.mxu0 %v1717
        %4467 = vmatprep.subr.mxu0 0.0
        %4468 = vmatpush2.msra.mxu0 0.0
        %4469 = vmatprep.subr.mxu0 0.0
        %4470 = vmatpush2.msra.mxu0 0.0
        %4471 = vmatprep.subr.mxu0 0.0
        %4472 = vmatpush2.msra.mxu0 0.0
        %4473 = vmatprep.subr.mxu0 0.0
        %4474 = vmatpush2.msra.mxu0 0.0
        %4475 = vmatprep.subr.mxu0 0.0
        %4476 = vmatpush2.msra.mxu0 0.0
        %4477 = vmatprep.subr.mxu0 0.0
        %4478 = vmatpush2.msra.mxu0 0.0
        %4479 = vmatprep.subr.mxu0 0.0
        %4480 = vmatpush2.msra.mxu0 0.0
        %4481 = vmatprep.subr.mxu0 0.0
        %4482 = vmatpush2.msra.mxu0 0.0
        %4483 = vmatprep.subr.mxu0 0.0
        %4484 = vmatpush2.msra.mxu0 0.0
        %4485 = vmatprep.subr.mxu0 0.0
        %4486 = vmatpush2.msra.mxu0 0.0
        %4487 = vmatprep.subr.mxu0 0.0
        %4488 = vmatpush2.msra.mxu0 0.0
        %4489 = vmatprep.subr.mxu0 0.0
        %4490 = vmatpush2.msra.mxu0 0.0
        %4491 = vmatprep.subr.mxu0 0.0
        %4492 = vmatpush2.msra.mxu0 0.0
        %4493 = vmatprep.subr.mxu0 0.0
        %4494 = vmatpush2.msra.mxu0 0.0
        %4495 = vmatprep.subr.mxu0 0.0
        %4496 = vmatpush2.msra.mxu0 0.0
        %4497 = vmatprep.subr.mxu0 0.0
        %4498 = vmatpush2.msra.mxu0 0.0
        %4499 = vmatprep.mubr.f32.mxu0 0.0
        %4500 = vmatmul.mubr.f32.gmra.mxu0 %v4430
        %v4501 = vpop.f32.mrf.mxu0
        %v4502 = vadd.f32 0.0, %v4501
        %v4503 = vpop.f32.mrf.mxu0
        %4504 = vmatprep.mubr.f32.mxu0 0.0
        %4505 = vmatmul.mubr.f32.gmra.mxu0 %v4433
        %v4506 = vpop.f32.mrf.mxu0
        %v4507 = vadd.f32 0.0, %v4506
        %v4508 = vpop.f32.mrf.mxu0
        %4509 = vdwg.mxu0
        %v4510 = vrcp.pop %v4502
        %v4511 = vrcp.pop %v4507
        %v4512 = vmul.f32 %v4426, %v4510
        %v4513 = vmul.f32 %v4428, %v4511
        %v4515 = vsel %vm2339, %v4512, 0
        %v4518 = vsel %vm2339, %v4513, 0
        %4520 = vmatprep.subr.mxu0 0.0
        %4521 = vmatpush1.msra.mxu0 0.0
        %4522 = vmatprep.subr.mxu0 0.0
        %4523 = vmatpush1.msra.mxu0 0.0
        %4524 = vmatprep.subr.mxu0 0.0
        %4525 = vmatpush1.msra.mxu0 0.0
        %4526 = vmatprep.subr.mxu0 0.0
        %4527 = vmatpush1.msra.mxu0 0.0
        %4528 = vmatprep.subr.mxu0 0.0
        %4529 = vmatpush1.msra.mxu0 0.0
        %4530 = vmatprep.subr.mxu0 0.0
        %4531 = vmatpush1.msra.mxu0 0.0
        %4532 = vmatprep.subr.mxu0 0.0
        %4533 = vmatpush1.msra.mxu0 0.0
        %4534 = vmatprep.subr.mxu0 0.0
        %4535 = vmatpush1.msra.mxu0 0.0
        %4536 = vmatprep.subr.mxu0 0.0
        %4537 = vmatpush1.msra.mxu0 0.0
        %4538 = vmatprep.subr.mxu0 0.0
        %4539 = vmatpush1.msra.mxu0 0.0
        %4540 = vmatprep.subr.mxu0 0.0
        %4541 = vmatpush1.msra.mxu0 0.0
        %4542 = vmatprep.subr.mxu0 0.0
        %4543 = vmatpush1.msra.mxu0 %v4322
        %4544 = vmatprep.subr.mxu0 0.0
        %4545 = vmatpush1.msra.mxu0 %v4321
        %4546 = vmatprep.subr.mxu0 0.0
        %4547 = vmatpush1.msra.mxu0 %v4320
        %4548 = vmatprep.subr.mxu0 0.0
        %4549 = vmatpush1.msra.mxu0 %v4319
        %4550 = vmatprep.subr.mxu0 0.0
        %4551 = vmatpush1.msra.mxu0 %v4318
        %4552 = vmatprep.subr.mxu0 0.0
        %4553 = vmatpush2.msra.mxu0 0.0
        %4554 = vmatprep.subr.mxu0 0.0
        %4555 = vmatpush2.msra.mxu0 0.0
        %4556 = vmatprep.subr.mxu0 0.0
        %4557 = vmatpush2.msra.mxu0 0.0
        %4558 = vmatprep.subr.mxu0 0.0
        %4559 = vmatpush2.msra.mxu0 0.0
        %4560 = vmatprep.subr.mxu0 0.0
        %4561 = vmatpush2.msra.mxu0 0.0
        %4562 = vmatprep.subr.mxu0 0.0
        %4563 = vmatpush2.msra.mxu0 0.0
        %4564 = vmatprep.subr.mxu0 0.0
        %4565 = vmatpush2.msra.mxu0 0.0
        %4566 = vmatprep.subr.mxu0 0.0
        %4567 = vmatpush2.msra.mxu0 0.0
        %4568 = vmatprep.subr.mxu0 0.0
        %4569 = vmatpush2.msra.mxu0 0.0
        %4570 = vmatprep.subr.mxu0 0.0
        %4571 = vmatpush2.msra.mxu0 0.0
        %4572 = vmatprep.subr.mxu0 0.0
        %4573 = vmatpush2.msra.mxu0 0.0
        %4574 = vmatprep.subr.mxu0 0.0
        %4575 = vmatpush2.msra.mxu0 0.0
        %4576 = vmatprep.subr.mxu0 0.0
        %4577 = vmatpush2.msra.mxu0 0.0
        %4578 = vmatprep.subr.mxu0 0.0
        %4579 = vmatpush2.msra.mxu0 0.0
        %4580 = vmatprep.subr.mxu0 0.0
        %4581 = vmatpush2.msra.mxu0 0.0
        %4582 = vmatprep.subr.mxu0 0.0
        %4583 = vmatpush2.msra.mxu0 0.0
        %4584 = vmatprep.mubr.f32.mxu0 0.0
        %4585 = vmatmul.mubr.f32.gmra.mxu0 %v4515
        %v4586 = vpop.f32.mrf.mxu0
        %v4587 = vadd.f32 0.0, %v4586
        %v4588 = vpop.f32.mrf.mxu0
        %4589 = vmatprep.mubr.f32.mxu0 0.0
        %4590 = vmatmul.mubr.f32.gmra.mxu0 %v4518
        %v4591 = vpop.f32.mrf.mxu0
        %v4592 = vadd.f32 0.0, %v4591
        %v4593 = vpop.f32.mrf.mxu0
        %4594 = vdwg.mxu0
        %v4595 = vpack.c.bf16 %v4592, %v4587
        %s4596 = scalar_lea.vmem %s12, 32
        %v4597 = vld [vmem:[%s4596] sm:$0xf]
        %v4598 = vld [vmem:[%s4596 + $0x4] sm:$0xf]
        %v4599 = vld [vmem:[%s4596 + $0x8] sm:$0xf]
        %v4600 = vld [vmem:[%s4596 + $0xc] sm:$0xf]
        %v4601 = vld [vmem:[#allocation12 + $0x13] sm:$0x1]
        %v4602 = vlaneseq
        %v4603 = vshrl.u32 %v4602, 7
        %v4604 = vsub.s32 0, %v4603
        %v4605 = vrot.slane %v4601, %v4604
        %v4610 = vunpack.c.l.b16 %v4597
        %v4611 = vunpack.c.l.b16 %v4598
        %v4612 = vunpack.c.l.b16 %v4599
        %v4613 = vunpack.c.l.b16 %v4600
        %v4614 = vpack.c.b16 %v4611, %v4610
        %v4615 = vpack.c.b16 %v4613, %v4612
        %v4619 = vsel %vm1158, %v4595, 0
        %4621 = vmatprep.subr.bf16.mxu0 0
        %4622 = vmatpush1.bf16.msra.mxu0 0
        %4623 = vmatprep.subr.bf16.mxu0 0
        %4624 = vmatpush1.bf16.msra.mxu0 0
        %4625 = vmatprep.subr.bf16.mxu0 0
        %4626 = vmatpush1.bf16.msra.mxu0 0
        %4627 = vmatprep.subr.bf16.mxu0 0
        %4628 = vmatpush1.bf16.msra.mxu0 0
        %4629 = vmatprep.subr.bf16.mxu0 0
        %4630 = vmatpush1.bf16.msra.mxu0 0
        %4631 = vmatprep.subr.bf16.mxu0 0
        %4632 = vmatpush1.bf16.msra.mxu0 0
        %4633 = vmatprep.subr.bf16.mxu0 0
        %4634 = vmatpush1.bf16.msra.mxu0 %v4615
        %4635 = vmatprep.subr.bf16.mxu0 0
        %4636 = vmatpush1.bf16.msra.mxu0 %v4614
        %4637 = vmatprep.subr.bf16.mxu0 0
        %4638 = vmatpush2.bf16.msra.mxu0 0
        %4639 = vmatprep.subr.bf16.mxu0 0
        %4640 = vmatpush2.bf16.msra.mxu0 0
        %4641 = vmatprep.subr.bf16.mxu0 0
        %4642 = vmatpush2.bf16.msra.mxu0 0
        %4643 = vmatprep.subr.bf16.mxu0 0
        %4644 = vmatpush2.bf16.msra.mxu0 0
        %4645 = vmatprep.subr.bf16.mxu0 0
        %4646 = vmatpush2.bf16.msra.mxu0 0
        %4647 = vmatprep.subr.bf16.mxu0 0
        %4648 = vmatpush2.bf16.msra.mxu0 0
        %4649 = vmatprep.subr.bf16.mxu0 0
        %4650 = vmatpush2.bf16.msra.mxu0 0
        %4651 = vmatprep.subr.bf16.mxu0 0
        %4652 = vmatpush2.bf16.msra.mxu0 0
        %4653 = vmatprep.mubr.bf16.mxu0 0
        %4654 = vmatmul.mubr.bf16.gmra.mxu0 %v4619
        %v4655 = vpop.f32.mrf.mxu0
        %v4656 = vadd.f32 %v4605, %v4655
        %v4657 = vpop.f32.mrf.mxu0
        %v4658 = vpop.f32.mrf.mxu0
        %v4659 = vadd.f32 %v4605, %v4658
        %v4660 = vpop.f32.mrf.mxu0
        %4661 = vdwg.mxu0
        %v4662 = vadd.f32 %v3819, %v4656
        %v4663 = vadd.f32 %v3820, %v4659
        %v4664 = vadd.f32 %v4662, %v4124
        %v4665 = vadd.f32 %v4663, %v4125
        %v4666 = vld [vmem:[#allocation12 + $0x14] sm:$0x1]
        %v4667 = vld [vmem:[#allocation12 + $0x15] sm:$0x1]
        %v4668 = vsel %vm1158, %v4664, 0.0
        %4669 = vadd.xlane.f32.xlu0 %v4668
        %v4670 = vpop.xlane.xlu0 %4669
        %v4671 = vsel %vm1727, %v4665, 0.0
        %4672 = vadd.xlane.f32.xlu0 %v4671
        %v4673 = vpop.xlane.xlu0 %4672
        %v4674 = vmul.f32 %v4670, %v1731
        %v4675 = vmul.f32 %v4673, %v1731
        %v4676 = vsub.f32 %v4664, %v4674
        %v4677 = vsub.f32 %v4665, %v4675
        %v4678 = vmul.f32 %v4676, %v4676
        %v4679 = vmul.f32 %v4677, %v4677
        %v4680 = vsel %vm1158, %v4678, 0.0
        %4681 = vadd.xlane.f32.xlu0 %v4680
        %v4682 = vpop.xlane.xlu0 %4681
        %v4683 = vsel %vm1727, %v4679, 0.0
        %4684 = vadd.xlane.f32.xlu0 %v4683
        %v4685 = vpop.xlane.xlu0 %4684
        %v4686 = vmul.f32 %v4682, %v1731
        %v4687 = vmul.f32 %v4685, %v1731
        %v4688 = vadd.f32 %v4686, 1e-05
        %v4689 = vadd.f32 %v4687, 1e-05
        %v4690 = vrsqrt.pop %v4688
        %v4691 = vrsqrt.pop %v4689
        %v4692 = vmul.f32 %v4676, %v4690
        %v4693 = vmul.f32 %v4677, %v4691
        %v4694 = vlaneseq
        %v4695 = vshrl.u32 %v4694, 7
        %v4696 = vsub.s32 0, %v4695
        %v4697 = vrot.slane %v4666, %v4696
        %v4698 = vmul.f32 %v4692, %v4697
        %v4699 = vmul.f32 %v4693, %v4697
        %v4700 = vlaneseq
        %v4701 = vshrl.u32 %v4700, 7
        %v4702 = vsub.s32 0, %v4701
        %v4703 = vrot.slane %v4667, %v4702
        %v4704 = vadd.f32 %v4698, %v4703
        %v4705 = vadd.f32 %v4699, %v4703
        %v4706 = vpack.c.bf16 %v4705, %v4704
        %s4707 = scalar_lea.vmem [#allocation17], 32
        %v4708 = vld [vmem:[%s4707] sm:$0xf]
        %v4709 = vld [vmem:[%s4707 + $0x4] sm:$0xf]
        %v4710 = vld [vmem:[%s4707 + $0x8] sm:$0xf]
        %v4711 = vld [vmem:[%s4707 + $0xc] sm:$0xf]
        %v4712 = vld [vmem:[#allocation12 + $0x16] sm:$0x1]
        %v4713 = vlaneseq
        %v4714 = vshrl.u32 %v4713, 7
        %v4715 = vsub.s32 0, %v4714
        %v4716 = vrot.slane %v4712, %v4715
        %v4721 = vunpack.c.l.b16 %v4708
        %v4722 = vunpack.c.l.b16 %v4709
        %v4723 = vunpack.c.l.b16 %v4710
        %v4724 = vunpack.c.l.b16 %v4711
        %v4725 = vpack.c.b16 %v4722, %v4721
        %v4726 = vpack.c.b16 %v4724, %v4723
        %v4730 = vsel %vm1158, %v4706, 0
        %4732 = vmatprep.subr.bf16.mxu0 0
        %4733 = vmatpush1.bf16.msra.mxu0 0
        %4734 = vmatprep.subr.bf16.mxu0 0
        %4735 = vmatpush1.bf16.msra.mxu0 0
        %4736 = vmatprep.subr.bf16.mxu0 0
        %4737 = vmatpush1.bf16.msra.mxu0 0
        %4738 = vmatprep.subr.bf16.mxu0 0
        %4739 = vmatpush1.bf16.msra.mxu0 0
        %4740 = vmatprep.subr.bf16.mxu0 0
        %4741 = vmatpush1.bf16.msra.mxu0 0
        %4742 = vmatprep.subr.bf16.mxu0 0
        %4743 = vmatpush1.bf16.msra.mxu0 0
        %4744 = vmatprep.subr.bf16.mxu0 0
        %4745 = vmatpush1.bf16.msra.mxu0 %v4726
        %4746 = vmatprep.subr.bf16.mxu0 0
        %4747 = vmatpush1.bf16.msra.mxu0 %v4725
        %4748 = vmatprep.subr.bf16.mxu0 0
        %4749 = vmatpush2.bf16.msra.mxu0 0
        %4750 = vmatprep.subr.bf16.mxu0 0
        %4751 = vmatpush2.bf16.msra.mxu0 0
        %4752 = vmatprep.subr.bf16.mxu0 0
        %4753 = vmatpush2.bf16.msra.mxu0 0
        %4754 = vmatprep.subr.bf16.mxu0 0
        %4755 = vmatpush2.bf16.msra.mxu0 0
        %4756 = vmatprep.subr.bf16.mxu0 0
        %4757 = vmatpush2.bf16.msra.mxu0 0
        %4758 = vmatprep.subr.bf16.mxu0 0
        %4759 = vmatpush2.bf16.msra.mxu0 0
        %4760 = vmatprep.subr.bf16.mxu0 0
        %4761 = vmatpush2.bf16.msra.mxu0 0
        %4762 = vmatprep.subr.bf16.mxu0 0
        %4763 = vmatpush2.bf16.msra.mxu0 0
        %4764 = vmatprep.mubr.bf16.mxu0 0
        %4765 = vmatmul.mubr.bf16.gmra.mxu0 %v4730
        %v4766 = vpop.f32.mrf.mxu0
        %v4767 = vadd.f32 %v4716, %v4766
        %v4768 = vpop.f32.mrf.mxu0
        %v4769 = vpop.f32.mrf.mxu0
        %v4770 = vadd.f32 %v4716, %v4769
        %v4771 = vpop.f32.mrf.mxu0
        %4772 = vdwg.mxu0
        %v4773 = vmax.f32 %v4767, 0.0
        %v4774 = vmax.f32 %v4770, 0.0
        %v4775 = vpack.c.bf16 %v4774, %v4773
        %s4776 = scalar_lea.vmem [#allocation18], 64
        %v4777 = vld [vmem:[%s4776] sm:$0xf]
        %v4778 = vld [vmem:[%s4776 + $0x4] sm:$0xf]
        %v4779 = vld [vmem:[%s4776 + $0x8] sm:$0xf]
        %v4780 = vld [vmem:[%s4776 + $0xc] sm:$0xf]
        %v4781 = vld [vmem:[%s4776 + $0x10] sm:$0xf]
        %v4782 = vld [vmem:[%s4776 + $0x14] sm:$0xf]
        %v4783 = vld [vmem:[%s4776 + $0x18] sm:$0xf]
        %v4784 = vld [vmem:[%s4776 + $0x1c] sm:$0xf]
        %v4785 = vld [vmem:[#allocation12 + $0x17] sm:$0x1]
        %v4786 = vlaneseq
        %v4787 = vshrl.u32 %v4786, 7
        %v4788 = vsub.s32 0, %v4787
        %v4789 = vrot.slane %v4785, %v4788
        %v4798 = vunpack.c.l.b16 %v4777
        %v4799 = vunpack.c.l.b16 %v4778
        %v4800 = vunpack.c.l.b16 %v4779
        %v4801 = vunpack.c.l.b16 %v4780
        %v4802 = vunpack.c.l.b16 %v4781
        %v4803 = vunpack.c.l.b16 %v4782
        %v4804 = vunpack.c.l.b16 %v4783
        %v4805 = vunpack.c.l.b16 %v4784
        %v4806 = vpack.c.b16 %v4799, %v4798
        %v4807 = vpack.c.b16 %v4801, %v4800
        %v4808 = vpack.c.b16 %v4803, %v4802
        %v4809 = vpack.c.b16 %v4805, %v4804
        %v4815 = vsel %vm2735, %v4775, 0
        %4817 = vmatprep.subr.bf16.mxu0 0
        %4818 = vmatpush1.bf16.msra.mxu0 0
        %4819 = vmatprep.subr.bf16.mxu0 0
        %4820 = vmatpush1.bf16.msra.mxu0 0
        %4821 = vmatprep.subr.bf16.mxu0 0
        %4822 = vmatpush1.bf16.msra.mxu0 0
        %4823 = vmatprep.subr.bf16.mxu0 0
        %4824 = vmatpush1.bf16.msra.mxu0 0
        %4825 = vmatprep.subr.bf16.mxu0 0
        %4826 = vmatpush1.bf16.msra.mxu0 %v4809
        %4827 = vmatprep.subr.bf16.mxu0 0
        %4828 = vmatpush1.bf16.msra.mxu0 %v4808
        %4829 = vmatprep.subr.bf16.mxu0 0
        %4830 = vmatpush1.bf16.msra.mxu0 %v4807
        %4831 = vmatprep.subr.bf16.mxu0 0
        %4832 = vmatpush1.bf16.msra.mxu0 %v4806
        %4833 = vmatprep.subr.bf16.mxu0 0
        %4834 = vmatpush2.bf16.msra.mxu0 0
        %4835 = vmatprep.subr.bf16.mxu0 0
        %4836 = vmatpush2.bf16.msra.mxu0 0
        %4837 = vmatprep.subr.bf16.mxu0 0
        %4838 = vmatpush2.bf16.msra.mxu0 0
        %4839 = vmatprep.subr.bf16.mxu0 0
        %4840 = vmatpush2.bf16.msra.mxu0 0
        %4841 = vmatprep.subr.bf16.mxu0 0
        %4842 = vmatpush2.bf16.msra.mxu0 0
        %4843 = vmatprep.subr.bf16.mxu0 0
        %4844 = vmatpush2.bf16.msra.mxu0 0
        %4845 = vmatprep.subr.bf16.mxu0 0
        %4846 = vmatpush2.bf16.msra.mxu0 0
        %4847 = vmatprep.subr.bf16.mxu0 0
        %4848 = vmatpush2.bf16.msra.mxu0 0
        %4849 = vmatprep.mubr.bf16.mxu0 0
        %4850 = vmatmul.mubr.bf16.gmra.mxu0 %v4815
        %v4851 = vpop.f32.mrf.mxu0
        %v4852 = vadd.f32 %v4789, %v4851
        %v4853 = vpop.f32.mrf.mxu0
        %v4854 = vpop.f32.mrf.mxu0
        %v4855 = vadd.f32 %v4789, %v4854
        %v4856 = vpop.f32.mrf.mxu0
        %4857 = vdwg.mxu0
        %v4858 = vadd.f32 %v4664, %v4852
        %v4859 = vadd.f32 %v4665, %v4855
        %v4860 = vld [vmem:[#allocation12 + $0x22] sm:$0x1]
        %v4861 = vld [vmem:[#allocation12 + $0x23] sm:$0x1]
        %v4862 = vsel %vm1158, %v4858, 0.0
        %4863 = vadd.xlane.f32.xlu0 %v4862
        %v4864 = vpop.xlane.xlu0 %4863
        %v4865 = vsel %vm1727, %v4859, 0.0
        %4866 = vadd.xlane.f32.xlu0 %v4865
        %v4867 = vpop.xlane.xlu0 %4866
        %v4868 = vmul.f32 %v4864, %v1731
        %v4869 = vmul.f32 %v4867, %v1731
        %v4870 = vsub.f32 %v4858, %v4868
        %v4871 = vsub.f32 %v4859, %v4869
        %v4872 = vmul.f32 %v4870, %v4870
        %v4873 = vmul.f32 %v4871, %v4871
        %v4874 = vsel %vm1158, %v4872, 0.0
        %4875 = vadd.xlane.f32.xlu0 %v4874
        %v4876 = vpop.xlane.xlu0 %4875
        %v4877 = vsel %vm1727, %v4873, 0.0
        %4878 = vadd.xlane.f32.xlu0 %v4877
        %v4879 = vpop.xlane.xlu0 %4878
        %v4880 = vmul.f32 %v4876, %v1731
        %v4881 = vmul.f32 %v4879, %v1731
        %v4882 = vadd.f32 %v4880, 1e-05
        %v4883 = vadd.f32 %v4881, 1e-05
        %v4884 = vrsqrt.pop %v4882
        %v4885 = vrsqrt.pop %v4883
        %v4886 = vmul.f32 %v4870, %v4884
        %v4887 = vmul.f32 %v4871, %v4885
        %v4888 = vlaneseq
        %v4889 = vshrl.u32 %v4888, 7
        %v4890 = vsub.s32 0, %v4889
        %v4891 = vrot.slane %v4860, %v4890
        %v4892 = vmul.f32 %v4886, %v4891
        %v4893 = vmul.f32 %v4887, %v4891
        %v4894 = vlaneseq
        %v4895 = vshrl.u32 %v4894, 7
        %v4896 = vsub.s32 0, %v4895
        %v4897 = vrot.slane %v4861, %v4896
        %v4898 = vadd.f32 %v4892, %v4897
        %v4899 = vadd.f32 %v4893, %v4897
        %v4900 = vld [vmem:[#allocation12 + $0x18] sm:$0x1]
        %v4901 = vld [vmem:[#allocation12 + $0x19] sm:$0x1]
        %v4902 = vsel %vm1158, %v4898, 0.0
        %4903 = vadd.xlane.f32.xlu0 %v4902
        %v4904 = vpop.xlane.xlu0 %4903
        %v4905 = vsel %vm1727, %v4899, 0.0
        %4906 = vadd.xlane.f32.xlu0 %v4905
        %v4907 = vpop.xlane.xlu0 %4906
        %v4908 = vmul.f32 %v4904, %v1731
        %v4909 = vmul.f32 %v4907, %v1731
        %v4910 = vsub.f32 %v4898, %v4908
        %v4911 = vsub.f32 %v4899, %v4909
        %v4912 = vmul.f32 %v4910, %v4910
        %v4913 = vmul.f32 %v4911, %v4911
        %v4914 = vsel %vm1158, %v4912, 0.0
        %4915 = vadd.xlane.f32.xlu0 %v4914
        %v4916 = vpop.xlane.xlu0 %4915
        %v4917 = vsel %vm1727, %v4913, 0.0
        %4918 = vadd.xlane.f32.xlu0 %v4917
        %v4919 = vpop.xlane.xlu0 %4918
        %v4920 = vmul.f32 %v4916, %v1731
        %v4921 = vmul.f32 %v4919, %v1731
        %v4922 = vadd.f32 %v4920, 1e-05
        %v4923 = vadd.f32 %v4921, 1e-05
        %v4924 = vrsqrt.pop %v4922
        %v4925 = vrsqrt.pop %v4923
        %v4926 = vmul.f32 %v4910, %v4924
        %v4927 = vmul.f32 %v4911, %v4925
        %v4928 = vlaneseq
        %v4929 = vshrl.u32 %v4928, 7
        %v4930 = vsub.s32 0, %v4929
        %v4931 = vrot.slane %v4900, %v4930
        %v4932 = vmul.f32 %v4926, %v4931
        %v4933 = vmul.f32 %v4927, %v4931
        %v4934 = vlaneseq
        %v4935 = vshrl.u32 %v4934, 7
        %v4936 = vsub.s32 0, %v4935
        %v4937 = vrot.slane %v4901, %v4936
        %v4938 = vadd.f32 %v4932, %v4937
        %v4939 = vadd.f32 %v4933, %v4937
        %v4940 = vpack.c.bf16 %v4939, %v4938
        %s4941 = scalar_lea.vmem [#allocation14], 48
        %v4942 = vld [vmem:[%s4941] sm:$0xf]
        %v4943 = vld [vmem:[%s4941 + $0x4] sm:$0xf]
        %v4944 = vld [vmem:[%s4941 + $0x8] sm:$0xf]
        %v4945 = vld [vmem:[%s4941 + $0xc] sm:$0xf]
        %v4946 = vld [vmem:[#allocation12 + $0x1a] sm:$0x1]
        %v4947 = vlaneseq
        %v4948 = vshrl.u32 %v4947, 7
        %v4949 = vsub.s32 0, %v4948
        %v4950 = vrot.slane %v4946, %v4949
        %v4955 = vunpack.c.l.b16 %v4942
        %v4956 = vunpack.c.l.b16 %v4943
        %v4957 = vunpack.c.l.b16 %v4944
        %v4958 = vunpack.c.l.b16 %v4945
        %v4959 = vpack.c.b16 %v4956, %v4955
        %v4960 = vpack.c.b16 %v4958, %v4957
        %v4964 = vsel %vm1158, %v4940, 0
        %4966 = vmatprep.subr.bf16.mxu0 0
        %4967 = vmatpush1.bf16.msra.mxu0 0
        %4968 = vmatprep.subr.bf16.mxu0 0
        %4969 = vmatpush1.bf16.msra.mxu0 0
        %4970 = vmatprep.subr.bf16.mxu0 0
        %4971 = vmatpush1.bf16.msra.mxu0 0
        %4972 = vmatprep.subr.bf16.mxu0 0
        %4973 = vmatpush1.bf16.msra.mxu0 0
        %4974 = vmatprep.subr.bf16.mxu0 0
        %4975 = vmatpush1.bf16.msra.mxu0 0
        %4976 = vmatprep.subr.bf16.mxu0 0
        %4977 = vmatpush1.bf16.msra.mxu0 0
        %4978 = vmatprep.subr.bf16.mxu0 0
        %4979 = vmatpush1.bf16.msra.mxu0 %v4960
        %4980 = vmatprep.subr.bf16.mxu0 0
        %4981 = vmatpush1.bf16.msra.mxu0 %v4959
        %4982 = vmatprep.subr.bf16.mxu0 0
        %4983 = vmatpush2.bf16.msra.mxu0 0
        %4984 = vmatprep.subr.bf16.mxu0 0
        %4985 = vmatpush2.bf16.msra.mxu0 0
        %4986 = vmatprep.subr.bf16.mxu0 0
        %4987 = vmatpush2.bf16.msra.mxu0 0
        %4988 = vmatprep.subr.bf16.mxu0 0
        %4989 = vmatpush2.bf16.msra.mxu0 0
        %4990 = vmatprep.subr.bf16.mxu0 0
        %4991 = vmatpush2.bf16.msra.mxu0 0
        %4992 = vmatprep.subr.bf16.mxu0 0
        %4993 = vmatpush2.bf16.msra.mxu0 0
        %4994 = vmatprep.subr.bf16.mxu0 0
        %4995 = vmatpush2.bf16.msra.mxu0 0
        %4996 = vmatprep.subr.bf16.mxu0 0
        %4997 = vmatpush2.bf16.msra.mxu0 0
        %4998 = vmatprep.mubr.bf16.mxu0 0
        %4999 = vmatmul.mubr.bf16.gmra.mxu0 %v4964
        %v5000 = vpop.f32.mrf.mxu0
        %v5001 = vadd.f32 %v4950, %v5000
        %v5002 = vpop.f32.mrf.mxu0
        %v5003 = vpop.f32.mrf.mxu0
        %v5004 = vadd.f32 %v4950, %v5003
        %v5005 = vpop.f32.mrf.mxu0
        %5006 = vdwg.mxu0
        %s5007 = scalar_lea.vmem [#allocation15], 12
        %v5008 = vld [vmem:[%s5007] sm:$0x7]
        %5011 = vrot.lane.b32.xlu0 %v5001, 64
        %v5012 = vpop.permute.xlu0 %5011
        %5013 = vrot.lane.b32.xlu0 %v5004, 64
        %v5014 = vpop.permute.xlu0 %5013
        %v5016 = vsel %vm646, %v5014, 0
        %5018 = vmatprep.subr.mxu0 0.0
        %5019 = vmatpush1.msra.mxu0 0.0
        %5020 = vmatprep.subr.mxu0 0.0
        %5021 = vmatpush1.msra.mxu0 0.0
        %5022 = vmatprep.subr.mxu0 0.0
        %5023 = vmatpush1.msra.mxu0 0.0
        %5024 = vmatprep.subr.mxu0 0.0
        %5025 = vmatpush1.msra.mxu0 0.0
        %5026 = vmatprep.subr.mxu0 0.0
        %5027 = vmatpush1.msra.mxu0 0.0
        %5028 = vmatprep.subr.mxu0 0.0
        %5029 = vmatpush1.msra.mxu0 0.0
        %5030 = vmatprep.subr.mxu0 0.0
        %5031 = vmatpush1.msra.mxu0 0.0
        %5032 = vmatprep.subr.mxu0 0.0
        %5033 = vmatpush1.msra.mxu0 0.0
        %5034 = vmatprep.subr.mxu0 0.0
        %5035 = vmatpush1.msra.mxu0 0.0
        %5036 = vmatprep.subr.mxu0 0.0
        %5037 = vmatpush1.msra.mxu0 0.0
        %5038 = vmatprep.subr.mxu0 0.0
        %5039 = vmatpush1.msra.mxu0 0.0
        %5040 = vmatprep.subr.mxu0 0.0
        %5041 = vmatpush1.msra.mxu0 0.0
        %5042 = vmatprep.subr.mxu0 0.0
        %5043 = vmatpush1.msra.mxu0 0.0
        %5044 = vmatprep.subr.mxu0 0.0
        %5045 = vmatpush1.msra.mxu0 0.0
        %5046 = vmatprep.subr.mxu0 0.0
        %5047 = vmatpush1.msra.mxu0 %v5016
        %5048 = vmatprep.subr.mxu0 0.0
        %5049 = vmatpush1.msra.mxu0 %v5012
        %5050 = vmatprep.subr.mxu0 0.0
        %5051 = vmatpush2.msra.mxu0 0.0
        %5052 = vmatprep.subr.mxu0 0.0
        %5053 = vmatpush2.msra.mxu0 0.0
        %5054 = vmatprep.subr.mxu0 0.0
        %5055 = vmatpush2.msra.mxu0 0.0
        %5056 = vmatprep.subr.mxu0 0.0
        %5057 = vmatpush2.msra.mxu0 0.0
        %5058 = vmatprep.subr.mxu0 0.0
        %5059 = vmatpush2.msra.mxu0 0.0
        %5060 = vmatprep.subr.mxu0 0.0
        %5061 = vmatpush2.msra.mxu0 0.0
        %5062 = vmatprep.subr.mxu0 0.0
        %5063 = vmatpush2.msra.mxu0 0.0
        %5064 = vmatprep.subr.mxu0 0.0
        %5065 = vmatpush2.msra.mxu0 0.0
        %5066 = vmatprep.subr.mxu0 0.0
        %5067 = vmatpush2.msra.mxu0 0.0
        %5068 = vmatprep.subr.mxu0 0.0
        %5069 = vmatpush2.msra.mxu0 0.0
        %5070 = vmatprep.subr.mxu0 0.0
        %5071 = vmatpush2.msra.mxu0 0.0
        %5072 = vmatprep.subr.mxu0 0.0
        %5073 = vmatpush2.msra.mxu0 0.0
        %5074 = vmatprep.subr.mxu0 0.0
        %5075 = vmatpush2.msra.mxu0 0.0
        %5076 = vmatprep.subr.mxu0 0.0
        %5077 = vmatpush2.msra.mxu0 0.0
        %5078 = vmatprep.subr.mxu0 0.0
        %5079 = vmatpush2.msra.mxu0 0.0
        %5080 = vmatprep.subr.mxu0 0.0
        %5081 = vmatpush2.msra.mxu0 0.0
        %5082 = vmatprep.mubr.f32.mxu0 0.0
        %5083 = vmatmul.mubr.f32.gmra.mxu0 %v641
        %v5084 = vpop.f32.mrf.mxu0
        %v5085 = vadd.f32 0.0, %v5084
        %v5086 = vpop.f32.mrf.mxu0
        %5087 = vmatprep.mubr.f32.mxu0 0.0
        %5088 = vmatmul.mubr.f32.gmra.mxu0 %v644
        %v5089 = vpop.f32.mrf.mxu0
        %v5090 = vadd.f32 0.0, %v5089
        %v5091 = vpop.f32.mrf.mxu0
        %5092 = vdwg.mxu0
        %5093 = vmatprep.subr.mxu0 0.0
        %5094 = vmatpush1.msra.mxu0 0.0
        %5095 = vmatprep.subr.mxu0 0.0
        %5096 = vmatpush1.msra.mxu0 0.0
        %5097 = vmatprep.subr.mxu0 0.0
        %5098 = vmatpush1.msra.mxu0 0.0
        %5099 = vmatprep.subr.mxu0 0.0
        %5100 = vmatpush1.msra.mxu0 0.0
        %5101 = vmatprep.subr.mxu0 0.0
        %5102 = vmatpush1.msra.mxu0 0.0
        %5103 = vmatprep.subr.mxu0 0.0
        %5104 = vmatpush1.msra.mxu0 0.0
        %5105 = vmatprep.subr.mxu0 0.0
        %5106 = vmatpush1.msra.mxu0 0.0
        %5107 = vmatprep.subr.mxu0 0.0
        %5108 = vmatpush1.msra.mxu0 0.0
        %5109 = vmatprep.subr.mxu0 0.0
        %5110 = vmatpush1.msra.mxu0 0.0
        %5111 = vmatprep.subr.mxu0 0.0
        %5112 = vmatpush1.msra.mxu0 0.0
        %5113 = vmatprep.subr.mxu0 0.0
        %5114 = vmatpush1.msra.mxu0 0.0
        %5115 = vmatprep.subr.mxu0 0.0
        %5116 = vmatpush1.msra.mxu0 0.0
        %5117 = vmatprep.subr.mxu0 0.0
        %5118 = vmatpush1.msra.mxu0 0.0
        %5119 = vmatprep.subr.mxu0 0.0
        %5120 = vmatpush1.msra.mxu0 0.0
        %5121 = vmatprep.subr.mxu0 0.0
        %5122 = vmatpush1.msra.mxu0 %v5016
        %5123 = vmatprep.subr.mxu0 0.0
        %5124 = vmatpush1.msra.mxu0 %v5012
        %5125 = vmatprep.subr.mxu0 0.0
        %5126 = vmatpush2.msra.mxu0 0.0
        %5127 = vmatprep.subr.mxu0 0.0
        %5128 = vmatpush2.msra.mxu0 0.0
        %5129 = vmatprep.subr.mxu0 0.0
        %5130 = vmatpush2.msra.mxu0 0.0
        %5131 = vmatprep.subr.mxu0 0.0
        %5132 = vmatpush2.msra.mxu0 0.0
        %5133 = vmatprep.subr.mxu0 0.0
        %5134 = vmatpush2.msra.mxu0 0.0
        %5135 = vmatprep.subr.mxu0 0.0
        %5136 = vmatpush2.msra.mxu0 0.0
        %5137 = vmatprep.subr.mxu0 0.0
        %5138 = vmatpush2.msra.mxu0 0.0
        %5139 = vmatprep.subr.mxu0 0.0
        %5140 = vmatpush2.msra.mxu0 0.0
        %5141 = vmatprep.subr.mxu0 0.0
        %5142 = vmatpush2.msra.mxu0 0.0
        %5143 = vmatprep.subr.mxu0 0.0
        %5144 = vmatpush2.msra.mxu0 0.0
        %5145 = vmatprep.subr.mxu0 0.0
        %5146 = vmatpush2.msra.mxu0 0.0
        %5147 = vmatprep.subr.mxu0 0.0
        %5148 = vmatpush2.msra.mxu0 0.0
        %5149 = vmatprep.subr.mxu0 0.0
        %5150 = vmatpush2.msra.mxu0 0.0
        %5151 = vmatprep.subr.mxu0 0.0
        %5152 = vmatpush2.msra.mxu0 0.0
        %5153 = vmatprep.subr.mxu0 0.0
        %5154 = vmatpush2.msra.mxu0 0.0
        %5155 = vmatprep.subr.mxu0 0.0
        %5156 = vmatpush2.msra.mxu0 0.0
        %5157 = vmatprep.mubr.f32.mxu0 0.0
        %5158 = vmatmul.mubr.f32.gmra.mxu0 %v1916
        %v5159 = vpop.f32.mrf.mxu0
        %v5160 = vadd.f32 0.0, %v5159
        %v5161 = vpop.f32.mrf.mxu0
        %5162 = vmatprep.mubr.f32.mxu0 0.0
        %5163 = vmatmul.mubr.f32.gmra.mxu0 %v1919
        %v5164 = vpop.f32.mrf.mxu0
        %v5165 = vadd.f32 0.0, %v5164
        %v5166 = vpop.f32.mrf.mxu0
        %5167 = vdwg.mxu0
        %v5168 = vlaneseq
        %v5169 = vshrl.u32 %v5168, 7
        %v5170 = vsub.s32 0, %v5169
        %v5171 = vrot.slane %v5008, %v5170
        %v5172 = vmul.f32 %v5085, %v5171
        %v5173 = vmul.f32 %v5090, %v5171
        %v5174 = vlaneseq
        %v5175 = vshrl.u32 %v5174, 7
        %v5176 = vsub.s32 1, %v5175
        %v5177 = vrot.slane %v5008, %v5176
        %5179 = vrot.lane.b32.xlu0 %v5177, 64
        %v5180 = vpop.permute.xlu0 %5179
        %v5182 = vmul.f32 %v5001, %v5180
        %v5183 = vmul.f32 %v5004, %v5180
        %5186 = vrot.lane.b32.xlu0 %v5182, 64
        %v5187 = vpop.permute.xlu0 %5186
        %5188 = vrot.lane.b32.xlu0 %v5183, 64
        %v5189 = vpop.permute.xlu0 %5188
        %v5192 = vadd.f32 %v5172, %v5187
        %v5193 = vadd.f32 %v5173, %v5189
        %v5194 = vlaneseq
        %v5195 = vshrl.u32 %v5194, 7
        %v5196 = vsub.s32 2, %v5195
        %v5197 = vrot.slane %v5008, %v5196
        %v5198 = vmul.f32 %v5160, %v5197
        %v5199 = vmul.f32 %v5165, %v5197
        %v5200 = vadd.f32 %v5192, %v5198
        %v5201 = vadd.f32 %v5193, %v5199
        %v5203 = vadd.f32 %v5200, %v5012
        %v5204 = vadd.f32 %v5201, %v5014
        %5205 = vrot.lane.b32.xlu0 %v5001, 96
        %v5206 = vpop.permute.xlu0 %5205
        %5207 = vrot.lane.b32.xlu0 %v5004, 96
        %v5208 = vpop.permute.xlu0 %5207
        %v5210 = vsel %vm646, %v5208, 0
        %5212 = vmatprep.subr.mxu0 0.0
        %5213 = vmatpush1.msra.mxu0 0.0
        %5214 = vmatprep.subr.mxu0 0.0
        %5215 = vmatpush1.msra.mxu0 0.0
        %5216 = vmatprep.subr.mxu0 0.0
        %5217 = vmatpush1.msra.mxu0 0.0
        %5218 = vmatprep.subr.mxu0 0.0
        %5219 = vmatpush1.msra.mxu0 0.0
        %5220 = vmatprep.subr.mxu0 0.0
        %5221 = vmatpush1.msra.mxu0 0.0
        %5222 = vmatprep.subr.mxu0 0.0
        %5223 = vmatpush1.msra.mxu0 0.0
        %5224 = vmatprep.subr.mxu0 0.0
        %5225 = vmatpush1.msra.mxu0 0.0
        %5226 = vmatprep.subr.mxu0 0.0
        %5227 = vmatpush1.msra.mxu0 0.0
        %5228 = vmatprep.subr.mxu0 0.0
        %5229 = vmatpush1.msra.mxu0 0.0
        %5230 = vmatprep.subr.mxu0 0.0
        %5231 = vmatpush1.msra.mxu0 0.0
        %5232 = vmatprep.subr.mxu0 0.0
        %5233 = vmatpush1.msra.mxu0 0.0
        %5234 = vmatprep.subr.mxu0 0.0
        %5235 = vmatpush1.msra.mxu0 0.0
        %5236 = vmatprep.subr.mxu0 0.0
        %5237 = vmatpush1.msra.mxu0 0.0
        %5238 = vmatprep.subr.mxu0 0.0
        %5239 = vmatpush1.msra.mxu0 0.0
        %5240 = vmatprep.subr.mxu0 0.0
        %5241 = vmatpush1.msra.mxu0 %v5210
        %5242 = vmatprep.subr.mxu0 0.0
        %5243 = vmatpush1.msra.mxu0 %v5206
        %5244 = vmatprep.subr.mxu0 0.0
        %5245 = vmatpush2.msra.mxu0 0.0
        %5246 = vmatprep.subr.mxu0 0.0
        %5247 = vmatpush2.msra.mxu0 0.0
        %5248 = vmatprep.subr.mxu0 0.0
        %5249 = vmatpush2.msra.mxu0 0.0
        %5250 = vmatprep.subr.mxu0 0.0
        %5251 = vmatpush2.msra.mxu0 0.0
        %5252 = vmatprep.subr.mxu0 0.0
        %5253 = vmatpush2.msra.mxu0 0.0
        %5254 = vmatprep.subr.mxu0 0.0
        %5255 = vmatpush2.msra.mxu0 0.0
        %5256 = vmatprep.subr.mxu0 0.0
        %5257 = vmatpush2.msra.mxu0 0.0
        %5258 = vmatprep.subr.mxu0 0.0
        %5259 = vmatpush2.msra.mxu0 0.0
        %5260 = vmatprep.subr.mxu0 0.0
        %5261 = vmatpush2.msra.mxu0 0.0
        %5262 = vmatprep.subr.mxu0 0.0
        %5263 = vmatpush2.msra.mxu0 0.0
        %5264 = vmatprep.subr.mxu0 0.0
        %5265 = vmatpush2.msra.mxu0 0.0
        %5266 = vmatprep.subr.mxu0 0.0
        %5267 = vmatpush2.msra.mxu0 0.0
        %5268 = vmatprep.subr.mxu0 0.0
        %5269 = vmatpush2.msra.mxu0 0.0
        %5270 = vmatprep.subr.mxu0 0.0
        %5271 = vmatpush2.msra.mxu0 0.0
        %5272 = vmatprep.subr.mxu0 0.0
        %5273 = vmatpush2.msra.mxu0 0.0
        %5274 = vmatprep.subr.mxu0 0.0
        %5275 = vmatpush2.msra.mxu0 0.0
        %5276 = vmatprep.mubr.f32.mxu0 0.0
        %5277 = vmatmul.mubr.f32.gmra.mxu0 %v2039
        %v5278 = vpop.f32.mrf.mxu0
        %v5279 = vadd.f32 0.0, %v5278
        %v5280 = vpop.f32.mrf.mxu0
        %5281 = vmatprep.mubr.f32.mxu0 0.0
        %5282 = vmatmul.mubr.f32.gmra.mxu0 %v2042
        %v5283 = vpop.f32.mrf.mxu0
        %v5284 = vadd.f32 0.0, %v5283
        %v5285 = vpop.f32.mrf.mxu0
        %5286 = vmatprep.mubr.f32.mxu0 0.0
        %5287 = vmatmul.mubr.f32.gmra.mxu0 %v2045
        %v5288 = vpop.f32.mrf.mxu0
        %v5289 = vadd.f32 0.0, %v5288
        %v5290 = vpop.f32.mrf.mxu0
        %5291 = vmatprep.mubr.f32.mxu0 0.0
        %5292 = vmatmul.mubr.f32.gmra.mxu0 %v2048
        %v5293 = vpop.f32.mrf.mxu0
        %v5294 = vadd.f32 0.0, %v5293
        %v5295 = vpop.f32.mrf.mxu0
        %5296 = vmatprep.mubr.f32.mxu0 0.0
        %5297 = vmatmul.mubr.f32.gmra.mxu0 %v2051
        %v5298 = vpop.f32.mrf.mxu0
        %v5299 = vadd.f32 0.0, %v5298
        %v5300 = vpop.f32.mrf.mxu0
        %5301 = vdwg.mxu0
        %v5302 = vmul.f32 %v5279, %v1601
        %v5303 = vmul.f32 %v5284, %v1602
        %v5304 = vmul.f32 %v5289, %v1603
        %v5305 = vmul.f32 %v5294, %v1604
        %v5306 = vmul.f32 %v5299, %v1605
        %5307 = vmatprep.subr.mxu0 0.0
        %5308 = vmatpush1.msra.mxu0 0.0
        %5309 = vmatprep.subr.mxu0 0.0
        %5310 = vmatpush1.msra.mxu0 0.0
        %5311 = vmatprep.subr.mxu0 0.0
        %5312 = vmatpush1.msra.mxu0 0.0
        %5313 = vmatprep.subr.mxu0 0.0
        %5314 = vmatpush1.msra.mxu0 0.0
        %5315 = vmatprep.subr.mxu0 0.0
        %5316 = vmatpush1.msra.mxu0 0.0
        %5317 = vmatprep.subr.mxu0 0.0
        %5318 = vmatpush1.msra.mxu0 0.0
        %5319 = vmatprep.subr.mxu0 0.0
        %5320 = vmatpush1.msra.mxu0 0.0
        %5321 = vmatprep.subr.mxu0 0.0
        %5322 = vmatpush1.msra.mxu0 0.0
        %5323 = vmatprep.subr.mxu0 0.0
        %5324 = vmatpush1.msra.mxu0 0.0
        %5325 = vmatprep.subr.mxu0 0.0
        %5326 = vmatpush1.msra.mxu0 0.0
        %5327 = vmatprep.subr.mxu0 0.0
        %5328 = vmatpush1.msra.mxu0 0.0
        %5329 = vmatprep.subr.mxu0 0.0
        %5330 = vmatpush1.msra.mxu0 0.0
        %5331 = vmatprep.subr.mxu0 0.0
        %5332 = vmatpush1.msra.mxu0 0.0
        %5333 = vmatprep.subr.mxu0 0.0
        %5334 = vmatpush1.msra.mxu0 0.0
        %5335 = vmatprep.subr.mxu0 0.0
        %5336 = vmatpush1.msra.mxu0 %v5016
        %5337 = vmatprep.subr.mxu0 0.0
        %5338 = vmatpush1.msra.mxu0 %v5012
        %5339 = vmatprep.subr.mxu0 0.0
        %5340 = vmatpush2.msra.mxu0 0.0
        %5341 = vmatprep.subr.mxu0 0.0
        %5342 = vmatpush2.msra.mxu0 0.0
        %5343 = vmatprep.subr.mxu0 0.0
        %5344 = vmatpush2.msra.mxu0 0.0
        %5345 = vmatprep.subr.mxu0 0.0
        %5346 = vmatpush2.msra.mxu0 0.0
        %5347 = vmatprep.subr.mxu0 0.0
        %5348 = vmatpush2.msra.mxu0 0.0
        %5349 = vmatprep.subr.mxu0 0.0
        %5350 = vmatpush2.msra.mxu0 0.0
        %5351 = vmatprep.subr.mxu0 0.0
        %5352 = vmatpush2.msra.mxu0 0.0
        %5353 = vmatprep.subr.mxu0 0.0
        %5354 = vmatpush2.msra.mxu0 0.0
        %5355 = vmatprep.subr.mxu0 0.0
        %5356 = vmatpush2.msra.mxu0 0.0
        %5357 = vmatprep.subr.mxu0 0.0
        %5358 = vmatpush2.msra.mxu0 0.0
        %5359 = vmatprep.subr.mxu0 0.0
        %5360 = vmatpush2.msra.mxu0 0.0
        %5361 = vmatprep.subr.mxu0 0.0
        %5362 = vmatpush2.msra.mxu0 0.0
        %5363 = vmatprep.subr.mxu0 0.0
        %5364 = vmatpush2.msra.mxu0 0.0
        %5365 = vmatprep.subr.mxu0 0.0
        %5366 = vmatpush2.msra.mxu0 0.0
        %5367 = vmatprep.subr.mxu0 0.0
        %5368 = vmatpush2.msra.mxu0 0.0
        %5369 = vmatprep.subr.mxu0 0.0
        %5370 = vmatpush2.msra.mxu0 0.0
        %5371 = vmatprep.mubr.f32.mxu0 0.0
        %5372 = vmatmul.mubr.f32.gmra.mxu0 %v2039
        %v5373 = vpop.f32.mrf.mxu0
        %v5374 = vadd.f32 0.0, %v5373
        %v5375 = vpop.f32.mrf.mxu0
        %5376 = vmatprep.mubr.f32.mxu0 0.0
        %5377 = vmatmul.mubr.f32.gmra.mxu0 %v2042
        %v5378 = vpop.f32.mrf.mxu0
        %v5379 = vadd.f32 0.0, %v5378
        %v5380 = vpop.f32.mrf.mxu0
        %5381 = vmatprep.mubr.f32.mxu0 0.0
        %5382 = vmatmul.mubr.f32.gmra.mxu0 %v2045
        %v5383 = vpop.f32.mrf.mxu0
        %v5384 = vadd.f32 0.0, %v5383
        %v5385 = vpop.f32.mrf.mxu0
        %5386 = vmatprep.mubr.f32.mxu0 0.0
        %5387 = vmatmul.mubr.f32.gmra.mxu0 %v2048
        %v5388 = vpop.f32.mrf.mxu0
        %v5389 = vadd.f32 0.0, %v5388
        %v5390 = vpop.f32.mrf.mxu0
        %5391 = vmatprep.mubr.f32.mxu0 0.0
        %5392 = vmatmul.mubr.f32.gmra.mxu0 %v2051
        %v5393 = vpop.f32.mrf.mxu0
        %v5394 = vadd.f32 0.0, %v5393
        %v5395 = vpop.f32.mrf.mxu0
        %5396 = vdwg.mxu0
        %v5397 = vmul.f32 %v5374, %v1601
        %v5398 = vmul.f32 %v5379, %v1602
        %v5399 = vmul.f32 %v5384, %v1603
        %v5400 = vmul.f32 %v5389, %v1604
        %v5401 = vmul.f32 %v5394, %v1605
        %v5402 = vsel %vm1158, %v5001, 0
        %v5404 = vsel %vm1158, %v5004, 0
        %v5407 = vsel %vm1158, %v5302, 0
        %v5410 = vsel %vm1158, %v5303, 0
        %v5413 = vsel %vm1158, %v5304, 0
        %v5416 = vsel %vm1158, %v5305, 0
        %v5419 = vsel %vm1158, %v5306, 0
        %5421 = vmatprep.subr.mxu0 0.0
        %5422 = vmatpush1.xpose.msra.mxu0 0.0
        %5423 = vmatprep.subr.mxu0 0.0
        %5424 = vmatpush1.xpose.msra.mxu0 0.0
        %5425 = vmatprep.subr.mxu0 0.0
        %5426 = vmatpush1.xpose.msra.mxu0 0.0
        %5427 = vmatprep.subr.mxu0 0.0
        %5428 = vmatpush1.xpose.msra.mxu0 0.0
        %5429 = vmatprep.subr.mxu0 0.0
        %5430 = vmatpush1.xpose.msra.mxu0 0.0
        %5431 = vmatprep.subr.mxu0 0.0
        %5432 = vmatpush1.xpose.msra.mxu0 0.0
        %5433 = vmatprep.subr.mxu0 0.0
        %5434 = vmatpush1.xpose.msra.mxu0 0.0
        %5435 = vmatprep.subr.mxu0 0.0
        %5436 = vmatpush1.xpose.msra.mxu0 0.0
        %5437 = vmatprep.subr.mxu0 0.0
        %5438 = vmatpush1.xpose.msra.mxu0 0.0
        %5439 = vmatprep.subr.mxu0 0.0
        %5440 = vmatpush1.xpose.msra.mxu0 0.0
        %5441 = vmatprep.subr.mxu0 0.0
        %5442 = vmatpush1.xpose.msra.mxu0 0.0
        %5443 = vmatprep.subr.mxu0 0.0
        %5444 = vmatpush1.xpose.msra.mxu0 %v5419
        %5445 = vmatprep.subr.mxu0 0.0
        %5446 = vmatpush1.xpose.msra.mxu0 %v5416
        %5447 = vmatprep.subr.mxu0 0.0
        %5448 = vmatpush1.xpose.msra.mxu0 %v5413
        %5449 = vmatprep.subr.mxu0 0.0
        %5450 = vmatpush1.xpose.msra.mxu0 %v5410
        %5451 = vmatprep.subr.mxu0 0.0
        %5452 = vmatpush1.xpose.msra.mxu0 %v5407
        %5453 = vmatprep.subr.mxu0 0.0
        %5454 = vmatpush2.xpose.msra.mxu0 0.0
        %5455 = vmatprep.subr.mxu0 0.0
        %5456 = vmatpush2.xpose.msra.mxu0 0.0
        %5457 = vmatprep.subr.mxu0 0.0
        %5458 = vmatpush2.xpose.msra.mxu0 0.0
        %5459 = vmatprep.subr.mxu0 0.0
        %5460 = vmatpush2.xpose.msra.mxu0 0.0
        %5461 = vmatprep.subr.mxu0 0.0
        %5462 = vmatpush2.xpose.msra.mxu0 0.0
        %5463 = vmatprep.subr.mxu0 0.0
        %5464 = vmatpush2.xpose.msra.mxu0 0.0
        %5465 = vmatprep.subr.mxu0 0.0
        %5466 = vmatpush2.xpose.msra.mxu0 0.0
        %5467 = vmatprep.subr.mxu0 0.0
        %5468 = vmatpush2.xpose.msra.mxu0 0.0
        %5469 = vmatprep.subr.mxu0 0.0
        %5470 = vmatpush2.xpose.msra.mxu0 0.0
        %5471 = vmatprep.subr.mxu0 0.0
        %5472 = vmatpush2.xpose.msra.mxu0 0.0
        %5473 = vmatprep.subr.mxu0 0.0
        %5474 = vmatpush2.xpose.msra.mxu0 0.0
        %5475 = vmatprep.subr.mxu0 0.0
        %5476 = vmatpush2.xpose.msra.mxu0 0.0
        %5477 = vmatprep.subr.mxu0 0.0
        %5478 = vmatpush2.xpose.msra.mxu0 0.0
        %5479 = vmatprep.subr.mxu0 0.0
        %5480 = vmatpush2.xpose.msra.mxu0 0.0
        %5481 = vmatprep.subr.mxu0 0.0
        %5482 = vmatpush2.xpose.msra.mxu0 0.0
        %5483 = vmatprep.subr.mxu0 0.0
        %5484 = vmatpush2.xpose.msra.mxu0 0.0
        %5485 = vmatprep.mubr.f32.mxu0 0.0
        %5486 = vmatmul.mubr.f32.gmra.mxu0 %v5402
        %v5487 = vpop.f32.mrf.mxu0
        %v5488 = vadd.f32 0.0, %v5487
        %v5489 = vpop.f32.mrf.mxu0
        %5490 = vmatprep.mubr.f32.mxu0 0.0
        %5491 = vmatmul.mubr.f32.gmra.mxu0 %v5404
        %v5492 = vpop.f32.mrf.mxu0
        %v5493 = vadd.f32 0.0, %v5492
        %v5494 = vpop.f32.mrf.mxu0
        %5495 = vdwg.mxu0
        %v5496 = vsel %vm2339, %v5488, -inf
        %5497 = vmax.xlane.f32.xlu0 %v5496
        %v5498 = vpop.xlane.xlu0 %5497
        %v5499 = vsel %vm2343, %v5493, -inf
        %5500 = vmax.xlane.f32.xlu0 %v5499
        %v5501 = vpop.xlane.xlu0 %5500
        %v5502 = vsub.f32 %v5488, %v5498
        %v5503 = vsub.f32 %v5493, %v5501
        %v5504 = vmul.f32 %v5502, 1.442695
        %v5505 = vpow.pop %v5504
        %v5506 = vmul.f32 %v5503, 1.442695
        %v5507 = vpow.pop %v5506
        %v5509 = vsel %vm2339, %v5505, 0
        %v5512 = vsel %vm2339, %v5507, 0
        %5514 = vmatprep.subr.mxu0 0.0
        %5515 = vmatpush1.msra.mxu0 0.0
        %5516 = vmatprep.subr.mxu0 0.0
        %5517 = vmatpush1.msra.mxu0 0.0
        %5518 = vmatprep.subr.mxu0 0.0
        %5519 = vmatpush1.msra.mxu0 0.0
        %5520 = vmatprep.subr.mxu0 0.0
        %5521 = vmatpush1.msra.mxu0 0.0
        %5522 = vmatprep.subr.mxu0 0.0
        %5523 = vmatpush1.msra.mxu0 0.0
        %5524 = vmatprep.subr.mxu0 0.0
        %5525 = vmatpush1.msra.mxu0 0.0
        %5526 = vmatprep.subr.mxu0 0.0
        %5527 = vmatpush1.msra.mxu0 0.0
        %5528 = vmatprep.subr.mxu0 0.0
        %5529 = vmatpush1.msra.mxu0 0.0
        %5530 = vmatprep.subr.mxu0 0.0
        %5531 = vmatpush1.msra.mxu0 0.0
        %5532 = vmatprep.subr.mxu0 0.0
        %5533 = vmatpush1.msra.mxu0 0.0
        %5534 = vmatprep.subr.mxu0 0.0
        %5535 = vmatpush1.msra.mxu0 0.0
        %5536 = vmatprep.subr.mxu0 0.0
        %5537 = vmatpush1.msra.mxu0 %v1721
        %5538 = vmatprep.subr.mxu0 0.0
        %5539 = vmatpush1.msra.mxu0 %v1720
        %5540 = vmatprep.subr.mxu0 0.0
        %5541 = vmatpush1.msra.mxu0 %v1719
        %5542 = vmatprep.subr.mxu0 0.0
        %5543 = vmatpush1.msra.mxu0 %v1718
        %5544 = vmatprep.subr.mxu0 0.0
        %5545 = vmatpush1.msra.mxu0 %v1717
        %5546 = vmatprep.subr.mxu0 0.0
        %5547 = vmatpush2.msra.mxu0 0.0
        %5548 = vmatprep.subr.mxu0 0.0
        %5549 = vmatpush2.msra.mxu0 0.0
        %5550 = vmatprep.subr.mxu0 0.0
        %5551 = vmatpush2.msra.mxu0 0.0
        %5552 = vmatprep.subr.mxu0 0.0
        %5553 = vmatpush2.msra.mxu0 0.0
        %5554 = vmatprep.subr.mxu0 0.0
        %5555 = vmatpush2.msra.mxu0 0.0
        %5556 = vmatprep.subr.mxu0 0.0
        %5557 = vmatpush2.msra.mxu0 0.0
        %5558 = vmatprep.subr.mxu0 0.0
        %5559 = vmatpush2.msra.mxu0 0.0
        %5560 = vmatprep.subr.mxu0 0.0
        %5561 = vmatpush2.msra.mxu0 0.0
        %5562 = vmatprep.subr.mxu0 0.0
        %5563 = vmatpush2.msra.mxu0 0.0
        %5564 = vmatprep.subr.mxu0 0.0
        %5565 = vmatpush2.msra.mxu0 0.0
        %5566 = vmatprep.subr.mxu0 0.0
        %5567 = vmatpush2.msra.mxu0 0.0
        %5568 = vmatprep.subr.mxu0 0.0
        %5569 = vmatpush2.msra.mxu0 0.0
        %5570 = vmatprep.subr.mxu0 0.0
        %5571 = vmatpush2.msra.mxu0 0.0
        %5572 = vmatprep.subr.mxu0 0.0
        %5573 = vmatpush2.msra.mxu0 0.0
        %5574 = vmatprep.subr.mxu0 0.0
        %5575 = vmatpush2.msra.mxu0 0.0
        %5576 = vmatprep.subr.mxu0 0.0
        %5577 = vmatpush2.msra.mxu0 0.0
        %5578 = vmatprep.mubr.f32.mxu0 0.0
        %5579 = vmatmul.mubr.f32.gmra.mxu0 %v5509
        %v5580 = vpop.f32.mrf.mxu0
        %v5581 = vadd.f32 0.0, %v5580
        %v5582 = vpop.f32.mrf.mxu0
        %5583 = vmatprep.mubr.f32.mxu0 0.0
        %5584 = vmatmul.mubr.f32.gmra.mxu0 %v5512
        %v5585 = vpop.f32.mrf.mxu0
        %v5586 = vadd.f32 0.0, %v5585
        %v5587 = vpop.f32.mrf.mxu0
        %5588 = vdwg.mxu0
        %v5589 = vrcp.pop %v5581
        %v5590 = vrcp.pop %v5586
        %v5591 = vmul.f32 %v5505, %v5589
        %v5592 = vmul.f32 %v5507, %v5590
        %v5594 = vsel %vm2339, %v5591, 0
        %v5597 = vsel %vm2339, %v5592, 0
        %5599 = vmatprep.subr.mxu0 0.0
        %5600 = vmatpush1.msra.mxu0 0.0
        %5601 = vmatprep.subr.mxu0 0.0
        %5602 = vmatpush1.msra.mxu0 0.0
        %5603 = vmatprep.subr.mxu0 0.0
        %5604 = vmatpush1.msra.mxu0 0.0
        %5605 = vmatprep.subr.mxu0 0.0
        %5606 = vmatpush1.msra.mxu0 0.0
        %5607 = vmatprep.subr.mxu0 0.0
        %5608 = vmatpush1.msra.mxu0 0.0
        %5609 = vmatprep.subr.mxu0 0.0
        %5610 = vmatpush1.msra.mxu0 0.0
        %5611 = vmatprep.subr.mxu0 0.0
        %5612 = vmatpush1.msra.mxu0 0.0
        %5613 = vmatprep.subr.mxu0 0.0
        %5614 = vmatpush1.msra.mxu0 0.0
        %5615 = vmatprep.subr.mxu0 0.0
        %5616 = vmatpush1.msra.mxu0 0.0
        %5617 = vmatprep.subr.mxu0 0.0
        %5618 = vmatpush1.msra.mxu0 0.0
        %5619 = vmatprep.subr.mxu0 0.0
        %5620 = vmatpush1.msra.mxu0 0.0
        %5621 = vmatprep.subr.mxu0 0.0
        %5622 = vmatpush1.msra.mxu0 %v5401
        %5623 = vmatprep.subr.mxu0 0.0
        %5624 = vmatpush1.msra.mxu0 %v5400
        %5625 = vmatprep.subr.mxu0 0.0
        %5626 = vmatpush1.msra.mxu0 %v5399
        %5627 = vmatprep.subr.mxu0 0.0
        %5628 = vmatpush1.msra.mxu0 %v5398
        %5629 = vmatprep.subr.mxu0 0.0
        %5630 = vmatpush1.msra.mxu0 %v5397
        %5631 = vmatprep.subr.mxu0 0.0
        %5632 = vmatpush2.msra.mxu0 0.0
        %5633 = vmatprep.subr.mxu0 0.0
        %5634 = vmatpush2.msra.mxu0 0.0
        %5635 = vmatprep.subr.mxu0 0.0
        %5636 = vmatpush2.msra.mxu0 0.0
        %5637 = vmatprep.subr.mxu0 0.0
        %5638 = vmatpush2.msra.mxu0 0.0
        %5639 = vmatprep.subr.mxu0 0.0
        %5640 = vmatpush2.msra.mxu0 0.0
        %5641 = vmatprep.subr.mxu0 0.0
        %5642 = vmatpush2.msra.mxu0 0.0
        %5643 = vmatprep.subr.mxu0 0.0
        %5644 = vmatpush2.msra.mxu0 0.0
        %5645 = vmatprep.subr.mxu0 0.0
        %5646 = vmatpush2.msra.mxu0 0.0
        %5647 = vmatprep.subr.mxu0 0.0
        %5648 = vmatpush2.msra.mxu0 0.0
        %5649 = vmatprep.subr.mxu0 0.0
        %5650 = vmatpush2.msra.mxu0 0.0
        %5651 = vmatprep.subr.mxu0 0.0
        %5652 = vmatpush2.msra.mxu0 0.0
        %5653 = vmatprep.subr.mxu0 0.0
        %5654 = vmatpush2.msra.mxu0 0.0
        %5655 = vmatprep.subr.mxu0 0.0
        %5656 = vmatpush2.msra.mxu0 0.0
        %5657 = vmatprep.subr.mxu0 0.0
        %5658 = vmatpush2.msra.mxu0 0.0
        %5659 = vmatprep.subr.mxu0 0.0
        %5660 = vmatpush2.msra.mxu0 0.0
        %5661 = vmatprep.subr.mxu0 0.0
        %5662 = vmatpush2.msra.mxu0 0.0
        %5663 = vmatprep.mubr.f32.mxu0 0.0
        %5664 = vmatmul.mubr.f32.gmra.mxu0 %v5594
        %v5665 = vpop.f32.mrf.mxu0
        %v5666 = vadd.f32 0.0, %v5665
        %v5667 = vpop.f32.mrf.mxu0
        %5668 = vmatprep.mubr.f32.mxu0 0.0
        %5669 = vmatmul.mubr.f32.gmra.mxu0 %v5597
        %v5670 = vpop.f32.mrf.mxu0
        %v5671 = vadd.f32 0.0, %v5670
        %v5672 = vpop.f32.mrf.mxu0
        %5673 = vdwg.mxu0
        %v5674 = vpack.c.bf16 %v5671, %v5666
        %s5675 = scalar_lea.vmem %s12, 48
        %v5676 = vld [vmem:[%s5675] sm:$0xf]
        %v5677 = vld [vmem:[%s5675 + $0x4] sm:$0xf]
        %v5678 = vld [vmem:[%s5675 + $0x8] sm:$0xf]
        %v5679 = vld [vmem:[%s5675 + $0xc] sm:$0xf]
        %v5680 = vld [vmem:[#allocation12 + $0x1b] sm:$0x1]
        %v5681 = vlaneseq
        %v5682 = vshrl.u32 %v5681, 7
        %v5683 = vsub.s32 0, %v5682
        %v5684 = vrot.slane %v5680, %v5683
        %v5689 = vunpack.c.l.b16 %v5676
        %v5690 = vunpack.c.l.b16 %v5677
        %v5691 = vunpack.c.l.b16 %v5678
        %v5692 = vunpack.c.l.b16 %v5679
        %v5693 = vpack.c.b16 %v5690, %v5689
        %v5694 = vpack.c.b16 %v5692, %v5691
        %v5698 = vsel %vm1158, %v5674, 0
        %5700 = vmatprep.subr.bf16.mxu0 0
        %5701 = vmatpush1.bf16.msra.mxu0 0
        %5702 = vmatprep.subr.bf16.mxu0 0
        %5703 = vmatpush1.bf16.msra.mxu0 0
        %5704 = vmatprep.subr.bf16.mxu0 0
        %5705 = vmatpush1.bf16.msra.mxu0 0
        %5706 = vmatprep.subr.bf16.mxu0 0
        %5707 = vmatpush1.bf16.msra.mxu0 0
        %5708 = vmatprep.subr.bf16.mxu0 0
        %5709 = vmatpush1.bf16.msra.mxu0 0
        %5710 = vmatprep.subr.bf16.mxu0 0
        %5711 = vmatpush1.bf16.msra.mxu0 0
        %5712 = vmatprep.subr.bf16.mxu0 0
        %5713 = vmatpush1.bf16.msra.mxu0 %v5694
        %5714 = vmatprep.subr.bf16.mxu0 0
        %5715 = vmatpush1.bf16.msra.mxu0 %v5693
        %5716 = vmatprep.subr.bf16.mxu0 0
        %5717 = vmatpush2.bf16.msra.mxu0 0
        %5718 = vmatprep.subr.bf16.mxu0 0
        %5719 = vmatpush2.bf16.msra.mxu0 0
        %5720 = vmatprep.subr.bf16.mxu0 0
        %5721 = vmatpush2.bf16.msra.mxu0 0
        %5722 = vmatprep.subr.bf16.mxu0 0
        %5723 = vmatpush2.bf16.msra.mxu0 0
        %5724 = vmatprep.subr.bf16.mxu0 0
        %5725 = vmatpush2.bf16.msra.mxu0 0
        %5726 = vmatprep.subr.bf16.mxu0 0
        %5727 = vmatpush2.bf16.msra.mxu0 0
        %5728 = vmatprep.subr.bf16.mxu0 0
        %5729 = vmatpush2.bf16.msra.mxu0 0
        %5730 = vmatprep.subr.bf16.mxu0 0
        %5731 = vmatpush2.bf16.msra.mxu0 0
        %5732 = vmatprep.mubr.bf16.mxu0 0
        %5733 = vmatmul.mubr.bf16.gmra.mxu0 %v5698
        %v5734 = vpop.f32.mrf.mxu0
        %v5735 = vadd.f32 %v5684, %v5734
        %v5736 = vpop.f32.mrf.mxu0
        %v5737 = vpop.f32.mrf.mxu0
        %v5738 = vadd.f32 %v5684, %v5737
        %v5739 = vpop.f32.mrf.mxu0
        %5740 = vdwg.mxu0
        %v5741 = vadd.f32 %v4898, %v5735
        %v5742 = vadd.f32 %v4899, %v5738
        %v5743 = vadd.f32 %v5741, %v5203
        %v5744 = vadd.f32 %v5742, %v5204
        %v5745 = vld [vmem:[#allocation12 + $0x1c] sm:$0x1]
        %v5746 = vld [vmem:[#allocation12 + $0x1d] sm:$0x1]
        %v5747 = vsel %vm1158, %v5743, 0.0
        %5748 = vadd.xlane.f32.xlu0 %v5747
        %v5749 = vpop.xlane.xlu0 %5748
        %v5750 = vsel %vm1727, %v5744, 0.0
        %5751 = vadd.xlane.f32.xlu0 %v5750
        %v5752 = vpop.xlane.xlu0 %5751
        %v5753 = vmul.f32 %v5749, %v1731
        %v5754 = vmul.f32 %v5752, %v1731
        %v5755 = vsub.f32 %v5743, %v5753
        %v5756 = vsub.f32 %v5744, %v5754
        %v5757 = vmul.f32 %v5755, %v5755
        %v5758 = vmul.f32 %v5756, %v5756
        %v5759 = vsel %vm1158, %v5757, 0.0
        %5760 = vadd.xlane.f32.xlu0 %v5759
        %v5761 = vpop.xlane.xlu0 %5760
        %v5762 = vsel %vm1727, %v5758, 0.0
        %5763 = vadd.xlane.f32.xlu0 %v5762
        %v5764 = vpop.xlane.xlu0 %5763
        %v5765 = vmul.f32 %v5761, %v1731
        %v5766 = vmul.f32 %v5764, %v1731
        %v5767 = vadd.f32 %v5765, 1e-05
        %v5768 = vadd.f32 %v5766, 1e-05
        %v5769 = vrsqrt.pop %v5767
        %v5770 = vrsqrt.pop %v5768
        %v5771 = vmul.f32 %v5755, %v5769
        %v5772 = vmul.f32 %v5756, %v5770
        %v5773 = vlaneseq
        %v5774 = vshrl.u32 %v5773, 7
        %v5775 = vsub.s32 0, %v5774
        %v5776 = vrot.slane %v5745, %v5775
        %v5777 = vmul.f32 %v5771, %v5776
        %v5778 = vmul.f32 %v5772, %v5776
        %v5779 = vlaneseq
        %v5780 = vshrl.u32 %v5779, 7
        %v5781 = vsub.s32 0, %v5780
        %v5782 = vrot.slane %v5746, %v5781
        %v5783 = vadd.f32 %v5777, %v5782
        %v5784 = vadd.f32 %v5778, %v5782
        %v5785 = vpack.c.bf16 %v5784, %v5783
        %s5786 = scalar_lea.vmem [#allocation17], 48
        %v5787 = vld [vmem:[%s5786] sm:$0xf]
        %v5788 = vld [vmem:[%s5786 + $0x4] sm:$0xf]
        %v5789 = vld [vmem:[%s5786 + $0x8] sm:$0xf]
        %v5790 = vld [vmem:[%s5786 + $0xc] sm:$0xf]
        %v5791 = vld [vmem:[#allocation12 + $0x1e] sm:$0x1]
        %v5792 = vlaneseq
        %v5793 = vshrl.u32 %v5792, 7
        %v5794 = vsub.s32 0, %v5793
        %v5795 = vrot.slane %v5791, %v5794
        %v5800 = vunpack.c.l.b16 %v5787
        %v5801 = vunpack.c.l.b16 %v5788
        %v5802 = vunpack.c.l.b16 %v5789
        %v5803 = vunpack.c.l.b16 %v5790
        %v5804 = vpack.c.b16 %v5801, %v5800
        %v5805 = vpack.c.b16 %v5803, %v5802
        %v5809 = vsel %vm1158, %v5785, 0
        %5811 = vmatprep.subr.bf16.mxu0 0
        %5812 = vmatpush1.bf16.msra.mxu0 0
        %5813 = vmatprep.subr.bf16.mxu0 0
        %5814 = vmatpush1.bf16.msra.mxu0 0
        %5815 = vmatprep.subr.bf16.mxu0 0
        %5816 = vmatpush1.bf16.msra.mxu0 0
        %5817 = vmatprep.subr.bf16.mxu0 0
        %5818 = vmatpush1.bf16.msra.mxu0 0
        %5819 = vmatprep.subr.bf16.mxu0 0
        %5820 = vmatpush1.bf16.msra.mxu0 0
        %5821 = vmatprep.subr.bf16.mxu0 0
        %5822 = vmatpush1.bf16.msra.mxu0 0
        %5823 = vmatprep.subr.bf16.mxu0 0
        %5824 = vmatpush1.bf16.msra.mxu0 %v5805
        %5825 = vmatprep.subr.bf16.mxu0 0
        %5826 = vmatpush1.bf16.msra.mxu0 %v5804
        %5827 = vmatprep.subr.bf16.mxu0 0
        %5828 = vmatpush2.bf16.msra.mxu0 0
        %5829 = vmatprep.subr.bf16.mxu0 0
        %5830 = vmatpush2.bf16.msra.mxu0 0
        %5831 = vmatprep.subr.bf16.mxu0 0
        %5832 = vmatpush2.bf16.msra.mxu0 0
        %5833 = vmatprep.subr.bf16.mxu0 0
        %5834 = vmatpush2.bf16.msra.mxu0 0
        %5835 = vmatprep.subr.bf16.mxu0 0
        %5836 = vmatpush2.bf16.msra.mxu0 0
        %5837 = vmatprep.subr.bf16.mxu0 0
        %5838 = vmatpush2.bf16.msra.mxu0 0
        %5839 = vmatprep.subr.bf16.mxu0 0
        %5840 = vmatpush2.bf16.msra.mxu0 0
        %5841 = vmatprep.subr.bf16.mxu0 0
        %5842 = vmatpush2.bf16.msra.mxu0 0
        %5843 = vmatprep.mubr.bf16.mxu0 0
        %5844 = vmatmul.mubr.bf16.gmra.mxu0 %v5809
        %v5845 = vpop.f32.mrf.mxu0
        %v5846 = vadd.f32 %v5795, %v5845
        %v5847 = vpop.f32.mrf.mxu0
        %v5848 = vpop.f32.mrf.mxu0
        %v5849 = vadd.f32 %v5795, %v5848
        %v5850 = vpop.f32.mrf.mxu0
        %5851 = vdwg.mxu0
        %v5852 = vmax.f32 %v5846, 0.0
        %v5853 = vmax.f32 %v5849, 0.0
        %v5854 = vpack.c.bf16 %v5853, %v5852
        %s5855 = scalar_lea.vmem [#allocation18], 96
        %v5856 = vld [vmem:[%s5855] sm:$0xf]
        %v5857 = vld [vmem:[%s5855 + $0x4] sm:$0xf]
        %v5858 = vld [vmem:[%s5855 + $0x8] sm:$0xf]
        %v5859 = vld [vmem:[%s5855 + $0xc] sm:$0xf]
        %v5860 = vld [vmem:[%s5855 + $0x10] sm:$0xf]
        %v5861 = vld [vmem:[%s5855 + $0x14] sm:$0xf]
        %v5862 = vld [vmem:[%s5855 + $0x18] sm:$0xf]
        %v5863 = vld [vmem:[%s5855 + $0x1c] sm:$0xf]
        %v5864 = vld [vmem:[#allocation12 + $0x1f] sm:$0x1]
        %v5865 = vlaneseq
        %v5866 = vshrl.u32 %v5865, 7
        %v5867 = vsub.s32 0, %v5866
        %v5868 = vrot.slane %v5864, %v5867
        %v5877 = vunpack.c.l.b16 %v5856
        %v5878 = vunpack.c.l.b16 %v5857
        %v5879 = vunpack.c.l.b16 %v5858
        %v5880 = vunpack.c.l.b16 %v5859
        %v5881 = vunpack.c.l.b16 %v5860
        %v5882 = vunpack.c.l.b16 %v5861
        %v5883 = vunpack.c.l.b16 %v5862
        %v5884 = vunpack.c.l.b16 %v5863
        %v5885 = vpack.c.b16 %v5878, %v5877
        %v5886 = vpack.c.b16 %v5880, %v5879
        %v5887 = vpack.c.b16 %v5882, %v5881
        %v5888 = vpack.c.b16 %v5884, %v5883
        %v5894 = vsel %vm2735, %v5854, 0
        %5896 = vmatprep.subr.bf16.mxu0 0
        %5897 = vmatpush1.bf16.msra.mxu0 0
        %5898 = vmatprep.subr.bf16.mxu0 0
        %5899 = vmatpush1.bf16.msra.mxu0 0
        %5900 = vmatprep.subr.bf16.mxu0 0
        %5901 = vmatpush1.bf16.msra.mxu0 0
        %5902 = vmatprep.subr.bf16.mxu0 0
        %5903 = vmatpush1.bf16.msra.mxu0 0
        %5904 = vmatprep.subr.bf16.mxu0 0
        %5905 = vmatpush1.bf16.msra.mxu0 %v5888
        %5906 = vmatprep.subr.bf16.mxu0 0
        %5907 = vmatpush1.bf16.msra.mxu0 %v5887
        %5908 = vmatprep.subr.bf16.mxu0 0
        %5909 = vmatpush1.bf16.msra.mxu0 %v5886
        %5910 = vmatprep.subr.bf16.mxu0 0
        %5911 = vmatpush1.bf16.msra.mxu0 %v5885
        %5912 = vmatprep.subr.bf16.mxu0 0
        %5913 = vmatpush2.bf16.msra.mxu0 0
        %5914 = vmatprep.subr.bf16.mxu0 0
        %5915 = vmatpush2.bf16.msra.mxu0 0
        %5916 = vmatprep.subr.bf16.mxu0 0
        %5917 = vmatpush2.bf16.msra.mxu0 0
        %5918 = vmatprep.subr.bf16.mxu0 0
        %5919 = vmatpush2.bf16.msra.mxu0 0
        %5920 = vmatprep.subr.bf16.mxu0 0
        %5921 = vmatpush2.bf16.msra.mxu0 0
        %5922 = vmatprep.subr.bf16.mxu0 0
        %5923 = vmatpush2.bf16.msra.mxu0 0
        %5924 = vmatprep.subr.bf16.mxu0 0
        %5925 = vmatpush2.bf16.msra.mxu0 0
        %5926 = vmatprep.subr.bf16.mxu0 0
        %5927 = vmatpush2.bf16.msra.mxu0 0
        %5928 = vmatprep.mubr.bf16.mxu0 0
        %5929 = vmatmul.mubr.bf16.gmra.mxu0 %v5894
        %v5930 = vpop.f32.mrf.mxu0
        %v5931 = vadd.f32 %v5868, %v5930
        %v5932 = vpop.f32.mrf.mxu0
        %v5933 = vpop.f32.mrf.mxu0
        %v5934 = vadd.f32 %v5868, %v5933
        %v5935 = vpop.f32.mrf.mxu0
        %5936 = vdwg.mxu0
        %v5937 = vadd.f32 %v5743, %v5931
        %v5938 = vadd.f32 %v5744, %v5934
        %v5939 = vld [vmem:[#allocation12 + $0x24] sm:$0x1]
        %v5940 = vld [vmem:[#allocation12 + $0x25] sm:$0x1]
        %v5941 = vsel %vm1158, %v5937, 0.0
        %5942 = vadd.xlane.f32.xlu0 %v5941
        %v5943 = vpop.xlane.xlu0 %5942
        %v5944 = vsel %vm1727, %v5938, 0.0
        %5945 = vadd.xlane.f32.xlu0 %v5944
        %v5946 = vpop.xlane.xlu0 %5945
        %v5947 = vmul.f32 %v5943, %v1731
        %v5948 = vmul.f32 %v5946, %v1731
        %v5949 = vsub.f32 %v5937, %v5947
        %v5950 = vsub.f32 %v5938, %v5948
        %v5951 = vmul.f32 %v5949, %v5949
        %v5952 = vmul.f32 %v5950, %v5950
        %v5953 = vsel %vm1158, %v5951, 0.0
        %5954 = vadd.xlane.f32.xlu0 %v5953
        %v5955 = vpop.xlane.xlu0 %5954
        %v5956 = vsel %vm1727, %v5952, 0.0
        %5957 = vadd.xlane.f32.xlu0 %v5956
        %v5958 = vpop.xlane.xlu0 %5957
        %v5959 = vmul.f32 %v5955, %v1731
        %v5960 = vmul.f32 %v5958, %v1731
        %v5961 = vadd.f32 %v5959, 1e-05
        %v5962 = vadd.f32 %v5960, 1e-05
        %v5963 = vrsqrt.pop %v5961
        %v5964 = vrsqrt.pop %v5962
        %v5965 = vmul.f32 %v5949, %v5963
        %v5966 = vmul.f32 %v5950, %v5964
        %v5967 = vlaneseq
        %v5968 = vshrl.u32 %v5967, 7
        %v5969 = vsub.s32 0, %v5968
        %v5970 = vrot.slane %v5939, %v5969
        %v5971 = vmul.f32 %v5965, %v5970
        %v5972 = vmul.f32 %v5966, %v5970
        %v5973 = vlaneseq
        %v5974 = vshrl.u32 %v5973, 7
        %v5975 = vsub.s32 0, %v5974
        %v5976 = vrot.slane %v5940, %v5975
        %v5977 = vadd.f32 %v5971, %v5976
        %v5978 = vadd.f32 %v5972, %v5976
        %v5979 = vld [vmem:[#allocation9 + $0x15] sm:$0xff]
        %v5980 = vld [vmem:[#allocation9 + $0x1d] sm:$0xff]
        %v5981 = vld [vmem:[#allocation9 + $0x25] sm:$0xff]
        %v5982 = vld [vmem:[#allocation9 + $0x2d] sm:$0xff]
        %v5983 = vld [vmem:[#allocation12 + $0x26] sm:$0x1]
        %v5984 = vlaneseq
        %v5985 = vshrl.u32 %v5984, 7
        %v5986 = vsub.s32 0, %v5985
        %v5987 = vrot.slane %v5983, %v5986
        %v5989 = vsel %vm1158, %v5977, 0
        %v5992 = vsel %vm1158, %v5978, 0
        %5994 = vmatprep.subr.mxu0 0.0
        %5995 = vmatpush1.msra.mxu0 0.0
        %5996 = vmatprep.subr.mxu0 0.0
        %5997 = vmatpush1.msra.mxu0 0.0
        %5998 = vmatprep.subr.mxu0 0.0
        %5999 = vmatpush1.msra.mxu0 0.0
        %6000 = vmatprep.subr.mxu0 0.0
        %6001 = vmatpush1.msra.mxu0 0.0
        %6002 = vmatprep.subr.mxu0 0.0
        %6003 = vmatpush1.msra.mxu0 0.0
        %6004 = vmatprep.subr.mxu0 0.0
        %6005 = vmatpush1.msra.mxu0 0.0
        %6006 = vmatprep.subr.mxu0 0.0
        %6007 = vmatpush1.msra.mxu0 0.0
        %6008 = vmatprep.subr.mxu0 0.0
        %6009 = vmatpush1.msra.mxu0 0.0
        %6010 = vmatprep.subr.mxu0 0.0
        %6011 = vmatpush1.msra.mxu0 0.0
        %6012 = vmatprep.subr.mxu0 0.0
        %6013 = vmatpush1.msra.mxu0 0.0
        %6014 = vmatprep.subr.mxu0 0.0
        %6015 = vmatpush1.msra.mxu0 0.0
        %6016 = vmatprep.subr.mxu0 0.0
        %6017 = vmatpush1.msra.mxu0 0.0
        %6018 = vmatprep.subr.mxu0 0.0
        %6019 = vmatpush1.msra.mxu0 %v5982
        %6020 = vmatprep.subr.mxu0 0.0
        %6021 = vmatpush1.msra.mxu0 %v5981
        %6022 = vmatprep.subr.mxu0 0.0
        %6023 = vmatpush1.msra.mxu0 %v5980
        %6024 = vmatprep.subr.mxu0 0.0
        %6025 = vmatpush1.msra.mxu0 %v5979
        %6026 = vmatprep.subr.mxu0 0.0
        %6027 = vmatpush2.msra.mxu0 0.0
        %6028 = vmatprep.subr.mxu0 0.0
        %6029 = vmatpush2.msra.mxu0 0.0
        %6030 = vmatprep.subr.mxu0 0.0
        %6031 = vmatpush2.msra.mxu0 0.0
        %6032 = vmatprep.subr.mxu0 0.0
        %6033 = vmatpush2.msra.mxu0 0.0
        %6034 = vmatprep.subr.mxu0 0.0
        %6035 = vmatpush2.msra.mxu0 0.0
        %6036 = vmatprep.subr.mxu0 0.0
        %6037 = vmatpush2.msra.mxu0 0.0
        %6038 = vmatprep.subr.mxu0 0.0
        %6039 = vmatpush2.msra.mxu0 0.0
        %6040 = vmatprep.subr.mxu0 0.0
        %6041 = vmatpush2.msra.mxu0 0.0
        %6042 = vmatprep.subr.mxu0 0.0
        %6043 = vmatpush2.msra.mxu0 0.0
        %6044 = vmatprep.subr.mxu0 0.0
        %6045 = vmatpush2.msra.mxu0 0.0
        %6046 = vmatprep.subr.mxu0 0.0
        %6047 = vmatpush2.msra.mxu0 0.0
        %6048 = vmatprep.subr.mxu0 0.0
        %6049 = vmatpush2.msra.mxu0 0.0
        %6050 = vmatprep.subr.mxu0 0.0
        %6051 = vmatpush2.msra.mxu0 0.0
        %6052 = vmatprep.subr.mxu0 0.0
        %6053 = vmatpush2.msra.mxu0 0.0
        %6054 = vmatprep.subr.mxu0 0.0
        %6055 = vmatpush2.msra.mxu0 0.0
        %6056 = vmatprep.subr.mxu0 0.0
        %6057 = vmatpush2.msra.mxu0 0.0
        %6058 = vmatprep.mubr.f32.mxu0 0.0
        %6059 = vmatmul.mubr.f32.gmra.mxu0 %v5989
        %v6060 = vpop.f32.mrf.mxu0
        %v6061 = vadd.f32 %v5987, %v6060
        %v6062 = vpop.f32.mrf.mxu0
        %6063 = vmatprep.mubr.f32.mxu0 0.0
        %6064 = vmatmul.mubr.f32.gmra.mxu0 %v5992
        %v6065 = vpop.f32.mrf.mxu0
        %v6066 = vadd.f32 %v5987, %v6065
        %v6067 = vpop.f32.mrf.mxu0
        %6068 = vdwg.mxu0
        %v6069 = vsel %vm1158, %v6061, -inf
        %6070 = vmax.xlane.f32.xlu0 %v6069
        %v6071 = vpop.xlane.xlu0 %6070
        %v6072 = vsel %vm1727, %v6066, -inf
        %6073 = vmax.xlane.f32.xlu0 %v6072
        %v6074 = vpop.xlane.xlu0 %6073
        %vm6075 = vcmp.eq.f32.partialorder %v6061, %v6071
        %vm6076 = vcmp.eq.f32.partialorder %v6066, %v6074
        %v6077 = vsel %vm6075, %v572, 32
        %v6078 = vsel %vm6076, %v572, 32
        %v6079 = vsel %vm1158, %v6077, 2147483647
        %v6080 = vand.u32 %v6079, 65535
        %v6081 = vshra.s32 %v6079, 16
        %v6082 = vcvt.s32.f32 %v6080
        %v6083 = vcvt.s32.f32 %v6081
        %6084 = vmin.xlane.f32.xlu0 %v6083
        %v6085 = vpop.xlane.xlu0 %6084
        %vm6086 = vcmp.eq.f32.partialorder %v6083, %v6085
        %v6087 = vsel %vm6086, %v6082, inf
        %6088 = vmin.xlane.f32.xlu0 %v6087
        %v6089 = vpop.xlane.xlu0 %6088
        %v6090 = vcvt.f32.s32 %v6089
        %v6091 = vcvt.f32.s32 %v6085
        %v6092 = vshll.u32 %v6091, 16
        %v6093 = vadd.s32 %v6092, %v6090
        %v6094 = vsel %vm1727, %v6078, 2147483647
        %v6095 = vand.u32 %v6094, 65535
        %v6096 = vshra.s32 %v6094, 16
        %v6097 = vcvt.s32.f32 %v6095
        %v6098 = vcvt.s32.f32 %v6096
        %6099 = vmin.xlane.f32.xlu0 %v6098
        %v6100 = vpop.xlane.xlu0 %6099
        %vm6101 = vcmp.eq.f32.partialorder %v6098, %v6100
        %v6102 = vsel %vm6101, %v6097, inf
        %6103 = vmin.xlane.f32.xlu0 %v6102
        %v6104 = vpop.xlane.xlu0 %6103
        %v6105 = vcvt.f32.s32 %v6104
        %v6106 = vcvt.f32.s32 %v6100
        %v6107 = vshll.u32 %v6106, 16
        %v6108 = vadd.s32 %v6107, %v6105
        %v6109 = vcvt.s32.f32 %v6093
        %v6110 = vcvt.s32.f32 %v6108
        %v6112 = vsel %vm639, %v604, 0
        %v6115 = vsel %vm639, %v605, 0
        %v6118 = vsel %vm646, %v6110, 0
        %6120 = vmatprep.subr.mxu0 0.0
        %6121 = vmatpush1.msra.mxu0 0.0
        %6122 = vmatprep.subr.mxu0 0.0
        %6123 = vmatpush1.msra.mxu0 0.0
        %6124 = vmatprep.subr.mxu0 0.0
        %6125 = vmatpush1.msra.mxu0 0.0
        %6126 = vmatprep.subr.mxu0 0.0
        %6127 = vmatpush1.msra.mxu0 0.0
        %6128 = vmatprep.subr.mxu0 0.0
        %6129 = vmatpush1.msra.mxu0 0.0
        %6130 = vmatprep.subr.mxu0 0.0
        %6131 = vmatpush1.msra.mxu0 0.0
        %6132 = vmatprep.subr.mxu0 0.0
        %6133 = vmatpush1.msra.mxu0 0.0
        %6134 = vmatprep.subr.mxu0 0.0
        %6135 = vmatpush1.msra.mxu0 0.0
        %6136 = vmatprep.subr.mxu0 0.0
        %6137 = vmatpush1.msra.mxu0 0.0
        %6138 = vmatprep.subr.mxu0 0.0
        %6139 = vmatpush1.msra.mxu0 0.0
        %6140 = vmatprep.subr.mxu0 0.0
        %6141 = vmatpush1.msra.mxu0 0.0
        %6142 = vmatprep.subr.mxu0 0.0
        %6143 = vmatpush1.msra.mxu0 0.0
        %6144 = vmatprep.subr.mxu0 0.0
        %6145 = vmatpush1.msra.mxu0 0.0
        %6146 = vmatprep.subr.mxu0 0.0
        %6147 = vmatpush1.msra.mxu0 0.0
        %6148 = vmatprep.subr.mxu0 0.0
        %6149 = vmatpush1.msra.mxu0 %v6118
        %6150 = vmatprep.subr.mxu0 0.0
        %6151 = vmatpush1.msra.mxu0 %v6109
        %6152 = vmatprep.subr.mxu0 0.0
        %6153 = vmatpush2.msra.mxu0 0.0
        %6154 = vmatprep.subr.mxu0 0.0
        %6155 = vmatpush2.msra.mxu0 0.0
        %6156 = vmatprep.subr.mxu0 0.0
        %6157 = vmatpush2.msra.mxu0 0.0
        %6158 = vmatprep.subr.mxu0 0.0
        %6159 = vmatpush2.msra.mxu0 0.0
        %6160 = vmatprep.subr.mxu0 0.0
        %6161 = vmatpush2.msra.mxu0 0.0
        %6162 = vmatprep.subr.mxu0 0.0
        %6163 = vmatpush2.msra.mxu0 0.0
        %6164 = vmatprep.subr.mxu0 0.0
        %6165 = vmatpush2.msra.mxu0 0.0
        %6166 = vmatprep.subr.mxu0 0.0
        %6167 = vmatpush2.msra.mxu0 0.0
        %6168 = vmatprep.subr.mxu0 0.0
        %6169 = vmatpush2.msra.mxu0 0.0
        %6170 = vmatprep.subr.mxu0 0.0
        %6171 = vmatpush2.msra.mxu0 0.0
        %6172 = vmatprep.subr.mxu0 0.0
        %6173 = vmatpush2.msra.mxu0 0.0
        %6174 = vmatprep.subr.mxu0 0.0
        %6175 = vmatpush2.msra.mxu0 0.0
        %6176 = vmatprep.subr.mxu0 0.0
        %6177 = vmatpush2.msra.mxu0 0.0
        %6178 = vmatprep.subr.mxu0 0.0
        %6179 = vmatpush2.msra.mxu0 0.0
        %6180 = vmatprep.subr.mxu0 0.0
        %6181 = vmatpush2.msra.mxu0 0.0
        %6182 = vmatprep.subr.mxu0 0.0
        %6183 = vmatpush2.msra.mxu0 0.0
        %6184 = vmatprep.mubr.f32.mxu0 0.0
        %6185 = vmatmul.mubr.f32.gmra.mxu0 %v6112
        %v6186 = vpop.f32.mrf.mxu0
        %v6187 = vadd.f32 0.0, %v6186
        %v6188 = vpop.f32.mrf.mxu0
        %6189 = vmatprep.mubr.f32.mxu0 0.0
        %6190 = vmatmul.mubr.f32.gmra.mxu0 %v6115
        %v6191 = vpop.f32.mrf.mxu0
        %v6192 = vadd.f32 0.0, %v6191
        %v6193 = vpop.f32.mrf.mxu0
        %6194 = vdwg.mxu0
        %vm6195 = vcmp.ne.f32.partialorder %v6109, %v6187
        %vm6196 = vcmp.ne.f32.partialorder %v6110, %v6192
        %vm6197 = vcmp.ne.s32.totalorder %v6093, 0
        %vm6198 = vcmp.ne.s32.totalorder %v6108, 0
        %vm6199 = vmand %vm6195, %vm6197
        %vm6200 = vmand %vm6196, %vm6198
        %v6201 = vsel %vm6199, 1, 0
        %v6202 = vsel %vm6200, 1, 0
        %vm6203 = vcmp.eq.s32.totalorder %v569, 0
        %vm6204 = vcmp.eq.s32.totalorder %v570, 0
        %v6205 = vsel %vm6203, 1, %v6201
        %v6206 = vsel %vm6204, 1, %v6202
        %6207 = vrot.lane.b32.xlu0 %v6205, 1
        %v6208 = vpop.permute.xlu0 %6207
        %6209 = vrot.lane.b32.xlu0 %v6206, 1
        %v6210 = vpop.permute.xlu0 %6209
        %vm6211 = vcmask 7168
        %v6212 = vsel %vm6211, %v6093, %v6208
        %v6213 = vsel %vm6211, %v6108, %v6210
        %vm6214 = vcmask 15360
        %6215 = vst.msk [vmem:[%s566] sm:$0xff] %vm6214, %v6212
        %vm6216 = vcmask 9216
        %6217 = vst.msk [vmem:[%s566 + $0x8] sm:$0x3] %vm6216, %v6213
        %p6218 = scmp.lt.s32.totalorder %s36, 1
        %s6219 = scalar_select %p6218, %s36, 1
        %s6220 = smul.addr %s6219, 2
        %s6221 = smul.addr %s6220, 8
        %s6222 = scalar_lea.vmem %s13, %s6221
        // Predicated region
        $region109: #{_lambda_.1} parent=67 // pred_check
          %p6223 = pneg %p311
        $region110: #{_lambda_.1} parent=67 // pred_check_branch
          %6225 = sbr.rel (%p6223) target = $region112
        $region111: #{_lambda_.1} parent=67 // pred_region
          _
        $region112: #{_lambda_.1} parent=67 // pred_fallthru
          _
      $region68: #{_lambda_.1} parent=5 // pred_fallthru
        _
      %p6226 = scmp.le.s32.totalorder 2, %s31
      // Predicated region
      $region113: #{_lambda_.1} parent=5 // pred_check
        %p6227 = pneg %p6226
      $region114: #{_lambda_.1} parent=5 // pred_check_branch
        %6229 = sbr.rel (%p6227) target = $region116
      $region115: #{_lambda_.1} parent=5 // pred_region
        %s6230 = ssub.s32 %s31, 2
        // Predicated region
        $region117: #{_lambda_.1} parent=115 // pred_check
          %p6231 = pneg %p317
        $region118: #{_lambda_.1} parent=115 // pred_check_branch
          %6233 = sbr.rel (%p6231) target = $region120
        $region119: #{_lambda_.1} parent=115 // pred_region
          %p6234 = scmp.lt.s32.totalorder %s37, 1
          %s6235 = scalar_select %p6234, %s37, 1
          %s6236 = smul.addr %s6235, 2
          %s6237 = smul.addr %s6236, 8
          %s6238 = scalar_lea.vmem %s13, %s6237
        $region120: #{_lambda_.1} parent=115 // pred_fallthru
          _
      $region116: #{_lambda_.1} parent=5 // pred_fallthru
        _
    $region6: #{_lambda_.1} parent=1 // loop_footer
      %s35 = sadd.s32 1, %s31
    $region7: #{_lambda_.1} parent=1 // loop_footer_branch
      %30 = sbr.rel target = $region3
    $region8: #{_lambda_.1} parent=1 // loop_exit
      _
    %6239 = vsyncpa [#allocation5], 1
    %s6240 = scalar_lea.sflag [#allocation5], 1
    %6241 = vsyncpa %s6240, 1
    %6242 = vsyncpa [#allocation7], 1
    %6243 = vsyncpa [#allocation10], 1
    %6244 = vsyncpa [#allocation13], 1
    %6245 = vsyncpa [#allocation16], 1
    %6246 = vsyncpa [#allocation19], 1

</llo_original>
